<compile_context>
chip_gen: v7x
topology: tpu7x:2x2x1
jax: 0.10.0
libtpu: 0.0.40
codegen_flags: <defaults>
</compile_context>

<pallas_src>
import functools
from enum import Enum

import jax
import jax.numpy as jnp
from jax import lax
from jax.experimental import pallas as pl
from jax.experimental.pallas import tpu as pltpu


class ForwardMode(Enum):
    PREFILL = 1
    EXTEND = 2
    DECODE = 3


_NEG_INF = -1e30                       # finite mask value: avoids inf-inf NaNs
_TRANS_B = (((1,), (1,)), ((), ()))    # contract last dims of both: q @ k^T
_MATMUL = (((1,), (0,)), ((), ()))     # plain matmul: p @ v


# ----------------------------------------------------------------------------
# Pallas kernel: one (batch, kv_group, lower-triangular (qi, ki) pair) step of
# causal flash attention.
# ----------------------------------------------------------------------------
def _prefill_attn_kernel(qi_map_ref, ki_map_ref,           # scalar prefetch (SMEM)
                         q_ref, k_ref, v_ref, o_ref,       # blocks (VMEM)
                         qs_ref, m_ref, l_ref, acc_ref, *, # scratch (VMEM)
                         scaling, group, head_dim, tile, exp_dtype):
    """Blocks (token-major; one kv-head group per grid step):
         q_ref  : (1, tile, group*head_dim)   queries of this kv group
         k_ref  : (1, tile, head_dim)
         v_ref  : (1, tile, head_dim)
         o_ref  : (1, tile, group*head_dim)
       Scratch (persists across the pair axis):
         qs_ref : (group*tile, head_dim)      pre-scaled, row-stacked Q
         m_ref  : (group*tile, 1) f32         running row max   (lanes pad 1->128)
         l_ref  : (group*tile, 1) f32         running row sum   (lanes pad 1->128)
         acc_ref: (group*tile, head_dim) f32  un-normalized output
    """
    p_idx = pl.program_id(2)
    qi = qi_map_ref[p_idx]
    ki = ki_map_ref[p_idx]
    D = head_dim

    @pl.when(ki == 0)
    def _init():
        # Restack this group's heads along the row (sublane) axis so QK^T / PV
        # run as one (group*tile)-row matmul per kv step, and pre-scale Q once
        # per q tile (O(tile*D) work instead of scaling O(tile^2) scores).
        for j in range(group):
            qs_ref[j * tile:(j + 1) * tile, :] = (
                q_ref[0, :, j * D:(j + 1) * D].astype(jnp.float32) * scaling
            ).astype(qs_ref.dtype)
        m_ref[...] = jnp.full(m_ref.shape, _NEG_INF, jnp.float32)
        l_ref[...] = jnp.zeros(l_ref.shape, jnp.float32)
        acc_ref[...] = jnp.zeros(acc_ref.shape, jnp.float32)

    def flash_step(masked):
        k_t = k_ref[0]                              # (tile, D)
        v_t = v_ref[0]                              # (tile, D)
        q_s = qs_ref[...]                           # (group*tile, D), pre-scaled
        s = lax.dot_general(q_s, k_t, _TRANS_B,
                            preferred_element_type=jnp.float32)
        if masked:  # diagonal tile only pays for the iota + where
            r = lax.broadcasted_iota(jnp.int32, s.shape, 0)
            c = lax.broadcasted_iota(jnp.int32, s.shape, 1)
            s = jnp.where(c <= (r % tile), s, _NEG_INF)
        m_prev = m_ref[...]
        m_new = jnp.maximum(m_prev, jnp.max(s, axis=-1, keepdims=True))
        alpha = jnp.exp(m_prev - m_new)                     # tiny; stays f32
        # Big exp in exp_dtype (bf16 on v6e/v7x EUP); row-sum l stays f32.
        p = jnp.exp((s - m_new).astype(exp_dtype))
        l_ref[...] = alpha * l_ref[...] + jnp.sum(
            p.astype(jnp.float32), axis=-1, keepdims=True)
        pv = lax.dot_general(p.astype(v_t.dtype), v_t, _MATMUL,
                             preferred_element_type=jnp.float32)
        acc_ref[...] = alpha * acc_ref[...] + pv
        m_ref[...] = m_new

    # Causal structure (tq == tk): ki < qi fully visible (no mask); ki == qi is
    # the diagonal (mask + finalize); ki > qi never appears in the pair list.
    @pl.when(ki < qi)
    def _interior():
        flash_step(masked=False)

    @pl.when(ki == qi)
    def _diag_and_finalize():
        flash_step(masked=True)
        # Last processed kv tile for this q tile: normalize and store a
        # lane-dense (group*head_dim wide) output slab.
        inv_l = pl.reciprocal(l_ref[...], approx=True)      # EUP slot
        for j in range(group):
            o_ref[0, :, j * D:(j + 1) * D] = (
                acc_ref[j * tile:(j + 1) * tile, :] *
                inv_l[j * tile:(j + 1) * tile, :]).astype(o_ref.dtype)


def prefill_attention(q, k, v, *, num_heads, num_kv_heads, head_dim, scaling,
                      batch, seq_len, tile=256, exp_in_bf16=None):
    """Causal (context) attention over packed equal-length sequences.

    q: [T, num_heads*head_dim], k/v: [T, num_kv_heads*head_dim], T = batch*seq_len.
    """
    T = q.shape[0]
    assert T == batch * seq_len
    assert num_heads % num_kv_heads == 0
    group = num_heads // num_kv_heads
    assert head_dim % 128 == 0, "use a lane-aligned head_dim (multiple of 128)"
    tile = min(tile, seq_len)
    assert seq_len % tile == 0, "seq_len must be a multiple of the tile size"
    # TODO(synk): variable-length packed sequences (start_loc/seq_lens as in
    # sglang's context_attention_fwd) need those arrays scalar-prefetched plus
    # per-row validity masking; equal-length sequences are assumed here.

    if exp_in_bf16 is None:
        try:
            kind = jax.devices()[0].device_kind.lower()
        except Exception:  # pragma: no cover - defensive
            kind = ""
        exp_in_bf16 = ("v6" in kind) or ("v7" in kind)   # bf16 EUP chips only
    exp_dtype = (jnp.bfloat16
                 if (exp_in_bf16 and q.dtype == jnp.bfloat16) else jnp.float32)

    HD = num_heads * head_dim
    KD = num_kv_heads * head_dim
    GD = group * head_dim
    # Free reshapes only -- no HBM transpose round trips. Heads are selected by
    # the BlockSpec (group slab for Q/O, single head for K/V) on the lane axis.
    qr = q.reshape(batch, seq_len, HD)
    kr = k.reshape(batch, seq_len, KD)
    vr = v.reshape(batch, seq_len, KD)
    n_tiles = seq_len // tile

    # Flatten the causal lower triangle into a 1-D pair axis (scalar-prefetched
    # qi/ki maps). Pairs with the same qi are consecutive, so the Q/O blocks
    # stay resident across the kv sweep of each q tile.
    pairs = [(qi, ki) for qi in range(n_tiles) for ki in range(qi + 1)]
    qi_map = jnp.asarray([p[0] for p in pairs], jnp.int32)
    ki_map = jnp.asarray([p[1] for p in pairs], jnp.int32)
    n_pairs = len(pairs)

    kernel = functools.partial(
        _prefill_attn_kernel, scaling=scaling, group=group,
        head_dim=head_dim, tile=tile, exp_dtype=exp_dtype)

    out = pl.pallas_call(
        kernel,
        out_shape=jax.ShapeDtypeStruct((batch, seq_len, HD), q.dtype),
        grid_spec=pltpu.PrefetchScalarGridSpec(
            num_scalar_prefetch=2,
            # pair (reduction) axis last; batch / kv-group axes are parallel and
            # carry identical triangular work -> balanced megacore split.
            grid=(batch, num_kv_heads, n_pairs),
            in_specs=[
                pl.BlockSpec((1, tile, GD),
                             lambda b, g, p, qi_m, ki_m: (b, qi_m[p], g)),
                pl.BlockSpec((1, tile, head_dim),
                             lambda b, g, p, qi_m, ki_m: (b, ki_m[p], g)),
                pl.BlockSpec((1, tile, head_dim),
                             lambda b, g, p, qi_m, ki_m: (b, ki_m[p], g)),
            ],
            out_specs=pl.BlockSpec((1, tile, GD),
                                   lambda b, g, p, qi_m, ki_m: (b, qi_m[p], g)),
            # VMEM accounting (per step, production group=8, tile=256, bf16):
            #   qs 1 MiB + acc 2 MiB + m/l 2x1 MiB (lane-padded) + double-
            #   buffered Q/O/K/V blocks ~ well inside the 48 MiB limit below.
            scratch_shapes=[
                pltpu.VMEM((group * tile, head_dim), q.dtype),    # scaled Q
                pltpu.VMEM((group * tile, 1), jnp.float32),       # m
                pltpu.VMEM((group * tile, 1), jnp.float32),       # l
                pltpu.VMEM((group * tile, head_dim), jnp.float32),  # acc
            ],
        ),
        compiler_params=pltpu.CompilerParams(
            dimension_semantics=("parallel", "parallel", "arbitrary"),
            vmem_limit_bytes=48 * 1024 * 1024,   # leaves headroom on v7x (64 MiB)
        ),
    )(qi_map, ki_map, qr, kr, vr)

    return out.reshape(T, HD)


# ----------------------------------------------------------------------------
# KV-cache scatter: in place via buffer donation (no O(pool) copy per layer).
# ----------------------------------------------------------------------------
@functools.partial(jax.jit, donate_argnums=(0, 1))
def _scatter_kv_cache(key_buffer, value_buffer, cache_k, cache_v, loc):
    return (key_buffer.at[loc].set(cache_k),
            value_buffer.at[loc].set(cache_v))


# ----------------------------------------------------------------------------
# Module-level glue mirroring RadixAttention.forward (prefill path).
# ----------------------------------------------------------------------------
class InputMetadata:
    def __init__(self, forward_mode, batch, seq_len, out_cache_loc,
                 key_buffer, value_buffer):
        self.forward_mode = forward_mode
        self.batch = batch
        self.seq_len = seq_len
        self.out_cache_loc = out_cache_loc
        self.key_buffer = key_buffer
        self.value_buffer = value_buffer


class RadixAttention:
    def __init__(self, num_heads, head_dim, scaling, num_kv_heads, layer_id):
        self.tp_q_head_num = num_heads
        self.tp_k_head_num = num_kv_heads
        self.tp_v_head_num = num_kv_heads
        self.head_dim = head_dim
        self.scaling = scaling
        self.layer_id = layer_id

    def store_kv_cache(self, cache_k, cache_v, md: InputMetadata):
        md.key_buffer, md.value_buffer = _scatter_kv_cache(
            md.key_buffer, md.value_buffer, cache_k, cache_v, md.out_cache_loc)

    def prefill_forward(self, q, k, v, md: InputMetadata):
        o = prefill_attention(
            q,
            k.reshape(-1, self.tp_k_head_num * self.head_dim),
            v.reshape(-1, self.tp_v_head_num * self.head_dim),
            num_heads=self.tp_q_head_num,
            num_kv_heads=self.tp_k_head_num,
            head_dim=self.head_dim,
            scaling=self.scaling,
            batch=md.batch,
            seq_len=md.seq_len,
        )
        self.store_kv_cache(k, v, md)
        return o

    def forward(self, q, k, v, md: InputMetadata):
        k = k.reshape(-1, self.tp_k_head_num, self.head_dim)
        v = v.reshape(-1, self.tp_v_head_num, self.head_dim)
        if md.forward_mode == ForwardMode.PREFILL:
            return self.prefill_forward(q, k, v, md)
        # TODO(synk): EXTEND/DECODE paths need a paged KV-cache gather kernel
        # (scalar-prefetched req_to_token page table); only the prefill
        # (context attention) hot path is implemented here.
        raise NotImplementedError


# ----------------------------------------------------------------------------
# Pure-JAX (f32) reference for correctness checking.
# ----------------------------------------------------------------------------
def _reference(q, k, v, num_heads, num_kv_heads, head_dim, scaling, batch, seq_len):
    q = q.astype(jnp.float32)
    k = k.astype(jnp.float32)
    v = v.astype(jnp.float32)
    group = num_heads // num_kv_heads
    qr = q.reshape(batch, seq_len, num_heads, head_dim).transpose(0, 2, 1, 3)
    kr = k.reshape(batch, seq_len, num_kv_heads, head_dim).transpose(0, 2, 1, 3)
    vr = v.reshape(batch, seq_len, num_kv_heads, head_dim).transpose(0, 2, 1, 3)
    kr = jnp.repeat(kr, group, axis=1)
    vr = jnp.repeat(vr, group, axis=1)
    s = jnp.einsum("bhqd,bhkd->bhqk", qr, kr) * scaling
    mask = jnp.tril(jnp.ones((seq_len, seq_len), bool))
    s = jnp.where(mask, s, -jnp.inf)
    p = jax.nn.softmax(s, axis=-1)
    o = jnp.einsum("bhqk,bhkd->bhqd", p, vr)
    return o.transpose(0, 2, 1, 3).reshape(batch * seq_len, num_heads * head_dim)


if __name__ == "__main__":
    num_heads = 4
    num_kv_heads = 2          # group = 2 (GQA)
    head_dim = 128            # lane-aligned, MXU-friendly contraction dim
    batch = 2
    seq_len = 512             # 2 q-tiles -> 3 lower-triangular (qi, ki) pairs
    T = batch * seq_len
    scaling = head_dim ** -0.5

    key = jax.random.PRNGKey(0)
    kq, kk, kv_, kloc = jax.random.split(key, 4)
    # bf16 I/O: bf16 MXU matmuls with f32 accumulation / f32 softmax stats.
    q = jax.random.normal(kq, (T, num_heads * head_dim), jnp.float32).astype(jnp.bfloat16)
    k = jax.random.normal(kk, (T, num_kv_heads * head_dim), jnp.float32).astype(jnp.bfloat16)
    v = jax.random.normal(kv_, (T, num_kv_heads * head_dim), jnp.float32).astype(jnp.bfloat16)

    # KV cache pool and (scattered) cache locations for this batch.
    pool_size = 2048
    key_buffer = jnp.zeros((pool_size, num_kv_heads, head_dim), jnp.bfloat16)
    value_buffer = jnp.zeros((pool_size, num_kv_heads, head_dim), jnp.bfloat16)
    out_cache_loc = jax.random.permutation(kloc, pool_size)[:T].astype(jnp.int32)

    md = InputMetadata(ForwardMode.PREFILL, batch, seq_len, out_cache_loc,
                       key_buffer, value_buffer)
    del key_buffer, value_buffer   # donated to the in-place cache scatter

    layer = RadixAttention(num_heads, head_dim, scaling, num_kv_heads, layer_id=0)
    o = layer.forward(q, k, v, md)
    o = jax.block_until_ready(o)
    md.key_buffer = jax.block_until_ready(md.key_buffer)
    md.value_buffer = jax.block_until_ready(md.value_buffer)

    ref = _reference(q, k, v, num_heads, num_kv_heads, head_dim, scaling,
                     batch, seq_len)
    assert o.shape == (T, num_heads * head_dim)
    err = jnp.max(jnp.abs(o.astype(jnp.float32) - ref))
    assert jnp.allclose(o.astype(jnp.float32), ref, atol=5e-2, rtol=5e-2), float(err)
    # KV cache was scattered (in place) at out_cache_loc.
    assert jnp.array_equal(md.key_buffer[out_cache_loc],
                           k.reshape(T, num_kv_heads, head_dim))
    assert jnp.array_equal(md.value_buffer[out_cache_loc],
                           v.reshape(T, num_kv_heads, head_dim))

    print("KERNEL_OK")
</pallas_src>

<mosaic_0001>
module attributes {stable_mosaic.version = 11 : i64} {
  func.func @_prefill_attn_kernel(%arg0: i32, %arg1: i32, %arg2: i32, %arg3: memref<3xi32, #tpu.memory_space<smem>>, %arg4: memref<3xi32, #tpu.memory_space<smem>>, %arg5: memref<1x256x256xbf16, #tpu.memory_space<vmem>>, %arg6: memref<1x256x128xbf16, #tpu.memory_space<vmem>>, %arg7: memref<1x256x128xbf16, #tpu.memory_space<vmem>>, %arg8: memref<1x256x256xbf16, #tpu.memory_space<vmem>>, %arg9: memref<512x128xbf16, #tpu.memory_space<vmem>>, %arg10: memref<512x1xf32, #tpu.memory_space<vmem>>, %arg11: memref<512x1xf32, #tpu.memory_space<vmem>>, %arg12: memref<512x128xf32, #tpu.memory_space<vmem>>) attributes {dimension_semantics = [#tpu.dimension_semantics<parallel>, #tpu.dimension_semantics<parallel>, #tpu.dimension_semantics<arbitrary>], iteration_bounds = array<i64: 2, 2, 3>, scalar_prefetch = 2 : i64, scratch_operands = 4 : i64, tpu.core_type = #tpu.core_type<tc>, window_params = [{transform_indices = @transform_0, window_bounds = array<i64: 1, 256, 256>}, {transform_indices = @transform_1, window_bounds = array<i64: 1, 256, 128>}, {transform_indices = @transform_2, window_bounds = array<i64: 1, 256, 128>}, {transform_indices = @transform_3, window_bounds = array<i64: 1, 256, 256>}]} {
    %0 = arith.index_cast %arg2 : i32 to index
    %1 = memref.load %arg3[%0] : memref<3xi32, #tpu.memory_space<smem>>
    %2 = arith.index_cast %arg2 : i32 to index
    %3 = memref.load %arg4[%2] : memref<3xi32, #tpu.memory_space<smem>>
    %c0_i32 = arith.constant 0 : i32
    %4 = arith.cmpi eq, %3, %c0_i32 : i32
    %5 = arith.extui %4 : i1 to i32
    %c0_i32_0 = arith.constant 0 : i32
    %6 = arith.cmpi ne, %5, %c0_i32_0 : i32
    scf.if %6 {
      %c0 = arith.constant 0 : index
      %c0_3 = arith.constant 0 : index
      %c0_4 = arith.constant 0 : index
      %13 = vector.load %arg5[%c0, %c0_3, %c0_4] : memref<1x256x256xbf16, #tpu.memory_space<vmem>>, vector<1x256x128xbf16>
      %14 = vector.shape_cast %13 : vector<1x256x128xbf16> to vector<256x128xbf16>
      %15 = arith.extf %14 : vector<256x128xbf16> to vector<256x128xf32>
      %cst = arith.constant 0.0883883461 : f32
      %16 = vector.broadcast %cst : f32 to vector<256x128xf32>
      %17 = arith.mulf %15, %16 : vector<256x128xf32>
      %18 = arith.truncf %17 : vector<256x128xf32> to vector<256x128xbf16>
      %c0_5 = arith.constant 0 : index
      %c0_6 = arith.constant 0 : index
      %19 = vector.load %arg9[%c0_5, %c0_6] : memref<512x128xbf16, #tpu.memory_space<vmem>>, vector<256x128xbf16>
      tpu.vector_store %arg9[%c0_5, %c0_6], %18 {strides = array<i32>} : memref<512x128xbf16, #tpu.memory_space<vmem>>, vector<256x128xbf16>,
      %c0_7 = arith.constant 0 : index
      %c0_8 = arith.constant 0 : index
      %c128 = arith.constant 128 : index
      %20 = vector.load %arg5[%c0_7, %c0_8, %c128] : memref<1x256x256xbf16, #tpu.memory_space<vmem>>, vector<1x256x128xbf16>
      %21 = vector.shape_cast %20 : vector<1x256x128xbf16> to vector<256x128xbf16>
      %22 = arith.extf %21 : vector<256x128xbf16> to vector<256x128xf32>
      %cst_9 = arith.constant 0.0883883461 : f32
      %23 = vector.broadcast %cst_9 : f32 to vector<256x128xf32>
      %24 = arith.mulf %22, %23 : vector<256x128xf32>
      %25 = arith.truncf %24 : vector<256x128xf32> to vector<256x128xbf16>
      %c256 = arith.constant 256 : index
      %c0_10 = arith.constant 0 : index
      %26 = vector.load %arg9[%c256, %c0_10] : memref<512x128xbf16, #tpu.memory_space<vmem>>, vector<256x128xbf16>
      tpu.vector_store %arg9[%c256, %c0_10], %25 {strides = array<i32>} : memref<512x128xbf16, #tpu.memory_space<vmem>>, vector<256x128xbf16>,
      %cst_11 = arith.constant -1.000000e+30 : f32
      %27 = vector.broadcast %cst_11 : f32 to vector<512x1xf32>
      %c0_12 = arith.constant 0 : index
      %c0_13 = arith.constant 0 : index
      %28 = vector.load %arg10[%c0_12, %c0_13] : memref<512x1xf32, #tpu.memory_space<vmem>>, vector<512x1xf32>
      tpu.vector_store %arg10[%c0_12, %c0_13], %27 {strides = array<i32>} : memref<512x1xf32, #tpu.memory_space<vmem>>, vector<512x1xf32>,
      %cst_14 = arith.constant 0.000000e+00 : f32
      %29 = vector.broadcast %cst_14 : f32 to vector<512x1xf32>
      %c0_15 = arith.constant 0 : index
      %c0_16 = arith.constant 0 : index
      %30 = vector.load %arg11[%c0_15, %c0_16] : memref<512x1xf32, #tpu.memory_space<vmem>>, vector<512x1xf32>
      tpu.vector_store %arg11[%c0_15, %c0_16], %29 {strides = array<i32>} : memref<512x1xf32, #tpu.memory_space<vmem>>, vector<512x1xf32>,
      %cst_17 = arith.constant 0.000000e+00 : f32
      %31 = vector.broadcast %cst_17 : f32 to vector<512x128xf32>
      %c0_18 = arith.constant 0 : index
      %c0_19 = arith.constant 0 : index
      %32 = vector.load %arg12[%c0_18, %c0_19] : memref<512x128xf32, #tpu.memory_space<vmem>>, vector<512x128xf32>
      tpu.vector_store %arg12[%c0_18, %c0_19], %31 {strides = array<i32>} : memref<512x128xf32, #tpu.memory_space<vmem>>, vector<512x128xf32>,
    } else {
    }
    %7 = arith.cmpi slt, %3, %1 : i32
    %8 = arith.extui %7 : i1 to i32
    %c0_i32_1 = arith.constant 0 : i32
    %9 = arith.cmpi ne, %8, %c0_i32_1 : i32
    scf.if %9 {
      %c0 = arith.constant 0 : index
      %c0_3 = arith.constant 0 : index
      %c0_4 = arith.constant 0 : index
      %13 = vector.load %arg6[%c0, %c0_3, %c0_4] : memref<1x256x128xbf16, #tpu.memory_space<vmem>>, vector<1x256x128xbf16>
      %14 = vector.shape_cast %13 : vector<1x256x128xbf16> to vector<256x128xbf16>
      %c0_5 = arith.constant 0 : index
      %c0_6 = arith.constant 0 : index
      %c0_7 = arith.constant 0 : index
      %15 = vector.load %arg7[%c0_5, %c0_6, %c0_7] : memref<1x256x128xbf16, #tpu.memory_space<vmem>>, vector<1x256x128xbf16>
      %16 = vector.shape_cast %15 : vector<1x256x128xbf16> to vector<256x128xbf16>
      %c0_8 = arith.constant 0 : index
      %c0_9 = arith.constant 0 : index
      %17 = vector.load %arg9[%c0_8, %c0_9] : memref<512x128xbf16, #tpu.memory_space<vmem>>, vector<512x128xbf16>
      %cst = arith.constant dense<0.000000e+00> : vector<512x256xf32>
      %18 = tpu.matmul %17, %14, %cst {dimension_numbers = #tpu.dot_dimension_numbers<[1], [1], [0], [0], [0, 0, 1, 0], [], []>} : vector<512x128xbf16>, vector<256x128xbf16>, vector<512x256xf32> -> vector<512x256xf32>
      %c0_10 = arith.constant 0 : index
      %c0_11 = arith.constant 0 : index
      %19 = vector.load %arg10[%c0_10, %c0_11] : memref<512x1xf32, #tpu.memory_space<vmem>>, vector<512x1xf32>
      %cst_12 = arith.constant dense<0xFF800000> : vector<512xf32>
      %20 = vector.multi_reduction <maximumf>, %18, %cst_12 [1] : vector<512x256xf32> to vector<512xf32>
      %21 = vector.shape_cast %20 : vector<512xf32> to vector<512x1xf32>
      %22 = arith.maximumf %19, %21 : vector<512x1xf32>
      %23 = arith.subf %19, %22 : vector<512x1xf32>
      %24 = math.exp %23 : vector<512x1xf32>
      %25 = vector.broadcast %22 : vector<512x1xf32> to vector<512x256xf32>
      %26 = arith.subf %18, %25 : vector<512x256xf32>
      %27 = math.exp %26 : vector<512x256xf32>
      %c0_13 = arith.constant 0 : index
      %c0_14 = arith.constant 0 : index
      %28 = vector.load %arg11[%c0_13, %c0_14] : memref<512x1xf32, #tpu.memory_space<vmem>>, vector<512x1xf32>
      %29 = arith.mulf %24, %28 : vector<512x1xf32>
      %cst_15 = arith.constant dense<0.000000e+00> : vector<512xf32>
      %30 = vector.multi_reduction <add>, %27, %cst_15 [1] : vector<512x256xf32> to vector<512xf32>
      %31 = vector.shape_cast %30 : vector<512xf32> to vector<512x1xf32>
      %32 = arith.addf %29, %31 : vector<512x1xf32>
      %c0_16 = arith.constant 0 : index
      %c0_17 = arith.constant 0 : index
      %33 = vector.load %arg11[%c0_16, %c0_17] : memref<512x1xf32, #tpu.memory_space<vmem>>, vector<512x1xf32>
      tpu.vector_store %arg11[%c0_16, %c0_17], %32 {strides = array<i32>} : memref<512x1xf32, #tpu.memory_space<vmem>>, vector<512x1xf32>,
      %34 = arith.truncf %27 : vector<512x256xf32> to vector<512x256xbf16>
      %cst_18 = arith.constant dense<0.000000e+00> : vector<512x128xf32>
      %35 = tpu.matmul %34, %16, %cst_18 {dimension_numbers = #tpu.dot_dimension_numbers<[1], [0], [0], [1], [0, 0, 1, 1], [], []>} : vector<512x256xbf16>, vector<256x128xbf16>, vector<512x128xf32> -> vector<512x128xf32>
      %c0_19 = arith.constant 0 : index
      %c0_20 = arith.constant 0 : index
      %36 = vector.load %arg12[%c0_19, %c0_20] : memref<512x128xf32, #tpu.memory_space<vmem>>, vector<512x128xf32>
      %37 = vector.broadcast %24 : vector<512x1xf32> to vector<512x128xf32>
      %38 = arith.mulf %37, %36 : vector<512x128xf32>
      %39 = arith.addf %38, %35 : vector<512x128xf32>
      %c0_21 = arith.constant 0 : index
      %c0_22 = arith.constant 0 : index
      %40 = vector.load %arg12[%c0_21, %c0_22] : memref<512x128xf32, #tpu.memory_space<vmem>>, vector<512x128xf32>
      tpu.vector_store %arg12[%c0_21, %c0_22], %39 {strides = array<i32>} : memref<512x128xf32, #tpu.memory_space<vmem>>, vector<512x128xf32>,
      %c0_23 = arith.constant 0 : index
      %c0_24 = arith.constant 0 : index
      %41 = vector.load %arg10[%c0_23, %c0_24] : memref<512x1xf32, #tpu.memory_space<vmem>>, vector<512x1xf32>
      tpu.vector_store %arg10[%c0_23, %c0_24], %22 {strides = array<i32>} : memref<512x1xf32, #tpu.memory_space<vmem>>, vector<512x1xf32>,
    } else {
    }
    %10 = arith.cmpi eq, %3, %1 : i32
    %11 = arith.extui %10 : i1 to i32
    %c0_i32_2 = arith.constant 0 : i32
    %12 = arith.cmpi ne, %11, %c0_i32_2 : i32
    scf.if %12 {
      %c0 = arith.constant 0 : index
      %c0_3 = arith.constant 0 : index
      %c0_4 = arith.constant 0 : index
      %13 = vector.load %arg6[%c0, %c0_3, %c0_4] : memref<1x256x128xbf16, #tpu.memory_space<vmem>>, vector<1x256x128xbf16>
      %14 = vector.shape_cast %13 : vector<1x256x128xbf16> to vector<256x128xbf16>
      %c0_5 = arith.constant 0 : index
      %c0_6 = arith.constant 0 : index
      %c0_7 = arith.constant 0 : index
      %15 = vector.load %arg7[%c0_5, %c0_6, %c0_7] : memref<1x256x128xbf16, #tpu.memory_space<vmem>>, vector<1x256x128xbf16>
      %16 = vector.shape_cast %15 : vector<1x256x128xbf16> to vector<256x128xbf16>
      %c0_8 = arith.constant 0 : index
      %c0_9 = arith.constant 0 : index
      %17 = vector.load %arg9[%c0_8, %c0_9] : memref<512x128xbf16, #tpu.memory_space<vmem>>, vector<512x128xbf16>
      %cst = arith.constant dense<0.000000e+00> : vector<512x256xf32>
      %18 = tpu.matmul %17, %14, %cst {dimension_numbers = #tpu.dot_dimension_numbers<[1], [1], [0], [0], [0, 0, 1, 0], [], []>} : vector<512x128xbf16>, vector<256x128xbf16>, vector<512x256xf32> -> vector<512x256xf32>
      %19 = tpu.iota {dimensions = array<i32: 0>} : vector<512x256xi32>
      %20 = tpu.iota {dimensions = array<i32: 1>} : vector<512x256xi32>
      %c256_i32 = arith.constant 256 : i32
      %c0_i32_10 = arith.constant 0 : i32
      %21 = arith.cmpi eq, %c256_i32, %c0_i32_10 : i32
      %c1_i32 = arith.constant 1 : i32
      %22 = arith.select %21, %c1_i32, %c256_i32 : i32
      %23 = vector.broadcast %22 : i32 to vector<512x256xi32>
      %24 = arith.remsi %19, %23 : vector<512x256xi32>
      %c0_i32_11 = arith.constant 0 : i32
      %25 = vector.broadcast %c0_i32_11 : i32 to vector<512x256xi32>
      %26 = arith.cmpi ne, %24, %25 : vector<512x256xi32>
      %c0_i32_12 = arith.constant 0 : i32
      %27 = vector.broadcast %c0_i32_12 : i32 to vector<512x256xi32>
      %28 = arith.cmpi slt, %24, %27 : vector<512x256xi32>
      %c0_i32_13 = arith.constant 0 : i32
      %29 = arith.cmpi slt, %22, %c0_i32_13 : i32
      %30 = vector.broadcast %29 : i1 to vector<512x256xi1>
      %31 = vector.broadcast %30 : vector<512x256xi1> to vector<512x256xi1>
      %32 = arith.xori %28, %31 : vector<512x256xi1>
      %33 = arith.andi %32, %26 : vector<512x256xi1>
      %34 = vector.broadcast %22 : i32 to vector<512x256xi32>
      %35 = arith.addi %24, %34 : vector<512x256xi32>
      %36 = arith.select %33, %35, %24 : vector<512x256xi1>, vector<512x256xi32>
      %37 = arith.cmpi sle, %20, %36 : vector<512x256xi32>
      %cst_14 = arith.constant -1.000000e+30 : f32
      %38 = vector.broadcast %cst_14 : f32 to vector<512x256xf32>
      %39 = arith.select %37, %18, %38 : vector<512x256xi1>, vector<512x256xf32>
      %c0_15 = arith.constant 0 : index
      %c0_16 = arith.constant 0 : index
      %40 = vector.load %arg10[%c0_15, %c0_16] : memref<512x1xf32, #tpu.memory_space<vmem>>, vector<512x1xf32>
      %cst_17 = arith.constant dense<0xFF800000> : vector<512xf32>
      %41 = vector.multi_reduction <maximumf>, %39, %cst_17 [1] : vector<512x256xf32> to vector<512xf32>
      %42 = vector.shape_cast %41 : vector<512xf32> to vector<512x1xf32>
      %43 = arith.maximumf %40, %42 : vector<512x1xf32>
      %44 = arith.subf %40, %43 : vector<512x1xf32>
      %45 = math.exp %44 : vector<512x1xf32>
      %46 = vector.broadcast %43 : vector<512x1xf32> to vector<512x256xf32>
      %47 = arith.subf %39, %46 : vector<512x256xf32>
      %48 = math.exp %47 : vector<512x256xf32>
      %c0_18 = arith.constant 0 : index
      %c0_19 = arith.constant 0 : index
      %49 = vector.load %arg11[%c0_18, %c0_19] : memref<512x1xf32, #tpu.memory_space<vmem>>, vector<512x1xf32>
      %50 = arith.mulf %45, %49 : vector<512x1xf32>
      %cst_20 = arith.constant dense<0.000000e+00> : vector<512xf32>
      %51 = vector.multi_reduction <add>, %48, %cst_20 [1] : vector<512x256xf32> to vector<512xf32>
      %52 = vector.shape_cast %51 : vector<512xf32> to vector<512x1xf32>
      %53 = arith.addf %50, %52 : vector<512x1xf32>
      %c0_21 = arith.constant 0 : index
      %c0_22 = arith.constant 0 : index
      %54 = vector.load %arg11[%c0_21, %c0_22] : memref<512x1xf32, #tpu.memory_space<vmem>>, vector<512x1xf32>
      tpu.vector_store %arg11[%c0_21, %c0_22], %53 {strides = array<i32>} : memref<512x1xf32, #tpu.memory_space<vmem>>, vector<512x1xf32>,
      %55 = arith.truncf %48 : vector<512x256xf32> to vector<512x256xbf16>
      %cst_23 = arith.constant dense<0.000000e+00> : vector<512x128xf32>
      %56 = tpu.matmul %55, %16, %cst_23 {dimension_numbers = #tpu.dot_dimension_numbers<[1], [0], [0], [1], [0, 0, 1, 1], [], []>} : vector<512x256xbf16>, vector<256x128xbf16>, vector<512x128xf32> -> vector<512x128xf32>
      %c0_24 = arith.constant 0 : index
      %c0_25 = arith.constant 0 : index
      %57 = vector.load %arg12[%c0_24, %c0_25] : memref<512x128xf32, #tpu.memory_space<vmem>>, vector<512x128xf32>
      %58 = vector.broadcast %45 : vector<512x1xf32> to vector<512x128xf32>
      %59 = arith.mulf %58, %57 : vector<512x128xf32>
      %60 = arith.addf %59, %56 : vector<512x128xf32>
      %c0_26 = arith.constant 0 : index
      %c0_27 = arith.constant 0 : index
      %61 = vector.load %arg12[%c0_26, %c0_27] : memref<512x128xf32, #tpu.memory_space<vmem>>, vector<512x128xf32>
      tpu.vector_store %arg12[%c0_26, %c0_27], %60 {strides = array<i32>} : memref<512x128xf32, #tpu.memory_space<vmem>>, vector<512x128xf32>,
      %c0_28 = arith.constant 0 : index
      %c0_29 = arith.constant 0 : index
      %62 = vector.load %arg10[%c0_28, %c0_29] : memref<512x1xf32, #tpu.memory_space<vmem>>, vector<512x1xf32>
      tpu.vector_store %arg10[%c0_28, %c0_29], %43 {strides = array<i32>} : memref<512x1xf32, #tpu.memory_space<vmem>>, vector<512x1xf32>,
      %c0_30 = arith.constant 0 : index
      %c0_31 = arith.constant 0 : index
      %63 = vector.load %arg11[%c0_30, %c0_31] : memref<512x1xf32, #tpu.memory_space<vmem>>, vector<512x1xf32>
      %64 = tpu.reciprocal %63 {approx = true} : vector<512x1xf32> -> vector<512x1xf32>
      %c0_32 = arith.constant 0 : index
      %c0_33 = arith.constant 0 : index
      %65 = vector.load %arg12[%c0_32, %c0_33] : memref<512x128xf32, #tpu.memory_space<vmem>>, vector<256x128xf32>
      %66 = vector.extract_strided_slice %64 {offsets = [0, 0], sizes = [256, 1], strides = [1, 1]} : vector<512x1xf32> to vector<256x1xf32>
      %67 = vector.broadcast %66 : vector<256x1xf32> to vector<256x128xf32>
      %68 = arith.mulf %65, %67 : vector<256x128xf32>
      %69 = arith.truncf %68 : vector<256x128xf32> to vector<256x128xbf16>
      %c0_34 = arith.constant 0 : index
      %c0_35 = arith.constant 0 : index
      %c0_36 = arith.constant 0 : index
      %70 = vector.load %arg8[%c0_34, %c0_35, %c0_36] : memref<1x256x256xbf16, #tpu.memory_space<vmem>>, vector<1x256x128xbf16>
      %71 = vector.shape_cast %70 : vector<1x256x128xbf16> to vector<256x128xbf16>
      %72 = vector.shape_cast %69 : vector<256x128xbf16> to vector<1x256x128xbf16>
      tpu.vector_store %arg8[%c0_34, %c0_35, %c0_36], %72 {strides = array<i32>} : memref<1x256x256xbf16, #tpu.memory_space<vmem>>, vector<1x256x128xbf16>,
      %c256 = arith.constant 256 : index
      %c0_37 = arith.constant 0 : index
      %73 = vector.load %arg12[%c256, %c0_37] : memref<512x128xf32, #tpu.memory_space<vmem>>, vector<256x128xf32>
      %74 = vector.extract_strided_slice %64 {offsets = [256, 0], sizes = [256, 1], strides = [1, 1]} : vector<512x1xf32> to vector<256x1xf32>
      %75 = vector.broadcast %74 : vector<256x1xf32> to vector<256x128xf32>
      %76 = arith.mulf %73, %75 : vector<256x128xf32>
      %77 = arith.truncf %76 : vector<256x128xf32> to vector<256x128xbf16>
      %c0_38 = arith.constant 0 : index
      %c0_39 = arith.constant 0 : index
      %c128 = arith.constant 128 : index
      %78 = vector.load %arg8[%c0_38, %c0_39, %c128] : memref<1x256x256xbf16, #tpu.memory_space<vmem>>, vector<1x256x128xbf16>
      %79 = vector.shape_cast %78 : vector<1x256x128xbf16> to vector<256x128xbf16>
      %80 = vector.shape_cast %77 : vector<256x128xbf16> to vector<1x256x128xbf16>
      tpu.vector_store %arg8[%c0_38, %c0_39, %c128], %80 {strides = array<i32>} : memref<1x256x256xbf16, #tpu.memory_space<vmem>>, vector<1x256x128xbf16>,
    } else {
    }
    return
  }
  func.func @transform_0(%arg0: i32, %arg1: i32, %arg2: i32, %arg3: memref<3xi32, #tpu.memory_space<smem>>, %arg4: memref<3xi32, #tpu.memory_space<smem>>) -> (i32, i32, i32) {
    %0 = arith.index_cast %arg2 : i32 to index
    %1 = memref.load %arg3[%0] : memref<3xi32, #tpu.memory_space<smem>>
    %c0_i32 = arith.constant 0 : i32
    return %arg0, %1, %arg1 : i32, i32, i32
  }
  func.func @transform_1(%arg0: i32, %arg1: i32, %arg2: i32, %arg3: memref<3xi32, #tpu.memory_space<smem>>, %arg4: memref<3xi32, #tpu.memory_space<smem>>) -> (i32, i32, i32) {
    %0 = arith.index_cast %arg2 : i32 to index
    %1 = memref.load %arg4[%0] : memref<3xi32, #tpu.memory_space<smem>>
    %c0_i32 = arith.constant 0 : i32
    return %arg0, %1, %arg1 : i32, i32, i32
  }
  func.func @transform_2(%arg0: i32, %arg1: i32, %arg2: i32, %arg3: memref<3xi32, #tpu.memory_space<smem>>, %arg4: memref<3xi32, #tpu.memory_space<smem>>) -> (i32, i32, i32) {
    %0 = arith.index_cast %arg2 : i32 to index
    %1 = memref.load %arg4[%0] : memref<3xi32, #tpu.memory_space<smem>>
    %c0_i32 = arith.constant 0 : i32
    return %arg0, %1, %arg1 : i32, i32, i32
  }
  func.func @transform_3(%arg0: i32, %arg1: i32, %arg2: i32, %arg3: memref<3xi32, #tpu.memory_space<smem>>, %arg4: memref<3xi32, #tpu.memory_space<smem>>) -> (i32, i32, i32) {
    %0 = arith.index_cast %arg2 : i32 to index
    %1 = memref.load %arg3[%0] : memref<3xi32, #tpu.memory_space<smem>>
    %c0_i32 = arith.constant 0 : i32
    return %arg0, %1, %arg1 : i32, i32, i32
  }
}

</mosaic_0001>

<llo_original>
// kernel: tpu_custom_call.1
$region0: #{tpu_custom_call.1}
  #allocation0 [shape = 'u32[]', space=smem, size = 0x4, offset = 0x4, fixed_abs, tag = 'smem constant byte address 0x4 - core index']
  #allocation1 [shape = 'u32[144,128]{1,0:T(1,128)}', space=vmem, size = 0x12000, scoped, tag = 'internal scratch']
  #allocation2 [shape = 'bf16[512,128]{1,0:T(16,128)(2,1)}', space=vmem, size = 0x20000, scoped, tag = 'scratch operand']
  #allocation3 [shape = 'f32[512,1]{1,0:T(8,128)}', space=vmem, size = 0x40000, scoped, tag = 'scratch operand']
  #allocation4 [shape = 'f32[512,1]{1,0:T(8,128)}', space=vmem, size = 0x40000, scoped, tag = 'scratch operand']
  #allocation5 [shape = 'f32[512,128]{1,0:T(8,128)}', space=vmem, size = 0x40000, scoped, tag = 'scratch operand']
  #allocation6 [shape = 's32[1]{0}', space=sflag, size = 0x4, scoped, tag = 'scoped memory for tpu_custom_call.1']
  #allocation7 [shape = 'u8[512]{0}', space=smem, size = 0x200, scoped, tag = 'prefetched SMEM operand 0']
  #allocation8 [shape = 'u8[512]{0}', space=smem, size = 0x200, scoped, tag = 'prefetched SMEM operand 1']
  %s0 = inlined_call_operand.hbm [shape: s32[3], index: 0, kind: input, shape index: {}]
  %s1 = inlined_call_operand.vmem [shape: s32[3], index: 1, kind: input, shape index: {}]
  %s2 = inlined_call_operand.hbm [shape: bf16[2,512,512], index: 2, kind: input, shape index: {}]
  %s3 = inlined_call_operand.hbm [shape: bf16[2,512,256], index: 3, kind: input, shape index: {}]
  %s4 = inlined_call_operand.hbm [shape: bf16[2,512,256], index: 4, kind: input, shape index: {}]
  %s5 = inlined_call_operand.hbm [shape: bf16[2,512,512], index: 5, kind: output, shape index: {}]
  %s6 = sld [smem:[#allocation0]]
  $region69: #{tpu_custom_call.1} parent=0
    _
  %s8 = ssub.s32 1, %s6
  %s9 = scalar_select 0, %s8, %s6
  %11 = dma.hbm_to_smem %s0, 16, [#allocation7], [#allocation6]
  %s12 = sshll.u32 %s1, 4
  %s13 = int_to_ptr.vmem [resolvable:$true] %s12
  %15 = dma.vmem_to_smem %s13, 16, [#allocation8], [#allocation6]
  %16 = dma.done [#allocation6], 32
  %17 = sfence
  $region1: #{tpu_custom_call.1} parent=0
    #allocation9 [shape = 'u8[262144]{0}', space=vmem, size = 0x40000, scoped, tag = 'input window, operand 2']
    #allocation10 [shape = 's32[2]{0}', space=sflag, size = 0x8, scoped, tag = 'scoped memory for tpu_custom_call.1']
    #allocation11 [shape = 's32[2]{0}', space=sflag, size = 0x8, scoped, tag = 'scoped memory for tpu_custom_call.1']
    #allocation12 [shape = 'u8[131072]{0}', space=vmem, size = 0x20000, scoped, tag = 'input window, operand 3']
    #allocation13 [shape = 's32[2]{0}', space=sflag, size = 0x8, scoped, tag = 'scoped memory for tpu_custom_call.1']
    #allocation14 [shape = 'u8[131072]{0}', space=vmem, size = 0x20000, scoped, tag = 'input window, operand 4']
    #allocation15 [shape = 'u8[262144]{0}', space=vmem, size = 0x40000, scoped, tag = 'output window, operand 0']
    %18 = vsyncpa [#allocation10], 0
    %s19 = scalar_lea.sflag [#allocation10], 1
    %20 = vsyncpa %s19, 0
    %21 = vsyncpa [#allocation13], 0
    %s22 = scalar_lea.sflag [#allocation13], 1
    %23 = vsyncpa %s22, 0
    %24 = vsyncpa [#allocation11], 0
    %s25 = scalar_lea.sflag [#allocation11], 1
    %26 = vsyncpa %s25, 0
    loop: start=0, step=1, limit=14
    $region2: #{tpu_custom_call.1} parent=1 // loop_pre_header
      _
    $region3: #{tpu_custom_call.1} parent=1 // loop_header
      %s28 = sphi 0, %s32
      %p29 = scmp.ge.s32.totalorder %s28, 14
      %s35 = sphi 0, %s54
      %s36 = sphi 0, %s50
      %s37 = sphi 0, %s46
      %s38 = sphi 0, %s35
      %s39 = sphi 0, %s36
      %s40 = sphi 0, %s37
      %s41 = sphi 0, %s38
      %s42 = sphi 0, %s39
      %s43 = sphi 0, %s40
      %s63 = sphi 0, %s65
      %s66 = sphi 0, %s63
      %s67 = sphi 0, %s66
      %s83 = sphi 0, %s67
      %s95 = sphi 0, %s97
      %s98 = sphi 0, %s95
      %s99 = sphi 0, %s98
      %s115 = sphi 0, %s99
      %s127 = sphi 0, %s129
      %s130 = sphi 0, %s127
      %s131 = sphi 0, %s130
      %s147 = sphi 0, %s131
      %s159 = sphi 0, %s161
      %s162 = sphi 0, %s159
      %s163 = sphi 0, %s162
      %s179 = sphi 0, %s163
    $region4: #{tpu_custom_call.1} parent=1 // loop_header_branch
      %31 = sbr.rel (%p29) target = $region8
    $region5: #{tpu_custom_call.1} parent=1 // loop_body
      %s33 = ssub.s32 %s28, 1
      %s34 = ssub.s32 %s28, 2
      %s44 = sadd.s32 1, %s37
      %p45 = scmp.ge.s32.totalorder %s44, 3
      %s46 = scalar_select %p45, 0, %s44
      %s47 = sadd.s32 1, %s36
      %s48 = scalar_select %p45, %s47, %s36
      %p49 = scmp.ge.s32.totalorder %s48, 2
      %s50 = scalar_select %p49, 0, %s48
      %s51 = sadd.s32 1, %s35
      %s52 = scalar_select %p49, %s51, %s35
      %p53 = scmp.ge.s32.totalorder %s52, 2
      %s54 = scalar_select %p53, 0, %s52
      %s55 = sld [smem:[#allocation7 + %s37]]
      %s56 = sld [smem:[#allocation7 + %s46]]
      %s57 = ssub.s32 %s35, %s54
      %s58 = ssub.s32 %s55, %s56
      %s59 = sor.u32 %s57, %s58
      %s60 = ssub.s32 %s36, %s50
      %s61 = sor.u32 %s59, %s60
      %p62 = scmp.eq.s32.totalorder %s61, 0
      %s64 = sadd.s32 %s63, 1
      %s65 = scalar_select %p62, %s63, %s64
      %p68 = pneg %p62
      %p69 = scmp.eq.s32.totalorder %s28, 11
      %p70 = por %p68, %p69
      %p71 = scmp.ne.s32.totalorder %s63, %s66
      %p72 = scmp.eq.s32.totalorder %s28, 0
      %p73 = por %p71, %p72
      %p74 = scmp.ne.s32.totalorder %s63, %s66
      %p75 = scmp.eq.s32.totalorder %s33, 11
      %p76 = por %p74, %p75
      %p77 = scmp.ne.s32.totalorder %s66, %s67
      %p78 = scmp.eq.s32.totalorder %s33, 0
      %p79 = por %p77, %p78
      %p80 = scmp.ne.s32.totalorder %s66, %s67
      %p81 = scmp.eq.s32.totalorder %s34, 11
      %p82 = por %p80, %p81
      %p84 = scmp.ne.s32.totalorder %s67, %s83
      %p85 = scmp.eq.s32.totalorder %s34, 0
      %p86 = por %p84, %p85
      %s87 = sld [smem:[#allocation8 + %s37]]
      %s88 = sld [smem:[#allocation8 + %s46]]
      %s89 = ssub.s32 %s35, %s54
      %s90 = ssub.s32 %s87, %s88
      %s91 = sor.u32 %s89, %s90
      %s92 = ssub.s32 %s36, %s50
      %s93 = sor.u32 %s91, %s92
      %p94 = scmp.eq.s32.totalorder %s93, 0
      %s96 = sadd.s32 %s95, 1
      %s97 = scalar_select %p94, %s95, %s96
      %p100 = pneg %p94
      %p101 = scmp.eq.s32.totalorder %s28, 11
      %p102 = por %p100, %p101
      %p103 = scmp.ne.s32.totalorder %s95, %s98
      %p104 = scmp.eq.s32.totalorder %s28, 0
      %p105 = por %p103, %p104
      %p106 = scmp.ne.s32.totalorder %s95, %s98
      %p107 = scmp.eq.s32.totalorder %s33, 11
      %p108 = por %p106, %p107
      %p109 = scmp.ne.s32.totalorder %s98, %s99
      %p110 = scmp.eq.s32.totalorder %s33, 0
      %p111 = por %p109, %p110
      %p112 = scmp.ne.s32.totalorder %s98, %s99
      %p113 = scmp.eq.s32.totalorder %s34, 11
      %p114 = por %p112, %p113
      %p116 = scmp.ne.s32.totalorder %s99, %s115
      %p117 = scmp.eq.s32.totalorder %s34, 0
      %p118 = por %p116, %p117
      %s119 = sld [smem:[#allocation8 + %s37]]
      %s120 = sld [smem:[#allocation8 + %s46]]
      %s121 = ssub.s32 %s35, %s54
      %s122 = ssub.s32 %s119, %s120
      %s123 = sor.u32 %s121, %s122
      %s124 = ssub.s32 %s36, %s50
      %s125 = sor.u32 %s123, %s124
      %p126 = scmp.eq.s32.totalorder %s125, 0
      %s128 = sadd.s32 %s127, 1
      %s129 = scalar_select %p126, %s127, %s128
      %p132 = pneg %p126
      %p133 = scmp.eq.s32.totalorder %s28, 11
      %p134 = por %p132, %p133
      %p135 = scmp.ne.s32.totalorder %s127, %s130
      %p136 = scmp.eq.s32.totalorder %s28, 0
      %p137 = por %p135, %p136
      %p138 = scmp.ne.s32.totalorder %s127, %s130
      %p139 = scmp.eq.s32.totalorder %s33, 11
      %p140 = por %p138, %p139
      %p141 = scmp.ne.s32.totalorder %s130, %s131
      %p142 = scmp.eq.s32.totalorder %s33, 0
      %p143 = por %p141, %p142
      %p144 = scmp.ne.s32.totalorder %s130, %s131
      %p145 = scmp.eq.s32.totalorder %s34, 11
      %p146 = por %p144, %p145
      %p148 = scmp.ne.s32.totalorder %s131, %s147
      %p149 = scmp.eq.s32.totalorder %s34, 0
      %p150 = por %p148, %p149
      %s151 = sld [smem:[#allocation7 + %s37]]
      %s152 = sld [smem:[#allocation7 + %s46]]
      %s153 = ssub.s32 %s35, %s54
      %s154 = ssub.s32 %s151, %s152
      %s155 = sor.u32 %s153, %s154
      %s156 = ssub.s32 %s36, %s50
      %s157 = sor.u32 %s155, %s156
      %p158 = scmp.eq.s32.totalorder %s157, 0
      %s160 = sadd.s32 %s159, 1
      %s161 = scalar_select %p158, %s159, %s160
      %p164 = pneg %p158
      %p165 = scmp.eq.s32.totalorder %s28, 11
      %p166 = por %p164, %p165
      %p167 = scmp.ne.s32.totalorder %s159, %s162
      %p168 = scmp.eq.s32.totalorder %s28, 0
      %p169 = por %p167, %p168
      %p170 = scmp.ne.s32.totalorder %s159, %s162
      %p171 = scmp.eq.s32.totalorder %s33, 11
      %p172 = por %p170, %p171
      %p173 = scmp.ne.s32.totalorder %s162, %s163
      %p174 = scmp.eq.s32.totalorder %s33, 0
      %p175 = por %p173, %p174
      %p176 = scmp.ne.s32.totalorder %s162, %s163
      %p177 = scmp.eq.s32.totalorder %s34, 11
      %p178 = por %p176, %p177
      %p180 = scmp.ne.s32.totalorder %s163, %s179
      %p181 = scmp.eq.s32.totalorder %s34, 0
      %p182 = por %p180, %p181
      %p183 = scmp.le.s32.totalorder 1, %s28
      %p184 = scmp.lt.s32.totalorder %s28, 13
      %p185 = pnand %p183, %p184
      %p186 = pneg %p185
      // Predicated region
      $region9: #{tpu_custom_call.1} parent=5 // pred_check
        _
      $region10: #{tpu_custom_call.1} parent=5 // pred_check_branch
        %188 = sbr.rel (%p185) target = $region12
      $region11: #{tpu_custom_call.1} parent=5 // pred_region
        %s189 = ssub.s32 %s28, 1
      $region12: #{tpu_custom_call.1} parent=5 // pred_fallthru
        _
      %p190 = scmp.lt.s32.totalorder %s28, 12
      // Predicated region
      $region13: #{tpu_custom_call.1} parent=5 // pred_check
        %p191 = pneg %p190
      $region14: #{tpu_custom_call.1} parent=5 // pred_check_branch
        %193 = sbr.rel (%p191) target = $region16
      $region15: #{tpu_custom_call.1} parent=5 // pred_region
        // Predicated region
        $region17: #{tpu_custom_call.1} parent=15 // pred_check
          %p194 = pneg %p73
        $region18: #{tpu_custom_call.1} parent=15 // pred_check_branch
          %196 = sbr.rel (%p194) target = $region20
        $region19: #{tpu_custom_call.1} parent=15 // pred_region
          %s197 = sand.u32 %s63, 1
          %s198 = scalar_lea.sflag [#allocation10], %s197
          %s199 = sand.u32 %s63, 1
          %s200 = smul.addr %s199, 256
          %s201 = scalar_lea.vmem [#allocation9], %s200
          %s202 = sld [smem:[#allocation7 + %s37]]
          %s203 = smul.u32 32, %s202
          %s204 = smul.u32 2, %s36
          %s206 = ssub.s32 4096, 4096
          %207 = vsyncadd %s198, %s206
          %s208 = smul.addr %s203, 4
          %s209 = sadd.s32 %s204, %s208
          %s210 = smul.addr %s35, 256
          %s211 = sadd.s32 %s209, %s210
          %s212 = smul.addr %s211, 64
          %s213 = scalar_lea.hbm %s2, %s212
          %s214 = sshll.u32 %s201, 4
          %s215 = int_to_ptr.vmem [resolvable:$true] %s214
          %220 = dma.hbm_to_vmem [thread:$0]  %s213, 4096, %s215, %s198, 256, 128, 8
        $region20: #{tpu_custom_call.1} parent=15 // pred_fallthru
          _
        // Predicated region
        $region21: #{tpu_custom_call.1} parent=15 // pred_check
          %p221 = pneg %p105
        $region22: #{tpu_custom_call.1} parent=15 // pred_check_branch
          %223 = sbr.rel (%p221) target = $region24
        $region23: #{tpu_custom_call.1} parent=15 // pred_region
          %s224 = sand.u32 %s28, 1
          %s225 = scalar_lea.sflag [#allocation13], %s224
          %s226 = sand.u32 %s95, 1
          %s227 = smul.addr %s226, 128
          %s228 = scalar_lea.vmem [#allocation12], %s227
          %s229 = sld [smem:[#allocation8 + %s37]]
          %s230 = smul.u32 32, %s229
          %s232 = ssub.s32 2048, 2048
          %233 = vsyncadd %s225, %s232
          %s234 = smul.addr %s230, 2
          %s235 = sadd.s32 %s36, %s234
          %s236 = smul.addr %s35, 128
          %s237 = sadd.s32 %s235, %s236
          %s238 = smul.addr %s237, 64
          %s239 = scalar_lea.hbm %s3, %s238
          %s240 = sshll.u32 %s228, 4
          %s241 = int_to_ptr.vmem [resolvable:$true] %s240
          %246 = dma.hbm_to_vmem [thread:$0]  %s239, 2048, %s241, %s225, 128, 64, 4
        $region24: #{tpu_custom_call.1} parent=15 // pred_fallthru
          _
        // Predicated region
        $region25: #{tpu_custom_call.1} parent=15 // pred_check
          %p247 = pneg %p137
        $region26: #{tpu_custom_call.1} parent=15 // pred_check_branch
          %249 = sbr.rel (%p247) target = $region28
        $region27: #{tpu_custom_call.1} parent=15 // pred_region
          %s250 = sand.u32 %s28, 1
          %s251 = scalar_lea.sflag [#allocation13], %s250
          %s252 = sand.u32 %s127, 1
          %s253 = smul.addr %s252, 128
          %s254 = scalar_lea.vmem [#allocation14], %s253
          %s255 = sld [smem:[#allocation8 + %s37]]
          %s256 = smul.u32 32, %s255
          %s258 = ssub.s32 2048, 2048
          %259 = vsyncadd %s251, %s258
          %s260 = smul.addr %s256, 2
          %s261 = sadd.s32 %s36, %s260
          %s262 = smul.addr %s35, 128
          %s263 = sadd.s32 %s261, %s262
          %s264 = smul.addr %s263, 64
          %s265 = scalar_lea.hbm %s4, %s264
          %s266 = sshll.u32 %s254, 4
          %s267 = int_to_ptr.vmem [resolvable:$true] %s266
          %272 = dma.hbm_to_vmem [thread:$0]  %s265, 2048, %s267, %s251, 128, 64, 4
        $region28: #{tpu_custom_call.1} parent=15 // pred_fallthru
          _
      $region16: #{tpu_custom_call.1} parent=5 // pred_fallthru
        _
      %p273 = scmp.le.s32.totalorder 1, %s28
      %p274 = scmp.lt.s32.totalorder %s28, 13
      %p275 = pnand %p273, %p274
      %p276 = pneg %p275
      // Predicated region
      $region29: #{tpu_custom_call.1} parent=5 // pred_check
        _
      $region30: #{tpu_custom_call.1} parent=5 // pred_check_branch
        %278 = sbr.rel (%p275) target = $region32
      $region31: #{tpu_custom_call.1} parent=5 // pred_region
        %s279 = ssub.s32 %s28, 1
        %s280 = sand.u32 %s66, 1
        %s281 = scalar_lea.sflag [#allocation10], %s280
        %s282 = sand.u32 %s66, 1
        %s283 = smul.addr %s282, 256
        %s284 = scalar_lea.vmem [#allocation9], %s283
        // Predicated region
        $region33: #{tpu_custom_call.1} parent=31 // pred_check
          %p285 = pneg %p79
        $region34: #{tpu_custom_call.1} parent=31 // pred_check_branch
          %287 = sbr.rel (%p285) target = $region36
        $region35: #{tpu_custom_call.1} parent=31 // pred_region
          %288 = dma.done %s281, 4096
        $region36: #{tpu_custom_call.1} parent=31 // pred_fallthru
          _
        %s289 = sand.u32 %s33, 1
        %s290 = scalar_lea.sflag [#allocation13], %s289
        %s291 = sand.u32 %s98, 1
        %s292 = smul.addr %s291, 128
        %s293 = scalar_lea.vmem [#allocation12], %s292
        // Predicated region
        $region37: #{tpu_custom_call.1} parent=31 // pred_check
          %p294 = pneg %p111
        $region38: #{tpu_custom_call.1} parent=31 // pred_check_branch
          %296 = sbr.rel (%p294) target = $region40
        $region39: #{tpu_custom_call.1} parent=31 // pred_region
          %297 = dma.done %s290, 2048
        $region40: #{tpu_custom_call.1} parent=31 // pred_fallthru
          _
        %s298 = sand.u32 %s33, 1
        %s299 = scalar_lea.sflag [#allocation13], %s298
        %s300 = sand.u32 %s130, 1
        %s301 = smul.addr %s300, 128
        %s302 = scalar_lea.vmem [#allocation14], %s301
        // Predicated region
        $region41: #{tpu_custom_call.1} parent=31 // pred_check
          %p303 = pneg %p143
        $region42: #{tpu_custom_call.1} parent=31 // pred_check_branch
          %305 = sbr.rel (%p303) target = $region44
        $region43: #{tpu_custom_call.1} parent=31 // pred_region
          %306 = dma.done %s299, 2048
        $region44: #{tpu_custom_call.1} parent=31 // pred_fallthru
          _
        %s307 = sand.u32 %s66, 1
        %s308 = scalar_lea.sflag [#allocation10], %s307
        %s309 = sand.u32 %s66, 1
        %s310 = smul.addr %s309, 256
        %s311 = scalar_lea.vmem [#allocation9], %s310
        %p312 = pneg %p79
        %p313 = pneg %p76
        %s314 = sand.u32 %s33, 1
        %s315 = scalar_lea.sflag [#allocation13], %s314
        %s316 = sand.u32 %s98, 1
        %s317 = smul.addr %s316, 128
        %s318 = scalar_lea.vmem [#allocation12], %s317
        %p319 = pneg %p111
        %p320 = pneg %p108
        %s321 = sand.u32 %s33, 1
        %s322 = scalar_lea.sflag [#allocation13], %s321
        %s323 = sand.u32 %s130, 1
        %s324 = smul.addr %s323, 128
        %s325 = scalar_lea.vmem [#allocation14], %s324
        %p326 = pneg %p143
        %p327 = pneg %p140
        %p328 = pneg %p175
        %p329 = pneg %p172
        %s330 = sand.u32 %s162, 1
        %s331 = scalar_lea.sflag [#allocation11], %s330
        %s332 = sand.u32 %s162, 1
        %s333 = smul.addr %s332, 256
        %s334 = scalar_lea.vmem [#allocation15], %s333
        %s335 = sld [smem:[#allocation7 + %s40]]
        %s336 = smul.u32 32, %s335
        %s337 = smul.u32 2, %s39
        %s338 = sld [smem:[#allocation8 + %s40]]
        %s339 = smul.u32 32, %s338
        %s340 = sld [smem:[#allocation8 + %s40]]
        %s341 = smul.u32 32, %s340
        %s342 = sld [smem:[#allocation7 + %s40]]
        %s343 = smul.u32 32, %s342
        %s344 = smul.u32 2, %s39
        %s346 = sld [smem:[#allocation7 + %s40]]
        %s347 = sld [smem:[#allocation8 + %s40]]
        %p348 = scmp.eq.s32.totalorder %s347, 0
        // Predicated region
        $region45: #{tpu_custom_call.1} parent=31 // pred_check
          %p349 = pneg %p348
        $region46: #{tpu_custom_call.1} parent=31 // pred_check_branch
          %351 = sbr.rel (%p349) target = $region48
        $region47: #{tpu_custom_call.1} parent=31 // pred_region
          %v352 = vld [vmem:[%s284] sm:$0xf]
          %v353 = vld [vmem:[%s284 + $0x8] sm:$0xf]
          %v354 = vld [vmem:[%s284 + $0x10] sm:$0xf]
          %v355 = vld [vmem:[%s284 + $0x18] sm:$0xf]
          %v356 = vld [vmem:[%s284 + $0x20] sm:$0xf]
          %v357 = vld [vmem:[%s284 + $0x28] sm:$0xf]
          %v358 = vld [vmem:[%s284 + $0x30] sm:$0xf]
          %v359 = vld [vmem:[%s284 + $0x38] sm:$0xf]
          %v360 = vld [vmem:[%s284 + $0x40] sm:$0xf]
          %v361 = vld [vmem:[%s284 + $0x48] sm:$0xf]
          %v362 = vld [vmem:[%s284 + $0x50] sm:$0xf]
          %v363 = vld [vmem:[%s284 + $0x58] sm:$0xf]
          %v364 = vld [vmem:[%s284 + $0x60] sm:$0xf]
          %v365 = vld [vmem:[%s284 + $0x68] sm:$0xf]
          %v366 = vld [vmem:[%s284 + $0x70] sm:$0xf]
          %v367 = vld [vmem:[%s284 + $0x78] sm:$0xf]
          %v368 = vld [vmem:[%s284 + $0x80] sm:$0xf]
          %v369 = vld [vmem:[%s284 + $0x88] sm:$0xf]
          %v370 = vld [vmem:[%s284 + $0x90] sm:$0xf]
          %v371 = vld [vmem:[%s284 + $0x98] sm:$0xf]
          %v372 = vld [vmem:[%s284 + $0xa0] sm:$0xf]
          %v373 = vld [vmem:[%s284 + $0xa8] sm:$0xf]
          %v374 = vld [vmem:[%s284 + $0xb0] sm:$0xf]
          %v375 = vld [vmem:[%s284 + $0xb8] sm:$0xf]
          %v376 = vld [vmem:[%s284 + $0xc0] sm:$0xf]
          %v377 = vld [vmem:[%s284 + $0xc8] sm:$0xf]
          %v378 = vld [vmem:[%s284 + $0xd0] sm:$0xf]
          %v379 = vld [vmem:[%s284 + $0xd8] sm:$0xf]
          %v380 = vld [vmem:[%s284 + $0xe0] sm:$0xf]
          %v381 = vld [vmem:[%s284 + $0xe8] sm:$0xf]
          %v382 = vld [vmem:[%s284 + $0xf0] sm:$0xf]
          %v383 = vld [vmem:[%s284 + $0xf8] sm:$0xf]
          %v384 = vunpack.c.l.bf16 %v352
          %v385 = vunpack.c.l.bf16 %v353
          %v386 = vunpack.c.l.bf16 %v354
          %v387 = vunpack.c.l.bf16 %v355
          %v388 = vunpack.c.l.bf16 %v356
          %v389 = vunpack.c.l.bf16 %v357
          %v390 = vunpack.c.l.bf16 %v358
          %v391 = vunpack.c.l.bf16 %v359
          %v392 = vunpack.c.l.bf16 %v360
          %v393 = vunpack.c.l.bf16 %v361
          %v394 = vunpack.c.l.bf16 %v362
          %v395 = vunpack.c.l.bf16 %v363
          %v396 = vunpack.c.l.bf16 %v364
          %v397 = vunpack.c.l.bf16 %v365
          %v398 = vunpack.c.l.bf16 %v366
          %v399 = vunpack.c.l.bf16 %v367
          %v400 = vunpack.c.l.bf16 %v368
          %v401 = vunpack.c.l.bf16 %v369
          %v402 = vunpack.c.l.bf16 %v370
          %v403 = vunpack.c.l.bf16 %v371
          %v404 = vunpack.c.l.bf16 %v372
          %v405 = vunpack.c.l.bf16 %v373
          %v406 = vunpack.c.l.bf16 %v374
          %v407 = vunpack.c.l.bf16 %v375
          %v408 = vunpack.c.l.bf16 %v376
          %v409 = vunpack.c.l.bf16 %v377
          %v410 = vunpack.c.l.bf16 %v378
          %v411 = vunpack.c.l.bf16 %v379
          %v412 = vunpack.c.l.bf16 %v380
          %v413 = vunpack.c.l.bf16 %v381
          %v414 = vunpack.c.l.bf16 %v382
          %v415 = vunpack.c.l.bf16 %v383
          %v416 = vmul.f32 %v384, 0.088388346
          %v417 = vmul.f32 %v385, 0.088388346
          %v418 = vmul.f32 %v386, 0.088388346
          %v419 = vmul.f32 %v387, 0.088388346
          %v420 = vmul.f32 %v388, 0.088388346
          %v421 = vmul.f32 %v389, 0.088388346
          %v422 = vmul.f32 %v390, 0.088388346
          %v423 = vmul.f32 %v391, 0.088388346
          %v424 = vmul.f32 %v392, 0.088388346
          %v425 = vmul.f32 %v393, 0.088388346
          %v426 = vmul.f32 %v394, 0.088388346
          %v427 = vmul.f32 %v395, 0.088388346
          %v428 = vmul.f32 %v396, 0.088388346
          %v429 = vmul.f32 %v397, 0.088388346
          %v430 = vmul.f32 %v398, 0.088388346
          %v431 = vmul.f32 %v399, 0.088388346
          %v432 = vmul.f32 %v400, 0.088388346
          %v433 = vmul.f32 %v401, 0.088388346
          %v434 = vmul.f32 %v402, 0.088388346
          %v435 = vmul.f32 %v403, 0.088388346
          %v436 = vmul.f32 %v404, 0.088388346
          %v437 = vmul.f32 %v405, 0.088388346
          %v438 = vmul.f32 %v406, 0.088388346
          %v439 = vmul.f32 %v407, 0.088388346
          %v440 = vmul.f32 %v408, 0.088388346
          %v441 = vmul.f32 %v409, 0.088388346
          %v442 = vmul.f32 %v410, 0.088388346
          %v443 = vmul.f32 %v411, 0.088388346
          %v444 = vmul.f32 %v412, 0.088388346
          %v445 = vmul.f32 %v413, 0.088388346
          %v446 = vmul.f32 %v414, 0.088388346
          %v447 = vmul.f32 %v415, 0.088388346
          %v448 = vpack.c.bf16 %v417, %v416
          %v449 = vpack.c.bf16 %v419, %v418
          %v450 = vpack.c.bf16 %v421, %v420
          %v451 = vpack.c.bf16 %v423, %v422
          %v452 = vpack.c.bf16 %v425, %v424
          %v453 = vpack.c.bf16 %v427, %v426
          %v454 = vpack.c.bf16 %v429, %v428
          %v455 = vpack.c.bf16 %v431, %v430
          %v456 = vpack.c.bf16 %v433, %v432
          %v457 = vpack.c.bf16 %v435, %v434
          %v458 = vpack.c.bf16 %v437, %v436
          %v459 = vpack.c.bf16 %v439, %v438
          %v460 = vpack.c.bf16 %v441, %v440
          %v461 = vpack.c.bf16 %v443, %v442
          %v462 = vpack.c.bf16 %v445, %v444
          %v463 = vpack.c.bf16 %v447, %v446
          %464 = vst [vmem:[#allocation2] sm:$0xff] %v448
          %465 = vst [vmem:[#allocation2 + $0x8] sm:$0xff] %v449
          %466 = vst [vmem:[#allocation2 + $0x10] sm:$0xff] %v450
          %467 = vst [vmem:[#allocation2 + $0x18] sm:$0xff] %v451
          %468 = vst [vmem:[#allocation2 + $0x20] sm:$0xff] %v452
          %469 = vst [vmem:[#allocation2 + $0x28] sm:$0xff] %v453
          %470 = vst [vmem:[#allocation2 + $0x30] sm:$0xff] %v454
          %471 = vst [vmem:[#allocation2 + $0x38] sm:$0xff] %v455
          %472 = vst [vmem:[#allocation2 + $0x40] sm:$0xff] %v456
          %473 = vst [vmem:[#allocation2 + $0x48] sm:$0xff] %v457
          %474 = vst [vmem:[#allocation2 + $0x50] sm:$0xff] %v458
          %475 = vst [vmem:[#allocation2 + $0x58] sm:$0xff] %v459
          %476 = vst [vmem:[#allocation2 + $0x60] sm:$0xff] %v460
          %477 = vst [vmem:[#allocation2 + $0x68] sm:$0xff] %v461
          %478 = vst [vmem:[#allocation2 + $0x70] sm:$0xff] %v462
          %479 = vst [vmem:[#allocation2 + $0x78] sm:$0xff] %v463
          %v480 = vld [vmem:[%s284 + $0x4] sm:$0xf]
          %v481 = vld [vmem:[%s284 + $0xc] sm:$0xf]
          %v482 = vld [vmem:[%s284 + $0x14] sm:$0xf]
          %v483 = vld [vmem:[%s284 + $0x1c] sm:$0xf]
          %v484 = vld [vmem:[%s284 + $0x24] sm:$0xf]
          %v485 = vld [vmem:[%s284 + $0x2c] sm:$0xf]
          %v486 = vld [vmem:[%s284 + $0x34] sm:$0xf]
          %v487 = vld [vmem:[%s284 + $0x3c] sm:$0xf]
          %v488 = vld [vmem:[%s284 + $0x44] sm:$0xf]
          %v489 = vld [vmem:[%s284 + $0x4c] sm:$0xf]
          %v490 = vld [vmem:[%s284 + $0x54] sm:$0xf]
          %v491 = vld [vmem:[%s284 + $0x5c] sm:$0xf]
          %v492 = vld [vmem:[%s284 + $0x64] sm:$0xf]
          %v493 = vld [vmem:[%s284 + $0x6c] sm:$0xf]
          %v494 = vld [vmem:[%s284 + $0x74] sm:$0xf]
          %v495 = vld [vmem:[%s284 + $0x7c] sm:$0xf]
          %v496 = vld [vmem:[%s284 + $0x84] sm:$0xf]
          %v497 = vld [vmem:[%s284 + $0x8c] sm:$0xf]
          %v498 = vld [vmem:[%s284 + $0x94] sm:$0xf]
          %v499 = vld [vmem:[%s284 + $0x9c] sm:$0xf]
          %v500 = vld [vmem:[%s284 + $0xa4] sm:$0xf]
          %v501 = vld [vmem:[%s284 + $0xac] sm:$0xf]
          %v502 = vld [vmem:[%s284 + $0xb4] sm:$0xf]
          %v503 = vld [vmem:[%s284 + $0xbc] sm:$0xf]
          %v504 = vld [vmem:[%s284 + $0xc4] sm:$0xf]
          %v505 = vld [vmem:[%s284 + $0xcc] sm:$0xf]
          %v506 = vld [vmem:[%s284 + $0xd4] sm:$0xf]
          %v507 = vld [vmem:[%s284 + $0xdc] sm:$0xf]
          %v508 = vld [vmem:[%s284 + $0xe4] sm:$0xf]
          %v509 = vld [vmem:[%s284 + $0xec] sm:$0xf]
          %v510 = vld [vmem:[%s284 + $0xf4] sm:$0xf]
          %v511 = vld [vmem:[%s284 + $0xfc] sm:$0xf]
          %v512 = vunpack.c.l.bf16 %v480
          %v513 = vunpack.c.l.bf16 %v481
          %v514 = vunpack.c.l.bf16 %v482
          %v515 = vunpack.c.l.bf16 %v483
          %v516 = vunpack.c.l.bf16 %v484
          %v517 = vunpack.c.l.bf16 %v485
          %v518 = vunpack.c.l.bf16 %v486
          %v519 = vunpack.c.l.bf16 %v487
          %v520 = vunpack.c.l.bf16 %v488
          %v521 = vunpack.c.l.bf16 %v489
          %v522 = vunpack.c.l.bf16 %v490
          %v523 = vunpack.c.l.bf16 %v491
          %v524 = vunpack.c.l.bf16 %v492
          %v525 = vunpack.c.l.bf16 %v493
          %v526 = vunpack.c.l.bf16 %v494
          %v527 = vunpack.c.l.bf16 %v495
          %v528 = vunpack.c.l.bf16 %v496
          %v529 = vunpack.c.l.bf16 %v497
          %v530 = vunpack.c.l.bf16 %v498
          %v531 = vunpack.c.l.bf16 %v499
          %v532 = vunpack.c.l.bf16 %v500
          %v533 = vunpack.c.l.bf16 %v501
          %v534 = vunpack.c.l.bf16 %v502
          %v535 = vunpack.c.l.bf16 %v503
          %v536 = vunpack.c.l.bf16 %v504
          %v537 = vunpack.c.l.bf16 %v505
          %v538 = vunpack.c.l.bf16 %v506
          %v539 = vunpack.c.l.bf16 %v507
          %v540 = vunpack.c.l.bf16 %v508
          %v541 = vunpack.c.l.bf16 %v509
          %v542 = vunpack.c.l.bf16 %v510
          %v543 = vunpack.c.l.bf16 %v511
          %v544 = vmul.f32 %v512, 0.088388346
          %v545 = vmul.f32 %v513, 0.088388346
          %v546 = vmul.f32 %v514, 0.088388346
          %v547 = vmul.f32 %v515, 0.088388346
          %v548 = vmul.f32 %v516, 0.088388346
          %v549 = vmul.f32 %v517, 0.088388346
          %v550 = vmul.f32 %v518, 0.088388346
          %v551 = vmul.f32 %v519, 0.088388346
          %v552 = vmul.f32 %v520, 0.088388346
          %v553 = vmul.f32 %v521, 0.088388346
          %v554 = vmul.f32 %v522, 0.088388346
          %v555 = vmul.f32 %v523, 0.088388346
          %v556 = vmul.f32 %v524, 0.088388346
          %v557 = vmul.f32 %v525, 0.088388346
          %v558 = vmul.f32 %v526, 0.088388346
          %v559 = vmul.f32 %v527, 0.088388346
          %v560 = vmul.f32 %v528, 0.088388346
          %v561 = vmul.f32 %v529, 0.088388346
          %v562 = vmul.f32 %v530, 0.088388346
          %v563 = vmul.f32 %v531, 0.088388346
          %v564 = vmul.f32 %v532, 0.088388346
          %v565 = vmul.f32 %v533, 0.088388346
          %v566 = vmul.f32 %v534, 0.088388346
          %v567 = vmul.f32 %v535, 0.088388346
          %v568 = vmul.f32 %v536, 0.088388346
          %v569 = vmul.f32 %v537, 0.088388346
          %v570 = vmul.f32 %v538, 0.088388346
          %v571 = vmul.f32 %v539, 0.088388346
          %v572 = vmul.f32 %v540, 0.088388346
          %v573 = vmul.f32 %v541, 0.088388346
          %v574 = vmul.f32 %v542, 0.088388346
          %v575 = vmul.f32 %v543, 0.088388346
          %v576 = vpack.c.bf16 %v545, %v544
          %v577 = vpack.c.bf16 %v547, %v546
          %v578 = vpack.c.bf16 %v549, %v548
          %v579 = vpack.c.bf16 %v551, %v550
          %v580 = vpack.c.bf16 %v553, %v552
          %v581 = vpack.c.bf16 %v555, %v554
          %v582 = vpack.c.bf16 %v557, %v556
          %v583 = vpack.c.bf16 %v559, %v558
          %v584 = vpack.c.bf16 %v561, %v560
          %v585 = vpack.c.bf16 %v563, %v562
          %v586 = vpack.c.bf16 %v565, %v564
          %v587 = vpack.c.bf16 %v567, %v566
          %v588 = vpack.c.bf16 %v569, %v568
          %v589 = vpack.c.bf16 %v571, %v570
          %v590 = vpack.c.bf16 %v573, %v572
          %v591 = vpack.c.bf16 %v575, %v574
          %592 = vst [vmem:[#allocation2 + $0x80] sm:$0xff] %v576
          %593 = vst [vmem:[#allocation2 + $0x88] sm:$0xff] %v577
          %594 = vst [vmem:[#allocation2 + $0x90] sm:$0xff] %v578
          %595 = vst [vmem:[#allocation2 + $0x98] sm:$0xff] %v579
          %596 = vst [vmem:[#allocation2 + $0xa0] sm:$0xff] %v580
          %597 = vst [vmem:[#allocation2 + $0xa8] sm:$0xff] %v581
          %598 = vst [vmem:[#allocation2 + $0xb0] sm:$0xff] %v582
          %599 = vst [vmem:[#allocation2 + $0xb8] sm:$0xff] %v583
          %600 = vst [vmem:[#allocation2 + $0xc0] sm:$0xff] %v584
          %601 = vst [vmem:[#allocation2 + $0xc8] sm:$0xff] %v585
          %602 = vst [vmem:[#allocation2 + $0xd0] sm:$0xff] %v586
          %603 = vst [vmem:[#allocation2 + $0xd8] sm:$0xff] %v587
          %604 = vst [vmem:[#allocation2 + $0xe0] sm:$0xff] %v588
          %605 = vst [vmem:[#allocation2 + $0xe8] sm:$0xff] %v589
          %606 = vst [vmem:[#allocation2 + $0xf0] sm:$0xff] %v590
          %607 = vst [vmem:[#allocation2 + $0xf8] sm:$0xff] %v591
          %vm608 = vcmask 7168
          %609 = vst.msk [vmem:[#allocation3] sm:$0xff] %vm608, -1e+30
          %610 = vst.msk [vmem:[#allocation3 + $0x8] sm:$0xff] %vm608, -1e+30
          %611 = vst.msk [vmem:[#allocation3 + $0x10] sm:$0xff] %vm608, -1e+30
          %612 = vst.msk [vmem:[#allocation3 + $0x18] sm:$0xff] %vm608, -1e+30
          %613 = vst.msk [vmem:[#allocation3 + $0x20] sm:$0xff] %vm608, -1e+30
          %614 = vst.msk [vmem:[#allocation3 + $0x28] sm:$0xff] %vm608, -1e+30
          %615 = vst.msk [vmem:[#allocation3 + $0x30] sm:$0xff] %vm608, -1e+30
          %616 = vst.msk [vmem:[#allocation3 + $0x38] sm:$0xff] %vm608, -1e+30
          %617 = vst.msk [vmem:[#allocation3 + $0x40] sm:$0xff] %vm608, -1e+30
          %618 = vst.msk [vmem:[#allocation3 + $0x48] sm:$0xff] %vm608, -1e+30
          %619 = vst.msk [vmem:[#allocation3 + $0x50] sm:$0xff] %vm608, -1e+30
          %620 = vst.msk [vmem:[#allocation3 + $0x58] sm:$0xff] %vm608, -1e+30
          %621 = vst.msk [vmem:[#allocation3 + $0x60] sm:$0xff] %vm608, -1e+30
          %622 = vst.msk [vmem:[#allocation3 + $0x68] sm:$0xff] %vm608, -1e+30
          %623 = vst.msk [vmem:[#allocation3 + $0x70] sm:$0xff] %vm608, -1e+30
          %624 = vst.msk [vmem:[#allocation3 + $0x78] sm:$0xff] %vm608, -1e+30
          %625 = vst.msk [vmem:[#allocation3 + $0x80] sm:$0xff] %vm608, -1e+30
          %626 = vst.msk [vmem:[#allocation3 + $0x88] sm:$0xff] %vm608, -1e+30
          %627 = vst.msk [vmem:[#allocation3 + $0x90] sm:$0xff] %vm608, -1e+30
          %628 = vst.msk [vmem:[#allocation3 + $0x98] sm:$0xff] %vm608, -1e+30
          %629 = vst.msk [vmem:[#allocation3 + $0xa0] sm:$0xff] %vm608, -1e+30
          %630 = vst.msk [vmem:[#allocation3 + $0xa8] sm:$0xff] %vm608, -1e+30
          %631 = vst.msk [vmem:[#allocation3 + $0xb0] sm:$0xff] %vm608, -1e+30
          %632 = vst.msk [vmem:[#allocation3 + $0xb8] sm:$0xff] %vm608, -1e+30
          %633 = vst.msk [vmem:[#allocation3 + $0xc0] sm:$0xff] %vm608, -1e+30
          %634 = vst.msk [vmem:[#allocation3 + $0xc8] sm:$0xff] %vm608, -1e+30
          %635 = vst.msk [vmem:[#allocation3 + $0xd0] sm:$0xff] %vm608, -1e+30
          %636 = vst.msk [vmem:[#allocation3 + $0xd8] sm:$0xff] %vm608, -1e+30
          %637 = vst.msk [vmem:[#allocation3 + $0xe0] sm:$0xff] %vm608, -1e+30
          %638 = vst.msk [vmem:[#allocation3 + $0xe8] sm:$0xff] %vm608, -1e+30
          %639 = vst.msk [vmem:[#allocation3 + $0xf0] sm:$0xff] %vm608, -1e+30
          %640 = vst.msk [vmem:[#allocation3 + $0xf8] sm:$0xff] %vm608, -1e+30
          %641 = vst.msk [vmem:[#allocation3 + $0x100] sm:$0xff] %vm608, -1e+30
          %642 = vst.msk [vmem:[#allocation3 + $0x108] sm:$0xff] %vm608, -1e+30
          %643 = vst.msk [vmem:[#allocation3 + $0x110] sm:$0xff] %vm608, -1e+30
          %644 = vst.msk [vmem:[#allocation3 + $0x118] sm:$0xff] %vm608, -1e+30
          %645 = vst.msk [vmem:[#allocation3 + $0x120] sm:$0xff] %vm608, -1e+30
          %646 = vst.msk [vmem:[#allocation3 + $0x128] sm:$0xff] %vm608, -1e+30
          %647 = vst.msk [vmem:[#allocation3 + $0x130] sm:$0xff] %vm608, -1e+30
          %648 = vst.msk [vmem:[#allocation3 + $0x138] sm:$0xff] %vm608, -1e+30
          %649 = vst.msk [vmem:[#allocation3 + $0x140] sm:$0xff] %vm608, -1e+30
          %650 = vst.msk [vmem:[#allocation3 + $0x148] sm:$0xff] %vm608, -1e+30
          %651 = vst.msk [vmem:[#allocation3 + $0x150] sm:$0xff] %vm608, -1e+30
          %652 = vst.msk [vmem:[#allocation3 + $0x158] sm:$0xff] %vm608, -1e+30
          %653 = vst.msk [vmem:[#allocation3 + $0x160] sm:$0xff] %vm608, -1e+30
          %654 = vst.msk [vmem:[#allocation3 + $0x168] sm:$0xff] %vm608, -1e+30
          %655 = vst.msk [vmem:[#allocation3 + $0x170] sm:$0xff] %vm608, -1e+30
          %656 = vst.msk [vmem:[#allocation3 + $0x178] sm:$0xff] %vm608, -1e+30
          %657 = vst.msk [vmem:[#allocation3 + $0x180] sm:$0xff] %vm608, -1e+30
          %658 = vst.msk [vmem:[#allocation3 + $0x188] sm:$0xff] %vm608, -1e+30
          %659 = vst.msk [vmem:[#allocation3 + $0x190] sm:$0xff] %vm608, -1e+30
          %660 = vst.msk [vmem:[#allocation3 + $0x198] sm:$0xff] %vm608, -1e+30
          %661 = vst.msk [vmem:[#allocation3 + $0x1a0] sm:$0xff] %vm608, -1e+30
          %662 = vst.msk [vmem:[#allocation3 + $0x1a8] sm:$0xff] %vm608, -1e+30
          %663 = vst.msk [vmem:[#allocation3 + $0x1b0] sm:$0xff] %vm608, -1e+30
          %664 = vst.msk [vmem:[#allocation3 + $0x1b8] sm:$0xff] %vm608, -1e+30
          %665 = vst.msk [vmem:[#allocation3 + $0x1c0] sm:$0xff] %vm608, -1e+30
          %666 = vst.msk [vmem:[#allocation3 + $0x1c8] sm:$0xff] %vm608, -1e+30
          %667 = vst.msk [vmem:[#allocation3 + $0x1d0] sm:$0xff] %vm608, -1e+30
          %668 = vst.msk [vmem:[#allocation3 + $0x1d8] sm:$0xff] %vm608, -1e+30
          %669 = vst.msk [vmem:[#allocation3 + $0x1e0] sm:$0xff] %vm608, -1e+30
          %670 = vst.msk [vmem:[#allocation3 + $0x1e8] sm:$0xff] %vm608, -1e+30
          %671 = vst.msk [vmem:[#allocation3 + $0x1f0] sm:$0xff] %vm608, -1e+30
          %672 = vst.msk [vmem:[#allocation3 + $0x1f8] sm:$0xff] %vm608, -1e+30
          %673 = vst.msk [vmem:[#allocation4] sm:$0xff] %vm608, 0.0
          %674 = vst.msk [vmem:[#allocation4 + $0x8] sm:$0xff] %vm608, 0.0
          %675 = vst.msk [vmem:[#allocation4 + $0x10] sm:$0xff] %vm608, 0.0
          %676 = vst.msk [vmem:[#allocation4 + $0x18] sm:$0xff] %vm608, 0.0
          %677 = vst.msk [vmem:[#allocation4 + $0x20] sm:$0xff] %vm608, 0.0
          %678 = vst.msk [vmem:[#allocation4 + $0x28] sm:$0xff] %vm608, 0.0
          %679 = vst.msk [vmem:[#allocation4 + $0x30] sm:$0xff] %vm608, 0.0
          %680 = vst.msk [vmem:[#allocation4 + $0x38] sm:$0xff] %vm608, 0.0
          %681 = vst.msk [vmem:[#allocation4 + $0x40] sm:$0xff] %vm608, 0.0
          %682 = vst.msk [vmem:[#allocation4 + $0x48] sm:$0xff] %vm608, 0.0
          %683 = vst.msk [vmem:[#allocation4 + $0x50] sm:$0xff] %vm608, 0.0
          %684 = vst.msk [vmem:[#allocation4 + $0x58] sm:$0xff] %vm608, 0.0
          %685 = vst.msk [vmem:[#allocation4 + $0x60] sm:$0xff] %vm608, 0.0
          %686 = vst.msk [vmem:[#allocation4 + $0x68] sm:$0xff] %vm608, 0.0
          %687 = vst.msk [vmem:[#allocation4 + $0x70] sm:$0xff] %vm608, 0.0
          %688 = vst.msk [vmem:[#allocation4 + $0x78] sm:$0xff] %vm608, 0.0
          %689 = vst.msk [vmem:[#allocation4 + $0x80] sm:$0xff] %vm608, 0.0
          %690 = vst.msk [vmem:[#allocation4 + $0x88] sm:$0xff] %vm608, 0.0
          %691 = vst.msk [vmem:[#allocation4 + $0x90] sm:$0xff] %vm608, 0.0
          %692 = vst.msk [vmem:[#allocation4 + $0x98] sm:$0xff] %vm608, 0.0
          %693 = vst.msk [vmem:[#allocation4 + $0xa0] sm:$0xff] %vm608, 0.0
          %694 = vst.msk [vmem:[#allocation4 + $0xa8] sm:$0xff] %vm608, 0.0
          %695 = vst.msk [vmem:[#allocation4 + $0xb0] sm:$0xff] %vm608, 0.0
          %696 = vst.msk [vmem:[#allocation4 + $0xb8] sm:$0xff] %vm608, 0.0
          %697 = vst.msk [vmem:[#allocation4 + $0xc0] sm:$0xff] %vm608, 0.0
          %698 = vst.msk [vmem:[#allocation4 + $0xc8] sm:$0xff] %vm608, 0.0
          %699 = vst.msk [vmem:[#allocation4 + $0xd0] sm:$0xff] %vm608, 0.0
          %700 = vst.msk [vmem:[#allocation4 + $0xd8] sm:$0xff] %vm608, 0.0
          %701 = vst.msk [vmem:[#allocation4 + $0xe0] sm:$0xff] %vm608, 0.0
          %702 = vst.msk [vmem:[#allocation4 + $0xe8] sm:$0xff] %vm608, 0.0
          %703 = vst.msk [vmem:[#allocation4 + $0xf0] sm:$0xff] %vm608, 0.0
          %704 = vst.msk [vmem:[#allocation4 + $0xf8] sm:$0xff] %vm608, 0.0
          %705 = vst.msk [vmem:[#allocation4 + $0x100] sm:$0xff] %vm608, 0.0
          %706 = vst.msk [vmem:[#allocation4 + $0x108] sm:$0xff] %vm608, 0.0
          %707 = vst.msk [vmem:[#allocation4 + $0x110] sm:$0xff] %vm608, 0.0
          %708 = vst.msk [vmem:[#allocation4 + $0x118] sm:$0xff] %vm608, 0.0
          %709 = vst.msk [vmem:[#allocation4 + $0x120] sm:$0xff] %vm608, 0.0
          %710 = vst.msk [vmem:[#allocation4 + $0x128] sm:$0xff] %vm608, 0.0
          %711 = vst.msk [vmem:[#allocation4 + $0x130] sm:$0xff] %vm608, 0.0
          %712 = vst.msk [vmem:[#allocation4 + $0x138] sm:$0xff] %vm608, 0.0
          %713 = vst.msk [vmem:[#allocation4 + $0x140] sm:$0xff] %vm608, 0.0
          %714 = vst.msk [vmem:[#allocation4 + $0x148] sm:$0xff] %vm608, 0.0
          %715 = vst.msk [vmem:[#allocation4 + $0x150] sm:$0xff] %vm608, 0.0
          %716 = vst.msk [vmem:[#allocation4 + $0x158] sm:$0xff] %vm608, 0.0
          %717 = vst.msk [vmem:[#allocation4 + $0x160] sm:$0xff] %vm608, 0.0
          %718 = vst.msk [vmem:[#allocation4 + $0x168] sm:$0xff] %vm608, 0.0
          %719 = vst.msk [vmem:[#allocation4 + $0x170] sm:$0xff] %vm608, 0.0
          %720 = vst.msk [vmem:[#allocation4 + $0x178] sm:$0xff] %vm608, 0.0
          %721 = vst.msk [vmem:[#allocation4 + $0x180] sm:$0xff] %vm608, 0.0
          %722 = vst.msk [vmem:[#allocation4 + $0x188] sm:$0xff] %vm608, 0.0
          %723 = vst.msk [vmem:[#allocation4 + $0x190] sm:$0xff] %vm608, 0.0
          %724 = vst.msk [vmem:[#allocation4 + $0x198] sm:$0xff] %vm608, 0.0
          %725 = vst.msk [vmem:[#allocation4 + $0x1a0] sm:$0xff] %vm608, 0.0
          %726 = vst.msk [vmem:[#allocation4 + $0x1a8] sm:$0xff] %vm608, 0.0
          %727 = vst.msk [vmem:[#allocation4 + $0x1b0] sm:$0xff] %vm608, 0.0
          %728 = vst.msk [vmem:[#allocation4 + $0x1b8] sm:$0xff] %vm608, 0.0
          %729 = vst.msk [vmem:[#allocation4 + $0x1c0] sm:$0xff] %vm608, 0.0
          %730 = vst.msk [vmem:[#allocation4 + $0x1c8] sm:$0xff] %vm608, 0.0
          %731 = vst.msk [vmem:[#allocation4 + $0x1d0] sm:$0xff] %vm608, 0.0
          %732 = vst.msk [vmem:[#allocation4 + $0x1d8] sm:$0xff] %vm608, 0.0
          %733 = vst.msk [vmem:[#allocation4 + $0x1e0] sm:$0xff] %vm608, 0.0
          %734 = vst.msk [vmem:[#allocation4 + $0x1e8] sm:$0xff] %vm608, 0.0
          %735 = vst.msk [vmem:[#allocation4 + $0x1f0] sm:$0xff] %vm608, 0.0
          %736 = vst.msk [vmem:[#allocation4 + $0x1f8] sm:$0xff] %vm608, 0.0
          %737 = vst [vmem:[#allocation5] sm:$0xff] 0.0
          %738 = vst [vmem:[#allocation5 + $0x8] sm:$0xff] 0.0
          %739 = vst [vmem:[#allocation5 + $0x10] sm:$0xff] 0.0
          %740 = vst [vmem:[#allocation5 + $0x18] sm:$0xff] 0.0
          %741 = vst [vmem:[#allocation5 + $0x20] sm:$0xff] 0.0
          %742 = vst [vmem:[#allocation5 + $0x28] sm:$0xff] 0.0
          %743 = vst [vmem:[#allocation5 + $0x30] sm:$0xff] 0.0
          %744 = vst [vmem:[#allocation5 + $0x38] sm:$0xff] 0.0
          %745 = vst [vmem:[#allocation5 + $0x40] sm:$0xff] 0.0
          %746 = vst [vmem:[#allocation5 + $0x48] sm:$0xff] 0.0
          %747 = vst [vmem:[#allocation5 + $0x50] sm:$0xff] 0.0
          %748 = vst [vmem:[#allocation5 + $0x58] sm:$0xff] 0.0
          %749 = vst [vmem:[#allocation5 + $0x60] sm:$0xff] 0.0
          %750 = vst [vmem:[#allocation5 + $0x68] sm:$0xff] 0.0
          %751 = vst [vmem:[#allocation5 + $0x70] sm:$0xff] 0.0
          %752 = vst [vmem:[#allocation5 + $0x78] sm:$0xff] 0.0
          %753 = vst [vmem:[#allocation5 + $0x80] sm:$0xff] 0.0
          %754 = vst [vmem:[#allocation5 + $0x88] sm:$0xff] 0.0
          %755 = vst [vmem:[#allocation5 + $0x90] sm:$0xff] 0.0
          %756 = vst [vmem:[#allocation5 + $0x98] sm:$0xff] 0.0
          %757 = vst [vmem:[#allocation5 + $0xa0] sm:$0xff] 0.0
          %758 = vst [vmem:[#allocation5 + $0xa8] sm:$0xff] 0.0
          %759 = vst [vmem:[#allocation5 + $0xb0] sm:$0xff] 0.0
          %760 = vst [vmem:[#allocation5 + $0xb8] sm:$0xff] 0.0
          %761 = vst [vmem:[#allocation5 + $0xc0] sm:$0xff] 0.0
          %762 = vst [vmem:[#allocation5 + $0xc8] sm:$0xff] 0.0
          %763 = vst [vmem:[#allocation5 + $0xd0] sm:$0xff] 0.0
          %764 = vst [vmem:[#allocation5 + $0xd8] sm:$0xff] 0.0
          %765 = vst [vmem:[#allocation5 + $0xe0] sm:$0xff] 0.0
          %766 = vst [vmem:[#allocation5 + $0xe8] sm:$0xff] 0.0
          %767 = vst [vmem:[#allocation5 + $0xf0] sm:$0xff] 0.0
          %768 = vst [vmem:[#allocation5 + $0xf8] sm:$0xff] 0.0
          %769 = vst [vmem:[#allocation5 + $0x100] sm:$0xff] 0.0
          %770 = vst [vmem:[#allocation5 + $0x108] sm:$0xff] 0.0
          %771 = vst [vmem:[#allocation5 + $0x110] sm:$0xff] 0.0
          %772 = vst [vmem:[#allocation5 + $0x118] sm:$0xff] 0.0
          %773 = vst [vmem:[#allocation5 + $0x120] sm:$0xff] 0.0
          %774 = vst [vmem:[#allocation5 + $0x128] sm:$0xff] 0.0
          %775 = vst [vmem:[#allocation5 + $0x130] sm:$0xff] 0.0
          %776 = vst [vmem:[#allocation5 + $0x138] sm:$0xff] 0.0
          %777 = vst [vmem:[#allocation5 + $0x140] sm:$0xff] 0.0
          %778 = vst [vmem:[#allocation5 + $0x148] sm:$0xff] 0.0
          %779 = vst [vmem:[#allocation5 + $0x150] sm:$0xff] 0.0
          %780 = vst [vmem:[#allocation5 + $0x158] sm:$0xff] 0.0
          %781 = vst [vmem:[#allocation5 + $0x160] sm:$0xff] 0.0
          %782 = vst [vmem:[#allocation5 + $0x168] sm:$0xff] 0.0
          %783 = vst [vmem:[#allocation5 + $0x170] sm:$0xff] 0.0
          %784 = vst [vmem:[#allocation5 + $0x178] sm:$0xff] 0.0
          %785 = vst [vmem:[#allocation5 + $0x180] sm:$0xff] 0.0
          %786 = vst [vmem:[#allocation5 + $0x188] sm:$0xff] 0.0
          %787 = vst [vmem:[#allocation5 + $0x190] sm:$0xff] 0.0
          %788 = vst [vmem:[#allocation5 + $0x198] sm:$0xff] 0.0
          %789 = vst [vmem:[#allocation5 + $0x1a0] sm:$0xff] 0.0
          %790 = vst [vmem:[#allocation5 + $0x1a8] sm:$0xff] 0.0
          %791 = vst [vmem:[#allocation5 + $0x1b0] sm:$0xff] 0.0
          %792 = vst [vmem:[#allocation5 + $0x1b8] sm:$0xff] 0.0
          %793 = vst [vmem:[#allocation5 + $0x1c0] sm:$0xff] 0.0
          %794 = vst [vmem:[#allocation5 + $0x1c8] sm:$0xff] 0.0
          %795 = vst [vmem:[#allocation5 + $0x1d0] sm:$0xff] 0.0
          %796 = vst [vmem:[#allocation5 + $0x1d8] sm:$0xff] 0.0
          %797 = vst [vmem:[#allocation5 + $0x1e0] sm:$0xff] 0.0
          %798 = vst [vmem:[#allocation5 + $0x1e8] sm:$0xff] 0.0
          %799 = vst [vmem:[#allocation5 + $0x1f0] sm:$0xff] 0.0
          %800 = vst [vmem:[#allocation5 + $0x1f8] sm:$0xff] 0.0
        $region48: #{tpu_custom_call.1} parent=31 // pred_fallthru
          _
        %p801 = scmp.lt.s32.totalorder %s347, %s346
        // Predicated region
        $region49: #{tpu_custom_call.1} parent=31 // pred_check
          %p802 = pneg %p801
        $region50: #{tpu_custom_call.1} parent=31 // pred_check_branch
          %804 = sbr.rel (%p802) target = $region52
        $region51: #{tpu_custom_call.1} parent=31 // pred_region
          %v805 = vld [vmem:[%s293] sm:$0xf]
          %v806 = vld [vmem:[%s293 + $0x4] sm:$0xf]
          %v807 = vld [vmem:[%s293 + $0x8] sm:$0xf]
          %v808 = vld [vmem:[%s293 + $0xc] sm:$0xf]
          %v809 = vld [vmem:[%s293 + $0x10] sm:$0xf]
          %v810 = vld [vmem:[%s293 + $0x14] sm:$0xf]
          %v811 = vld [vmem:[%s293 + $0x18] sm:$0xf]
          %v812 = vld [vmem:[%s293 + $0x1c] sm:$0xf]
          %v813 = vld [vmem:[%s293 + $0x20] sm:$0xf]
          %v814 = vld [vmem:[%s293 + $0x24] sm:$0xf]
          %v815 = vld [vmem:[%s293 + $0x28] sm:$0xf]
          %v816 = vld [vmem:[%s293 + $0x2c] sm:$0xf]
          %v817 = vld [vmem:[%s293 + $0x30] sm:$0xf]
          %v818 = vld [vmem:[%s293 + $0x34] sm:$0xf]
          %v819 = vld [vmem:[%s293 + $0x38] sm:$0xf]
          %v820 = vld [vmem:[%s293 + $0x3c] sm:$0xf]
          %v821 = vld [vmem:[%s293 + $0x40] sm:$0xf]
          %v822 = vld [vmem:[%s293 + $0x44] sm:$0xf]
          %v823 = vld [vmem:[%s293 + $0x48] sm:$0xf]
          %v824 = vld [vmem:[%s293 + $0x4c] sm:$0xf]
          %v825 = vld [vmem:[%s293 + $0x50] sm:$0xf]
          %v826 = vld [vmem:[%s293 + $0x54] sm:$0xf]
          %v827 = vld [vmem:[%s293 + $0x58] sm:$0xf]
          %v828 = vld [vmem:[%s293 + $0x5c] sm:$0xf]
          %v829 = vld [vmem:[%s293 + $0x60] sm:$0xf]
          %v830 = vld [vmem:[%s293 + $0x64] sm:$0xf]
          %v831 = vld [vmem:[%s293 + $0x68] sm:$0xf]
          %v832 = vld [vmem:[%s293 + $0x6c] sm:$0xf]
          %v833 = vld [vmem:[%s293 + $0x70] sm:$0xf]
          %v834 = vld [vmem:[%s293 + $0x74] sm:$0xf]
          %v835 = vld [vmem:[%s293 + $0x78] sm:$0xf]
          %v836 = vld [vmem:[%s293 + $0x7c] sm:$0xf]
          %v837 = vld [vmem:[%s302] sm:$0xf]
          %v838 = vld [vmem:[%s302 + $0x4] sm:$0xf]
          %v839 = vld [vmem:[%s302 + $0x8] sm:$0xf]
          %v840 = vld [vmem:[%s302 + $0xc] sm:$0xf]
          %v841 = vld [vmem:[%s302 + $0x10] sm:$0xf]
          %v842 = vld [vmem:[%s302 + $0x14] sm:$0xf]
          %v843 = vld [vmem:[%s302 + $0x18] sm:$0xf]
          %v844 = vld [vmem:[%s302 + $0x1c] sm:$0xf]
          %v845 = vld [vmem:[%s302 + $0x20] sm:$0xf]
          %v846 = vld [vmem:[%s302 + $0x24] sm:$0xf]
          %v847 = vld [vmem:[%s302 + $0x28] sm:$0xf]
          %v848 = vld [vmem:[%s302 + $0x2c] sm:$0xf]
          %v849 = vld [vmem:[%s302 + $0x30] sm:$0xf]
          %v850 = vld [vmem:[%s302 + $0x34] sm:$0xf]
          %v851 = vld [vmem:[%s302 + $0x38] sm:$0xf]
          %v852 = vld [vmem:[%s302 + $0x3c] sm:$0xf]
          %v853 = vld [vmem:[%s302 + $0x40] sm:$0xf]
          %v854 = vld [vmem:[%s302 + $0x44] sm:$0xf]
          %v855 = vld [vmem:[%s302 + $0x48] sm:$0xf]
          %v856 = vld [vmem:[%s302 + $0x4c] sm:$0xf]
          %v857 = vld [vmem:[%s302 + $0x50] sm:$0xf]
          %v858 = vld [vmem:[%s302 + $0x54] sm:$0xf]
          %v859 = vld [vmem:[%s302 + $0x58] sm:$0xf]
          %v860 = vld [vmem:[%s302 + $0x5c] sm:$0xf]
          %v861 = vld [vmem:[%s302 + $0x60] sm:$0xf]
          %v862 = vld [vmem:[%s302 + $0x64] sm:$0xf]
          %v863 = vld [vmem:[%s302 + $0x68] sm:$0xf]
          %v864 = vld [vmem:[%s302 + $0x6c] sm:$0xf]
          %v865 = vld [vmem:[%s302 + $0x70] sm:$0xf]
          %v866 = vld [vmem:[%s302 + $0x74] sm:$0xf]
          %v867 = vld [vmem:[%s302 + $0x78] sm:$0xf]
          %v868 = vld [vmem:[%s302 + $0x7c] sm:$0xf]
          %v869 = vld [vmem:[#allocation2] sm:$0xff]
          %v870 = vld [vmem:[#allocation2 + $0x8] sm:$0xff]
          %v871 = vld [vmem:[#allocation2 + $0x10] sm:$0xff]
          %v872 = vld [vmem:[#allocation2 + $0x18] sm:$0xff]
          %v873 = vld [vmem:[#allocation2 + $0x20] sm:$0xff]
          %v874 = vld [vmem:[#allocation2 + $0x28] sm:$0xff]
          %v875 = vld [vmem:[#allocation2 + $0x30] sm:$0xff]
          %v876 = vld [vmem:[#allocation2 + $0x38] sm:$0xff]
          %v877 = vld [vmem:[#allocation2 + $0x40] sm:$0xff]
          %v878 = vld [vmem:[#allocation2 + $0x48] sm:$0xff]
          %v879 = vld [vmem:[#allocation2 + $0x50] sm:$0xff]
          %v880 = vld [vmem:[#allocation2 + $0x58] sm:$0xff]
          %v881 = vld [vmem:[#allocation2 + $0x60] sm:$0xff]
          %v882 = vld [vmem:[#allocation2 + $0x68] sm:$0xff]
          %v883 = vld [vmem:[#allocation2 + $0x70] sm:$0xff]
          %v884 = vld [vmem:[#allocation2 + $0x78] sm:$0xff]
          %v885 = vld [vmem:[#allocation2 + $0x80] sm:$0xff]
          %v886 = vld [vmem:[#allocation2 + $0x88] sm:$0xff]
          %v887 = vld [vmem:[#allocation2 + $0x90] sm:$0xff]
          %v888 = vld [vmem:[#allocation2 + $0x98] sm:$0xff]
          %v889 = vld [vmem:[#allocation2 + $0xa0] sm:$0xff]
          %v890 = vld [vmem:[#allocation2 + $0xa8] sm:$0xff]
          %v891 = vld [vmem:[#allocation2 + $0xb0] sm:$0xff]
          %v892 = vld [vmem:[#allocation2 + $0xb8] sm:$0xff]
          %v893 = vld [vmem:[#allocation2 + $0xc0] sm:$0xff]
          %v894 = vld [vmem:[#allocation2 + $0xc8] sm:$0xff]
          %v895 = vld [vmem:[#allocation2 + $0xd0] sm:$0xff]
          %v896 = vld [vmem:[#allocation2 + $0xd8] sm:$0xff]
          %v897 = vld [vmem:[#allocation2 + $0xe0] sm:$0xff]
          %v898 = vld [vmem:[#allocation2 + $0xe8] sm:$0xff]
          %v899 = vld [vmem:[#allocation2 + $0xf0] sm:$0xff]
          %v900 = vld [vmem:[#allocation2 + $0xf8] sm:$0xff]
          %v933 = vunpack.c.l.b16 %v805
          %v934 = vunpack.c.l.b16 %v806
          %v935 = vunpack.c.l.b16 %v807
          %v936 = vunpack.c.l.b16 %v808
          %v937 = vunpack.c.l.b16 %v809
          %v938 = vunpack.c.l.b16 %v810
          %v939 = vunpack.c.l.b16 %v811
          %v940 = vunpack.c.l.b16 %v812
          %v941 = vunpack.c.l.b16 %v813
          %v942 = vunpack.c.l.b16 %v814
          %v943 = vunpack.c.l.b16 %v815
          %v944 = vunpack.c.l.b16 %v816
          %v945 = vunpack.c.l.b16 %v817
          %v946 = vunpack.c.l.b16 %v818
          %v947 = vunpack.c.l.b16 %v819
          %v948 = vunpack.c.l.b16 %v820
          %v949 = vunpack.c.l.b16 %v821
          %v950 = vunpack.c.l.b16 %v822
          %v951 = vunpack.c.l.b16 %v823
          %v952 = vunpack.c.l.b16 %v824
          %v953 = vunpack.c.l.b16 %v825
          %v954 = vunpack.c.l.b16 %v826
          %v955 = vunpack.c.l.b16 %v827
          %v956 = vunpack.c.l.b16 %v828
          %v957 = vunpack.c.l.b16 %v829
          %v958 = vunpack.c.l.b16 %v830
          %v959 = vunpack.c.l.b16 %v831
          %v960 = vunpack.c.l.b16 %v832
          %v961 = vunpack.c.l.b16 %v833
          %v962 = vunpack.c.l.b16 %v834
          %v963 = vunpack.c.l.b16 %v835
          %v964 = vunpack.c.l.b16 %v836
          %v965 = vpack.c.b16 %v934, %v933
          %v966 = vpack.c.b16 %v936, %v935
          %v967 = vpack.c.b16 %v938, %v937
          %v968 = vpack.c.b16 %v940, %v939
          %v969 = vpack.c.b16 %v942, %v941
          %v970 = vpack.c.b16 %v944, %v943
          %v971 = vpack.c.b16 %v946, %v945
          %v972 = vpack.c.b16 %v948, %v947
          %v973 = vpack.c.b16 %v950, %v949
          %v974 = vpack.c.b16 %v952, %v951
          %v975 = vpack.c.b16 %v954, %v953
          %v976 = vpack.c.b16 %v956, %v955
          %v977 = vpack.c.b16 %v958, %v957
          %v978 = vpack.c.b16 %v960, %v959
          %v979 = vpack.c.b16 %v962, %v961
          %v980 = vpack.c.b16 %v964, %v963
          %997 = vmatprep.subr.bf16.mxu0 0
          %998 = vmatpush1.bf16.xpose.msra.mxu0 %v965
          %999 = vmatprep.subr.bf16.mxu0 0
          %1000 = vmatpush1.bf16.xpose.msra.mxu0 %v966
          %1001 = vmatprep.subr.bf16.mxu0 0
          %1002 = vmatpush1.bf16.xpose.msra.mxu0 %v967
          %1003 = vmatprep.subr.bf16.mxu0 0
          %1004 = vmatpush1.bf16.xpose.msra.mxu0 %v968
          %1005 = vmatprep.subr.bf16.mxu0 0
          %1006 = vmatpush1.bf16.xpose.msra.mxu0 %v969
          %1007 = vmatprep.subr.bf16.mxu0 0
          %1008 = vmatpush1.bf16.xpose.msra.mxu0 %v970
          %1009 = vmatprep.subr.bf16.mxu0 0
          %1010 = vmatpush1.bf16.xpose.msra.mxu0 %v971
          %1011 = vmatprep.subr.bf16.mxu0 0
          %1012 = vmatpush1.bf16.xpose.msra.mxu0 %v972
          %1013 = vmatprep.subr.bf16.mxu0 0
          %1014 = vmatpush1.bf16.xpose.msra.mxu0 %v973
          %1015 = vmatprep.subr.bf16.mxu0 0
          %1016 = vmatpush1.bf16.xpose.msra.mxu0 %v974
          %1017 = vmatprep.subr.bf16.mxu0 0
          %1018 = vmatpush1.bf16.xpose.msra.mxu0 %v975
          %1019 = vmatprep.subr.bf16.mxu0 0
          %1020 = vmatpush1.bf16.xpose.msra.mxu0 %v976
          %1021 = vmatprep.subr.bf16.mxu0 0
          %1022 = vmatpush1.bf16.xpose.msra.mxu0 %v977
          %1023 = vmatprep.subr.bf16.mxu0 0
          %1024 = vmatpush1.bf16.xpose.msra.mxu0 %v978
          %1025 = vmatprep.subr.bf16.mxu0 0
          %1026 = vmatpush1.bf16.xpose.msra.mxu0 %v979
          %1027 = vmatprep.subr.bf16.mxu0 0
          %1028 = vmatpush1.bf16.xpose.msra.mxu0 %v980
          %1029 = vmatprep.mubr.bf16.mxu0 0
          %1030 = vmatmul.mubr.bf16.gmra.mrb[0].mxu0 %v869
          %v1031 = vpop.f32.mrb[0].mxu0
          %v1032 = vadd.f32 0.0, %v1031
          %v1033 = vpop.f32.mrb[0].mxu0
          %v1034 = vadd.f32 0.0, %v1033
          %v1035 = vpop.f32.mrb[0].mxu0
          %v1036 = vadd.f32 0.0, %v1035
          %v1037 = vpop.f32.mrb[0].mxu0
          %v1038 = vadd.f32 0.0, %v1037
          %1039 = vmatprep.mubr.bf16.mxu0 0
          %1040 = vmatmul.mubr.bf16.gmra.mrb[0].mxu0 %v870
          %v1041 = vpop.f32.mrb[0].mxu0
          %v1042 = vadd.f32 0.0, %v1041
          %v1043 = vpop.f32.mrb[0].mxu0
          %v1044 = vadd.f32 0.0, %v1043
          %v1045 = vpop.f32.mrb[0].mxu0
          %v1046 = vadd.f32 0.0, %v1045
          %v1047 = vpop.f32.mrb[0].mxu0
          %v1048 = vadd.f32 0.0, %v1047
          %1049 = vmatprep.mubr.bf16.mxu0 0
          %1050 = vmatmul.mubr.bf16.gmra.mrb[0].mxu0 %v871
          %v1051 = vpop.f32.mrb[0].mxu0
          %v1052 = vadd.f32 0.0, %v1051
          %v1053 = vpop.f32.mrb[0].mxu0
          %v1054 = vadd.f32 0.0, %v1053
          %v1055 = vpop.f32.mrb[0].mxu0
          %v1056 = vadd.f32 0.0, %v1055
          %v1057 = vpop.f32.mrb[0].mxu0
          %v1058 = vadd.f32 0.0, %v1057
          %1059 = vmatprep.mubr.bf16.mxu0 0
          %1060 = vmatmul.mubr.bf16.gmra.mrb[0].mxu0 %v872
          %v1061 = vpop.f32.mrb[0].mxu0
          %v1062 = vadd.f32 0.0, %v1061
          %v1063 = vpop.f32.mrb[0].mxu0
          %v1064 = vadd.f32 0.0, %v1063
          %v1065 = vpop.f32.mrb[0].mxu0
          %v1066 = vadd.f32 0.0, %v1065
          %v1067 = vpop.f32.mrb[0].mxu0
          %v1068 = vadd.f32 0.0, %v1067
          %1069 = vmatprep.mubr.bf16.mxu0 0
          %1070 = vmatmul.mubr.bf16.gmra.mrb[0].mxu0 %v873
          %v1071 = vpop.f32.mrb[0].mxu0
          %v1072 = vadd.f32 0.0, %v1071
          %v1073 = vpop.f32.mrb[0].mxu0
          %v1074 = vadd.f32 0.0, %v1073
          %v1075 = vpop.f32.mrb[0].mxu0
          %v1076 = vadd.f32 0.0, %v1075
          %v1077 = vpop.f32.mrb[0].mxu0
          %v1078 = vadd.f32 0.0, %v1077
          %1079 = vmatprep.mubr.bf16.mxu0 0
          %1080 = vmatmul.mubr.bf16.gmra.mrb[0].mxu0 %v874
          %v1081 = vpop.f32.mrb[0].mxu0
          %v1082 = vadd.f32 0.0, %v1081
          %v1083 = vpop.f32.mrb[0].mxu0
          %v1084 = vadd.f32 0.0, %v1083
          %v1085 = vpop.f32.mrb[0].mxu0
          %v1086 = vadd.f32 0.0, %v1085
          %v1087 = vpop.f32.mrb[0].mxu0
          %v1088 = vadd.f32 0.0, %v1087
          %1089 = vmatprep.mubr.bf16.mxu0 0
          %1090 = vmatmul.mubr.bf16.gmra.mrb[0].mxu0 %v875
          %v1091 = vpop.f32.mrb[0].mxu0
          %v1092 = vadd.f32 0.0, %v1091
          %v1093 = vpop.f32.mrb[0].mxu0
          %v1094 = vadd.f32 0.0, %v1093
          %v1095 = vpop.f32.mrb[0].mxu0
          %v1096 = vadd.f32 0.0, %v1095
          %v1097 = vpop.f32.mrb[0].mxu0
          %v1098 = vadd.f32 0.0, %v1097
          %1099 = vmatprep.mubr.bf16.mxu0 0
          %1100 = vmatmul.mubr.bf16.gmra.mrb[0].mxu0 %v876
          %v1101 = vpop.f32.mrb[0].mxu0
          %v1102 = vadd.f32 0.0, %v1101
          %v1103 = vpop.f32.mrb[0].mxu0
          %v1104 = vadd.f32 0.0, %v1103
          %v1105 = vpop.f32.mrb[0].mxu0
          %v1106 = vadd.f32 0.0, %v1105
          %v1107 = vpop.f32.mrb[0].mxu0
          %v1108 = vadd.f32 0.0, %v1107
          %1109 = vmatprep.mubr.bf16.mxu0 0
          %1110 = vmatmul.mubr.bf16.gmra.mrb[0].mxu0 %v877
          %v1111 = vpop.f32.mrb[0].mxu0
          %v1112 = vadd.f32 0.0, %v1111
          %v1113 = vpop.f32.mrb[0].mxu0
          %v1114 = vadd.f32 0.0, %v1113
          %v1115 = vpop.f32.mrb[0].mxu0
          %v1116 = vadd.f32 0.0, %v1115
          %v1117 = vpop.f32.mrb[0].mxu0
          %v1118 = vadd.f32 0.0, %v1117
          %1119 = vmatprep.mubr.bf16.mxu0 0
          %1120 = vmatmul.mubr.bf16.gmra.mrb[0].mxu0 %v878
          %v1121 = vpop.f32.mrb[0].mxu0
          %v1122 = vadd.f32 0.0, %v1121
          %v1123 = vpop.f32.mrb[0].mxu0
          %v1124 = vadd.f32 0.0, %v1123
          %v1125 = vpop.f32.mrb[0].mxu0
          %v1126 = vadd.f32 0.0, %v1125
          %v1127 = vpop.f32.mrb[0].mxu0
          %v1128 = vadd.f32 0.0, %v1127
          %1129 = vmatprep.mubr.bf16.mxu0 0
          %1130 = vmatmul.mubr.bf16.gmra.mrb[0].mxu0 %v879
          %v1131 = vpop.f32.mrb[0].mxu0
          %v1132 = vadd.f32 0.0, %v1131
          %v1133 = vpop.f32.mrb[0].mxu0
          %v1134 = vadd.f32 0.0, %v1133
          %v1135 = vpop.f32.mrb[0].mxu0
          %v1136 = vadd.f32 0.0, %v1135
          %v1137 = vpop.f32.mrb[0].mxu0
          %v1138 = vadd.f32 0.0, %v1137
          %1139 = vmatprep.mubr.bf16.mxu0 0
          %1140 = vmatmul.mubr.bf16.gmra.mrb[0].mxu0 %v880
          %v1141 = vpop.f32.mrb[0].mxu0
          %v1142 = vadd.f32 0.0, %v1141
          %v1143 = vpop.f32.mrb[0].mxu0
          %v1144 = vadd.f32 0.0, %v1143
          %v1145 = vpop.f32.mrb[0].mxu0
          %v1146 = vadd.f32 0.0, %v1145
          %v1147 = vpop.f32.mrb[0].mxu0
          %v1148 = vadd.f32 0.0, %v1147
          %1149 = vmatprep.mubr.bf16.mxu0 0
          %1150 = vmatmul.mubr.bf16.gmra.mrb[0].mxu0 %v881
          %v1151 = vpop.f32.mrb[0].mxu0
          %v1152 = vadd.f32 0.0, %v1151
          %v1153 = vpop.f32.mrb[0].mxu0
          %v1154 = vadd.f32 0.0, %v1153
          %v1155 = vpop.f32.mrb[0].mxu0
          %v1156 = vadd.f32 0.0, %v1155
          %v1157 = vpop.f32.mrb[0].mxu0
          %v1158 = vadd.f32 0.0, %v1157
          %1159 = vmatprep.mubr.bf16.mxu0 0
          %1160 = vmatmul.mubr.bf16.gmra.mrb[0].mxu0 %v882
          %v1161 = vpop.f32.mrb[0].mxu0
          %v1162 = vadd.f32 0.0, %v1161
          %v1163 = vpop.f32.mrb[0].mxu0
          %v1164 = vadd.f32 0.0, %v1163
          %v1165 = vpop.f32.mrb[0].mxu0
          %v1166 = vadd.f32 0.0, %v1165
          %v1167 = vpop.f32.mrb[0].mxu0
          %v1168 = vadd.f32 0.0, %v1167
          %1169 = vmatprep.mubr.bf16.mxu0 0
          %1170 = vmatmul.mubr.bf16.gmra.mrb[0].mxu0 %v883
          %v1171 = vpop.f32.mrb[0].mxu0
          %v1172 = vadd.f32 0.0, %v1171
          %v1173 = vpop.f32.mrb[0].mxu0
          %v1174 = vadd.f32 0.0, %v1173
          %v1175 = vpop.f32.mrb[0].mxu0
          %v1176 = vadd.f32 0.0, %v1175
          %v1177 = vpop.f32.mrb[0].mxu0
          %v1178 = vadd.f32 0.0, %v1177
          %1179 = vmatprep.mubr.bf16.mxu0 0
          %1180 = vmatmul.mubr.bf16.gmra.mrb[0].mxu0 %v884
          %v1181 = vpop.f32.mrb[0].mxu0
          %v1182 = vadd.f32 0.0, %v1181
          %v1183 = vpop.f32.mrb[0].mxu0
          %v1184 = vadd.f32 0.0, %v1183
          %v1185 = vpop.f32.mrb[0].mxu0
          %v1186 = vadd.f32 0.0, %v1185
          %v1187 = vpop.f32.mrb[0].mxu0
          %v1188 = vadd.f32 0.0, %v1187
          %1189 = vmatprep.mubr.bf16.mxu0 0
          %1190 = vmatmul.mubr.bf16.gmra.mrb[0].mxu0 %v885
          %v1191 = vpop.f32.mrb[0].mxu0
          %v1192 = vadd.f32 0.0, %v1191
          %v1193 = vpop.f32.mrb[0].mxu0
          %v1194 = vadd.f32 0.0, %v1193
          %v1195 = vpop.f32.mrb[0].mxu0
          %v1196 = vadd.f32 0.0, %v1195
          %v1197 = vpop.f32.mrb[0].mxu0
          %v1198 = vadd.f32 0.0, %v1197
          %1199 = vmatprep.mubr.bf16.mxu0 0
          %1200 = vmatmul.mubr.bf16.gmra.mrb[0].mxu0 %v886
          %v1201 = vpop.f32.mrb[0].mxu0
          %v1202 = vadd.f32 0.0, %v1201
          %v1203 = vpop.f32.mrb[0].mxu0
          %v1204 = vadd.f32 0.0, %v1203
          %v1205 = vpop.f32.mrb[0].mxu0
          %v1206 = vadd.f32 0.0, %v1205
          %v1207 = vpop.f32.mrb[0].mxu0
          %v1208 = vadd.f32 0.0, %v1207
          %1209 = vmatprep.mubr.bf16.mxu0 0
          %1210 = vmatmul.mubr.bf16.gmra.mrb[0].mxu0 %v887
          %v1211 = vpop.f32.mrb[0].mxu0
          %v1212 = vadd.f32 0.0, %v1211
          %v1213 = vpop.f32.mrb[0].mxu0
          %v1214 = vadd.f32 0.0, %v1213
          %v1215 = vpop.f32.mrb[0].mxu0
          %v1216 = vadd.f32 0.0, %v1215
          %v1217 = vpop.f32.mrb[0].mxu0
          %v1218 = vadd.f32 0.0, %v1217
          %1219 = vmatprep.mubr.bf16.mxu0 0
          %1220 = vmatmul.mubr.bf16.gmra.mrb[0].mxu0 %v888
          %v1221 = vpop.f32.mrb[0].mxu0
          %v1222 = vadd.f32 0.0, %v1221
          %v1223 = vpop.f32.mrb[0].mxu0
          %v1224 = vadd.f32 0.0, %v1223
          %v1225 = vpop.f32.mrb[0].mxu0
          %v1226 = vadd.f32 0.0, %v1225
          %v1227 = vpop.f32.mrb[0].mxu0
          %v1228 = vadd.f32 0.0, %v1227
          %1229 = vmatprep.mubr.bf16.mxu0 0
          %1230 = vmatmul.mubr.bf16.gmra.mrb[0].mxu0 %v889
          %v1231 = vpop.f32.mrb[0].mxu0
          %v1232 = vadd.f32 0.0, %v1231
          %v1233 = vpop.f32.mrb[0].mxu0
          %v1234 = vadd.f32 0.0, %v1233
          %v1235 = vpop.f32.mrb[0].mxu0
          %v1236 = vadd.f32 0.0, %v1235
          %v1237 = vpop.f32.mrb[0].mxu0
          %v1238 = vadd.f32 0.0, %v1237
          %1239 = vmatprep.mubr.bf16.mxu0 0
          %1240 = vmatmul.mubr.bf16.gmra.mrb[0].mxu0 %v890
          %v1241 = vpop.f32.mrb[0].mxu0
          %v1242 = vadd.f32 0.0, %v1241
          %v1243 = vpop.f32.mrb[0].mxu0
          %v1244 = vadd.f32 0.0, %v1243
          %v1245 = vpop.f32.mrb[0].mxu0
          %v1246 = vadd.f32 0.0, %v1245
          %v1247 = vpop.f32.mrb[0].mxu0
          %v1248 = vadd.f32 0.0, %v1247
          %1249 = vmatprep.mubr.bf16.mxu0 0
          %1250 = vmatmul.mubr.bf16.gmra.mrb[0].mxu0 %v891
          %v1251 = vpop.f32.mrb[0].mxu0
          %v1252 = vadd.f32 0.0, %v1251
          %v1253 = vpop.f32.mrb[0].mxu0
          %v1254 = vadd.f32 0.0, %v1253
          %v1255 = vpop.f32.mrb[0].mxu0
          %v1256 = vadd.f32 0.0, %v1255
          %v1257 = vpop.f32.mrb[0].mxu0
          %v1258 = vadd.f32 0.0, %v1257
          %1259 = vmatprep.mubr.bf16.mxu0 0
          %1260 = vmatmul.mubr.bf16.gmra.mrb[0].mxu0 %v892
          %v1261 = vpop.f32.mrb[0].mxu0
          %v1262 = vadd.f32 0.0, %v1261
          %v1263 = vpop.f32.mrb[0].mxu0
          %v1264 = vadd.f32 0.0, %v1263
          %v1265 = vpop.f32.mrb[0].mxu0
          %v1266 = vadd.f32 0.0, %v1265
          %v1267 = vpop.f32.mrb[0].mxu0
          %v1268 = vadd.f32 0.0, %v1267
          %1269 = vmatprep.mubr.bf16.mxu0 0
          %1270 = vmatmul.mubr.bf16.gmra.mrb[0].mxu0 %v893
          %v1271 = vpop.f32.mrb[0].mxu0
          %v1272 = vadd.f32 0.0, %v1271
          %v1273 = vpop.f32.mrb[0].mxu0
          %v1274 = vadd.f32 0.0, %v1273
          %v1275 = vpop.f32.mrb[0].mxu0
          %v1276 = vadd.f32 0.0, %v1275
          %v1277 = vpop.f32.mrb[0].mxu0
          %v1278 = vadd.f32 0.0, %v1277
          %1279 = vmatprep.mubr.bf16.mxu0 0
          %1280 = vmatmul.mubr.bf16.gmra.mrb[0].mxu0 %v894
          %v1281 = vpop.f32.mrb[0].mxu0
          %v1282 = vadd.f32 0.0, %v1281
          %v1283 = vpop.f32.mrb[0].mxu0
          %v1284 = vadd.f32 0.0, %v1283
          %v1285 = vpop.f32.mrb[0].mxu0
          %v1286 = vadd.f32 0.0, %v1285
          %v1287 = vpop.f32.mrb[0].mxu0
          %v1288 = vadd.f32 0.0, %v1287
          %1289 = vmatprep.mubr.bf16.mxu0 0
          %1290 = vmatmul.mubr.bf16.gmra.mrb[0].mxu0 %v895
          %v1291 = vpop.f32.mrb[0].mxu0
          %v1292 = vadd.f32 0.0, %v1291
          %v1293 = vpop.f32.mrb[0].mxu0
          %v1294 = vadd.f32 0.0, %v1293
          %v1295 = vpop.f32.mrb[0].mxu0
          %v1296 = vadd.f32 0.0, %v1295
          %v1297 = vpop.f32.mrb[0].mxu0
          %v1298 = vadd.f32 0.0, %v1297
          %1299 = vmatprep.mubr.bf16.mxu0 0
          %1300 = vmatmul.mubr.bf16.gmra.mrb[0].mxu0 %v896
          %v1301 = vpop.f32.mrb[0].mxu0
          %v1302 = vadd.f32 0.0, %v1301
          %v1303 = vpop.f32.mrb[0].mxu0
          %v1304 = vadd.f32 0.0, %v1303
          %v1305 = vpop.f32.mrb[0].mxu0
          %v1306 = vadd.f32 0.0, %v1305
          %v1307 = vpop.f32.mrb[0].mxu0
          %v1308 = vadd.f32 0.0, %v1307
          %1309 = vmatprep.mubr.bf16.mxu0 0
          %1310 = vmatmul.mubr.bf16.gmra.mrb[0].mxu0 %v897
          %v1311 = vpop.f32.mrb[0].mxu0
          %v1312 = vadd.f32 0.0, %v1311
          %v1313 = vpop.f32.mrb[0].mxu0
          %v1314 = vadd.f32 0.0, %v1313
          %v1315 = vpop.f32.mrb[0].mxu0
          %v1316 = vadd.f32 0.0, %v1315
          %v1317 = vpop.f32.mrb[0].mxu0
          %v1318 = vadd.f32 0.0, %v1317
          %1319 = vmatprep.mubr.bf16.mxu0 0
          %1320 = vmatmul.mubr.bf16.gmra.mrb[0].mxu0 %v898
          %v1321 = vpop.f32.mrb[0].mxu0
          %v1322 = vadd.f32 0.0, %v1321
          %v1323 = vpop.f32.mrb[0].mxu0
          %v1324 = vadd.f32 0.0, %v1323
          %v1325 = vpop.f32.mrb[0].mxu0
          %v1326 = vadd.f32 0.0, %v1325
          %v1327 = vpop.f32.mrb[0].mxu0
          %v1328 = vadd.f32 0.0, %v1327
          %1329 = vmatprep.mubr.bf16.mxu0 0
          %1330 = vmatmul.mubr.bf16.gmra.mrb[0].mxu0 %v899
          %v1331 = vpop.f32.mrb[0].mxu0
          %v1332 = vadd.f32 0.0, %v1331
          %v1333 = vpop.f32.mrb[0].mxu0
          %v1334 = vadd.f32 0.0, %v1333
          %v1335 = vpop.f32.mrb[0].mxu0
          %v1336 = vadd.f32 0.0, %v1335
          %v1337 = vpop.f32.mrb[0].mxu0
          %v1338 = vadd.f32 0.0, %v1337
          %1339 = vmatprep.mubr.bf16.mxu0 0
          %1340 = vmatmul.mubr.bf16.gmra.mrb[0].mxu0 %v900
          %v1341 = vpop.f32.mrb[0].mxu0
          %v1342 = vadd.f32 0.0, %v1341
          %v1343 = vpop.f32.mrb[0].mxu0
          %v1344 = vadd.f32 0.0, %v1343
          %v1345 = vpop.f32.mrb[0].mxu0
          %v1346 = vadd.f32 0.0, %v1345
          %v1347 = vpop.f32.mrb[0].mxu0
          %v1348 = vadd.f32 0.0, %v1347
          %1349 = vdwg.mxu0
          %v1350 = vld [vmem:[#allocation3] sm:$0xff]
          %v1351 = vld [vmem:[#allocation3 + $0x8] sm:$0xff]
          %v1352 = vld [vmem:[#allocation3 + $0x10] sm:$0xff]
          %v1353 = vld [vmem:[#allocation3 + $0x18] sm:$0xff]
          %v1354 = vld [vmem:[#allocation3 + $0x20] sm:$0xff]
          %v1355 = vld [vmem:[#allocation3 + $0x28] sm:$0xff]
          %v1356 = vld [vmem:[#allocation3 + $0x30] sm:$0xff]
          %v1357 = vld [vmem:[#allocation3 + $0x38] sm:$0xff]
          %v1358 = vld [vmem:[#allocation3 + $0x40] sm:$0xff]
          %v1359 = vld [vmem:[#allocation3 + $0x48] sm:$0xff]
          %v1360 = vld [vmem:[#allocation3 + $0x50] sm:$0xff]
          %v1361 = vld [vmem:[#allocation3 + $0x58] sm:$0xff]
          %v1362 = vld [vmem:[#allocation3 + $0x60] sm:$0xff]
          %v1363 = vld [vmem:[#allocation3 + $0x68] sm:$0xff]
          %v1364 = vld [vmem:[#allocation3 + $0x70] sm:$0xff]
          %v1365 = vld [vmem:[#allocation3 + $0x78] sm:$0xff]
          %v1366 = vld [vmem:[#allocation3 + $0x80] sm:$0xff]
          %v1367 = vld [vmem:[#allocation3 + $0x88] sm:$0xff]
          %v1368 = vld [vmem:[#allocation3 + $0x90] sm:$0xff]
          %v1369 = vld [vmem:[#allocation3 + $0x98] sm:$0xff]
          %v1370 = vld [vmem:[#allocation3 + $0xa0] sm:$0xff]
          %v1371 = vld [vmem:[#allocation3 + $0xa8] sm:$0xff]
          %v1372 = vld [vmem:[#allocation3 + $0xb0] sm:$0xff]
          %v1373 = vld [vmem:[#allocation3 + $0xb8] sm:$0xff]
          %v1374 = vld [vmem:[#allocation3 + $0xc0] sm:$0xff]
          %v1375 = vld [vmem:[#allocation3 + $0xc8] sm:$0xff]
          %v1376 = vld [vmem:[#allocation3 + $0xd0] sm:$0xff]
          %v1377 = vld [vmem:[#allocation3 + $0xd8] sm:$0xff]
          %v1378 = vld [vmem:[#allocation3 + $0xe0] sm:$0xff]
          %v1379 = vld [vmem:[#allocation3 + $0xe8] sm:$0xff]
          %v1380 = vld [vmem:[#allocation3 + $0xf0] sm:$0xff]
          %v1381 = vld [vmem:[#allocation3 + $0xf8] sm:$0xff]
          %v1382 = vld [vmem:[#allocation3 + $0x100] sm:$0xff]
          %v1383 = vld [vmem:[#allocation3 + $0x108] sm:$0xff]
          %v1384 = vld [vmem:[#allocation3 + $0x110] sm:$0xff]
          %v1385 = vld [vmem:[#allocation3 + $0x118] sm:$0xff]
          %v1386 = vld [vmem:[#allocation3 + $0x120] sm:$0xff]
          %v1387 = vld [vmem:[#allocation3 + $0x128] sm:$0xff]
          %v1388 = vld [vmem:[#allocation3 + $0x130] sm:$0xff]
          %v1389 = vld [vmem:[#allocation3 + $0x138] sm:$0xff]
          %v1390 = vld [vmem:[#allocation3 + $0x140] sm:$0xff]
          %v1391 = vld [vmem:[#allocation3 + $0x148] sm:$0xff]
          %v1392 = vld [vmem:[#allocation3 + $0x150] sm:$0xff]
          %v1393 = vld [vmem:[#allocation3 + $0x158] sm:$0xff]
          %v1394 = vld [vmem:[#allocation3 + $0x160] sm:$0xff]
          %v1395 = vld [vmem:[#allocation3 + $0x168] sm:$0xff]
          %v1396 = vld [vmem:[#allocation3 + $0x170] sm:$0xff]
          %v1397 = vld [vmem:[#allocation3 + $0x178] sm:$0xff]
          %v1398 = vld [vmem:[#allocation3 + $0x180] sm:$0xff]
          %v1399 = vld [vmem:[#allocation3 + $0x188] sm:$0xff]
          %v1400 = vld [vmem:[#allocation3 + $0x190] sm:$0xff]
          %v1401 = vld [vmem:[#allocation3 + $0x198] sm:$0xff]
          %v1402 = vld [vmem:[#allocation3 + $0x1a0] sm:$0xff]
          %v1403 = vld [vmem:[#allocation3 + $0x1a8] sm:$0xff]
          %v1404 = vld [vmem:[#allocation3 + $0x1b0] sm:$0xff]
          %v1405 = vld [vmem:[#allocation3 + $0x1b8] sm:$0xff]
          %v1406 = vld [vmem:[#allocation3 + $0x1c0] sm:$0xff]
          %v1407 = vld [vmem:[#allocation3 + $0x1c8] sm:$0xff]
          %v1408 = vld [vmem:[#allocation3 + $0x1d0] sm:$0xff]
          %v1409 = vld [vmem:[#allocation3 + $0x1d8] sm:$0xff]
          %v1410 = vld [vmem:[#allocation3 + $0x1e0] sm:$0xff]
          %v1411 = vld [vmem:[#allocation3 + $0x1e8] sm:$0xff]
          %v1412 = vld [vmem:[#allocation3 + $0x1f0] sm:$0xff]
          %v1413 = vld [vmem:[#allocation3 + $0x1f8] sm:$0xff]
          %v1414 = vmax.f32 %v1032, %v1034
          %1415 = vmax.xlane.f32.xlu0 %v1414
          %v1416 = vpop.xlane.xlu0 %1415
          %v1417 = vmax.f32 %v1036, %v1038
          %1418 = vmax.xlane.f32.xlu0 %v1417
          %v1419 = vpop.xlane.xlu0 %1418
          %v1420 = vmax.f32 %v1042, %v1044
          %1421 = vmax.xlane.f32.xlu0 %v1420
          %v1422 = vpop.xlane.xlu0 %1421
          %v1423 = vmax.f32 %v1046, %v1048
          %1424 = vmax.xlane.f32.xlu0 %v1423
          %v1425 = vpop.xlane.xlu0 %1424
          %v1426 = vmax.f32 %v1052, %v1054
          %1427 = vmax.xlane.f32.xlu0 %v1426
          %v1428 = vpop.xlane.xlu0 %1427
          %v1429 = vmax.f32 %v1056, %v1058
          %1430 = vmax.xlane.f32.xlu0 %v1429
          %v1431 = vpop.xlane.xlu0 %1430
          %v1432 = vmax.f32 %v1062, %v1064
          %1433 = vmax.xlane.f32.xlu0 %v1432
          %v1434 = vpop.xlane.xlu0 %1433
          %v1435 = vmax.f32 %v1066, %v1068
          %1436 = vmax.xlane.f32.xlu0 %v1435
          %v1437 = vpop.xlane.xlu0 %1436
          %v1438 = vmax.f32 %v1072, %v1074
          %1439 = vmax.xlane.f32.xlu0 %v1438
          %v1440 = vpop.xlane.xlu0 %1439
          %v1441 = vmax.f32 %v1076, %v1078
          %1442 = vmax.xlane.f32.xlu0 %v1441
          %v1443 = vpop.xlane.xlu0 %1442
          %v1444 = vmax.f32 %v1082, %v1084
          %1445 = vmax.xlane.f32.xlu0 %v1444
          %v1446 = vpop.xlane.xlu0 %1445
          %v1447 = vmax.f32 %v1086, %v1088
          %1448 = vmax.xlane.f32.xlu0 %v1447
          %v1449 = vpop.xlane.xlu0 %1448
          %v1450 = vmax.f32 %v1092, %v1094
          %1451 = vmax.xlane.f32.xlu0 %v1450
          %v1452 = vpop.xlane.xlu0 %1451
          %v1453 = vmax.f32 %v1096, %v1098
          %1454 = vmax.xlane.f32.xlu0 %v1453
          %v1455 = vpop.xlane.xlu0 %1454
          %v1456 = vmax.f32 %v1102, %v1104
          %1457 = vmax.xlane.f32.xlu0 %v1456
          %v1458 = vpop.xlane.xlu0 %1457
          %v1459 = vmax.f32 %v1106, %v1108
          %1460 = vmax.xlane.f32.xlu0 %v1459
          %v1461 = vpop.xlane.xlu0 %1460
          %v1462 = vmax.f32 %v1112, %v1114
          %1463 = vmax.xlane.f32.xlu0 %v1462
          %v1464 = vpop.xlane.xlu0 %1463
          %v1465 = vmax.f32 %v1116, %v1118
          %1466 = vmax.xlane.f32.xlu0 %v1465
          %v1467 = vpop.xlane.xlu0 %1466
          %v1468 = vmax.f32 %v1122, %v1124
          %1469 = vmax.xlane.f32.xlu0 %v1468
          %v1470 = vpop.xlane.xlu0 %1469
          %v1471 = vmax.f32 %v1126, %v1128
          %1472 = vmax.xlane.f32.xlu0 %v1471
          %v1473 = vpop.xlane.xlu0 %1472
          %v1474 = vmax.f32 %v1132, %v1134
          %1475 = vmax.xlane.f32.xlu0 %v1474
          %v1476 = vpop.xlane.xlu0 %1475
          %v1477 = vmax.f32 %v1136, %v1138
          %1478 = vmax.xlane.f32.xlu0 %v1477
          %v1479 = vpop.xlane.xlu0 %1478
          %v1480 = vmax.f32 %v1142, %v1144
          %1481 = vmax.xlane.f32.xlu0 %v1480
          %v1482 = vpop.xlane.xlu0 %1481
          %v1483 = vmax.f32 %v1146, %v1148
          %1484 = vmax.xlane.f32.xlu0 %v1483
          %v1485 = vpop.xlane.xlu0 %1484
          %v1486 = vmax.f32 %v1152, %v1154
          %1487 = vmax.xlane.f32.xlu0 %v1486
          %v1488 = vpop.xlane.xlu0 %1487
          %v1489 = vmax.f32 %v1156, %v1158
          %1490 = vmax.xlane.f32.xlu0 %v1489
          %v1491 = vpop.xlane.xlu0 %1490
          %v1492 = vmax.f32 %v1162, %v1164
          %1493 = vmax.xlane.f32.xlu0 %v1492
          %v1494 = vpop.xlane.xlu0 %1493
          %v1495 = vmax.f32 %v1166, %v1168
          %1496 = vmax.xlane.f32.xlu0 %v1495
          %v1497 = vpop.xlane.xlu0 %1496
          %v1498 = vmax.f32 %v1172, %v1174
          %1499 = vmax.xlane.f32.xlu0 %v1498
          %v1500 = vpop.xlane.xlu0 %1499
          %v1501 = vmax.f32 %v1176, %v1178
          %1502 = vmax.xlane.f32.xlu0 %v1501
          %v1503 = vpop.xlane.xlu0 %1502
          %v1504 = vmax.f32 %v1182, %v1184
          %1505 = vmax.xlane.f32.xlu0 %v1504
          %v1506 = vpop.xlane.xlu0 %1505
          %v1507 = vmax.f32 %v1186, %v1188
          %1508 = vmax.xlane.f32.xlu0 %v1507
          %v1509 = vpop.xlane.xlu0 %1508
          %v1510 = vmax.f32 %v1192, %v1194
          %1511 = vmax.xlane.f32.xlu0 %v1510
          %v1512 = vpop.xlane.xlu0 %1511
          %v1513 = vmax.f32 %v1196, %v1198
          %1514 = vmax.xlane.f32.xlu0 %v1513
          %v1515 = vpop.xlane.xlu0 %1514
          %v1516 = vmax.f32 %v1202, %v1204
          %1517 = vmax.xlane.f32.xlu0 %v1516
          %v1518 = vpop.xlane.xlu0 %1517
          %v1519 = vmax.f32 %v1206, %v1208
          %1520 = vmax.xlane.f32.xlu0 %v1519
          %v1521 = vpop.xlane.xlu0 %1520
          %v1522 = vmax.f32 %v1212, %v1214
          %1523 = vmax.xlane.f32.xlu0 %v1522
          %v1524 = vpop.xlane.xlu0 %1523
          %v1525 = vmax.f32 %v1216, %v1218
          %1526 = vmax.xlane.f32.xlu0 %v1525
          %v1527 = vpop.xlane.xlu0 %1526
          %v1528 = vmax.f32 %v1222, %v1224
          %1529 = vmax.xlane.f32.xlu0 %v1528
          %v1530 = vpop.xlane.xlu0 %1529
          %v1531 = vmax.f32 %v1226, %v1228
          %1532 = vmax.xlane.f32.xlu0 %v1531
          %v1533 = vpop.xlane.xlu0 %1532
          %v1534 = vmax.f32 %v1232, %v1234
          %1535 = vmax.xlane.f32.xlu0 %v1534
          %v1536 = vpop.xlane.xlu0 %1535
          %v1537 = vmax.f32 %v1236, %v1238
          %1538 = vmax.xlane.f32.xlu0 %v1537
          %v1539 = vpop.xlane.xlu0 %1538
          %v1540 = vmax.f32 %v1242, %v1244
          %1541 = vmax.xlane.f32.xlu0 %v1540
          %v1542 = vpop.xlane.xlu0 %1541
          %v1543 = vmax.f32 %v1246, %v1248
          %1544 = vmax.xlane.f32.xlu0 %v1543
          %v1545 = vpop.xlane.xlu0 %1544
          %v1546 = vmax.f32 %v1252, %v1254
          %1547 = vmax.xlane.f32.xlu0 %v1546
          %v1548 = vpop.xlane.xlu0 %1547
          %v1549 = vmax.f32 %v1256, %v1258
          %1550 = vmax.xlane.f32.xlu0 %v1549
          %v1551 = vpop.xlane.xlu0 %1550
          %v1552 = vmax.f32 %v1262, %v1264
          %1553 = vmax.xlane.f32.xlu0 %v1552
          %v1554 = vpop.xlane.xlu0 %1553
          %v1555 = vmax.f32 %v1266, %v1268
          %1556 = vmax.xlane.f32.xlu0 %v1555
          %v1557 = vpop.xlane.xlu0 %1556
          %v1558 = vmax.f32 %v1272, %v1274
          %1559 = vmax.xlane.f32.xlu0 %v1558
          %v1560 = vpop.xlane.xlu0 %1559
          %v1561 = vmax.f32 %v1276, %v1278
          %1562 = vmax.xlane.f32.xlu0 %v1561
          %v1563 = vpop.xlane.xlu0 %1562
          %v1564 = vmax.f32 %v1282, %v1284
          %1565 = vmax.xlane.f32.xlu0 %v1564
          %v1566 = vpop.xlane.xlu0 %1565
          %v1567 = vmax.f32 %v1286, %v1288
          %1568 = vmax.xlane.f32.xlu0 %v1567
          %v1569 = vpop.xlane.xlu0 %1568
          %v1570 = vmax.f32 %v1292, %v1294
          %1571 = vmax.xlane.f32.xlu0 %v1570
          %v1572 = vpop.xlane.xlu0 %1571
          %v1573 = vmax.f32 %v1296, %v1298
          %1574 = vmax.xlane.f32.xlu0 %v1573
          %v1575 = vpop.xlane.xlu0 %1574
          %v1576 = vmax.f32 %v1302, %v1304
          %1577 = vmax.xlane.f32.xlu0 %v1576
          %v1578 = vpop.xlane.xlu0 %1577
          %v1579 = vmax.f32 %v1306, %v1308
          %1580 = vmax.xlane.f32.xlu0 %v1579
          %v1581 = vpop.xlane.xlu0 %1580
          %v1582 = vmax.f32 %v1312, %v1314
          %1583 = vmax.xlane.f32.xlu0 %v1582
          %v1584 = vpop.xlane.xlu0 %1583
          %v1585 = vmax.f32 %v1316, %v1318
          %1586 = vmax.xlane.f32.xlu0 %v1585
          %v1587 = vpop.xlane.xlu0 %1586
          %v1588 = vmax.f32 %v1322, %v1324
          %1589 = vmax.xlane.f32.xlu0 %v1588
          %v1590 = vpop.xlane.xlu0 %1589
          %v1591 = vmax.f32 %v1326, %v1328
          %1592 = vmax.xlane.f32.xlu0 %v1591
          %v1593 = vpop.xlane.xlu0 %1592
          %v1594 = vmax.f32 %v1332, %v1334
          %1595 = vmax.xlane.f32.xlu0 %v1594
          %v1596 = vpop.xlane.xlu0 %1595
          %v1597 = vmax.f32 %v1336, %v1338
          %1598 = vmax.xlane.f32.xlu0 %v1597
          %v1599 = vpop.xlane.xlu0 %1598
          %v1600 = vmax.f32 %v1342, %v1344
          %1601 = vmax.xlane.f32.xlu0 %v1600
          %v1602 = vpop.xlane.xlu0 %1601
          %v1603 = vmax.f32 %v1346, %v1348
          %1604 = vmax.xlane.f32.xlu0 %v1603
          %v1605 = vpop.xlane.xlu0 %1604
          %v1606 = vmax.f32 %v1350, %v1416
          %v1607 = vmax.f32 %v1351, %v1419
          %v1608 = vmax.f32 %v1352, %v1422
          %v1609 = vmax.f32 %v1353, %v1425
          %v1610 = vmax.f32 %v1354, %v1428
          %v1611 = vmax.f32 %v1355, %v1431
          %v1612 = vmax.f32 %v1356, %v1434
          %v1613 = vmax.f32 %v1357, %v1437
          %v1614 = vmax.f32 %v1358, %v1440
          %v1615 = vmax.f32 %v1359, %v1443
          %v1616 = vmax.f32 %v1360, %v1446
          %v1617 = vmax.f32 %v1361, %v1449
          %v1618 = vmax.f32 %v1362, %v1452
          %v1619 = vmax.f32 %v1363, %v1455
          %v1620 = vmax.f32 %v1364, %v1458
          %v1621 = vmax.f32 %v1365, %v1461
          %v1622 = vmax.f32 %v1366, %v1464
          %v1623 = vmax.f32 %v1367, %v1467
          %v1624 = vmax.f32 %v1368, %v1470
          %v1625 = vmax.f32 %v1369, %v1473
          %v1626 = vmax.f32 %v1370, %v1476
          %v1627 = vmax.f32 %v1371, %v1479
          %v1628 = vmax.f32 %v1372, %v1482
          %v1629 = vmax.f32 %v1373, %v1485
          %v1630 = vmax.f32 %v1374, %v1488
          %v1631 = vmax.f32 %v1375, %v1491
          %v1632 = vmax.f32 %v1376, %v1494
          %v1633 = vmax.f32 %v1377, %v1497
          %v1634 = vmax.f32 %v1378, %v1500
          %v1635 = vmax.f32 %v1379, %v1503
          %v1636 = vmax.f32 %v1380, %v1506
          %v1637 = vmax.f32 %v1381, %v1509
          %v1638 = vmax.f32 %v1382, %v1512
          %v1639 = vmax.f32 %v1383, %v1515
          %v1640 = vmax.f32 %v1384, %v1518
          %v1641 = vmax.f32 %v1385, %v1521
          %v1642 = vmax.f32 %v1386, %v1524
          %v1643 = vmax.f32 %v1387, %v1527
          %v1644 = vmax.f32 %v1388, %v1530
          %v1645 = vmax.f32 %v1389, %v1533
          %v1646 = vmax.f32 %v1390, %v1536
          %v1647 = vmax.f32 %v1391, %v1539
          %v1648 = vmax.f32 %v1392, %v1542
          %v1649 = vmax.f32 %v1393, %v1545
          %v1650 = vmax.f32 %v1394, %v1548
          %v1651 = vmax.f32 %v1395, %v1551
          %v1652 = vmax.f32 %v1396, %v1554
          %v1653 = vmax.f32 %v1397, %v1557
          %v1654 = vmax.f32 %v1398, %v1560
          %v1655 = vmax.f32 %v1399, %v1563
          %v1656 = vmax.f32 %v1400, %v1566
          %v1657 = vmax.f32 %v1401, %v1569
          %v1658 = vmax.f32 %v1402, %v1572
          %v1659 = vmax.f32 %v1403, %v1575
          %v1660 = vmax.f32 %v1404, %v1578
          %v1661 = vmax.f32 %v1405, %v1581
          %v1662 = vmax.f32 %v1406, %v1584
          %v1663 = vmax.f32 %v1407, %v1587
          %v1664 = vmax.f32 %v1408, %v1590
          %v1665 = vmax.f32 %v1409, %v1593
          %v1666 = vmax.f32 %v1410, %v1596
          %v1667 = vmax.f32 %v1411, %v1599
          %v1668 = vmax.f32 %v1412, %v1602
          %v1669 = vmax.f32 %v1413, %v1605
          %v1670 = vsub.f32 %v1350, %v1606
          %v1671 = vsub.f32 %v1351, %v1607
          %v1672 = vsub.f32 %v1352, %v1608
          %v1673 = vsub.f32 %v1353, %v1609
          %v1674 = vsub.f32 %v1354, %v1610
          %v1675 = vsub.f32 %v1355, %v1611
          %v1676 = vsub.f32 %v1356, %v1612
          %v1677 = vsub.f32 %v1357, %v1613
          %v1678 = vsub.f32 %v1358, %v1614
          %v1679 = vsub.f32 %v1359, %v1615
          %v1680 = vsub.f32 %v1360, %v1616
          %v1681 = vsub.f32 %v1361, %v1617
          %v1682 = vsub.f32 %v1362, %v1618
          %v1683 = vsub.f32 %v1363, %v1619
          %v1684 = vsub.f32 %v1364, %v1620
          %v1685 = vsub.f32 %v1365, %v1621
          %v1686 = vsub.f32 %v1366, %v1622
          %v1687 = vsub.f32 %v1367, %v1623
          %v1688 = vsub.f32 %v1368, %v1624
          %v1689 = vsub.f32 %v1369, %v1625
          %v1690 = vsub.f32 %v1370, %v1626
          %v1691 = vsub.f32 %v1371, %v1627
          %v1692 = vsub.f32 %v1372, %v1628
          %v1693 = vsub.f32 %v1373, %v1629
          %v1694 = vsub.f32 %v1374, %v1630
          %v1695 = vsub.f32 %v1375, %v1631
          %v1696 = vsub.f32 %v1376, %v1632
          %v1697 = vsub.f32 %v1377, %v1633
          %v1698 = vsub.f32 %v1378, %v1634
          %v1699 = vsub.f32 %v1379, %v1635
          %v1700 = vsub.f32 %v1380, %v1636
          %v1701 = vsub.f32 %v1381, %v1637
          %v1702 = vsub.f32 %v1382, %v1638
          %v1703 = vsub.f32 %v1383, %v1639
          %v1704 = vsub.f32 %v1384, %v1640
          %v1705 = vsub.f32 %v1385, %v1641
          %v1706 = vsub.f32 %v1386, %v1642
          %v1707 = vsub.f32 %v1387, %v1643
          %v1708 = vsub.f32 %v1388, %v1644
          %v1709 = vsub.f32 %v1389, %v1645
          %v1710 = vsub.f32 %v1390, %v1646
          %v1711 = vsub.f32 %v1391, %v1647
          %v1712 = vsub.f32 %v1392, %v1648
          %v1713 = vsub.f32 %v1393, %v1649
          %v1714 = vsub.f32 %v1394, %v1650
          %v1715 = vsub.f32 %v1395, %v1651
          %v1716 = vsub.f32 %v1396, %v1652
          %v1717 = vsub.f32 %v1397, %v1653
          %v1718 = vsub.f32 %v1398, %v1654
          %v1719 = vsub.f32 %v1399, %v1655
          %v1720 = vsub.f32 %v1400, %v1656
          %v1721 = vsub.f32 %v1401, %v1657
          %v1722 = vsub.f32 %v1402, %v1658
          %v1723 = vsub.f32 %v1403, %v1659
          %v1724 = vsub.f32 %v1404, %v1660
          %v1725 = vsub.f32 %v1405, %v1661
          %v1726 = vsub.f32 %v1406, %v1662
          %v1727 = vsub.f32 %v1407, %v1663
          %v1728 = vsub.f32 %v1408, %v1664
          %v1729 = vsub.f32 %v1409, %v1665
          %v1730 = vsub.f32 %v1410, %v1666
          %v1731 = vsub.f32 %v1411, %v1667
          %v1732 = vsub.f32 %v1412, %v1668
          %v1733 = vsub.f32 %v1413, %v1669
          %v1734 = vmul.f32 %v1670, 1.442695
          %v1735 = vpow.pop %v1734
          %v1736 = vmul.f32 %v1671, 1.442695
          %v1737 = vpow.pop %v1736
          %v1738 = vmul.f32 %v1672, 1.442695
          %v1739 = vpow.pop %v1738
          %v1740 = vmul.f32 %v1673, 1.442695
          %v1741 = vpow.pop %v1740
          %v1742 = vmul.f32 %v1674, 1.442695
          %v1743 = vpow.pop %v1742
          %v1744 = vmul.f32 %v1675, 1.442695
          %v1745 = vpow.pop %v1744
          %v1746 = vmul.f32 %v1676, 1.442695
          %v1747 = vpow.pop %v1746
          %v1748 = vmul.f32 %v1677, 1.442695
          %v1749 = vpow.pop %v1748
          %v1750 = vmul.f32 %v1678, 1.442695
          %v1751 = vpow.pop %v1750
          %v1752 = vmul.f32 %v1679, 1.442695
          %v1753 = vpow.pop %v1752
          %v1754 = vmul.f32 %v1680, 1.442695
          %v1755 = vpow.pop %v1754
          %v1756 = vmul.f32 %v1681, 1.442695
          %v1757 = vpow.pop %v1756
          %v1758 = vmul.f32 %v1682, 1.442695
          %v1759 = vpow.pop %v1758
          %v1760 = vmul.f32 %v1683, 1.442695
          %v1761 = vpow.pop %v1760
          %v1762 = vmul.f32 %v1684, 1.442695
          %v1763 = vpow.pop %v1762
          %v1764 = vmul.f32 %v1685, 1.442695
          %v1765 = vpow.pop %v1764
          %v1766 = vmul.f32 %v1686, 1.442695
          %v1767 = vpow.pop %v1766
          %v1768 = vmul.f32 %v1687, 1.442695
          %v1769 = vpow.pop %v1768
          %v1770 = vmul.f32 %v1688, 1.442695
          %v1771 = vpow.pop %v1770
          %v1772 = vmul.f32 %v1689, 1.442695
          %v1773 = vpow.pop %v1772
          %v1774 = vmul.f32 %v1690, 1.442695
          %v1775 = vpow.pop %v1774
          %v1776 = vmul.f32 %v1691, 1.442695
          %v1777 = vpow.pop %v1776
          %v1778 = vmul.f32 %v1692, 1.442695
          %v1779 = vpow.pop %v1778
          %v1780 = vmul.f32 %v1693, 1.442695
          %v1781 = vpow.pop %v1780
          %v1782 = vmul.f32 %v1694, 1.442695
          %v1783 = vpow.pop %v1782
          %v1784 = vmul.f32 %v1695, 1.442695
          %v1785 = vpow.pop %v1784
          %v1786 = vmul.f32 %v1696, 1.442695
          %v1787 = vpow.pop %v1786
          %v1788 = vmul.f32 %v1697, 1.442695
          %v1789 = vpow.pop %v1788
          %v1790 = vmul.f32 %v1698, 1.442695
          %v1791 = vpow.pop %v1790
          %v1792 = vmul.f32 %v1699, 1.442695
          %v1793 = vpow.pop %v1792
          %v1794 = vmul.f32 %v1700, 1.442695
          %v1795 = vpow.pop %v1794
          %v1796 = vmul.f32 %v1701, 1.442695
          %v1797 = vpow.pop %v1796
          %v1798 = vmul.f32 %v1702, 1.442695
          %v1799 = vpow.pop %v1798
          %v1800 = vmul.f32 %v1703, 1.442695
          %v1801 = vpow.pop %v1800
          %v1802 = vmul.f32 %v1704, 1.442695
          %v1803 = vpow.pop %v1802
          %v1804 = vmul.f32 %v1705, 1.442695
          %v1805 = vpow.pop %v1804
          %v1806 = vmul.f32 %v1706, 1.442695
          %v1807 = vpow.pop %v1806
          %v1808 = vmul.f32 %v1707, 1.442695
          %v1809 = vpow.pop %v1808
          %v1810 = vmul.f32 %v1708, 1.442695
          %v1811 = vpow.pop %v1810
          %v1812 = vmul.f32 %v1709, 1.442695
          %v1813 = vpow.pop %v1812
          %v1814 = vmul.f32 %v1710, 1.442695
          %v1815 = vpow.pop %v1814
          %v1816 = vmul.f32 %v1711, 1.442695
          %v1817 = vpow.pop %v1816
          %v1818 = vmul.f32 %v1712, 1.442695
          %v1819 = vpow.pop %v1818
          %v1820 = vmul.f32 %v1713, 1.442695
          %v1821 = vpow.pop %v1820
          %v1822 = vmul.f32 %v1714, 1.442695
          %v1823 = vpow.pop %v1822
          %v1824 = vmul.f32 %v1715, 1.442695
          %v1825 = vpow.pop %v1824
          %v1826 = vmul.f32 %v1716, 1.442695
          %v1827 = vpow.pop %v1826
          %v1828 = vmul.f32 %v1717, 1.442695
          %v1829 = vpow.pop %v1828
          %v1830 = vmul.f32 %v1718, 1.442695
          %v1831 = vpow.pop %v1830
          %v1832 = vmul.f32 %v1719, 1.442695
          %v1833 = vpow.pop %v1832
          %v1834 = vmul.f32 %v1720, 1.442695
          %v1835 = vpow.pop %v1834
          %v1836 = vmul.f32 %v1721, 1.442695
          %v1837 = vpow.pop %v1836
          %v1838 = vmul.f32 %v1722, 1.442695
          %v1839 = vpow.pop %v1838
          %v1840 = vmul.f32 %v1723, 1.442695
          %v1841 = vpow.pop %v1840
          %v1842 = vmul.f32 %v1724, 1.442695
          %v1843 = vpow.pop %v1842
          %v1844 = vmul.f32 %v1725, 1.442695
          %v1845 = vpow.pop %v1844
          %v1846 = vmul.f32 %v1726, 1.442695
          %v1847 = vpow.pop %v1846
          %v1848 = vmul.f32 %v1727, 1.442695
          %v1849 = vpow.pop %v1848
          %v1850 = vmul.f32 %v1728, 1.442695
          %v1851 = vpow.pop %v1850
          %v1852 = vmul.f32 %v1729, 1.442695
          %v1853 = vpow.pop %v1852
          %v1854 = vmul.f32 %v1730, 1.442695
          %v1855 = vpow.pop %v1854
          %v1856 = vmul.f32 %v1731, 1.442695
          %v1857 = vpow.pop %v1856
          %v1858 = vmul.f32 %v1732, 1.442695
          %v1859 = vpow.pop %v1858
          %v1860 = vmul.f32 %v1733, 1.442695
          %v1861 = vpow.pop %v1860
          %1863 = vset.pattern.permute.xlu0 0
          %1864 = vperm.xlu0 %1863, %v1606
          %v1865 = vpop.permute.xlu0 %1864
          %1868 = vset.pattern.permute.xlu0 0
          %1869 = vperm.xlu0 %1868, %v1607
          %v1870 = vpop.permute.xlu0 %1869
          %1873 = vset.pattern.permute.xlu0 0
          %1874 = vperm.xlu0 %1873, %v1608
          %v1875 = vpop.permute.xlu0 %1874
          %1878 = vset.pattern.permute.xlu0 0
          %1879 = vperm.xlu0 %1878, %v1609
          %v1880 = vpop.permute.xlu0 %1879
          %1883 = vset.pattern.permute.xlu0 0
          %1884 = vperm.xlu0 %1883, %v1610
          %v1885 = vpop.permute.xlu0 %1884
          %1888 = vset.pattern.permute.xlu0 0
          %1889 = vperm.xlu0 %1888, %v1611
          %v1890 = vpop.permute.xlu0 %1889
          %1893 = vset.pattern.permute.xlu0 0
          %1894 = vperm.xlu0 %1893, %v1612
          %v1895 = vpop.permute.xlu0 %1894
          %1898 = vset.pattern.permute.xlu0 0
          %1899 = vperm.xlu0 %1898, %v1613
          %v1900 = vpop.permute.xlu0 %1899
          %1903 = vset.pattern.permute.xlu0 0
          %1904 = vperm.xlu0 %1903, %v1614
          %v1905 = vpop.permute.xlu0 %1904
          %1908 = vset.pattern.permute.xlu0 0
          %1909 = vperm.xlu0 %1908, %v1615
          %v1910 = vpop.permute.xlu0 %1909
          %1913 = vset.pattern.permute.xlu0 0
          %1914 = vperm.xlu0 %1913, %v1616
          %v1915 = vpop.permute.xlu0 %1914
          %1918 = vset.pattern.permute.xlu0 0
          %1919 = vperm.xlu0 %1918, %v1617
          %v1920 = vpop.permute.xlu0 %1919
          %1923 = vset.pattern.permute.xlu0 0
          %1924 = vperm.xlu0 %1923, %v1618
          %v1925 = vpop.permute.xlu0 %1924
          %1928 = vset.pattern.permute.xlu0 0
          %1929 = vperm.xlu0 %1928, %v1619
          %v1930 = vpop.permute.xlu0 %1929
          %1933 = vset.pattern.permute.xlu0 0
          %1934 = vperm.xlu0 %1933, %v1620
          %v1935 = vpop.permute.xlu0 %1934
          %1938 = vset.pattern.permute.xlu0 0
          %1939 = vperm.xlu0 %1938, %v1621
          %v1940 = vpop.permute.xlu0 %1939
          %1943 = vset.pattern.permute.xlu0 0
          %1944 = vperm.xlu0 %1943, %v1622
          %v1945 = vpop.permute.xlu0 %1944
          %1948 = vset.pattern.permute.xlu0 0
          %1949 = vperm.xlu0 %1948, %v1623
          %v1950 = vpop.permute.xlu0 %1949
          %1953 = vset.pattern.permute.xlu0 0
          %1954 = vperm.xlu0 %1953, %v1624
          %v1955 = vpop.permute.xlu0 %1954
          %1958 = vset.pattern.permute.xlu0 0
          %1959 = vperm.xlu0 %1958, %v1625
          %v1960 = vpop.permute.xlu0 %1959
          %1963 = vset.pattern.permute.xlu0 0
          %1964 = vperm.xlu0 %1963, %v1626
          %v1965 = vpop.permute.xlu0 %1964
          %1968 = vset.pattern.permute.xlu0 0
          %1969 = vperm.xlu0 %1968, %v1627
          %v1970 = vpop.permute.xlu0 %1969
          %1973 = vset.pattern.permute.xlu0 0
          %1974 = vperm.xlu0 %1973, %v1628
          %v1975 = vpop.permute.xlu0 %1974
          %1978 = vset.pattern.permute.xlu0 0
          %1979 = vperm.xlu0 %1978, %v1629
          %v1980 = vpop.permute.xlu0 %1979
          %1983 = vset.pattern.permute.xlu0 0
          %1984 = vperm.xlu0 %1983, %v1630
          %v1985 = vpop.permute.xlu0 %1984
          %1988 = vset.pattern.permute.xlu0 0
          %1989 = vperm.xlu0 %1988, %v1631
          %v1990 = vpop.permute.xlu0 %1989
          %1993 = vset.pattern.permute.xlu0 0
          %1994 = vperm.xlu0 %1993, %v1632
          %v1995 = vpop.permute.xlu0 %1994
          %1998 = vset.pattern.permute.xlu0 0
          %1999 = vperm.xlu0 %1998, %v1633
          %v2000 = vpop.permute.xlu0 %1999
          %2003 = vset.pattern.permute.xlu0 0
          %2004 = vperm.xlu0 %2003, %v1634
          %v2005 = vpop.permute.xlu0 %2004
          %2008 = vset.pattern.permute.xlu0 0
          %2009 = vperm.xlu0 %2008, %v1635
          %v2010 = vpop.permute.xlu0 %2009
          %2013 = vset.pattern.permute.xlu0 0
          %2014 = vperm.xlu0 %2013, %v1636
          %v2015 = vpop.permute.xlu0 %2014
          %2018 = vset.pattern.permute.xlu0 0
          %2019 = vperm.xlu0 %2018, %v1637
          %v2020 = vpop.permute.xlu0 %2019
          %2023 = vset.pattern.permute.xlu0 0
          %2024 = vperm.xlu0 %2023, %v1638
          %v2025 = vpop.permute.xlu0 %2024
          %2028 = vset.pattern.permute.xlu0 0
          %2029 = vperm.xlu0 %2028, %v1639
          %v2030 = vpop.permute.xlu0 %2029
          %2033 = vset.pattern.permute.xlu0 0
          %2034 = vperm.xlu0 %2033, %v1640
          %v2035 = vpop.permute.xlu0 %2034
          %2038 = vset.pattern.permute.xlu0 0
          %2039 = vperm.xlu0 %2038, %v1641
          %v2040 = vpop.permute.xlu0 %2039
          %2043 = vset.pattern.permute.xlu0 0
          %2044 = vperm.xlu0 %2043, %v1642
          %v2045 = vpop.permute.xlu0 %2044
          %2048 = vset.pattern.permute.xlu0 0
          %2049 = vperm.xlu0 %2048, %v1643
          %v2050 = vpop.permute.xlu0 %2049
          %2053 = vset.pattern.permute.xlu0 0
          %2054 = vperm.xlu0 %2053, %v1644
          %v2055 = vpop.permute.xlu0 %2054
          %2058 = vset.pattern.permute.xlu0 0
          %2059 = vperm.xlu0 %2058, %v1645
          %v2060 = vpop.permute.xlu0 %2059
          %2063 = vset.pattern.permute.xlu0 0
          %2064 = vperm.xlu0 %2063, %v1646
          %v2065 = vpop.permute.xlu0 %2064
          %2068 = vset.pattern.permute.xlu0 0
          %2069 = vperm.xlu0 %2068, %v1647
          %v2070 = vpop.permute.xlu0 %2069
          %2073 = vset.pattern.permute.xlu0 0
          %2074 = vperm.xlu0 %2073, %v1648
          %v2075 = vpop.permute.xlu0 %2074
          %2078 = vset.pattern.permute.xlu0 0
          %2079 = vperm.xlu0 %2078, %v1649
          %v2080 = vpop.permute.xlu0 %2079
          %2083 = vset.pattern.permute.xlu0 0
          %2084 = vperm.xlu0 %2083, %v1650
          %v2085 = vpop.permute.xlu0 %2084
          %2088 = vset.pattern.permute.xlu0 0
          %2089 = vperm.xlu0 %2088, %v1651
          %v2090 = vpop.permute.xlu0 %2089
          %2093 = vset.pattern.permute.xlu0 0
          %2094 = vperm.xlu0 %2093, %v1652
          %v2095 = vpop.permute.xlu0 %2094
          %2098 = vset.pattern.permute.xlu0 0
          %2099 = vperm.xlu0 %2098, %v1653
          %v2100 = vpop.permute.xlu0 %2099
          %2103 = vset.pattern.permute.xlu0 0
          %2104 = vperm.xlu0 %2103, %v1654
          %v2105 = vpop.permute.xlu0 %2104
          %2108 = vset.pattern.permute.xlu0 0
          %2109 = vperm.xlu0 %2108, %v1655
          %v2110 = vpop.permute.xlu0 %2109
          %2113 = vset.pattern.permute.xlu0 0
          %2114 = vperm.xlu0 %2113, %v1656
          %v2115 = vpop.permute.xlu0 %2114
          %2118 = vset.pattern.permute.xlu0 0
          %2119 = vperm.xlu0 %2118, %v1657
          %v2120 = vpop.permute.xlu0 %2119
          %2123 = vset.pattern.permute.xlu0 0
          %2124 = vperm.xlu0 %2123, %v1658
          %v2125 = vpop.permute.xlu0 %2124
          %2128 = vset.pattern.permute.xlu0 0
          %2129 = vperm.xlu0 %2128, %v1659
          %v2130 = vpop.permute.xlu0 %2129
          %2133 = vset.pattern.permute.xlu0 0
          %2134 = vperm.xlu0 %2133, %v1660
          %v2135 = vpop.permute.xlu0 %2134
          %2138 = vset.pattern.permute.xlu0 0
          %2139 = vperm.xlu0 %2138, %v1661
          %v2140 = vpop.permute.xlu0 %2139
          %2143 = vset.pattern.permute.xlu0 0
          %2144 = vperm.xlu0 %2143, %v1662
          %v2145 = vpop.permute.xlu0 %2144
          %2148 = vset.pattern.permute.xlu0 0
          %2149 = vperm.xlu0 %2148, %v1663
          %v2150 = vpop.permute.xlu0 %2149
          %2153 = vset.pattern.permute.xlu0 0
          %2154 = vperm.xlu0 %2153, %v1664
          %v2155 = vpop.permute.xlu0 %2154
          %2158 = vset.pattern.permute.xlu0 0
          %2159 = vperm.xlu0 %2158, %v1665
          %v2160 = vpop.permute.xlu0 %2159
          %2163 = vset.pattern.permute.xlu0 0
          %2164 = vperm.xlu0 %2163, %v1666
          %v2165 = vpop.permute.xlu0 %2164
          %2168 = vset.pattern.permute.xlu0 0
          %2169 = vperm.xlu0 %2168, %v1667
          %v2170 = vpop.permute.xlu0 %2169
          %2173 = vset.pattern.permute.xlu0 0
          %2174 = vperm.xlu0 %2173, %v1668
          %v2175 = vpop.permute.xlu0 %2174
          %2178 = vset.pattern.permute.xlu0 0
          %2179 = vperm.xlu0 %2178, %v1669
          %v2180 = vpop.permute.xlu0 %2179
          %v2182 = vsub.f32 %v1032, %v1865
          %v2183 = vsub.f32 %v1034, %v1865
          %v2184 = vsub.f32 %v1036, %v1870
          %v2185 = vsub.f32 %v1038, %v1870
          %v2186 = vsub.f32 %v1042, %v1875
          %v2187 = vsub.f32 %v1044, %v1875
          %v2188 = vsub.f32 %v1046, %v1880
          %v2189 = vsub.f32 %v1048, %v1880
          %v2190 = vsub.f32 %v1052, %v1885
          %v2191 = vsub.f32 %v1054, %v1885
          %v2192 = vsub.f32 %v1056, %v1890
          %v2193 = vsub.f32 %v1058, %v1890
          %v2194 = vsub.f32 %v1062, %v1895
          %v2195 = vsub.f32 %v1064, %v1895
          %v2196 = vsub.f32 %v1066, %v1900
          %v2197 = vsub.f32 %v1068, %v1900
          %v2198 = vsub.f32 %v1072, %v1905
          %v2199 = vsub.f32 %v1074, %v1905
          %v2200 = vsub.f32 %v1076, %v1910
          %v2201 = vsub.f32 %v1078, %v1910
          %v2202 = vsub.f32 %v1082, %v1915
          %v2203 = vsub.f32 %v1084, %v1915
          %v2204 = vsub.f32 %v1086, %v1920
          %v2205 = vsub.f32 %v1088, %v1920
          %v2206 = vsub.f32 %v1092, %v1925
          %v2207 = vsub.f32 %v1094, %v1925
          %v2208 = vsub.f32 %v1096, %v1930
          %v2209 = vsub.f32 %v1098, %v1930
          %v2210 = vsub.f32 %v1102, %v1935
          %v2211 = vsub.f32 %v1104, %v1935
          %v2212 = vsub.f32 %v1106, %v1940
          %v2213 = vsub.f32 %v1108, %v1940
          %v2214 = vsub.f32 %v1112, %v1945
          %v2215 = vsub.f32 %v1114, %v1945
          %v2216 = vsub.f32 %v1116, %v1950
          %v2217 = vsub.f32 %v1118, %v1950
          %v2218 = vsub.f32 %v1122, %v1955
          %v2219 = vsub.f32 %v1124, %v1955
          %v2220 = vsub.f32 %v1126, %v1960
          %v2221 = vsub.f32 %v1128, %v1960
          %v2222 = vsub.f32 %v1132, %v1965
          %v2223 = vsub.f32 %v1134, %v1965
          %v2224 = vsub.f32 %v1136, %v1970
          %v2225 = vsub.f32 %v1138, %v1970
          %v2226 = vsub.f32 %v1142, %v1975
          %v2227 = vsub.f32 %v1144, %v1975
          %v2228 = vsub.f32 %v1146, %v1980
          %v2229 = vsub.f32 %v1148, %v1980
          %v2230 = vsub.f32 %v1152, %v1985
          %v2231 = vsub.f32 %v1154, %v1985
          %v2232 = vsub.f32 %v1156, %v1990
          %v2233 = vsub.f32 %v1158, %v1990
          %v2234 = vsub.f32 %v1162, %v1995
          %v2235 = vsub.f32 %v1164, %v1995
          %v2236 = vsub.f32 %v1166, %v2000
          %v2237 = vsub.f32 %v1168, %v2000
          %v2238 = vsub.f32 %v1172, %v2005
          %v2239 = vsub.f32 %v1174, %v2005
          %v2240 = vsub.f32 %v1176, %v2010
          %v2241 = vsub.f32 %v1178, %v2010
          %v2242 = vsub.f32 %v1182, %v2015
          %v2243 = vsub.f32 %v1184, %v2015
          %v2244 = vsub.f32 %v1186, %v2020
          %v2245 = vsub.f32 %v1188, %v2020
          %v2246 = vsub.f32 %v1192, %v2025
          %v2247 = vsub.f32 %v1194, %v2025
          %v2248 = vsub.f32 %v1196, %v2030
          %v2249 = vsub.f32 %v1198, %v2030
          %v2250 = vsub.f32 %v1202, %v2035
          %v2251 = vsub.f32 %v1204, %v2035
          %v2252 = vsub.f32 %v1206, %v2040
          %v2253 = vsub.f32 %v1208, %v2040
          %v2254 = vsub.f32 %v1212, %v2045
          %v2255 = vsub.f32 %v1214, %v2045
          %v2256 = vsub.f32 %v1216, %v2050
          %v2257 = vsub.f32 %v1218, %v2050
          %v2258 = vsub.f32 %v1222, %v2055
          %v2259 = vsub.f32 %v1224, %v2055
          %v2260 = vsub.f32 %v1226, %v2060
          %v2261 = vsub.f32 %v1228, %v2060
          %v2262 = vsub.f32 %v1232, %v2065
          %v2263 = vsub.f32 %v1234, %v2065
          %v2264 = vsub.f32 %v1236, %v2070
          %v2265 = vsub.f32 %v1238, %v2070
          %v2266 = vsub.f32 %v1242, %v2075
          %v2267 = vsub.f32 %v1244, %v2075
          %v2268 = vsub.f32 %v1246, %v2080
          %v2269 = vsub.f32 %v1248, %v2080
          %v2270 = vsub.f32 %v1252, %v2085
          %v2271 = vsub.f32 %v1254, %v2085
          %v2272 = vsub.f32 %v1256, %v2090
          %v2273 = vsub.f32 %v1258, %v2090
          %v2274 = vsub.f32 %v1262, %v2095
          %v2275 = vsub.f32 %v1264, %v2095
          %v2276 = vsub.f32 %v1266, %v2100
          %v2277 = vsub.f32 %v1268, %v2100
          %v2278 = vsub.f32 %v1272, %v2105
          %v2279 = vsub.f32 %v1274, %v2105
          %v2280 = vsub.f32 %v1276, %v2110
          %v2281 = vsub.f32 %v1278, %v2110
          %v2282 = vsub.f32 %v1282, %v2115
          %v2283 = vsub.f32 %v1284, %v2115
          %v2284 = vsub.f32 %v1286, %v2120
          %v2285 = vsub.f32 %v1288, %v2120
          %v2286 = vsub.f32 %v1292, %v2125
          %v2287 = vsub.f32 %v1294, %v2125
          %v2288 = vsub.f32 %v1296, %v2130
          %v2289 = vsub.f32 %v1298, %v2130
          %v2290 = vsub.f32 %v1302, %v2135
          %v2291 = vsub.f32 %v1304, %v2135
          %v2292 = vsub.f32 %v1306, %v2140
          %v2293 = vsub.f32 %v1308, %v2140
          %v2294 = vsub.f32 %v1312, %v2145
          %v2295 = vsub.f32 %v1314, %v2145
          %v2296 = vsub.f32 %v1316, %v2150
          %v2297 = vsub.f32 %v1318, %v2150
          %v2298 = vsub.f32 %v1322, %v2155
          %v2299 = vsub.f32 %v1324, %v2155
          %v2300 = vsub.f32 %v1326, %v2160
          %v2301 = vsub.f32 %v1328, %v2160
          %v2302 = vsub.f32 %v1332, %v2165
          %v2303 = vsub.f32 %v1334, %v2165
          %v2304 = vsub.f32 %v1336, %v2170
          %v2305 = vsub.f32 %v1338, %v2170
          %v2306 = vsub.f32 %v1342, %v2175
          %v2307 = vsub.f32 %v1344, %v2175
          %v2308 = vsub.f32 %v1346, %v2180
          %v2309 = vsub.f32 %v1348, %v2180
          %v2310 = vmul.f32 %v2182, 1.442695
          %v2311 = vpow.pop %v2310
          %v2312 = vmul.f32 %v2183, 1.442695
          %v2313 = vpow.pop %v2312
          %v2314 = vmul.f32 %v2184, 1.442695
          %v2315 = vpow.pop %v2314
          %v2316 = vmul.f32 %v2185, 1.442695
          %v2317 = vpow.pop %v2316
          %v2318 = vmul.f32 %v2186, 1.442695
          %v2319 = vpow.pop %v2318
          %v2320 = vmul.f32 %v2187, 1.442695
          %v2321 = vpow.pop %v2320
          %v2322 = vmul.f32 %v2188, 1.442695
          %v2323 = vpow.pop %v2322
          %v2324 = vmul.f32 %v2189, 1.442695
          %v2325 = vpow.pop %v2324
          %v2326 = vmul.f32 %v2190, 1.442695
          %v2327 = vpow.pop %v2326
          %v2328 = vmul.f32 %v2191, 1.442695
          %v2329 = vpow.pop %v2328
          %v2330 = vmul.f32 %v2192, 1.442695
          %v2331 = vpow.pop %v2330
          %v2332 = vmul.f32 %v2193, 1.442695
          %v2333 = vpow.pop %v2332
          %v2334 = vmul.f32 %v2194, 1.442695
          %v2335 = vpow.pop %v2334
          %v2336 = vmul.f32 %v2195, 1.442695
          %v2337 = vpow.pop %v2336
          %v2338 = vmul.f32 %v2196, 1.442695
          %v2339 = vpow.pop %v2338
          %v2340 = vmul.f32 %v2197, 1.442695
          %v2341 = vpow.pop %v2340
          %v2342 = vmul.f32 %v2198, 1.442695
          %v2343 = vpow.pop %v2342
          %v2344 = vmul.f32 %v2199, 1.442695
          %v2345 = vpow.pop %v2344
          %v2346 = vmul.f32 %v2200, 1.442695
          %v2347 = vpow.pop %v2346
          %v2348 = vmul.f32 %v2201, 1.442695
          %v2349 = vpow.pop %v2348
          %v2350 = vmul.f32 %v2202, 1.442695
          %v2351 = vpow.pop %v2350
          %v2352 = vmul.f32 %v2203, 1.442695
          %v2353 = vpow.pop %v2352
          %v2354 = vmul.f32 %v2204, 1.442695
          %v2355 = vpow.pop %v2354
          %v2356 = vmul.f32 %v2205, 1.442695
          %v2357 = vpow.pop %v2356
          %v2358 = vmul.f32 %v2206, 1.442695
          %v2359 = vpow.pop %v2358
          %v2360 = vmul.f32 %v2207, 1.442695
          %v2361 = vpow.pop %v2360
          %v2362 = vmul.f32 %v2208, 1.442695
          %v2363 = vpow.pop %v2362
          %v2364 = vmul.f32 %v2209, 1.442695
          %v2365 = vpow.pop %v2364
          %v2366 = vmul.f32 %v2210, 1.442695
          %v2367 = vpow.pop %v2366
          %v2368 = vmul.f32 %v2211, 1.442695
          %v2369 = vpow.pop %v2368
          %v2370 = vmul.f32 %v2212, 1.442695
          %v2371 = vpow.pop %v2370
          %v2372 = vmul.f32 %v2213, 1.442695
          %v2373 = vpow.pop %v2372
          %v2374 = vmul.f32 %v2214, 1.442695
          %v2375 = vpow.pop %v2374
          %v2376 = vmul.f32 %v2215, 1.442695
          %v2377 = vpow.pop %v2376
          %v2378 = vmul.f32 %v2216, 1.442695
          %v2379 = vpow.pop %v2378
          %v2380 = vmul.f32 %v2217, 1.442695
          %v2381 = vpow.pop %v2380
          %v2382 = vmul.f32 %v2218, 1.442695
          %v2383 = vpow.pop %v2382
          %v2384 = vmul.f32 %v2219, 1.442695
          %v2385 = vpow.pop %v2384
          %v2386 = vmul.f32 %v2220, 1.442695
          %v2387 = vpow.pop %v2386
          %v2388 = vmul.f32 %v2221, 1.442695
          %v2389 = vpow.pop %v2388
          %v2390 = vmul.f32 %v2222, 1.442695
          %v2391 = vpow.pop %v2390
          %v2392 = vmul.f32 %v2223, 1.442695
          %v2393 = vpow.pop %v2392
          %v2394 = vmul.f32 %v2224, 1.442695
          %v2395 = vpow.pop %v2394
          %v2396 = vmul.f32 %v2225, 1.442695
          %v2397 = vpow.pop %v2396
          %v2398 = vmul.f32 %v2226, 1.442695
          %v2399 = vpow.pop %v2398
          %v2400 = vmul.f32 %v2227, 1.442695
          %v2401 = vpow.pop %v2400
          %v2402 = vmul.f32 %v2228, 1.442695
          %v2403 = vpow.pop %v2402
          %v2404 = vmul.f32 %v2229, 1.442695
          %v2405 = vpow.pop %v2404
          %v2406 = vmul.f32 %v2230, 1.442695
          %v2407 = vpow.pop %v2406
          %v2408 = vmul.f32 %v2231, 1.442695
          %v2409 = vpow.pop %v2408
          %v2410 = vmul.f32 %v2232, 1.442695
          %v2411 = vpow.pop %v2410
          %v2412 = vmul.f32 %v2233, 1.442695
          %v2413 = vpow.pop %v2412
          %v2414 = vmul.f32 %v2234, 1.442695
          %v2415 = vpow.pop %v2414
          %v2416 = vmul.f32 %v2235, 1.442695
          %v2417 = vpow.pop %v2416
          %v2418 = vmul.f32 %v2236, 1.442695
          %v2419 = vpow.pop %v2418
          %v2420 = vmul.f32 %v2237, 1.442695
          %v2421 = vpow.pop %v2420
          %v2422 = vmul.f32 %v2238, 1.442695
          %v2423 = vpow.pop %v2422
          %v2424 = vmul.f32 %v2239, 1.442695
          %v2425 = vpow.pop %v2424
          %v2426 = vmul.f32 %v2240, 1.442695
          %v2427 = vpow.pop %v2426
          %v2428 = vmul.f32 %v2241, 1.442695
          %v2429 = vpow.pop %v2428
          %v2430 = vmul.f32 %v2242, 1.442695
          %v2431 = vpow.pop %v2430
          %v2432 = vmul.f32 %v2243, 1.442695
          %v2433 = vpow.pop %v2432
          %v2434 = vmul.f32 %v2244, 1.442695
          %v2435 = vpow.pop %v2434
          %v2436 = vmul.f32 %v2245, 1.442695
          %v2437 = vpow.pop %v2436
          %v2438 = vmul.f32 %v2246, 1.442695
          %v2439 = vpow.pop %v2438
          %v2440 = vmul.f32 %v2247, 1.442695
          %v2441 = vpow.pop %v2440
          %v2442 = vmul.f32 %v2248, 1.442695
          %v2443 = vpow.pop %v2442
          %v2444 = vmul.f32 %v2249, 1.442695
          %v2445 = vpow.pop %v2444
          %v2446 = vmul.f32 %v2250, 1.442695
          %v2447 = vpow.pop %v2446
          %v2448 = vmul.f32 %v2251, 1.442695
          %v2449 = vpow.pop %v2448
          %v2450 = vmul.f32 %v2252, 1.442695
          %v2451 = vpow.pop %v2450
          %v2452 = vmul.f32 %v2253, 1.442695
          %v2453 = vpow.pop %v2452
          %v2454 = vmul.f32 %v2254, 1.442695
          %v2455 = vpow.pop %v2454
          %v2456 = vmul.f32 %v2255, 1.442695
          %v2457 = vpow.pop %v2456
          %v2458 = vmul.f32 %v2256, 1.442695
          %v2459 = vpow.pop %v2458
          %v2460 = vmul.f32 %v2257, 1.442695
          %v2461 = vpow.pop %v2460
          %v2462 = vmul.f32 %v2258, 1.442695
          %v2463 = vpow.pop %v2462
          %v2464 = vmul.f32 %v2259, 1.442695
          %v2465 = vpow.pop %v2464
          %v2466 = vmul.f32 %v2260, 1.442695
          %v2467 = vpow.pop %v2466
          %v2468 = vmul.f32 %v2261, 1.442695
          %v2469 = vpow.pop %v2468
          %v2470 = vmul.f32 %v2262, 1.442695
          %v2471 = vpow.pop %v2470
          %v2472 = vmul.f32 %v2263, 1.442695
          %v2473 = vpow.pop %v2472
          %v2474 = vmul.f32 %v2264, 1.442695
          %v2475 = vpow.pop %v2474
          %v2476 = vmul.f32 %v2265, 1.442695
          %v2477 = vpow.pop %v2476
          %v2478 = vmul.f32 %v2266, 1.442695
          %v2479 = vpow.pop %v2478
          %v2480 = vmul.f32 %v2267, 1.442695
          %v2481 = vpow.pop %v2480
          %v2482 = vmul.f32 %v2268, 1.442695
          %v2483 = vpow.pop %v2482
          %v2484 = vmul.f32 %v2269, 1.442695
          %v2485 = vpow.pop %v2484
          %v2486 = vmul.f32 %v2270, 1.442695
          %v2487 = vpow.pop %v2486
          %v2488 = vmul.f32 %v2271, 1.442695
          %v2489 = vpow.pop %v2488
          %v2490 = vmul.f32 %v2272, 1.442695
          %v2491 = vpow.pop %v2490
          %v2492 = vmul.f32 %v2273, 1.442695
          %v2493 = vpow.pop %v2492
          %v2494 = vmul.f32 %v2274, 1.442695
          %v2495 = vpow.pop %v2494
          %v2496 = vmul.f32 %v2275, 1.442695
          %v2497 = vpow.pop %v2496
          %v2498 = vmul.f32 %v2276, 1.442695
          %v2499 = vpow.pop %v2498
          %v2500 = vmul.f32 %v2277, 1.442695
          %v2501 = vpow.pop %v2500
          %v2502 = vmul.f32 %v2278, 1.442695
          %v2503 = vpow.pop %v2502
          %v2504 = vmul.f32 %v2279, 1.442695
          %v2505 = vpow.pop %v2504
          %v2506 = vmul.f32 %v2280, 1.442695
          %v2507 = vpow.pop %v2506
          %v2508 = vmul.f32 %v2281, 1.442695
          %v2509 = vpow.pop %v2508
          %v2510 = vmul.f32 %v2282, 1.442695
          %v2511 = vpow.pop %v2510
          %v2512 = vmul.f32 %v2283, 1.442695
          %v2513 = vpow.pop %v2512
          %v2514 = vmul.f32 %v2284, 1.442695
          %v2515 = vpow.pop %v2514
          %v2516 = vmul.f32 %v2285, 1.442695
          %v2517 = vpow.pop %v2516
          %v2518 = vmul.f32 %v2286, 1.442695
          %v2519 = vpow.pop %v2518
          %v2520 = vmul.f32 %v2287, 1.442695
          %v2521 = vpow.pop %v2520
          %v2522 = vmul.f32 %v2288, 1.442695
          %v2523 = vpow.pop %v2522
          %v2524 = vmul.f32 %v2289, 1.442695
          %v2525 = vpow.pop %v2524
          %v2526 = vmul.f32 %v2290, 1.442695
          %v2527 = vpow.pop %v2526
          %v2528 = vmul.f32 %v2291, 1.442695
          %v2529 = vpow.pop %v2528
          %v2530 = vmul.f32 %v2292, 1.442695
          %v2531 = vpow.pop %v2530
          %v2532 = vmul.f32 %v2293, 1.442695
          %v2533 = vpow.pop %v2532
          %v2534 = vmul.f32 %v2294, 1.442695
          %v2535 = vpow.pop %v2534
          %v2536 = vmul.f32 %v2295, 1.442695
          %v2537 = vpow.pop %v2536
          %v2538 = vmul.f32 %v2296, 1.442695
          %v2539 = vpow.pop %v2538
          %v2540 = vmul.f32 %v2297, 1.442695
          %v2541 = vpow.pop %v2540
          %v2542 = vmul.f32 %v2298, 1.442695
          %v2543 = vpow.pop %v2542
          %v2544 = vmul.f32 %v2299, 1.442695
          %v2545 = vpow.pop %v2544
          %v2546 = vmul.f32 %v2300, 1.442695
          %v2547 = vpow.pop %v2546
          %v2548 = vmul.f32 %v2301, 1.442695
          %v2549 = vpow.pop %v2548
          %v2550 = vmul.f32 %v2302, 1.442695
          %v2551 = vpow.pop %v2550
          %v2552 = vmul.f32 %v2303, 1.442695
          %v2553 = vpow.pop %v2552
          %v2554 = vmul.f32 %v2304, 1.442695
          %v2555 = vpow.pop %v2554
          %v2556 = vmul.f32 %v2305, 1.442695
          %v2557 = vpow.pop %v2556
          %v2558 = vmul.f32 %v2306, 1.442695
          %v2559 = vpow.pop %v2558
          %v2560 = vmul.f32 %v2307, 1.442695
          %v2561 = vpow.pop %v2560
          %v2562 = vmul.f32 %v2308, 1.442695
          %v2563 = vpow.pop %v2562
          %v2564 = vmul.f32 %v2309, 1.442695
          %v2565 = vpow.pop %v2564
          %v2566 = vld [vmem:[#allocation4] sm:$0xff]
          %v2567 = vld [vmem:[#allocation4 + $0x8] sm:$0xff]
          %v2568 = vld [vmem:[#allocation4 + $0x10] sm:$0xff]
          %v2569 = vld [vmem:[#allocation4 + $0x18] sm:$0xff]
          %v2570 = vld [vmem:[#allocation4 + $0x20] sm:$0xff]
          %v2571 = vld [vmem:[#allocation4 + $0x28] sm:$0xff]
          %v2572 = vld [vmem:[#allocation4 + $0x30] sm:$0xff]
          %v2573 = vld [vmem:[#allocation4 + $0x38] sm:$0xff]
          %v2574 = vld [vmem:[#allocation4 + $0x40] sm:$0xff]
          %v2575 = vld [vmem:[#allocation4 + $0x48] sm:$0xff]
          %v2576 = vld [vmem:[#allocation4 + $0x50] sm:$0xff]
          %v2577 = vld [vmem:[#allocation4 + $0x58] sm:$0xff]
          %v2578 = vld [vmem:[#allocation4 + $0x60] sm:$0xff]
          %v2579 = vld [vmem:[#allocation4 + $0x68] sm:$0xff]
          %v2580 = vld [vmem:[#allocation4 + $0x70] sm:$0xff]
          %v2581 = vld [vmem:[#allocation4 + $0x78] sm:$0xff]
          %v2582 = vld [vmem:[#allocation4 + $0x80] sm:$0xff]
          %v2583 = vld [vmem:[#allocation4 + $0x88] sm:$0xff]
          %v2584 = vld [vmem:[#allocation4 + $0x90] sm:$0xff]
          %v2585 = vld [vmem:[#allocation4 + $0x98] sm:$0xff]
          %v2586 = vld [vmem:[#allocation4 + $0xa0] sm:$0xff]
          %v2587 = vld [vmem:[#allocation4 + $0xa8] sm:$0xff]
          %v2588 = vld [vmem:[#allocation4 + $0xb0] sm:$0xff]
          %v2589 = vld [vmem:[#allocation4 + $0xb8] sm:$0xff]
          %v2590 = vld [vmem:[#allocation4 + $0xc0] sm:$0xff]
          %v2591 = vld [vmem:[#allocation4 + $0xc8] sm:$0xff]
          %v2592 = vld [vmem:[#allocation4 + $0xd0] sm:$0xff]
          %v2593 = vld [vmem:[#allocation4 + $0xd8] sm:$0xff]
          %v2594 = vld [vmem:[#allocation4 + $0xe0] sm:$0xff]
          %v2595 = vld [vmem:[#allocation4 + $0xe8] sm:$0xff]
          %v2596 = vld [vmem:[#allocation4 + $0xf0] sm:$0xff]
          %v2597 = vld [vmem:[#allocation4 + $0xf8] sm:$0xff]
          %v2598 = vld [vmem:[#allocation4 + $0x100] sm:$0xff]
          %v2599 = vld [vmem:[#allocation4 + $0x108] sm:$0xff]
          %v2600 = vld [vmem:[#allocation4 + $0x110] sm:$0xff]
          %v2601 = vld [vmem:[#allocation4 + $0x118] sm:$0xff]
          %v2602 = vld [vmem:[#allocation4 + $0x120] sm:$0xff]
          %v2603 = vld [vmem:[#allocation4 + $0x128] sm:$0xff]
          %v2604 = vld [vmem:[#allocation4 + $0x130] sm:$0xff]
          %v2605 = vld [vmem:[#allocation4 + $0x138] sm:$0xff]
          %v2606 = vld [vmem:[#allocation4 + $0x140] sm:$0xff]
          %v2607 = vld [vmem:[#allocation4 + $0x148] sm:$0xff]
          %v2608 = vld [vmem:[#allocation4 + $0x150] sm:$0xff]
          %v2609 = vld [vmem:[#allocation4 + $0x158] sm:$0xff]
          %v2610 = vld [vmem:[#allocation4 + $0x160] sm:$0xff]
          %v2611 = vld [vmem:[#allocation4 + $0x168] sm:$0xff]
          %v2612 = vld [vmem:[#allocation4 + $0x170] sm:$0xff]
          %v2613 = vld [vmem:[#allocation4 + $0x178] sm:$0xff]
          %v2614 = vld [vmem:[#allocation4 + $0x180] sm:$0xff]
          %v2615 = vld [vmem:[#allocation4 + $0x188] sm:$0xff]
          %v2616 = vld [vmem:[#allocation4 + $0x190] sm:$0xff]
          %v2617 = vld [vmem:[#allocation4 + $0x198] sm:$0xff]
          %v2618 = vld [vmem:[#allocation4 + $0x1a0] sm:$0xff]
          %v2619 = vld [vmem:[#allocation4 + $0x1a8] sm:$0xff]
          %v2620 = vld [vmem:[#allocation4 + $0x1b0] sm:$0xff]
          %v2621 = vld [vmem:[#allocation4 + $0x1b8] sm:$0xff]
          %v2622 = vld [vmem:[#allocation4 + $0x1c0] sm:$0xff]
          %v2623 = vld [vmem:[#allocation4 + $0x1c8] sm:$0xff]
          %v2624 = vld [vmem:[#allocation4 + $0x1d0] sm:$0xff]
          %v2625 = vld [vmem:[#allocation4 + $0x1d8] sm:$0xff]
          %v2626 = vld [vmem:[#allocation4 + $0x1e0] sm:$0xff]
          %v2627 = vld [vmem:[#allocation4 + $0x1e8] sm:$0xff]
          %v2628 = vld [vmem:[#allocation4 + $0x1f0] sm:$0xff]
          %v2629 = vld [vmem:[#allocation4 + $0x1f8] sm:$0xff]
          %v2630 = vmul.f32 %v1735, %v2566
          %v2631 = vmul.f32 %v1737, %v2567
          %v2632 = vmul.f32 %v1739, %v2568
          %v2633 = vmul.f32 %v1741, %v2569
          %v2634 = vmul.f32 %v1743, %v2570
          %v2635 = vmul.f32 %v1745, %v2571
          %v2636 = vmul.f32 %v1747, %v2572
          %v2637 = vmul.f32 %v1749, %v2573
          %v2638 = vmul.f32 %v1751, %v2574
          %v2639 = vmul.f32 %v1753, %v2575
          %v2640 = vmul.f32 %v1755, %v2576
          %v2641 = vmul.f32 %v1757, %v2577
          %v2642 = vmul.f32 %v1759, %v2578
          %v2643 = vmul.f32 %v1761, %v2579
          %v2644 = vmul.f32 %v1763, %v2580
          %v2645 = vmul.f32 %v1765, %v2581
          %v2646 = vmul.f32 %v1767, %v2582
          %v2647 = vmul.f32 %v1769, %v2583
          %v2648 = vmul.f32 %v1771, %v2584
          %v2649 = vmul.f32 %v1773, %v2585
          %v2650 = vmul.f32 %v1775, %v2586
          %v2651 = vmul.f32 %v1777, %v2587
          %v2652 = vmul.f32 %v1779, %v2588
          %v2653 = vmul.f32 %v1781, %v2589
          %v2654 = vmul.f32 %v1783, %v2590
          %v2655 = vmul.f32 %v1785, %v2591
          %v2656 = vmul.f32 %v1787, %v2592
          %v2657 = vmul.f32 %v1789, %v2593
          %v2658 = vmul.f32 %v1791, %v2594
          %v2659 = vmul.f32 %v1793, %v2595
          %v2660 = vmul.f32 %v1795, %v2596
          %v2661 = vmul.f32 %v1797, %v2597
          %v2662 = vmul.f32 %v1799, %v2598
          %v2663 = vmul.f32 %v1801, %v2599
          %v2664 = vmul.f32 %v1803, %v2600
          %v2665 = vmul.f32 %v1805, %v2601
          %v2666 = vmul.f32 %v1807, %v2602
          %v2667 = vmul.f32 %v1809, %v2603
          %v2668 = vmul.f32 %v1811, %v2604
          %v2669 = vmul.f32 %v1813, %v2605
          %v2670 = vmul.f32 %v1815, %v2606
          %v2671 = vmul.f32 %v1817, %v2607
          %v2672 = vmul.f32 %v1819, %v2608
          %v2673 = vmul.f32 %v1821, %v2609
          %v2674 = vmul.f32 %v1823, %v2610
          %v2675 = vmul.f32 %v1825, %v2611
          %v2676 = vmul.f32 %v1827, %v2612
          %v2677 = vmul.f32 %v1829, %v2613
          %v2678 = vmul.f32 %v1831, %v2614
          %v2679 = vmul.f32 %v1833, %v2615
          %v2680 = vmul.f32 %v1835, %v2616
          %v2681 = vmul.f32 %v1837, %v2617
          %v2682 = vmul.f32 %v1839, %v2618
          %v2683 = vmul.f32 %v1841, %v2619
          %v2684 = vmul.f32 %v1843, %v2620
          %v2685 = vmul.f32 %v1845, %v2621
          %v2686 = vmul.f32 %v1847, %v2622
          %v2687 = vmul.f32 %v1849, %v2623
          %v2688 = vmul.f32 %v1851, %v2624
          %v2689 = vmul.f32 %v1853, %v2625
          %v2690 = vmul.f32 %v1855, %v2626
          %v2691 = vmul.f32 %v1857, %v2627
          %v2692 = vmul.f32 %v1859, %v2628
          %v2693 = vmul.f32 %v1861, %v2629
          %v2694 = vadd.f32 %v2311, %v2313
          %2695 = vadd.xlane.f32.xlu0 %v2694
          %v2696 = vpop.xlane.xlu0 %2695
          %v2697 = vadd.f32 %v2315, %v2317
          %2698 = vadd.xlane.f32.xlu0 %v2697
          %v2699 = vpop.xlane.xlu0 %2698
          %v2700 = vadd.f32 %v2319, %v2321
          %2701 = vadd.xlane.f32.xlu0 %v2700
          %v2702 = vpop.xlane.xlu0 %2701
          %v2703 = vadd.f32 %v2323, %v2325
          %2704 = vadd.xlane.f32.xlu0 %v2703
          %v2705 = vpop.xlane.xlu0 %2704
          %v2706 = vadd.f32 %v2327, %v2329
          %2707 = vadd.xlane.f32.xlu0 %v2706
          %v2708 = vpop.xlane.xlu0 %2707
          %v2709 = vadd.f32 %v2331, %v2333
          %2710 = vadd.xlane.f32.xlu0 %v2709
          %v2711 = vpop.xlane.xlu0 %2710
          %v2712 = vadd.f32 %v2335, %v2337
          %2713 = vadd.xlane.f32.xlu0 %v2712
          %v2714 = vpop.xlane.xlu0 %2713
          %v2715 = vadd.f32 %v2339, %v2341
          %2716 = vadd.xlane.f32.xlu0 %v2715
          %v2717 = vpop.xlane.xlu0 %2716
          %v2718 = vadd.f32 %v2343, %v2345
          %2719 = vadd.xlane.f32.xlu0 %v2718
          %v2720 = vpop.xlane.xlu0 %2719
          %v2721 = vadd.f32 %v2347, %v2349
          %2722 = vadd.xlane.f32.xlu0 %v2721
          %v2723 = vpop.xlane.xlu0 %2722
          %v2724 = vadd.f32 %v2351, %v2353
          %2725 = vadd.xlane.f32.xlu0 %v2724
          %v2726 = vpop.xlane.xlu0 %2725
          %v2727 = vadd.f32 %v2355, %v2357
          %2728 = vadd.xlane.f32.xlu0 %v2727
          %v2729 = vpop.xlane.xlu0 %2728
          %v2730 = vadd.f32 %v2359, %v2361
          %2731 = vadd.xlane.f32.xlu0 %v2730
          %v2732 = vpop.xlane.xlu0 %2731
          %v2733 = vadd.f32 %v2363, %v2365
          %2734 = vadd.xlane.f32.xlu0 %v2733
          %v2735 = vpop.xlane.xlu0 %2734
          %v2736 = vadd.f32 %v2367, %v2369
          %2737 = vadd.xlane.f32.xlu0 %v2736
          %v2738 = vpop.xlane.xlu0 %2737
          %v2739 = vadd.f32 %v2371, %v2373
          %2740 = vadd.xlane.f32.xlu0 %v2739
          %v2741 = vpop.xlane.xlu0 %2740
          %v2742 = vadd.f32 %v2375, %v2377
          %2743 = vadd.xlane.f32.xlu0 %v2742
          %v2744 = vpop.xlane.xlu0 %2743
          %v2745 = vadd.f32 %v2379, %v2381
          %2746 = vadd.xlane.f32.xlu0 %v2745
          %v2747 = vpop.xlane.xlu0 %2746
          %v2748 = vadd.f32 %v2383, %v2385
          %2749 = vadd.xlane.f32.xlu0 %v2748
          %v2750 = vpop.xlane.xlu0 %2749
          %v2751 = vadd.f32 %v2387, %v2389
          %2752 = vadd.xlane.f32.xlu0 %v2751
          %v2753 = vpop.xlane.xlu0 %2752
          %v2754 = vadd.f32 %v2391, %v2393
          %2755 = vadd.xlane.f32.xlu0 %v2754
          %v2756 = vpop.xlane.xlu0 %2755
          %v2757 = vadd.f32 %v2395, %v2397
          %2758 = vadd.xlane.f32.xlu0 %v2757
          %v2759 = vpop.xlane.xlu0 %2758
          %v2760 = vadd.f32 %v2399, %v2401
          %2761 = vadd.xlane.f32.xlu0 %v2760
          %v2762 = vpop.xlane.xlu0 %2761
          %v2763 = vadd.f32 %v2403, %v2405
          %2764 = vadd.xlane.f32.xlu0 %v2763
          %v2765 = vpop.xlane.xlu0 %2764
          %v2766 = vadd.f32 %v2407, %v2409
          %2767 = vadd.xlane.f32.xlu0 %v2766
          %v2768 = vpop.xlane.xlu0 %2767
          %v2769 = vadd.f32 %v2411, %v2413
          %2770 = vadd.xlane.f32.xlu0 %v2769
          %v2771 = vpop.xlane.xlu0 %2770
          %v2772 = vadd.f32 %v2415, %v2417
          %2773 = vadd.xlane.f32.xlu0 %v2772
          %v2774 = vpop.xlane.xlu0 %2773
          %v2775 = vadd.f32 %v2419, %v2421
          %2776 = vadd.xlane.f32.xlu0 %v2775
          %v2777 = vpop.xlane.xlu0 %2776
          %v2778 = vadd.f32 %v2423, %v2425
          %2779 = vadd.xlane.f32.xlu0 %v2778
          %v2780 = vpop.xlane.xlu0 %2779
          %v2781 = vadd.f32 %v2427, %v2429
          %2782 = vadd.xlane.f32.xlu0 %v2781
          %v2783 = vpop.xlane.xlu0 %2782
          %v2784 = vadd.f32 %v2431, %v2433
          %2785 = vadd.xlane.f32.xlu0 %v2784
          %v2786 = vpop.xlane.xlu0 %2785
          %v2787 = vadd.f32 %v2435, %v2437
          %2788 = vadd.xlane.f32.xlu0 %v2787
          %v2789 = vpop.xlane.xlu0 %2788
          %v2790 = vadd.f32 %v2439, %v2441
          %2791 = vadd.xlane.f32.xlu0 %v2790
          %v2792 = vpop.xlane.xlu0 %2791
          %v2793 = vadd.f32 %v2443, %v2445
          %2794 = vadd.xlane.f32.xlu0 %v2793
          %v2795 = vpop.xlane.xlu0 %2794
          %v2796 = vadd.f32 %v2447, %v2449
          %2797 = vadd.xlane.f32.xlu0 %v2796
          %v2798 = vpop.xlane.xlu0 %2797
          %v2799 = vadd.f32 %v2451, %v2453
          %2800 = vadd.xlane.f32.xlu0 %v2799
          %v2801 = vpop.xlane.xlu0 %2800
          %v2802 = vadd.f32 %v2455, %v2457
          %2803 = vadd.xlane.f32.xlu0 %v2802
          %v2804 = vpop.xlane.xlu0 %2803
          %v2805 = vadd.f32 %v2459, %v2461
          %2806 = vadd.xlane.f32.xlu0 %v2805
          %v2807 = vpop.xlane.xlu0 %2806
          %v2808 = vadd.f32 %v2463, %v2465
          %2809 = vadd.xlane.f32.xlu0 %v2808
          %v2810 = vpop.xlane.xlu0 %2809
          %v2811 = vadd.f32 %v2467, %v2469
          %2812 = vadd.xlane.f32.xlu0 %v2811
          %v2813 = vpop.xlane.xlu0 %2812
          %v2814 = vadd.f32 %v2471, %v2473
          %2815 = vadd.xlane.f32.xlu0 %v2814
          %v2816 = vpop.xlane.xlu0 %2815
          %v2817 = vadd.f32 %v2475, %v2477
          %2818 = vadd.xlane.f32.xlu0 %v2817
          %v2819 = vpop.xlane.xlu0 %2818
          %v2820 = vadd.f32 %v2479, %v2481
          %2821 = vadd.xlane.f32.xlu0 %v2820
          %v2822 = vpop.xlane.xlu0 %2821
          %v2823 = vadd.f32 %v2483, %v2485
          %2824 = vadd.xlane.f32.xlu0 %v2823
          %v2825 = vpop.xlane.xlu0 %2824
          %v2826 = vadd.f32 %v2487, %v2489
          %2827 = vadd.xlane.f32.xlu0 %v2826
          %v2828 = vpop.xlane.xlu0 %2827
          %v2829 = vadd.f32 %v2491, %v2493
          %2830 = vadd.xlane.f32.xlu0 %v2829
          %v2831 = vpop.xlane.xlu0 %2830
          %v2832 = vadd.f32 %v2495, %v2497
          %2833 = vadd.xlane.f32.xlu0 %v2832
          %v2834 = vpop.xlane.xlu0 %2833
          %v2835 = vadd.f32 %v2499, %v2501
          %2836 = vadd.xlane.f32.xlu0 %v2835
          %v2837 = vpop.xlane.xlu0 %2836
          %v2838 = vadd.f32 %v2503, %v2505
          %2839 = vadd.xlane.f32.xlu0 %v2838
          %v2840 = vpop.xlane.xlu0 %2839
          %v2841 = vadd.f32 %v2507, %v2509
          %2842 = vadd.xlane.f32.xlu0 %v2841
          %v2843 = vpop.xlane.xlu0 %2842
          %v2844 = vadd.f32 %v2511, %v2513
          %2845 = vadd.xlane.f32.xlu0 %v2844
          %v2846 = vpop.xlane.xlu0 %2845
          %v2847 = vadd.f32 %v2515, %v2517
          %2848 = vadd.xlane.f32.xlu0 %v2847
          %v2849 = vpop.xlane.xlu0 %2848
          %v2850 = vadd.f32 %v2519, %v2521
          %2851 = vadd.xlane.f32.xlu0 %v2850
          %v2852 = vpop.xlane.xlu0 %2851
          %v2853 = vadd.f32 %v2523, %v2525
          %2854 = vadd.xlane.f32.xlu0 %v2853
          %v2855 = vpop.xlane.xlu0 %2854
          %v2856 = vadd.f32 %v2527, %v2529
          %2857 = vadd.xlane.f32.xlu0 %v2856
          %v2858 = vpop.xlane.xlu0 %2857
          %v2859 = vadd.f32 %v2531, %v2533
          %2860 = vadd.xlane.f32.xlu0 %v2859
          %v2861 = vpop.xlane.xlu0 %2860
          %v2862 = vadd.f32 %v2535, %v2537
          %2863 = vadd.xlane.f32.xlu0 %v2862
          %v2864 = vpop.xlane.xlu0 %2863
          %v2865 = vadd.f32 %v2539, %v2541
          %2866 = vadd.xlane.f32.xlu0 %v2865
          %v2867 = vpop.xlane.xlu0 %2866
          %v2868 = vadd.f32 %v2543, %v2545
          %2869 = vadd.xlane.f32.xlu0 %v2868
          %v2870 = vpop.xlane.xlu0 %2869
          %v2871 = vadd.f32 %v2547, %v2549
          %2872 = vadd.xlane.f32.xlu0 %v2871
          %v2873 = vpop.xlane.xlu0 %2872
          %v2874 = vadd.f32 %v2551, %v2553
          %2875 = vadd.xlane.f32.xlu0 %v2874
          %v2876 = vpop.xlane.xlu0 %2875
          %v2877 = vadd.f32 %v2555, %v2557
          %2878 = vadd.xlane.f32.xlu0 %v2877
          %v2879 = vpop.xlane.xlu0 %2878
          %v2880 = vadd.f32 %v2559, %v2561
          %2881 = vadd.xlane.f32.xlu0 %v2880
          %v2882 = vpop.xlane.xlu0 %2881
          %v2883 = vadd.f32 %v2563, %v2565
          %2884 = vadd.xlane.f32.xlu0 %v2883
          %v2885 = vpop.xlane.xlu0 %2884
          %v2886 = vadd.f32 %v2630, %v2696
          %v2887 = vadd.f32 %v2631, %v2699
          %v2888 = vadd.f32 %v2632, %v2702
          %v2889 = vadd.f32 %v2633, %v2705
          %v2890 = vadd.f32 %v2634, %v2708
          %v2891 = vadd.f32 %v2635, %v2711
          %v2892 = vadd.f32 %v2636, %v2714
          %v2893 = vadd.f32 %v2637, %v2717
          %v2894 = vadd.f32 %v2638, %v2720
          %v2895 = vadd.f32 %v2639, %v2723
          %v2896 = vadd.f32 %v2640, %v2726
          %v2897 = vadd.f32 %v2641, %v2729
          %v2898 = vadd.f32 %v2642, %v2732
          %v2899 = vadd.f32 %v2643, %v2735
          %v2900 = vadd.f32 %v2644, %v2738
          %v2901 = vadd.f32 %v2645, %v2741
          %v2902 = vadd.f32 %v2646, %v2744
          %v2903 = vadd.f32 %v2647, %v2747
          %v2904 = vadd.f32 %v2648, %v2750
          %v2905 = vadd.f32 %v2649, %v2753
          %v2906 = vadd.f32 %v2650, %v2756
          %v2907 = vadd.f32 %v2651, %v2759
          %v2908 = vadd.f32 %v2652, %v2762
          %v2909 = vadd.f32 %v2653, %v2765
          %v2910 = vadd.f32 %v2654, %v2768
          %v2911 = vadd.f32 %v2655, %v2771
          %v2912 = vadd.f32 %v2656, %v2774
          %v2913 = vadd.f32 %v2657, %v2777
          %v2914 = vadd.f32 %v2658, %v2780
          %v2915 = vadd.f32 %v2659, %v2783
          %v2916 = vadd.f32 %v2660, %v2786
          %v2917 = vadd.f32 %v2661, %v2789
          %v2918 = vadd.f32 %v2662, %v2792
          %v2919 = vadd.f32 %v2663, %v2795
          %v2920 = vadd.f32 %v2664, %v2798
          %v2921 = vadd.f32 %v2665, %v2801
          %v2922 = vadd.f32 %v2666, %v2804
          %v2923 = vadd.f32 %v2667, %v2807
          %v2924 = vadd.f32 %v2668, %v2810
          %v2925 = vadd.f32 %v2669, %v2813
          %v2926 = vadd.f32 %v2670, %v2816
          %v2927 = vadd.f32 %v2671, %v2819
          %v2928 = vadd.f32 %v2672, %v2822
          %v2929 = vadd.f32 %v2673, %v2825
          %v2930 = vadd.f32 %v2674, %v2828
          %v2931 = vadd.f32 %v2675, %v2831
          %v2932 = vadd.f32 %v2676, %v2834
          %v2933 = vadd.f32 %v2677, %v2837
          %v2934 = vadd.f32 %v2678, %v2840
          %v2935 = vadd.f32 %v2679, %v2843
          %v2936 = vadd.f32 %v2680, %v2846
          %v2937 = vadd.f32 %v2681, %v2849
          %v2938 = vadd.f32 %v2682, %v2852
          %v2939 = vadd.f32 %v2683, %v2855
          %v2940 = vadd.f32 %v2684, %v2858
          %v2941 = vadd.f32 %v2685, %v2861
          %v2942 = vadd.f32 %v2686, %v2864
          %v2943 = vadd.f32 %v2687, %v2867
          %v2944 = vadd.f32 %v2688, %v2870
          %v2945 = vadd.f32 %v2689, %v2873
          %v2946 = vadd.f32 %v2690, %v2876
          %v2947 = vadd.f32 %v2691, %v2879
          %v2948 = vadd.f32 %v2692, %v2882
          %v2949 = vadd.f32 %v2693, %v2885
          %vm2950 = vcmask 7168
          %2951 = vst.msk [vmem:[#allocation4] sm:$0xff] %vm2950, %v2886
          %2952 = vst.msk [vmem:[#allocation4 + $0x8] sm:$0xff] %vm2950, %v2887
          %2953 = vst.msk [vmem:[#allocation4 + $0x10] sm:$0xff] %vm2950, %v2888
          %2954 = vst.msk [vmem:[#allocation4 + $0x18] sm:$0xff] %vm2950, %v2889
          %2955 = vst.msk [vmem:[#allocation4 + $0x20] sm:$0xff] %vm2950, %v2890
          %2956 = vst.msk [vmem:[#allocation4 + $0x28] sm:$0xff] %vm2950, %v2891
          %2957 = vst.msk [vmem:[#allocation4 + $0x30] sm:$0xff] %vm2950, %v2892
          %2958 = vst.msk [vmem:[#allocation4 + $0x38] sm:$0xff] %vm2950, %v2893
          %2959 = vst.msk [vmem:[#allocation4 + $0x40] sm:$0xff] %vm2950, %v2894
          %2960 = vst.msk [vmem:[#allocation4 + $0x48] sm:$0xff] %vm2950, %v2895
          %2961 = vst.msk [vmem:[#allocation4 + $0x50] sm:$0xff] %vm2950, %v2896
          %2962 = vst.msk [vmem:[#allocation4 + $0x58] sm:$0xff] %vm2950, %v2897
          %2963 = vst.msk [vmem:[#allocation4 + $0x60] sm:$0xff] %vm2950, %v2898
          %2964 = vst.msk [vmem:[#allocation4 + $0x68] sm:$0xff] %vm2950, %v2899
          %2965 = vst.msk [vmem:[#allocation4 + $0x70] sm:$0xff] %vm2950, %v2900
          %2966 = vst.msk [vmem:[#allocation4 + $0x78] sm:$0xff] %vm2950, %v2901
          %2967 = vst.msk [vmem:[#allocation4 + $0x80] sm:$0xff] %vm2950, %v2902
          %2968 = vst.msk [vmem:[#allocation4 + $0x88] sm:$0xff] %vm2950, %v2903
          %2969 = vst.msk [vmem:[#allocation4 + $0x90] sm:$0xff] %vm2950, %v2904
          %2970 = vst.msk [vmem:[#allocation4 + $0x98] sm:$0xff] %vm2950, %v2905
          %2971 = vst.msk [vmem:[#allocation4 + $0xa0] sm:$0xff] %vm2950, %v2906
          %2972 = vst.msk [vmem:[#allocation4 + $0xa8] sm:$0xff] %vm2950, %v2907
          %2973 = vst.msk [vmem:[#allocation4 + $0xb0] sm:$0xff] %vm2950, %v2908
          %2974 = vst.msk [vmem:[#allocation4 + $0xb8] sm:$0xff] %vm2950, %v2909
          %2975 = vst.msk [vmem:[#allocation4 + $0xc0] sm:$0xff] %vm2950, %v2910
          %2976 = vst.msk [vmem:[#allocation4 + $0xc8] sm:$0xff] %vm2950, %v2911
          %2977 = vst.msk [vmem:[#allocation4 + $0xd0] sm:$0xff] %vm2950, %v2912
          %2978 = vst.msk [vmem:[#allocation4 + $0xd8] sm:$0xff] %vm2950, %v2913
          %2979 = vst.msk [vmem:[#allocation4 + $0xe0] sm:$0xff] %vm2950, %v2914
          %2980 = vst.msk [vmem:[#allocation4 + $0xe8] sm:$0xff] %vm2950, %v2915
          %2981 = vst.msk [vmem:[#allocation4 + $0xf0] sm:$0xff] %vm2950, %v2916
          %2982 = vst.msk [vmem:[#allocation4 + $0xf8] sm:$0xff] %vm2950, %v2917
          %2983 = vst.msk [vmem:[#allocation4 + $0x100] sm:$0xff] %vm2950, %v2918
          %2984 = vst.msk [vmem:[#allocation4 + $0x108] sm:$0xff] %vm2950, %v2919
          %2985 = vst.msk [vmem:[#allocation4 + $0x110] sm:$0xff] %vm2950, %v2920
          %2986 = vst.msk [vmem:[#allocation4 + $0x118] sm:$0xff] %vm2950, %v2921
          %2987 = vst.msk [vmem:[#allocation4 + $0x120] sm:$0xff] %vm2950, %v2922
          %2988 = vst.msk [vmem:[#allocation4 + $0x128] sm:$0xff] %vm2950, %v2923
          %2989 = vst.msk [vmem:[#allocation4 + $0x130] sm:$0xff] %vm2950, %v2924
          %2990 = vst.msk [vmem:[#allocation4 + $0x138] sm:$0xff] %vm2950, %v2925
          %2991 = vst.msk [vmem:[#allocation4 + $0x140] sm:$0xff] %vm2950, %v2926
          %2992 = vst.msk [vmem:[#allocation4 + $0x148] sm:$0xff] %vm2950, %v2927
          %2993 = vst.msk [vmem:[#allocation4 + $0x150] sm:$0xff] %vm2950, %v2928
          %2994 = vst.msk [vmem:[#allocation4 + $0x158] sm:$0xff] %vm2950, %v2929
          %2995 = vst.msk [vmem:[#allocation4 + $0x160] sm:$0xff] %vm2950, %v2930
          %2996 = vst.msk [vmem:[#allocation4 + $0x168] sm:$0xff] %vm2950, %v2931
          %2997 = vst.msk [vmem:[#allocation4 + $0x170] sm:$0xff] %vm2950, %v2932
          %2998 = vst.msk [vmem:[#allocation4 + $0x178] sm:$0xff] %vm2950, %v2933
          %2999 = vst.msk [vmem:[#allocation4 + $0x180] sm:$0xff] %vm2950, %v2934
          %3000 = vst.msk [vmem:[#allocation4 + $0x188] sm:$0xff] %vm2950, %v2935
          %3001 = vst.msk [vmem:[#allocation4 + $0x190] sm:$0xff] %vm2950, %v2936
          %3002 = vst.msk [vmem:[#allocation4 + $0x198] sm:$0xff] %vm2950, %v2937
          %3003 = vst.msk [vmem:[#allocation4 + $0x1a0] sm:$0xff] %vm2950, %v2938
          %3004 = vst.msk [vmem:[#allocation4 + $0x1a8] sm:$0xff] %vm2950, %v2939
          %3005 = vst.msk [vmem:[#allocation4 + $0x1b0] sm:$0xff] %vm2950, %v2940
          %3006 = vst.msk [vmem:[#allocation4 + $0x1b8] sm:$0xff] %vm2950, %v2941
          %3007 = vst.msk [vmem:[#allocation4 + $0x1c0] sm:$0xff] %vm2950, %v2942
          %3008 = vst.msk [vmem:[#allocation4 + $0x1c8] sm:$0xff] %vm2950, %v2943
          %3009 = vst.msk [vmem:[#allocation4 + $0x1d0] sm:$0xff] %vm2950, %v2944
          %3010 = vst.msk [vmem:[#allocation4 + $0x1d8] sm:$0xff] %vm2950, %v2945
          %3011 = vst.msk [vmem:[#allocation4 + $0x1e0] sm:$0xff] %vm2950, %v2946
          %3012 = vst.msk [vmem:[#allocation4 + $0x1e8] sm:$0xff] %vm2950, %v2947
          %3013 = vst.msk [vmem:[#allocation4 + $0x1f0] sm:$0xff] %vm2950, %v2948
          %3014 = vst.msk [vmem:[#allocation4 + $0x1f8] sm:$0xff] %vm2950, %v2949
          %v3015 = vpack.c.bf16 %v2315, %v2311
          %v3016 = vpack.c.bf16 %v2317, %v2313
          %v3017 = vpack.c.bf16 %v2323, %v2319
          %v3018 = vpack.c.bf16 %v2325, %v2321
          %v3019 = vpack.c.bf16 %v2331, %v2327
          %v3020 = vpack.c.bf16 %v2333, %v2329
          %v3021 = vpack.c.bf16 %v2339, %v2335
          %v3022 = vpack.c.bf16 %v2341, %v2337
          %v3023 = vpack.c.bf16 %v2347, %v2343
          %v3024 = vpack.c.bf16 %v2349, %v2345
          %v3025 = vpack.c.bf16 %v2355, %v2351
          %v3026 = vpack.c.bf16 %v2357, %v2353
          %v3027 = vpack.c.bf16 %v2363, %v2359
          %v3028 = vpack.c.bf16 %v2365, %v2361
          %v3029 = vpack.c.bf16 %v2371, %v2367
          %v3030 = vpack.c.bf16 %v2373, %v2369
          %v3031 = vpack.c.bf16 %v2379, %v2375
          %v3032 = vpack.c.bf16 %v2381, %v2377
          %v3033 = vpack.c.bf16 %v2387, %v2383
          %v3034 = vpack.c.bf16 %v2389, %v2385
          %v3035 = vpack.c.bf16 %v2395, %v2391
          %v3036 = vpack.c.bf16 %v2397, %v2393
          %v3037 = vpack.c.bf16 %v2403, %v2399
          %v3038 = vpack.c.bf16 %v2405, %v2401
          %v3039 = vpack.c.bf16 %v2411, %v2407
          %v3040 = vpack.c.bf16 %v2413, %v2409
          %v3041 = vpack.c.bf16 %v2419, %v2415
          %v3042 = vpack.c.bf16 %v2421, %v2417
          %v3043 = vpack.c.bf16 %v2427, %v2423
          %v3044 = vpack.c.bf16 %v2429, %v2425
          %v3045 = vpack.c.bf16 %v2435, %v2431
          %v3046 = vpack.c.bf16 %v2437, %v2433
          %v3047 = vpack.c.bf16 %v2443, %v2439
          %v3048 = vpack.c.bf16 %v2445, %v2441
          %v3049 = vpack.c.bf16 %v2451, %v2447
          %v3050 = vpack.c.bf16 %v2453, %v2449
          %v3051 = vpack.c.bf16 %v2459, %v2455
          %v3052 = vpack.c.bf16 %v2461, %v2457
          %v3053 = vpack.c.bf16 %v2467, %v2463
          %v3054 = vpack.c.bf16 %v2469, %v2465
          %v3055 = vpack.c.bf16 %v2475, %v2471
          %v3056 = vpack.c.bf16 %v2477, %v2473
          %v3057 = vpack.c.bf16 %v2483, %v2479
          %v3058 = vpack.c.bf16 %v2485, %v2481
          %v3059 = vpack.c.bf16 %v2491, %v2487
          %v3060 = vpack.c.bf16 %v2493, %v2489
          %v3061 = vpack.c.bf16 %v2499, %v2495
          %v3062 = vpack.c.bf16 %v2501, %v2497
          %v3063 = vpack.c.bf16 %v2507, %v2503
          %v3064 = vpack.c.bf16 %v2509, %v2505
          %v3065 = vpack.c.bf16 %v2515, %v2511
          %v3066 = vpack.c.bf16 %v2517, %v2513
          %v3067 = vpack.c.bf16 %v2523, %v2519
          %v3068 = vpack.c.bf16 %v2525, %v2521
          %v3069 = vpack.c.bf16 %v2531, %v2527
          %v3070 = vpack.c.bf16 %v2533, %v2529
          %v3071 = vpack.c.bf16 %v2539, %v2535
          %v3072 = vpack.c.bf16 %v2541, %v2537
          %v3073 = vpack.c.bf16 %v2547, %v2543
          %v3074 = vpack.c.bf16 %v2549, %v2545
          %v3075 = vpack.c.bf16 %v2555, %v2551
          %v3076 = vpack.c.bf16 %v2557, %v2553
          %v3077 = vpack.c.bf16 %v2563, %v2559
          %v3078 = vpack.c.bf16 %v2565, %v2561
          %v3111 = vunpack.c.l.b16 %v837
          %v3112 = vunpack.c.l.b16 %v838
          %v3113 = vunpack.c.l.b16 %v839
          %v3114 = vunpack.c.l.b16 %v840
          %v3115 = vunpack.c.l.b16 %v841
          %v3116 = vunpack.c.l.b16 %v842
          %v3117 = vunpack.c.l.b16 %v843
          %v3118 = vunpack.c.l.b16 %v844
          %v3119 = vunpack.c.l.b16 %v845
          %v3120 = vunpack.c.l.b16 %v846
          %v3121 = vunpack.c.l.b16 %v847
          %v3122 = vunpack.c.l.b16 %v848
          %v3123 = vunpack.c.l.b16 %v849
          %v3124 = vunpack.c.l.b16 %v850
          %v3125 = vunpack.c.l.b16 %v851
          %v3126 = vunpack.c.l.b16 %v852
          %v3127 = vunpack.c.l.b16 %v853
          %v3128 = vunpack.c.l.b16 %v854
          %v3129 = vunpack.c.l.b16 %v855
          %v3130 = vunpack.c.l.b16 %v856
          %v3131 = vunpack.c.l.b16 %v857
          %v3132 = vunpack.c.l.b16 %v858
          %v3133 = vunpack.c.l.b16 %v859
          %v3134 = vunpack.c.l.b16 %v860
          %v3135 = vunpack.c.l.b16 %v861
          %v3136 = vunpack.c.l.b16 %v862
          %v3137 = vunpack.c.l.b16 %v863
          %v3138 = vunpack.c.l.b16 %v864
          %v3139 = vunpack.c.l.b16 %v865
          %v3140 = vunpack.c.l.b16 %v866
          %v3141 = vunpack.c.l.b16 %v867
          %v3142 = vunpack.c.l.b16 %v868
          %v3143 = vpack.c.b16 %v3112, %v3111
          %v3144 = vpack.c.b16 %v3114, %v3113
          %v3145 = vpack.c.b16 %v3116, %v3115
          %v3146 = vpack.c.b16 %v3118, %v3117
          %v3147 = vpack.c.b16 %v3120, %v3119
          %v3148 = vpack.c.b16 %v3122, %v3121
          %v3149 = vpack.c.b16 %v3124, %v3123
          %v3150 = vpack.c.b16 %v3126, %v3125
          %v3151 = vpack.c.b16 %v3128, %v3127
          %v3152 = vpack.c.b16 %v3130, %v3129
          %v3153 = vpack.c.b16 %v3132, %v3131
          %v3154 = vpack.c.b16 %v3134, %v3133
          %v3155 = vpack.c.b16 %v3136, %v3135
          %v3156 = vpack.c.b16 %v3138, %v3137
          %v3157 = vpack.c.b16 %v3140, %v3139
          %v3158 = vpack.c.b16 %v3142, %v3141
          %3175 = vmatprep.subr.bf16.mxu0 0
          %3176 = vmatpush1.bf16.msra.mxu0 %v3143
          %3177 = vmatprep.subr.bf16.mxu0 0
          %3178 = vmatpush1.bf16.msra.mxu0 %v3144
          %3179 = vmatprep.subr.bf16.mxu0 0
          %3180 = vmatpush1.bf16.msra.mxu0 %v3145
          %3181 = vmatprep.subr.bf16.mxu0 0
          %3182 = vmatpush1.bf16.msra.mxu0 %v3146
          %3183 = vmatprep.subr.bf16.mxu0 0
          %3184 = vmatpush1.bf16.msra.mxu0 %v3147
          %3185 = vmatprep.subr.bf16.mxu0 0
          %3186 = vmatpush1.bf16.msra.mxu0 %v3148
          %3187 = vmatprep.subr.bf16.mxu0 0
          %3188 = vmatpush1.bf16.msra.mxu0 %v3149
          %3189 = vmatprep.subr.bf16.mxu0 0
          %3190 = vmatpush1.bf16.msra.mxu0 %v3150
          %3191 = vmatprep.subr.bf16.mxu0 0
          %3192 = vmatpush1.bf16.msra.mxu0 %v3151
          %3193 = vmatprep.subr.bf16.mxu0 0
          %3194 = vmatpush1.bf16.msra.mxu0 %v3152
          %3195 = vmatprep.subr.bf16.mxu0 0
          %3196 = vmatpush1.bf16.msra.mxu0 %v3153
          %3197 = vmatprep.subr.bf16.mxu0 0
          %3198 = vmatpush1.bf16.msra.mxu0 %v3154
          %3199 = vmatprep.subr.bf16.mxu0 0
          %3200 = vmatpush1.bf16.msra.mxu0 %v3155
          %3201 = vmatprep.subr.bf16.mxu0 0
          %3202 = vmatpush1.bf16.msra.mxu0 %v3156
          %3203 = vmatprep.subr.bf16.mxu0 0
          %3204 = vmatpush1.bf16.msra.mxu0 %v3157
          %3205 = vmatprep.subr.bf16.mxu0 0
          %3206 = vmatpush1.bf16.msra.mxu0 %v3158
          %3207 = vmatprep.mubr.bf16.mxu0 %v3016
          %3208 = vmatmul.mubr.bf16.gmra.mrb[0].mxu0 %v3015
          %v3209 = vpop.f32.mrb[0].mxu0
          %v3210 = vadd.f32 0.0, %v3209
          %v3211 = vpop.f32.mrb[0].mxu0
          %v3212 = vpop.f32.mrb[0].mxu0
          %v3213 = vadd.f32 0.0, %v3212
          %v3214 = vpop.f32.mrb[0].mxu0
          %3215 = vmatprep.mubr.bf16.mxu0 %v3018
          %3216 = vmatmul.mubr.bf16.gmra.mrb[0].mxu0 %v3017
          %v3217 = vpop.f32.mrb[0].mxu0
          %v3218 = vadd.f32 0.0, %v3217
          %v3219 = vpop.f32.mrb[0].mxu0
          %v3220 = vpop.f32.mrb[0].mxu0
          %v3221 = vadd.f32 0.0, %v3220
          %v3222 = vpop.f32.mrb[0].mxu0
          %3223 = vmatprep.mubr.bf16.mxu0 %v3020
          %3224 = vmatmul.mubr.bf16.gmra.mrb[0].mxu0 %v3019
          %v3225 = vpop.f32.mrb[0].mxu0
          %v3226 = vadd.f32 0.0, %v3225
          %v3227 = vpop.f32.mrb[0].mxu0
          %v3228 = vpop.f32.mrb[0].mxu0
          %v3229 = vadd.f32 0.0, %v3228
          %v3230 = vpop.f32.mrb[0].mxu0
          %3231 = vmatprep.mubr.bf16.mxu0 %v3022
          %3232 = vmatmul.mubr.bf16.gmra.mrb[0].mxu0 %v3021
          %v3233 = vpop.f32.mrb[0].mxu0
          %v3234 = vadd.f32 0.0, %v3233
          %v3235 = vpop.f32.mrb[0].mxu0
          %v3236 = vpop.f32.mrb[0].mxu0
          %v3237 = vadd.f32 0.0, %v3236
          %v3238 = vpop.f32.mrb[0].mxu0
          %3239 = vmatprep.mubr.bf16.mxu0 %v3024
          %3240 = vmatmul.mubr.bf16.gmra.mrb[0].mxu0 %v3023
          %v3241 = vpop.f32.mrb[0].mxu0
          %v3242 = vadd.f32 0.0, %v3241
          %v3243 = vpop.f32.mrb[0].mxu0
          %v3244 = vpop.f32.mrb[0].mxu0
          %v3245 = vadd.f32 0.0, %v3244
          %v3246 = vpop.f32.mrb[0].mxu0
          %3247 = vmatprep.mubr.bf16.mxu0 %v3026
          %3248 = vmatmul.mubr.bf16.gmra.mrb[0].mxu0 %v3025
          %v3249 = vpop.f32.mrb[0].mxu0
          %v3250 = vadd.f32 0.0, %v3249
          %v3251 = vpop.f32.mrb[0].mxu0
          %v3252 = vpop.f32.mrb[0].mxu0
          %v3253 = vadd.f32 0.0, %v3252
          %v3254 = vpop.f32.mrb[0].mxu0
          %3255 = vmatprep.mubr.bf16.mxu0 %v3028
          %3256 = vmatmul.mubr.bf16.gmra.mrb[0].mxu0 %v3027
          %v3257 = vpop.f32.mrb[0].mxu0
          %v3258 = vadd.f32 0.0, %v3257
          %v3259 = vpop.f32.mrb[0].mxu0
          %v3260 = vpop.f32.mrb[0].mxu0
          %v3261 = vadd.f32 0.0, %v3260
          %v3262 = vpop.f32.mrb[0].mxu0
          %3263 = vmatprep.mubr.bf16.mxu0 %v3030
          %3264 = vmatmul.mubr.bf16.gmra.mrb[0].mxu0 %v3029
          %v3265 = vpop.f32.mrb[0].mxu0
          %v3266 = vadd.f32 0.0, %v3265
          %v3267 = vpop.f32.mrb[0].mxu0
          %v3268 = vpop.f32.mrb[0].mxu0
          %v3269 = vadd.f32 0.0, %v3268
          %v3270 = vpop.f32.mrb[0].mxu0
          %3271 = vmatprep.mubr.bf16.mxu0 %v3032
          %3272 = vmatmul.mubr.bf16.gmra.mrb[0].mxu0 %v3031
          %v3273 = vpop.f32.mrb[0].mxu0
          %v3274 = vadd.f32 0.0, %v3273
          %v3275 = vpop.f32.mrb[0].mxu0
          %v3276 = vpop.f32.mrb[0].mxu0
          %v3277 = vadd.f32 0.0, %v3276
          %v3278 = vpop.f32.mrb[0].mxu0
          %3279 = vmatprep.mubr.bf16.mxu0 %v3034
          %3280 = vmatmul.mubr.bf16.gmra.mrb[0].mxu0 %v3033
          %v3281 = vpop.f32.mrb[0].mxu0
          %v3282 = vadd.f32 0.0, %v3281
          %v3283 = vpop.f32.mrb[0].mxu0
          %v3284 = vpop.f32.mrb[0].mxu0
          %v3285 = vadd.f32 0.0, %v3284
          %v3286 = vpop.f32.mrb[0].mxu0
          %3287 = vmatprep.mubr.bf16.mxu0 %v3036
          %3288 = vmatmul.mubr.bf16.gmra.mrb[0].mxu0 %v3035
          %v3289 = vpop.f32.mrb[0].mxu0
          %v3290 = vadd.f32 0.0, %v3289
          %v3291 = vpop.f32.mrb[0].mxu0
          %v3292 = vpop.f32.mrb[0].mxu0
          %v3293 = vadd.f32 0.0, %v3292
          %v3294 = vpop.f32.mrb[0].mxu0
          %3295 = vmatprep.mubr.bf16.mxu0 %v3038
          %3296 = vmatmul.mubr.bf16.gmra.mrb[0].mxu0 %v3037
          %v3297 = vpop.f32.mrb[0].mxu0
          %v3298 = vadd.f32 0.0, %v3297
          %v3299 = vpop.f32.mrb[0].mxu0
          %v3300 = vpop.f32.mrb[0].mxu0
          %v3301 = vadd.f32 0.0, %v3300
          %v3302 = vpop.f32.mrb[0].mxu0
          %3303 = vmatprep.mubr.bf16.mxu0 %v3040
          %3304 = vmatmul.mubr.bf16.gmra.mrb[0].mxu0 %v3039
          %v3305 = vpop.f32.mrb[0].mxu0
          %v3306 = vadd.f32 0.0, %v3305
          %v3307 = vpop.f32.mrb[0].mxu0
          %v3308 = vpop.f32.mrb[0].mxu0
          %v3309 = vadd.f32 0.0, %v3308
          %v3310 = vpop.f32.mrb[0].mxu0
          %3311 = vmatprep.mubr.bf16.mxu0 %v3042
          %3312 = vmatmul.mubr.bf16.gmra.mrb[0].mxu0 %v3041
          %v3313 = vpop.f32.mrb[0].mxu0
          %v3314 = vadd.f32 0.0, %v3313
          %v3315 = vpop.f32.mrb[0].mxu0
          %v3316 = vpop.f32.mrb[0].mxu0
          %v3317 = vadd.f32 0.0, %v3316
          %v3318 = vpop.f32.mrb[0].mxu0
          %3319 = vmatprep.mubr.bf16.mxu0 %v3044
          %3320 = vmatmul.mubr.bf16.gmra.mrb[0].mxu0 %v3043
          %v3321 = vpop.f32.mrb[0].mxu0
          %v3322 = vadd.f32 0.0, %v3321
          %v3323 = vpop.f32.mrb[0].mxu0
          %v3324 = vpop.f32.mrb[0].mxu0
          %v3325 = vadd.f32 0.0, %v3324
          %v3326 = vpop.f32.mrb[0].mxu0
          %3327 = vmatprep.mubr.bf16.mxu0 %v3046
          %3328 = vmatmul.mubr.bf16.gmra.mrb[0].mxu0 %v3045
          %v3329 = vpop.f32.mrb[0].mxu0
          %v3330 = vadd.f32 0.0, %v3329
          %v3331 = vpop.f32.mrb[0].mxu0
          %v3332 = vpop.f32.mrb[0].mxu0
          %v3333 = vadd.f32 0.0, %v3332
          %v3334 = vpop.f32.mrb[0].mxu0
          %3335 = vmatprep.mubr.bf16.mxu0 %v3048
          %3336 = vmatmul.mubr.bf16.gmra.mrb[0].mxu0 %v3047
          %v3337 = vpop.f32.mrb[0].mxu0
          %v3338 = vadd.f32 0.0, %v3337
          %v3339 = vpop.f32.mrb[0].mxu0
          %v3340 = vpop.f32.mrb[0].mxu0
          %v3341 = vadd.f32 0.0, %v3340
          %v3342 = vpop.f32.mrb[0].mxu0
          %3343 = vmatprep.mubr.bf16.mxu0 %v3050
          %3344 = vmatmul.mubr.bf16.gmra.mrb[0].mxu0 %v3049
          %v3345 = vpop.f32.mrb[0].mxu0
          %v3346 = vadd.f32 0.0, %v3345
          %v3347 = vpop.f32.mrb[0].mxu0
          %v3348 = vpop.f32.mrb[0].mxu0
          %v3349 = vadd.f32 0.0, %v3348
          %v3350 = vpop.f32.mrb[0].mxu0
          %3351 = vmatprep.mubr.bf16.mxu0 %v3052
          %3352 = vmatmul.mubr.bf16.gmra.mrb[0].mxu0 %v3051
          %v3353 = vpop.f32.mrb[0].mxu0
          %v3354 = vadd.f32 0.0, %v3353
          %v3355 = vpop.f32.mrb[0].mxu0
          %v3356 = vpop.f32.mrb[0].mxu0
          %v3357 = vadd.f32 0.0, %v3356
          %v3358 = vpop.f32.mrb[0].mxu0
          %3359 = vmatprep.mubr.bf16.mxu0 %v3054
          %3360 = vmatmul.mubr.bf16.gmra.mrb[0].mxu0 %v3053
          %v3361 = vpop.f32.mrb[0].mxu0
          %v3362 = vadd.f32 0.0, %v3361
          %v3363 = vpop.f32.mrb[0].mxu0
          %v3364 = vpop.f32.mrb[0].mxu0
          %v3365 = vadd.f32 0.0, %v3364
          %v3366 = vpop.f32.mrb[0].mxu0
          %3367 = vmatprep.mubr.bf16.mxu0 %v3056
          %3368 = vmatmul.mubr.bf16.gmra.mrb[0].mxu0 %v3055
          %v3369 = vpop.f32.mrb[0].mxu0
          %v3370 = vadd.f32 0.0, %v3369
          %v3371 = vpop.f32.mrb[0].mxu0
          %v3372 = vpop.f32.mrb[0].mxu0
          %v3373 = vadd.f32 0.0, %v3372
          %v3374 = vpop.f32.mrb[0].mxu0
          %3375 = vmatprep.mubr.bf16.mxu0 %v3058
          %3376 = vmatmul.mubr.bf16.gmra.mrb[0].mxu0 %v3057
          %v3377 = vpop.f32.mrb[0].mxu0
          %v3378 = vadd.f32 0.0, %v3377
          %v3379 = vpop.f32.mrb[0].mxu0
          %v3380 = vpop.f32.mrb[0].mxu0
          %v3381 = vadd.f32 0.0, %v3380
          %v3382 = vpop.f32.mrb[0].mxu0
          %3383 = vmatprep.mubr.bf16.mxu0 %v3060
          %3384 = vmatmul.mubr.bf16.gmra.mrb[0].mxu0 %v3059
          %v3385 = vpop.f32.mrb[0].mxu0
          %v3386 = vadd.f32 0.0, %v3385
          %v3387 = vpop.f32.mrb[0].mxu0
          %v3388 = vpop.f32.mrb[0].mxu0
          %v3389 = vadd.f32 0.0, %v3388
          %v3390 = vpop.f32.mrb[0].mxu0
          %3391 = vmatprep.mubr.bf16.mxu0 %v3062
          %3392 = vmatmul.mubr.bf16.gmra.mrb[0].mxu0 %v3061
          %v3393 = vpop.f32.mrb[0].mxu0
          %v3394 = vadd.f32 0.0, %v3393
          %v3395 = vpop.f32.mrb[0].mxu0
          %v3396 = vpop.f32.mrb[0].mxu0
          %v3397 = vadd.f32 0.0, %v3396
          %v3398 = vpop.f32.mrb[0].mxu0
          %3399 = vmatprep.mubr.bf16.mxu0 %v3064
          %3400 = vmatmul.mubr.bf16.gmra.mrb[0].mxu0 %v3063
          %v3401 = vpop.f32.mrb[0].mxu0
          %v3402 = vadd.f32 0.0, %v3401
          %v3403 = vpop.f32.mrb[0].mxu0
          %v3404 = vpop.f32.mrb[0].mxu0
          %v3405 = vadd.f32 0.0, %v3404
          %v3406 = vpop.f32.mrb[0].mxu0
          %3407 = vmatprep.mubr.bf16.mxu0 %v3066
          %3408 = vmatmul.mubr.bf16.gmra.mrb[0].mxu0 %v3065
          %v3409 = vpop.f32.mrb[0].mxu0
          %v3410 = vadd.f32 0.0, %v3409
          %v3411 = vpop.f32.mrb[0].mxu0
          %v3412 = vpop.f32.mrb[0].mxu0
          %v3413 = vadd.f32 0.0, %v3412
          %v3414 = vpop.f32.mrb[0].mxu0
          %3415 = vmatprep.mubr.bf16.mxu0 %v3068
          %3416 = vmatmul.mubr.bf16.gmra.mrb[0].mxu0 %v3067
          %v3417 = vpop.f32.mrb[0].mxu0
          %v3418 = vadd.f32 0.0, %v3417
          %v3419 = vpop.f32.mrb[0].mxu0
          %v3420 = vpop.f32.mrb[0].mxu0
          %v3421 = vadd.f32 0.0, %v3420
          %v3422 = vpop.f32.mrb[0].mxu0
          %3423 = vmatprep.mubr.bf16.mxu0 %v3070
          %3424 = vmatmul.mubr.bf16.gmra.mrb[0].mxu0 %v3069
          %v3425 = vpop.f32.mrb[0].mxu0
          %v3426 = vadd.f32 0.0, %v3425
          %v3427 = vpop.f32.mrb[0].mxu0
          %v3428 = vpop.f32.mrb[0].mxu0
          %v3429 = vadd.f32 0.0, %v3428
          %v3430 = vpop.f32.mrb[0].mxu0
          %3431 = vmatprep.mubr.bf16.mxu0 %v3072
          %3432 = vmatmul.mubr.bf16.gmra.mrb[0].mxu0 %v3071
          %v3433 = vpop.f32.mrb[0].mxu0
          %v3434 = vadd.f32 0.0, %v3433
          %v3435 = vpop.f32.mrb[0].mxu0
          %v3436 = vpop.f32.mrb[0].mxu0
          %v3437 = vadd.f32 0.0, %v3436
          %v3438 = vpop.f32.mrb[0].mxu0
          %3439 = vmatprep.mubr.bf16.mxu0 %v3074
          %3440 = vmatmul.mubr.bf16.gmra.mrb[0].mxu0 %v3073
          %v3441 = vpop.f32.mrb[0].mxu0
          %v3442 = vadd.f32 0.0, %v3441
          %v3443 = vpop.f32.mrb[0].mxu0
          %v3444 = vpop.f32.mrb[0].mxu0
          %v3445 = vadd.f32 0.0, %v3444
          %v3446 = vpop.f32.mrb[0].mxu0
          %3447 = vmatprep.mubr.bf16.mxu0 %v3076
          %3448 = vmatmul.mubr.bf16.gmra.mrb[0].mxu0 %v3075
          %v3449 = vpop.f32.mrb[0].mxu0
          %v3450 = vadd.f32 0.0, %v3449
          %v3451 = vpop.f32.mrb[0].mxu0
          %v3452 = vpop.f32.mrb[0].mxu0
          %v3453 = vadd.f32 0.0, %v3452
          %v3454 = vpop.f32.mrb[0].mxu0
          %3455 = vmatprep.mubr.bf16.mxu0 %v3078
          %3456 = vmatmul.mubr.bf16.gmra.mrb[0].mxu0 %v3077
          %v3457 = vpop.f32.mrb[0].mxu0
          %v3458 = vadd.f32 0.0, %v3457
          %v3459 = vpop.f32.mrb[0].mxu0
          %v3460 = vpop.f32.mrb[0].mxu0
          %v3461 = vadd.f32 0.0, %v3460
          %v3462 = vpop.f32.mrb[0].mxu0
          %3463 = vdwg.mxu0
          %v3464 = vld [vmem:[#allocation5] sm:$0xff]
          %v3465 = vld [vmem:[#allocation5 + $0x8] sm:$0xff]
          %v3466 = vld [vmem:[#allocation5 + $0x10] sm:$0xff]
          %v3467 = vld [vmem:[#allocation5 + $0x18] sm:$0xff]
          %v3468 = vld [vmem:[#allocation5 + $0x20] sm:$0xff]
          %v3469 = vld [vmem:[#allocation5 + $0x28] sm:$0xff]
          %v3470 = vld [vmem:[#allocation5 + $0x30] sm:$0xff]
          %v3471 = vld [vmem:[#allocation5 + $0x38] sm:$0xff]
          %v3472 = vld [vmem:[#allocation5 + $0x40] sm:$0xff]
          %v3473 = vld [vmem:[#allocation5 + $0x48] sm:$0xff]
          %v3474 = vld [vmem:[#allocation5 + $0x50] sm:$0xff]
          %v3475 = vld [vmem:[#allocation5 + $0x58] sm:$0xff]
          %v3476 = vld [vmem:[#allocation5 + $0x60] sm:$0xff]
          %v3477 = vld [vmem:[#allocation5 + $0x68] sm:$0xff]
          %v3478 = vld [vmem:[#allocation5 + $0x70] sm:$0xff]
          %v3479 = vld [vmem:[#allocation5 + $0x78] sm:$0xff]
          %v3480 = vld [vmem:[#allocation5 + $0x80] sm:$0xff]
          %v3481 = vld [vmem:[#allocation5 + $0x88] sm:$0xff]
          %v3482 = vld [vmem:[#allocation5 + $0x90] sm:$0xff]
          %v3483 = vld [vmem:[#allocation5 + $0x98] sm:$0xff]
          %v3484 = vld [vmem:[#allocation5 + $0xa0] sm:$0xff]
          %v3485 = vld [vmem:[#allocation5 + $0xa8] sm:$0xff]
          %v3486 = vld [vmem:[#allocation5 + $0xb0] sm:$0xff]
          %v3487 = vld [vmem:[#allocation5 + $0xb8] sm:$0xff]
          %v3488 = vld [vmem:[#allocation5 + $0xc0] sm:$0xff]
          %v3489 = vld [vmem:[#allocation5 + $0xc8] sm:$0xff]
          %v3490 = vld [vmem:[#allocation5 + $0xd0] sm:$0xff]
          %v3491 = vld [vmem:[#allocation5 + $0xd8] sm:$0xff]
          %v3492 = vld [vmem:[#allocation5 + $0xe0] sm:$0xff]
          %v3493 = vld [vmem:[#allocation5 + $0xe8] sm:$0xff]
          %v3494 = vld [vmem:[#allocation5 + $0xf0] sm:$0xff]
          %v3495 = vld [vmem:[#allocation5 + $0xf8] sm:$0xff]
          %v3496 = vld [vmem:[#allocation5 + $0x100] sm:$0xff]
          %v3497 = vld [vmem:[#allocation5 + $0x108] sm:$0xff]
          %v3498 = vld [vmem:[#allocation5 + $0x110] sm:$0xff]
          %v3499 = vld [vmem:[#allocation5 + $0x118] sm:$0xff]
          %v3500 = vld [vmem:[#allocation5 + $0x120] sm:$0xff]
          %v3501 = vld [vmem:[#allocation5 + $0x128] sm:$0xff]
          %v3502 = vld [vmem:[#allocation5 + $0x130] sm:$0xff]
          %v3503 = vld [vmem:[#allocation5 + $0x138] sm:$0xff]
          %v3504 = vld [vmem:[#allocation5 + $0x140] sm:$0xff]
          %v3505 = vld [vmem:[#allocation5 + $0x148] sm:$0xff]
          %v3506 = vld [vmem:[#allocation5 + $0x150] sm:$0xff]
          %v3507 = vld [vmem:[#allocation5 + $0x158] sm:$0xff]
          %v3508 = vld [vmem:[#allocation5 + $0x160] sm:$0xff]
          %v3509 = vld [vmem:[#allocation5 + $0x168] sm:$0xff]
          %v3510 = vld [vmem:[#allocation5 + $0x170] sm:$0xff]
          %v3511 = vld [vmem:[#allocation5 + $0x178] sm:$0xff]
          %v3512 = vld [vmem:[#allocation5 + $0x180] sm:$0xff]
          %v3513 = vld [vmem:[#allocation5 + $0x188] sm:$0xff]
          %v3514 = vld [vmem:[#allocation5 + $0x190] sm:$0xff]
          %v3515 = vld [vmem:[#allocation5 + $0x198] sm:$0xff]
          %v3516 = vld [vmem:[#allocation5 + $0x1a0] sm:$0xff]
          %v3517 = vld [vmem:[#allocation5 + $0x1a8] sm:$0xff]
          %v3518 = vld [vmem:[#allocation5 + $0x1b0] sm:$0xff]
          %v3519 = vld [vmem:[#allocation5 + $0x1b8] sm:$0xff]
          %v3520 = vld [vmem:[#allocation5 + $0x1c0] sm:$0xff]
          %v3521 = vld [vmem:[#allocation5 + $0x1c8] sm:$0xff]
          %v3522 = vld [vmem:[#allocation5 + $0x1d0] sm:$0xff]
          %v3523 = vld [vmem:[#allocation5 + $0x1d8] sm:$0xff]
          %v3524 = vld [vmem:[#allocation5 + $0x1e0] sm:$0xff]
          %v3525 = vld [vmem:[#allocation5 + $0x1e8] sm:$0xff]
          %v3526 = vld [vmem:[#allocation5 + $0x1f0] sm:$0xff]
          %v3527 = vld [vmem:[#allocation5 + $0x1f8] sm:$0xff]
          %3529 = vset.pattern.permute.xlu0 0
          %3530 = vperm.xlu0 %3529, %v1735
          %v3531 = vpop.permute.xlu0 %3530
          %3534 = vset.pattern.permute.xlu0 0
          %3535 = vperm.xlu0 %3534, %v1737
          %v3536 = vpop.permute.xlu0 %3535
          %3539 = vset.pattern.permute.xlu0 0
          %3540 = vperm.xlu0 %3539, %v1739
          %v3541 = vpop.permute.xlu0 %3540
          %3544 = vset.pattern.permute.xlu0 0
          %3545 = vperm.xlu0 %3544, %v1741
          %v3546 = vpop.permute.xlu0 %3545
          %3549 = vset.pattern.permute.xlu0 0
          %3550 = vperm.xlu0 %3549, %v1743
          %v3551 = vpop.permute.xlu0 %3550
          %3554 = vset.pattern.permute.xlu0 0
          %3555 = vperm.xlu0 %3554, %v1745
          %v3556 = vpop.permute.xlu0 %3555
          %3559 = vset.pattern.permute.xlu0 0
          %3560 = vperm.xlu0 %3559, %v1747
          %v3561 = vpop.permute.xlu0 %3560
          %3564 = vset.pattern.permute.xlu0 0
          %3565 = vperm.xlu0 %3564, %v1749
          %v3566 = vpop.permute.xlu0 %3565
          %3569 = vset.pattern.permute.xlu0 0
          %3570 = vperm.xlu0 %3569, %v1751
          %v3571 = vpop.permute.xlu0 %3570
          %3574 = vset.pattern.permute.xlu0 0
          %3575 = vperm.xlu0 %3574, %v1753
          %v3576 = vpop.permute.xlu0 %3575
          %3579 = vset.pattern.permute.xlu0 0
          %3580 = vperm.xlu0 %3579, %v1755
          %v3581 = vpop.permute.xlu0 %3580
          %3584 = vset.pattern.permute.xlu0 0
          %3585 = vperm.xlu0 %3584, %v1757
          %v3586 = vpop.permute.xlu0 %3585
          %3589 = vset.pattern.permute.xlu0 0
          %3590 = vperm.xlu0 %3589, %v1759
          %v3591 = vpop.permute.xlu0 %3590
          %3594 = vset.pattern.permute.xlu0 0
          %3595 = vperm.xlu0 %3594, %v1761
          %v3596 = vpop.permute.xlu0 %3595
          %3599 = vset.pattern.permute.xlu0 0
          %3600 = vperm.xlu0 %3599, %v1763
          %v3601 = vpop.permute.xlu0 %3600
          %3604 = vset.pattern.permute.xlu0 0
          %3605 = vperm.xlu0 %3604, %v1765
          %v3606 = vpop.permute.xlu0 %3605
          %3609 = vset.pattern.permute.xlu0 0
          %3610 = vperm.xlu0 %3609, %v1767
          %v3611 = vpop.permute.xlu0 %3610
          %3614 = vset.pattern.permute.xlu0 0
          %3615 = vperm.xlu0 %3614, %v1769
          %v3616 = vpop.permute.xlu0 %3615
          %3619 = vset.pattern.permute.xlu0 0
          %3620 = vperm.xlu0 %3619, %v1771
          %v3621 = vpop.permute.xlu0 %3620
          %3624 = vset.pattern.permute.xlu0 0
          %3625 = vperm.xlu0 %3624, %v1773
          %v3626 = vpop.permute.xlu0 %3625
          %3629 = vset.pattern.permute.xlu0 0
          %3630 = vperm.xlu0 %3629, %v1775
          %v3631 = vpop.permute.xlu0 %3630
          %3634 = vset.pattern.permute.xlu0 0
          %3635 = vperm.xlu0 %3634, %v1777
          %v3636 = vpop.permute.xlu0 %3635
          %3639 = vset.pattern.permute.xlu0 0
          %3640 = vperm.xlu0 %3639, %v1779
          %v3641 = vpop.permute.xlu0 %3640
          %3644 = vset.pattern.permute.xlu0 0
          %3645 = vperm.xlu0 %3644, %v1781
          %v3646 = vpop.permute.xlu0 %3645
          %3649 = vset.pattern.permute.xlu0 0
          %3650 = vperm.xlu0 %3649, %v1783
          %v3651 = vpop.permute.xlu0 %3650
          %3654 = vset.pattern.permute.xlu0 0
          %3655 = vperm.xlu0 %3654, %v1785
          %v3656 = vpop.permute.xlu0 %3655
          %3659 = vset.pattern.permute.xlu0 0
          %3660 = vperm.xlu0 %3659, %v1787
          %v3661 = vpop.permute.xlu0 %3660
          %3664 = vset.pattern.permute.xlu0 0
          %3665 = vperm.xlu0 %3664, %v1789
          %v3666 = vpop.permute.xlu0 %3665
          %3669 = vset.pattern.permute.xlu0 0
          %3670 = vperm.xlu0 %3669, %v1791
          %v3671 = vpop.permute.xlu0 %3670
          %3674 = vset.pattern.permute.xlu0 0
          %3675 = vperm.xlu0 %3674, %v1793
          %v3676 = vpop.permute.xlu0 %3675
          %3679 = vset.pattern.permute.xlu0 0
          %3680 = vperm.xlu0 %3679, %v1795
          %v3681 = vpop.permute.xlu0 %3680
          %3684 = vset.pattern.permute.xlu0 0
          %3685 = vperm.xlu0 %3684, %v1797
          %v3686 = vpop.permute.xlu0 %3685
          %3689 = vset.pattern.permute.xlu0 0
          %3690 = vperm.xlu0 %3689, %v1799
          %v3691 = vpop.permute.xlu0 %3690
          %3694 = vset.pattern.permute.xlu0 0
          %3695 = vperm.xlu0 %3694, %v1801
          %v3696 = vpop.permute.xlu0 %3695
          %3699 = vset.pattern.permute.xlu0 0
          %3700 = vperm.xlu0 %3699, %v1803
          %v3701 = vpop.permute.xlu0 %3700
          %3704 = vset.pattern.permute.xlu0 0
          %3705 = vperm.xlu0 %3704, %v1805
          %v3706 = vpop.permute.xlu0 %3705
          %3709 = vset.pattern.permute.xlu0 0
          %3710 = vperm.xlu0 %3709, %v1807
          %v3711 = vpop.permute.xlu0 %3710
          %3714 = vset.pattern.permute.xlu0 0
          %3715 = vperm.xlu0 %3714, %v1809
          %v3716 = vpop.permute.xlu0 %3715
          %3719 = vset.pattern.permute.xlu0 0
          %3720 = vperm.xlu0 %3719, %v1811
          %v3721 = vpop.permute.xlu0 %3720
          %3724 = vset.pattern.permute.xlu0 0
          %3725 = vperm.xlu0 %3724, %v1813
          %v3726 = vpop.permute.xlu0 %3725
          %3729 = vset.pattern.permute.xlu0 0
          %3730 = vperm.xlu0 %3729, %v1815
          %v3731 = vpop.permute.xlu0 %3730
          %3734 = vset.pattern.permute.xlu0 0
          %3735 = vperm.xlu0 %3734, %v1817
          %v3736 = vpop.permute.xlu0 %3735
          %3739 = vset.pattern.permute.xlu0 0
          %3740 = vperm.xlu0 %3739, %v1819
          %v3741 = vpop.permute.xlu0 %3740
          %3744 = vset.pattern.permute.xlu0 0
          %3745 = vperm.xlu0 %3744, %v1821
          %v3746 = vpop.permute.xlu0 %3745
          %3749 = vset.pattern.permute.xlu0 0
          %3750 = vperm.xlu0 %3749, %v1823
          %v3751 = vpop.permute.xlu0 %3750
          %3754 = vset.pattern.permute.xlu0 0
          %3755 = vperm.xlu0 %3754, %v1825
          %v3756 = vpop.permute.xlu0 %3755
          %3759 = vset.pattern.permute.xlu0 0
          %3760 = vperm.xlu0 %3759, %v1827
          %v3761 = vpop.permute.xlu0 %3760
          %3764 = vset.pattern.permute.xlu0 0
          %3765 = vperm.xlu0 %3764, %v1829
          %v3766 = vpop.permute.xlu0 %3765
          %3769 = vset.pattern.permute.xlu0 0
          %3770 = vperm.xlu0 %3769, %v1831
          %v3771 = vpop.permute.xlu0 %3770
          %3774 = vset.pattern.permute.xlu0 0
          %3775 = vperm.xlu0 %3774, %v1833
          %v3776 = vpop.permute.xlu0 %3775
          %3779 = vset.pattern.permute.xlu0 0
          %3780 = vperm.xlu0 %3779, %v1835
          %v3781 = vpop.permute.xlu0 %3780
          %3784 = vset.pattern.permute.xlu0 0
          %3785 = vperm.xlu0 %3784, %v1837
          %v3786 = vpop.permute.xlu0 %3785
          %3789 = vset.pattern.permute.xlu0 0
          %3790 = vperm.xlu0 %3789, %v1839
          %v3791 = vpop.permute.xlu0 %3790
          %3794 = vset.pattern.permute.xlu0 0
          %3795 = vperm.xlu0 %3794, %v1841
          %v3796 = vpop.permute.xlu0 %3795
          %3799 = vset.pattern.permute.xlu0 0
          %3800 = vperm.xlu0 %3799, %v1843
          %v3801 = vpop.permute.xlu0 %3800
          %3804 = vset.pattern.permute.xlu0 0
          %3805 = vperm.xlu0 %3804, %v1845
          %v3806 = vpop.permute.xlu0 %3805
          %3809 = vset.pattern.permute.xlu0 0
          %3810 = vperm.xlu0 %3809, %v1847
          %v3811 = vpop.permute.xlu0 %3810
          %3814 = vset.pattern.permute.xlu0 0
          %3815 = vperm.xlu0 %3814, %v1849
          %v3816 = vpop.permute.xlu0 %3815
          %3819 = vset.pattern.permute.xlu0 0
          %3820 = vperm.xlu0 %3819, %v1851
          %v3821 = vpop.permute.xlu0 %3820
          %3824 = vset.pattern.permute.xlu0 0
          %3825 = vperm.xlu0 %3824, %v1853
          %v3826 = vpop.permute.xlu0 %3825
          %3829 = vset.pattern.permute.xlu0 0
          %3830 = vperm.xlu0 %3829, %v1855
          %v3831 = vpop.permute.xlu0 %3830
          %3834 = vset.pattern.permute.xlu0 0
          %3835 = vperm.xlu0 %3834, %v1857
          %v3836 = vpop.permute.xlu0 %3835
          %3839 = vset.pattern.permute.xlu0 0
          %3840 = vperm.xlu0 %3839, %v1859
          %v3841 = vpop.permute.xlu0 %3840
          %3844 = vset.pattern.permute.xlu0 0
          %3845 = vperm.xlu0 %3844, %v1861
          %v3846 = vpop.permute.xlu0 %3845
          %v3848 = vmul.f32 %v3531, %v3464
          %v3849 = vmul.f32 %v3536, %v3465
          %v3850 = vmul.f32 %v3541, %v3466
          %v3851 = vmul.f32 %v3546, %v3467
          %v3852 = vmul.f32 %v3551, %v3468
          %v3853 = vmul.f32 %v3556, %v3469
          %v3854 = vmul.f32 %v3561, %v3470
          %v3855 = vmul.f32 %v3566, %v3471
          %v3856 = vmul.f32 %v3571, %v3472
          %v3857 = vmul.f32 %v3576, %v3473
          %v3858 = vmul.f32 %v3581, %v3474
          %v3859 = vmul.f32 %v3586, %v3475
          %v3860 = vmul.f32 %v3591, %v3476
          %v3861 = vmul.f32 %v3596, %v3477
          %v3862 = vmul.f32 %v3601, %v3478
          %v3863 = vmul.f32 %v3606, %v3479
          %v3864 = vmul.f32 %v3611, %v3480
          %v3865 = vmul.f32 %v3616, %v3481
          %v3866 = vmul.f32 %v3621, %v3482
          %v3867 = vmul.f32 %v3626, %v3483
          %v3868 = vmul.f32 %v3631, %v3484
          %v3869 = vmul.f32 %v3636, %v3485
          %v3870 = vmul.f32 %v3641, %v3486
          %v3871 = vmul.f32 %v3646, %v3487
          %v3872 = vmul.f32 %v3651, %v3488
          %v3873 = vmul.f32 %v3656, %v3489
          %v3874 = vmul.f32 %v3661, %v3490
          %v3875 = vmul.f32 %v3666, %v3491
          %v3876 = vmul.f32 %v3671, %v3492
          %v3877 = vmul.f32 %v3676, %v3493
          %v3878 = vmul.f32 %v3681, %v3494
          %v3879 = vmul.f32 %v3686, %v3495
          %v3880 = vmul.f32 %v3691, %v3496
          %v3881 = vmul.f32 %v3696, %v3497
          %v3882 = vmul.f32 %v3701, %v3498
          %v3883 = vmul.f32 %v3706, %v3499
          %v3884 = vmul.f32 %v3711, %v3500
          %v3885 = vmul.f32 %v3716, %v3501
          %v3886 = vmul.f32 %v3721, %v3502
          %v3887 = vmul.f32 %v3726, %v3503
          %v3888 = vmul.f32 %v3731, %v3504
          %v3889 = vmul.f32 %v3736, %v3505
          %v3890 = vmul.f32 %v3741, %v3506
          %v3891 = vmul.f32 %v3746, %v3507
          %v3892 = vmul.f32 %v3751, %v3508
          %v3893 = vmul.f32 %v3756, %v3509
          %v3894 = vmul.f32 %v3761, %v3510
          %v3895 = vmul.f32 %v3766, %v3511
          %v3896 = vmul.f32 %v3771, %v3512
          %v3897 = vmul.f32 %v3776, %v3513
          %v3898 = vmul.f32 %v3781, %v3514
          %v3899 = vmul.f32 %v3786, %v3515
          %v3900 = vmul.f32 %v3791, %v3516
          %v3901 = vmul.f32 %v3796, %v3517
          %v3902 = vmul.f32 %v3801, %v3518
          %v3903 = vmul.f32 %v3806, %v3519
          %v3904 = vmul.f32 %v3811, %v3520
          %v3905 = vmul.f32 %v3816, %v3521
          %v3906 = vmul.f32 %v3821, %v3522
          %v3907 = vmul.f32 %v3826, %v3523
          %v3908 = vmul.f32 %v3831, %v3524
          %v3909 = vmul.f32 %v3836, %v3525
          %v3910 = vmul.f32 %v3841, %v3526
          %v3911 = vmul.f32 %v3846, %v3527
          %v3912 = vadd.f32 %v3848, %v3210
          %v3913 = vadd.f32 %v3849, %v3213
          %v3914 = vadd.f32 %v3850, %v3218
          %v3915 = vadd.f32 %v3851, %v3221
          %v3916 = vadd.f32 %v3852, %v3226
          %v3917 = vadd.f32 %v3853, %v3229
          %v3918 = vadd.f32 %v3854, %v3234
          %v3919 = vadd.f32 %v3855, %v3237
          %v3920 = vadd.f32 %v3856, %v3242
          %v3921 = vadd.f32 %v3857, %v3245
          %v3922 = vadd.f32 %v3858, %v3250
          %v3923 = vadd.f32 %v3859, %v3253
          %v3924 = vadd.f32 %v3860, %v3258
          %v3925 = vadd.f32 %v3861, %v3261
          %v3926 = vadd.f32 %v3862, %v3266
          %v3927 = vadd.f32 %v3863, %v3269
          %v3928 = vadd.f32 %v3864, %v3274
          %v3929 = vadd.f32 %v3865, %v3277
          %v3930 = vadd.f32 %v3866, %v3282
          %v3931 = vadd.f32 %v3867, %v3285
          %v3932 = vadd.f32 %v3868, %v3290
          %v3933 = vadd.f32 %v3869, %v3293
          %v3934 = vadd.f32 %v3870, %v3298
          %v3935 = vadd.f32 %v3871, %v3301
          %v3936 = vadd.f32 %v3872, %v3306
          %v3937 = vadd.f32 %v3873, %v3309
          %v3938 = vadd.f32 %v3874, %v3314
          %v3939 = vadd.f32 %v3875, %v3317
          %v3940 = vadd.f32 %v3876, %v3322
          %v3941 = vadd.f32 %v3877, %v3325
          %v3942 = vadd.f32 %v3878, %v3330
          %v3943 = vadd.f32 %v3879, %v3333
          %v3944 = vadd.f32 %v3880, %v3338
          %v3945 = vadd.f32 %v3881, %v3341
          %v3946 = vadd.f32 %v3882, %v3346
          %v3947 = vadd.f32 %v3883, %v3349
          %v3948 = vadd.f32 %v3884, %v3354
          %v3949 = vadd.f32 %v3885, %v3357
          %v3950 = vadd.f32 %v3886, %v3362
          %v3951 = vadd.f32 %v3887, %v3365
          %v3952 = vadd.f32 %v3888, %v3370
          %v3953 = vadd.f32 %v3889, %v3373
          %v3954 = vadd.f32 %v3890, %v3378
          %v3955 = vadd.f32 %v3891, %v3381
          %v3956 = vadd.f32 %v3892, %v3386
          %v3957 = vadd.f32 %v3893, %v3389
          %v3958 = vadd.f32 %v3894, %v3394
          %v3959 = vadd.f32 %v3895, %v3397
          %v3960 = vadd.f32 %v3896, %v3402
          %v3961 = vadd.f32 %v3897, %v3405
          %v3962 = vadd.f32 %v3898, %v3410
          %v3963 = vadd.f32 %v3899, %v3413
          %v3964 = vadd.f32 %v3900, %v3418
          %v3965 = vadd.f32 %v3901, %v3421
          %v3966 = vadd.f32 %v3902, %v3426
          %v3967 = vadd.f32 %v3903, %v3429
          %v3968 = vadd.f32 %v3904, %v3434
          %v3969 = vadd.f32 %v3905, %v3437
          %v3970 = vadd.f32 %v3906, %v3442
          %v3971 = vadd.f32 %v3907, %v3445
          %v3972 = vadd.f32 %v3908, %v3450
          %v3973 = vadd.f32 %v3909, %v3453
          %v3974 = vadd.f32 %v3910, %v3458
          %v3975 = vadd.f32 %v3911, %v3461
          %3976 = vst [vmem:[#allocation5] sm:$0xff] %v3912
          %3977 = vst [vmem:[#allocation5 + $0x8] sm:$0xff] %v3913
          %3978 = vst [vmem:[#allocation5 + $0x10] sm:$0xff] %v3914
          %3979 = vst [vmem:[#allocation5 + $0x18] sm:$0xff] %v3915
          %3980 = vst [vmem:[#allocation5 + $0x20] sm:$0xff] %v3916
          %3981 = vst [vmem:[#allocation5 + $0x28] sm:$0xff] %v3917
          %3982 = vst [vmem:[#allocation5 + $0x30] sm:$0xff] %v3918
          %3983 = vst [vmem:[#allocation5 + $0x38] sm:$0xff] %v3919
          %3984 = vst [vmem:[#allocation5 + $0x40] sm:$0xff] %v3920
          %3985 = vst [vmem:[#allocation5 + $0x48] sm:$0xff] %v3921
          %3986 = vst [vmem:[#allocation5 + $0x50] sm:$0xff] %v3922
          %3987 = vst [vmem:[#allocation5 + $0x58] sm:$0xff] %v3923
          %3988 = vst [vmem:[#allocation5 + $0x60] sm:$0xff] %v3924
          %3989 = vst [vmem:[#allocation5 + $0x68] sm:$0xff] %v3925
          %3990 = vst [vmem:[#allocation5 + $0x70] sm:$0xff] %v3926
          %3991 = vst [vmem:[#allocation5 + $0x78] sm:$0xff] %v3927
          %3992 = vst [vmem:[#allocation5 + $0x80] sm:$0xff] %v3928
          %3993 = vst [vmem:[#allocation5 + $0x88] sm:$0xff] %v3929
          %3994 = vst [vmem:[#allocation5 + $0x90] sm:$0xff] %v3930
          %3995 = vst [vmem:[#allocation5 + $0x98] sm:$0xff] %v3931
          %3996 = vst [vmem:[#allocation5 + $0xa0] sm:$0xff] %v3932
          %3997 = vst [vmem:[#allocation5 + $0xa8] sm:$0xff] %v3933
          %3998 = vst [vmem:[#allocation5 + $0xb0] sm:$0xff] %v3934
          %3999 = vst [vmem:[#allocation5 + $0xb8] sm:$0xff] %v3935
          %4000 = vst [vmem:[#allocation5 + $0xc0] sm:$0xff] %v3936
          %4001 = vst [vmem:[#allocation5 + $0xc8] sm:$0xff] %v3937
          %4002 = vst [vmem:[#allocation5 + $0xd0] sm:$0xff] %v3938
          %4003 = vst [vmem:[#allocation5 + $0xd8] sm:$0xff] %v3939
          %4004 = vst [vmem:[#allocation5 + $0xe0] sm:$0xff] %v3940
          %4005 = vst [vmem:[#allocation5 + $0xe8] sm:$0xff] %v3941
          %4006 = vst [vmem:[#allocation5 + $0xf0] sm:$0xff] %v3942
          %4007 = vst [vmem:[#allocation5 + $0xf8] sm:$0xff] %v3943
          %4008 = vst [vmem:[#allocation5 + $0x100] sm:$0xff] %v3944
          %4009 = vst [vmem:[#allocation5 + $0x108] sm:$0xff] %v3945
          %4010 = vst [vmem:[#allocation5 + $0x110] sm:$0xff] %v3946
          %4011 = vst [vmem:[#allocation5 + $0x118] sm:$0xff] %v3947
          %4012 = vst [vmem:[#allocation5 + $0x120] sm:$0xff] %v3948
          %4013 = vst [vmem:[#allocation5 + $0x128] sm:$0xff] %v3949
          %4014 = vst [vmem:[#allocation5 + $0x130] sm:$0xff] %v3950
          %4015 = vst [vmem:[#allocation5 + $0x138] sm:$0xff] %v3951
          %4016 = vst [vmem:[#allocation5 + $0x140] sm:$0xff] %v3952
          %4017 = vst [vmem:[#allocation5 + $0x148] sm:$0xff] %v3953
          %4018 = vst [vmem:[#allocation5 + $0x150] sm:$0xff] %v3954
          %4019 = vst [vmem:[#allocation5 + $0x158] sm:$0xff] %v3955
          %4020 = vst [vmem:[#allocation5 + $0x160] sm:$0xff] %v3956
          %4021 = vst [vmem:[#allocation5 + $0x168] sm:$0xff] %v3957
          %4022 = vst [vmem:[#allocation5 + $0x170] sm:$0xff] %v3958
          %4023 = vst [vmem:[#allocation5 + $0x178] sm:$0xff] %v3959
          %4024 = vst [vmem:[#allocation5 + $0x180] sm:$0xff] %v3960
          %4025 = vst [vmem:[#allocation5 + $0x188] sm:$0xff] %v3961
          %4026 = vst [vmem:[#allocation5 + $0x190] sm:$0xff] %v3962
          %4027 = vst [vmem:[#allocation5 + $0x198] sm:$0xff] %v3963
          %4028 = vst [vmem:[#allocation5 + $0x1a0] sm:$0xff] %v3964
          %4029 = vst [vmem:[#allocation5 + $0x1a8] sm:$0xff] %v3965
          %4030 = vst [vmem:[#allocation5 + $0x1b0] sm:$0xff] %v3966
          %4031 = vst [vmem:[#allocation5 + $0x1b8] sm:$0xff] %v3967
          %4032 = vst [vmem:[#allocation5 + $0x1c0] sm:$0xff] %v3968
          %4033 = vst [vmem:[#allocation5 + $0x1c8] sm:$0xff] %v3969
          %4034 = vst [vmem:[#allocation5 + $0x1d0] sm:$0xff] %v3970
          %4035 = vst [vmem:[#allocation5 + $0x1d8] sm:$0xff] %v3971
          %4036 = vst [vmem:[#allocation5 + $0x1e0] sm:$0xff] %v3972
          %4037 = vst [vmem:[#allocation5 + $0x1e8] sm:$0xff] %v3973
          %4038 = vst [vmem:[#allocation5 + $0x1f0] sm:$0xff] %v3974
          %4039 = vst [vmem:[#allocation5 + $0x1f8] sm:$0xff] %v3975
          %4040 = vst.msk [vmem:[#allocation3] sm:$0xff] %vm2950, %v1606
          %4041 = vst.msk [vmem:[#allocation3 + $0x8] sm:$0xff] %vm2950, %v1607
          %4042 = vst.msk [vmem:[#allocation3 + $0x10] sm:$0xff] %vm2950, %v1608
          %4043 = vst.msk [vmem:[#allocation3 + $0x18] sm:$0xff] %vm2950, %v1609
          %4044 = vst.msk [vmem:[#allocation3 + $0x20] sm:$0xff] %vm2950, %v1610
          %4045 = vst.msk [vmem:[#allocation3 + $0x28] sm:$0xff] %vm2950, %v1611
          %4046 = vst.msk [vmem:[#allocation3 + $0x30] sm:$0xff] %vm2950, %v1612
          %4047 = vst.msk [vmem:[#allocation3 + $0x38] sm:$0xff] %vm2950, %v1613
          %4048 = vst.msk [vmem:[#allocation3 + $0x40] sm:$0xff] %vm2950, %v1614
          %4049 = vst.msk [vmem:[#allocation3 + $0x48] sm:$0xff] %vm2950, %v1615
          %4050 = vst.msk [vmem:[#allocation3 + $0x50] sm:$0xff] %vm2950, %v1616
          %4051 = vst.msk [vmem:[#allocation3 + $0x58] sm:$0xff] %vm2950, %v1617
          %4052 = vst.msk [vmem:[#allocation3 + $0x60] sm:$0xff] %vm2950, %v1618
          %4053 = vst.msk [vmem:[#allocation3 + $0x68] sm:$0xff] %vm2950, %v1619
          %4054 = vst.msk [vmem:[#allocation3 + $0x70] sm:$0xff] %vm2950, %v1620
          %4055 = vst.msk [vmem:[#allocation3 + $0x78] sm:$0xff] %vm2950, %v1621
          %4056 = vst.msk [vmem:[#allocation3 + $0x80] sm:$0xff] %vm2950, %v1622
          %4057 = vst.msk [vmem:[#allocation3 + $0x88] sm:$0xff] %vm2950, %v1623
          %4058 = vst.msk [vmem:[#allocation3 + $0x90] sm:$0xff] %vm2950, %v1624
          %4059 = vst.msk [vmem:[#allocation3 + $0x98] sm:$0xff] %vm2950, %v1625
          %4060 = vst.msk [vmem:[#allocation3 + $0xa0] sm:$0xff] %vm2950, %v1626
          %4061 = vst.msk [vmem:[#allocation3 + $0xa8] sm:$0xff] %vm2950, %v1627
          %4062 = vst.msk [vmem:[#allocation3 + $0xb0] sm:$0xff] %vm2950, %v1628
          %4063 = vst.msk [vmem:[#allocation3 + $0xb8] sm:$0xff] %vm2950, %v1629
          %4064 = vst.msk [vmem:[#allocation3 + $0xc0] sm:$0xff] %vm2950, %v1630
          %4065 = vst.msk [vmem:[#allocation3 + $0xc8] sm:$0xff] %vm2950, %v1631
          %4066 = vst.msk [vmem:[#allocation3 + $0xd0] sm:$0xff] %vm2950, %v1632
          %4067 = vst.msk [vmem:[#allocation3 + $0xd8] sm:$0xff] %vm2950, %v1633
          %4068 = vst.msk [vmem:[#allocation3 + $0xe0] sm:$0xff] %vm2950, %v1634
          %4069 = vst.msk [vmem:[#allocation3 + $0xe8] sm:$0xff] %vm2950, %v1635
          %4070 = vst.msk [vmem:[#allocation3 + $0xf0] sm:$0xff] %vm2950, %v1636
          %4071 = vst.msk [vmem:[#allocation3 + $0xf8] sm:$0xff] %vm2950, %v1637
          %4072 = vst.msk [vmem:[#allocation3 + $0x100] sm:$0xff] %vm2950, %v1638
          %4073 = vst.msk [vmem:[#allocation3 + $0x108] sm:$0xff] %vm2950, %v1639
          %4074 = vst.msk [vmem:[#allocation3 + $0x110] sm:$0xff] %vm2950, %v1640
          %4075 = vst.msk [vmem:[#allocation3 + $0x118] sm:$0xff] %vm2950, %v1641
          %4076 = vst.msk [vmem:[#allocation3 + $0x120] sm:$0xff] %vm2950, %v1642
          %4077 = vst.msk [vmem:[#allocation3 + $0x128] sm:$0xff] %vm2950, %v1643
          %4078 = vst.msk [vmem:[#allocation3 + $0x130] sm:$0xff] %vm2950, %v1644
          %4079 = vst.msk [vmem:[#allocation3 + $0x138] sm:$0xff] %vm2950, %v1645
          %4080 = vst.msk [vmem:[#allocation3 + $0x140] sm:$0xff] %vm2950, %v1646
          %4081 = vst.msk [vmem:[#allocation3 + $0x148] sm:$0xff] %vm2950, %v1647
          %4082 = vst.msk [vmem:[#allocation3 + $0x150] sm:$0xff] %vm2950, %v1648
          %4083 = vst.msk [vmem:[#allocation3 + $0x158] sm:$0xff] %vm2950, %v1649
          %4084 = vst.msk [vmem:[#allocation3 + $0x160] sm:$0xff] %vm2950, %v1650
          %4085 = vst.msk [vmem:[#allocation3 + $0x168] sm:$0xff] %vm2950, %v1651
          %4086 = vst.msk [vmem:[#allocation3 + $0x170] sm:$0xff] %vm2950, %v1652
          %4087 = vst.msk [vmem:[#allocation3 + $0x178] sm:$0xff] %vm2950, %v1653
          %4088 = vst.msk [vmem:[#allocation3 + $0x180] sm:$0xff] %vm2950, %v1654
          %4089 = vst.msk [vmem:[#allocation3 + $0x188] sm:$0xff] %vm2950, %v1655
          %4090 = vst.msk [vmem:[#allocation3 + $0x190] sm:$0xff] %vm2950, %v1656
          %4091 = vst.msk [vmem:[#allocation3 + $0x198] sm:$0xff] %vm2950, %v1657
          %4092 = vst.msk [vmem:[#allocation3 + $0x1a0] sm:$0xff] %vm2950, %v1658
          %4093 = vst.msk [vmem:[#allocation3 + $0x1a8] sm:$0xff] %vm2950, %v1659
          %4094 = vst.msk [vmem:[#allocation3 + $0x1b0] sm:$0xff] %vm2950, %v1660
          %4095 = vst.msk [vmem:[#allocation3 + $0x1b8] sm:$0xff] %vm2950, %v1661
          %4096 = vst.msk [vmem:[#allocation3 + $0x1c0] sm:$0xff] %vm2950, %v1662
          %4097 = vst.msk [vmem:[#allocation3 + $0x1c8] sm:$0xff] %vm2950, %v1663
          %4098 = vst.msk [vmem:[#allocation3 + $0x1d0] sm:$0xff] %vm2950, %v1664
          %4099 = vst.msk [vmem:[#allocation3 + $0x1d8] sm:$0xff] %vm2950, %v1665
          %4100 = vst.msk [vmem:[#allocation3 + $0x1e0] sm:$0xff] %vm2950, %v1666
          %4101 = vst.msk [vmem:[#allocation3 + $0x1e8] sm:$0xff] %vm2950, %v1667
          %4102 = vst.msk [vmem:[#allocation3 + $0x1f0] sm:$0xff] %vm2950, %v1668
          %4103 = vst.msk [vmem:[#allocation3 + $0x1f8] sm:$0xff] %vm2950, %v1669
        $region52: #{tpu_custom_call.1} parent=31 // pred_fallthru
          _
        %p4104 = scmp.eq.s32.totalorder %s347, %s346
        // Predicated region
        $region53: #{tpu_custom_call.1} parent=31 // pred_check
          %p4105 = pneg %p4104
        $region54: #{tpu_custom_call.1} parent=31 // pred_check_branch
          %4107 = sbr.rel (%p4105) target = $region56
        $region55: #{tpu_custom_call.1} parent=31 // pred_region
          %v4108 = vld [vmem:[%s293] sm:$0xf]
          %v4109 = vld [vmem:[%s293 + $0x4] sm:$0xf]
          %v4110 = vld [vmem:[%s293 + $0x8] sm:$0xf]
          %v4111 = vld [vmem:[%s293 + $0xc] sm:$0xf]
          %v4112 = vld [vmem:[%s293 + $0x10] sm:$0xf]
          %v4113 = vld [vmem:[%s293 + $0x14] sm:$0xf]
          %v4114 = vld [vmem:[%s293 + $0x18] sm:$0xf]
          %v4115 = vld [vmem:[%s293 + $0x1c] sm:$0xf]
          %v4116 = vld [vmem:[%s293 + $0x20] sm:$0xf]
          %v4117 = vld [vmem:[%s293 + $0x24] sm:$0xf]
          %v4118 = vld [vmem:[%s293 + $0x28] sm:$0xf]
          %v4119 = vld [vmem:[%s293 + $0x2c] sm:$0xf]
          %v4120 = vld [vmem:[%s293 + $0x30] sm:$0xf]
          %v4121 = vld [vmem:[%s293 + $0x34] sm:$0xf]
          %v4122 = vld [vmem:[%s293 + $0x38] sm:$0xf]
          %v4123 = vld [vmem:[%s293 + $0x3c] sm:$0xf]
          %v4124 = vld [vmem:[%s293 + $0x40] sm:$0xf]
          %v4125 = vld [vmem:[%s293 + $0x44] sm:$0xf]
          %v4126 = vld [vmem:[%s293 + $0x48] sm:$0xf]
          %v4127 = vld [vmem:[%s293 + $0x4c] sm:$0xf]
          %v4128 = vld [vmem:[%s293 + $0x50] sm:$0xf]
          %v4129 = vld [vmem:[%s293 + $0x54] sm:$0xf]
          %v4130 = vld [vmem:[%s293 + $0x58] sm:$0xf]
          %v4131 = vld [vmem:[%s293 + $0x5c] sm:$0xf]
          %v4132 = vld [vmem:[%s293 + $0x60] sm:$0xf]
          %v4133 = vld [vmem:[%s293 + $0x64] sm:$0xf]
          %v4134 = vld [vmem:[%s293 + $0x68] sm:$0xf]
          %v4135 = vld [vmem:[%s293 + $0x6c] sm:$0xf]
          %v4136 = vld [vmem:[%s293 + $0x70] sm:$0xf]
          %v4137 = vld [vmem:[%s293 + $0x74] sm:$0xf]
          %v4138 = vld [vmem:[%s293 + $0x78] sm:$0xf]
          %v4139 = vld [vmem:[%s293 + $0x7c] sm:$0xf]
          %v4140 = vld [vmem:[%s302] sm:$0xf]
          %v4141 = vld [vmem:[%s302 + $0x4] sm:$0xf]
          %v4142 = vld [vmem:[%s302 + $0x8] sm:$0xf]
          %v4143 = vld [vmem:[%s302 + $0xc] sm:$0xf]
          %v4144 = vld [vmem:[%s302 + $0x10] sm:$0xf]
          %v4145 = vld [vmem:[%s302 + $0x14] sm:$0xf]
          %v4146 = vld [vmem:[%s302 + $0x18] sm:$0xf]
          %v4147 = vld [vmem:[%s302 + $0x1c] sm:$0xf]
          %v4148 = vld [vmem:[%s302 + $0x20] sm:$0xf]
          %v4149 = vld [vmem:[%s302 + $0x24] sm:$0xf]
          %v4150 = vld [vmem:[%s302 + $0x28] sm:$0xf]
          %v4151 = vld [vmem:[%s302 + $0x2c] sm:$0xf]
          %v4152 = vld [vmem:[%s302 + $0x30] sm:$0xf]
          %v4153 = vld [vmem:[%s302 + $0x34] sm:$0xf]
          %v4154 = vld [vmem:[%s302 + $0x38] sm:$0xf]
          %v4155 = vld [vmem:[%s302 + $0x3c] sm:$0xf]
          %v4156 = vld [vmem:[%s302 + $0x40] sm:$0xf]
          %v4157 = vld [vmem:[%s302 + $0x44] sm:$0xf]
          %v4158 = vld [vmem:[%s302 + $0x48] sm:$0xf]
          %v4159 = vld [vmem:[%s302 + $0x4c] sm:$0xf]
          %v4160 = vld [vmem:[%s302 + $0x50] sm:$0xf]
          %v4161 = vld [vmem:[%s302 + $0x54] sm:$0xf]
          %v4162 = vld [vmem:[%s302 + $0x58] sm:$0xf]
          %v4163 = vld [vmem:[%s302 + $0x5c] sm:$0xf]
          %v4164 = vld [vmem:[%s302 + $0x60] sm:$0xf]
          %v4165 = vld [vmem:[%s302 + $0x64] sm:$0xf]
          %v4166 = vld [vmem:[%s302 + $0x68] sm:$0xf]
          %v4167 = vld [vmem:[%s302 + $0x6c] sm:$0xf]
          %v4168 = vld [vmem:[%s302 + $0x70] sm:$0xf]
          %v4169 = vld [vmem:[%s302 + $0x74] sm:$0xf]
          %v4170 = vld [vmem:[%s302 + $0x78] sm:$0xf]
          %v4171 = vld [vmem:[%s302 + $0x7c] sm:$0xf]
          %v4172 = vld [vmem:[#allocation2] sm:$0xff]
          %v4173 = vld [vmem:[#allocation2 + $0x8] sm:$0xff]
          %v4174 = vld [vmem:[#allocation2 + $0x10] sm:$0xff]
          %v4175 = vld [vmem:[#allocation2 + $0x18] sm:$0xff]
          %v4176 = vld [vmem:[#allocation2 + $0x20] sm:$0xff]
          %v4177 = vld [vmem:[#allocation2 + $0x28] sm:$0xff]
          %v4178 = vld [vmem:[#allocation2 + $0x30] sm:$0xff]
          %v4179 = vld [vmem:[#allocation2 + $0x38] sm:$0xff]
          %v4180 = vld [vmem:[#allocation2 + $0x40] sm:$0xff]
          %v4181 = vld [vmem:[#allocation2 + $0x48] sm:$0xff]
          %v4182 = vld [vmem:[#allocation2 + $0x50] sm:$0xff]
          %v4183 = vld [vmem:[#allocation2 + $0x58] sm:$0xff]
          %v4184 = vld [vmem:[#allocation2 + $0x60] sm:$0xff]
          %v4185 = vld [vmem:[#allocation2 + $0x68] sm:$0xff]
          %v4186 = vld [vmem:[#allocation2 + $0x70] sm:$0xff]
          %v4187 = vld [vmem:[#allocation2 + $0x78] sm:$0xff]
          %v4188 = vld [vmem:[#allocation2 + $0x80] sm:$0xff]
          %v4189 = vld [vmem:[#allocation2 + $0x88] sm:$0xff]
          %v4190 = vld [vmem:[#allocation2 + $0x90] sm:$0xff]
          %v4191 = vld [vmem:[#allocation2 + $0x98] sm:$0xff]
          %v4192 = vld [vmem:[#allocation2 + $0xa0] sm:$0xff]
          %v4193 = vld [vmem:[#allocation2 + $0xa8] sm:$0xff]
          %v4194 = vld [vmem:[#allocation2 + $0xb0] sm:$0xff]
          %v4195 = vld [vmem:[#allocation2 + $0xb8] sm:$0xff]
          %v4196 = vld [vmem:[#allocation2 + $0xc0] sm:$0xff]
          %v4197 = vld [vmem:[#allocation2 + $0xc8] sm:$0xff]
          %v4198 = vld [vmem:[#allocation2 + $0xd0] sm:$0xff]
          %v4199 = vld [vmem:[#allocation2 + $0xd8] sm:$0xff]
          %v4200 = vld [vmem:[#allocation2 + $0xe0] sm:$0xff]
          %v4201 = vld [vmem:[#allocation2 + $0xe8] sm:$0xff]
          %v4202 = vld [vmem:[#allocation2 + $0xf0] sm:$0xff]
          %v4203 = vld [vmem:[#allocation2 + $0xf8] sm:$0xff]
          %v4236 = vunpack.c.l.b16 %v4108
          %v4237 = vunpack.c.l.b16 %v4109
          %v4238 = vunpack.c.l.b16 %v4110
          %v4239 = vunpack.c.l.b16 %v4111
          %v4240 = vunpack.c.l.b16 %v4112
          %v4241 = vunpack.c.l.b16 %v4113
          %v4242 = vunpack.c.l.b16 %v4114
          %v4243 = vunpack.c.l.b16 %v4115
          %v4244 = vunpack.c.l.b16 %v4116
          %v4245 = vunpack.c.l.b16 %v4117
          %v4246 = vunpack.c.l.b16 %v4118
          %v4247 = vunpack.c.l.b16 %v4119
          %v4248 = vunpack.c.l.b16 %v4120
          %v4249 = vunpack.c.l.b16 %v4121
          %v4250 = vunpack.c.l.b16 %v4122
          %v4251 = vunpack.c.l.b16 %v4123
          %v4252 = vunpack.c.l.b16 %v4124
          %v4253 = vunpack.c.l.b16 %v4125
          %v4254 = vunpack.c.l.b16 %v4126
          %v4255 = vunpack.c.l.b16 %v4127
          %v4256 = vunpack.c.l.b16 %v4128
          %v4257 = vunpack.c.l.b16 %v4129
          %v4258 = vunpack.c.l.b16 %v4130
          %v4259 = vunpack.c.l.b16 %v4131
          %v4260 = vunpack.c.l.b16 %v4132
          %v4261 = vunpack.c.l.b16 %v4133
          %v4262 = vunpack.c.l.b16 %v4134
          %v4263 = vunpack.c.l.b16 %v4135
          %v4264 = vunpack.c.l.b16 %v4136
          %v4265 = vunpack.c.l.b16 %v4137
          %v4266 = vunpack.c.l.b16 %v4138
          %v4267 = vunpack.c.l.b16 %v4139
          %v4268 = vpack.c.b16 %v4237, %v4236
          %v4269 = vpack.c.b16 %v4239, %v4238
          %v4270 = vpack.c.b16 %v4241, %v4240
          %v4271 = vpack.c.b16 %v4243, %v4242
          %v4272 = vpack.c.b16 %v4245, %v4244
          %v4273 = vpack.c.b16 %v4247, %v4246
          %v4274 = vpack.c.b16 %v4249, %v4248
          %v4275 = vpack.c.b16 %v4251, %v4250
          %v4276 = vpack.c.b16 %v4253, %v4252
          %v4277 = vpack.c.b16 %v4255, %v4254
          %v4278 = vpack.c.b16 %v4257, %v4256
          %v4279 = vpack.c.b16 %v4259, %v4258
          %v4280 = vpack.c.b16 %v4261, %v4260
          %v4281 = vpack.c.b16 %v4263, %v4262
          %v4282 = vpack.c.b16 %v4265, %v4264
          %v4283 = vpack.c.b16 %v4267, %v4266
          %4300 = vmatprep.subr.bf16.mxu0 0
          %4301 = vmatpush1.bf16.xpose.msra.mxu0 %v4268
          %4302 = vmatprep.subr.bf16.mxu0 0
          %4303 = vmatpush1.bf16.xpose.msra.mxu0 %v4269
          %4304 = vmatprep.subr.bf16.mxu0 0
          %4305 = vmatpush1.bf16.xpose.msra.mxu0 %v4270
          %4306 = vmatprep.subr.bf16.mxu0 0
          %4307 = vmatpush1.bf16.xpose.msra.mxu0 %v4271
          %4308 = vmatprep.subr.bf16.mxu0 0
          %4309 = vmatpush1.bf16.xpose.msra.mxu0 %v4272
          %4310 = vmatprep.subr.bf16.mxu0 0
          %4311 = vmatpush1.bf16.xpose.msra.mxu0 %v4273
          %4312 = vmatprep.subr.bf16.mxu0 0
          %4313 = vmatpush1.bf16.xpose.msra.mxu0 %v4274
          %4314 = vmatprep.subr.bf16.mxu0 0
          %4315 = vmatpush1.bf16.xpose.msra.mxu0 %v4275
          %4316 = vmatprep.subr.bf16.mxu0 0
          %4317 = vmatpush1.bf16.xpose.msra.mxu0 %v4276
          %4318 = vmatprep.subr.bf16.mxu0 0
          %4319 = vmatpush1.bf16.xpose.msra.mxu0 %v4277
          %4320 = vmatprep.subr.bf16.mxu0 0
          %4321 = vmatpush1.bf16.xpose.msra.mxu0 %v4278
          %4322 = vmatprep.subr.bf16.mxu0 0
          %4323 = vmatpush1.bf16.xpose.msra.mxu0 %v4279
          %4324 = vmatprep.subr.bf16.mxu0 0
          %4325 = vmatpush1.bf16.xpose.msra.mxu0 %v4280
          %4326 = vmatprep.subr.bf16.mxu0 0
          %4327 = vmatpush1.bf16.xpose.msra.mxu0 %v4281
          %4328 = vmatprep.subr.bf16.mxu0 0
          %4329 = vmatpush1.bf16.xpose.msra.mxu0 %v4282
          %4330 = vmatprep.subr.bf16.mxu0 0
          %4331 = vmatpush1.bf16.xpose.msra.mxu0 %v4283
          %4332 = vmatprep.mubr.bf16.mxu0 0
          %4333 = vmatmul.mubr.bf16.gmra.mrb[0].mxu0 %v4172
          %v4334 = vpop.f32.mrb[0].mxu0
          %v4335 = vadd.f32 0.0, %v4334
          %v4336 = vpop.f32.mrb[0].mxu0
          %v4337 = vadd.f32 0.0, %v4336
          %v4338 = vpop.f32.mrb[0].mxu0
          %v4339 = vadd.f32 0.0, %v4338
          %v4340 = vpop.f32.mrb[0].mxu0
          %v4341 = vadd.f32 0.0, %v4340
          %4342 = vmatprep.mubr.bf16.mxu0 0
          %4343 = vmatmul.mubr.bf16.gmra.mrb[0].mxu0 %v4173
          %v4344 = vpop.f32.mrb[0].mxu0
          %v4345 = vadd.f32 0.0, %v4344
          %v4346 = vpop.f32.mrb[0].mxu0
          %v4347 = vadd.f32 0.0, %v4346
          %v4348 = vpop.f32.mrb[0].mxu0
          %v4349 = vadd.f32 0.0, %v4348
          %v4350 = vpop.f32.mrb[0].mxu0
          %v4351 = vadd.f32 0.0, %v4350
          %4352 = vmatprep.mubr.bf16.mxu0 0
          %4353 = vmatmul.mubr.bf16.gmra.mrb[0].mxu0 %v4174
          %v4354 = vpop.f32.mrb[0].mxu0
          %v4355 = vadd.f32 0.0, %v4354
          %v4356 = vpop.f32.mrb[0].mxu0
          %v4357 = vadd.f32 0.0, %v4356
          %v4358 = vpop.f32.mrb[0].mxu0
          %v4359 = vadd.f32 0.0, %v4358
          %v4360 = vpop.f32.mrb[0].mxu0
          %v4361 = vadd.f32 0.0, %v4360
          %4362 = vmatprep.mubr.bf16.mxu0 0
          %4363 = vmatmul.mubr.bf16.gmra.mrb[0].mxu0 %v4175
          %v4364 = vpop.f32.mrb[0].mxu0
          %v4365 = vadd.f32 0.0, %v4364
          %v4366 = vpop.f32.mrb[0].mxu0
          %v4367 = vadd.f32 0.0, %v4366
          %v4368 = vpop.f32.mrb[0].mxu0
          %v4369 = vadd.f32 0.0, %v4368
          %v4370 = vpop.f32.mrb[0].mxu0
          %v4371 = vadd.f32 0.0, %v4370
          %4372 = vmatprep.mubr.bf16.mxu0 0
          %4373 = vmatmul.mubr.bf16.gmra.mrb[0].mxu0 %v4176
          %v4374 = vpop.f32.mrb[0].mxu0
          %v4375 = vadd.f32 0.0, %v4374
          %v4376 = vpop.f32.mrb[0].mxu0
          %v4377 = vadd.f32 0.0, %v4376
          %v4378 = vpop.f32.mrb[0].mxu0
          %v4379 = vadd.f32 0.0, %v4378
          %v4380 = vpop.f32.mrb[0].mxu0
          %v4381 = vadd.f32 0.0, %v4380
          %4382 = vmatprep.mubr.bf16.mxu0 0
          %4383 = vmatmul.mubr.bf16.gmra.mrb[0].mxu0 %v4177
          %v4384 = vpop.f32.mrb[0].mxu0
          %v4385 = vadd.f32 0.0, %v4384
          %v4386 = vpop.f32.mrb[0].mxu0
          %v4387 = vadd.f32 0.0, %v4386
          %v4388 = vpop.f32.mrb[0].mxu0
          %v4389 = vadd.f32 0.0, %v4388
          %v4390 = vpop.f32.mrb[0].mxu0
          %v4391 = vadd.f32 0.0, %v4390
          %4392 = vmatprep.mubr.bf16.mxu0 0
          %4393 = vmatmul.mubr.bf16.gmra.mrb[0].mxu0 %v4178
          %v4394 = vpop.f32.mrb[0].mxu0
          %v4395 = vadd.f32 0.0, %v4394
          %v4396 = vpop.f32.mrb[0].mxu0
          %v4397 = vadd.f32 0.0, %v4396
          %v4398 = vpop.f32.mrb[0].mxu0
          %v4399 = vadd.f32 0.0, %v4398
          %v4400 = vpop.f32.mrb[0].mxu0
          %v4401 = vadd.f32 0.0, %v4400
          %4402 = vmatprep.mubr.bf16.mxu0 0
          %4403 = vmatmul.mubr.bf16.gmra.mrb[0].mxu0 %v4179
          %v4404 = vpop.f32.mrb[0].mxu0
          %v4405 = vadd.f32 0.0, %v4404
          %v4406 = vpop.f32.mrb[0].mxu0
          %v4407 = vadd.f32 0.0, %v4406
          %v4408 = vpop.f32.mrb[0].mxu0
          %v4409 = vadd.f32 0.0, %v4408
          %v4410 = vpop.f32.mrb[0].mxu0
          %v4411 = vadd.f32 0.0, %v4410
          %4412 = vmatprep.mubr.bf16.mxu0 0
          %4413 = vmatmul.mubr.bf16.gmra.mrb[0].mxu0 %v4180
          %v4414 = vpop.f32.mrb[0].mxu0
          %v4415 = vadd.f32 0.0, %v4414
          %v4416 = vpop.f32.mrb[0].mxu0
          %v4417 = vadd.f32 0.0, %v4416
          %v4418 = vpop.f32.mrb[0].mxu0
          %v4419 = vadd.f32 0.0, %v4418
          %v4420 = vpop.f32.mrb[0].mxu0
          %v4421 = vadd.f32 0.0, %v4420
          %4422 = vmatprep.mubr.bf16.mxu0 0
          %4423 = vmatmul.mubr.bf16.gmra.mrb[0].mxu0 %v4181
          %v4424 = vpop.f32.mrb[0].mxu0
          %v4425 = vadd.f32 0.0, %v4424
          %v4426 = vpop.f32.mrb[0].mxu0
          %v4427 = vadd.f32 0.0, %v4426
          %v4428 = vpop.f32.mrb[0].mxu0
          %v4429 = vadd.f32 0.0, %v4428
          %v4430 = vpop.f32.mrb[0].mxu0
          %v4431 = vadd.f32 0.0, %v4430
          %4432 = vmatprep.mubr.bf16.mxu0 0
          %4433 = vmatmul.mubr.bf16.gmra.mrb[0].mxu0 %v4182
          %v4434 = vpop.f32.mrb[0].mxu0
          %v4435 = vadd.f32 0.0, %v4434
          %v4436 = vpop.f32.mrb[0].mxu0
          %v4437 = vadd.f32 0.0, %v4436
          %v4438 = vpop.f32.mrb[0].mxu0
          %v4439 = vadd.f32 0.0, %v4438
          %v4440 = vpop.f32.mrb[0].mxu0
          %v4441 = vadd.f32 0.0, %v4440
          %4442 = vmatprep.mubr.bf16.mxu0 0
          %4443 = vmatmul.mubr.bf16.gmra.mrb[0].mxu0 %v4183
          %v4444 = vpop.f32.mrb[0].mxu0
          %v4445 = vadd.f32 0.0, %v4444
          %v4446 = vpop.f32.mrb[0].mxu0
          %v4447 = vadd.f32 0.0, %v4446
          %v4448 = vpop.f32.mrb[0].mxu0
          %v4449 = vadd.f32 0.0, %v4448
          %v4450 = vpop.f32.mrb[0].mxu0
          %v4451 = vadd.f32 0.0, %v4450
          %4452 = vmatprep.mubr.bf16.mxu0 0
          %4453 = vmatmul.mubr.bf16.gmra.mrb[0].mxu0 %v4184
          %v4454 = vpop.f32.mrb[0].mxu0
          %v4455 = vadd.f32 0.0, %v4454
          %v4456 = vpop.f32.mrb[0].mxu0
          %v4457 = vadd.f32 0.0, %v4456
          %v4458 = vpop.f32.mrb[0].mxu0
          %v4459 = vadd.f32 0.0, %v4458
          %v4460 = vpop.f32.mrb[0].mxu0
          %v4461 = vadd.f32 0.0, %v4460
          %4462 = vmatprep.mubr.bf16.mxu0 0
          %4463 = vmatmul.mubr.bf16.gmra.mrb[0].mxu0 %v4185
          %v4464 = vpop.f32.mrb[0].mxu0
          %v4465 = vadd.f32 0.0, %v4464
          %v4466 = vpop.f32.mrb[0].mxu0
          %v4467 = vadd.f32 0.0, %v4466
          %v4468 = vpop.f32.mrb[0].mxu0
          %v4469 = vadd.f32 0.0, %v4468
          %v4470 = vpop.f32.mrb[0].mxu0
          %v4471 = vadd.f32 0.0, %v4470
          %4472 = vmatprep.mubr.bf16.mxu0 0
          %4473 = vmatmul.mubr.bf16.gmra.mrb[0].mxu0 %v4186
          %v4474 = vpop.f32.mrb[0].mxu0
          %v4475 = vadd.f32 0.0, %v4474
          %v4476 = vpop.f32.mrb[0].mxu0
          %v4477 = vadd.f32 0.0, %v4476
          %v4478 = vpop.f32.mrb[0].mxu0
          %v4479 = vadd.f32 0.0, %v4478
          %v4480 = vpop.f32.mrb[0].mxu0
          %v4481 = vadd.f32 0.0, %v4480
          %4482 = vmatprep.mubr.bf16.mxu0 0
          %4483 = vmatmul.mubr.bf16.gmra.mrb[0].mxu0 %v4187
          %v4484 = vpop.f32.mrb[0].mxu0
          %v4485 = vadd.f32 0.0, %v4484
          %v4486 = vpop.f32.mrb[0].mxu0
          %v4487 = vadd.f32 0.0, %v4486
          %v4488 = vpop.f32.mrb[0].mxu0
          %v4489 = vadd.f32 0.0, %v4488
          %v4490 = vpop.f32.mrb[0].mxu0
          %v4491 = vadd.f32 0.0, %v4490
          %4492 = vmatprep.mubr.bf16.mxu0 0
          %4493 = vmatmul.mubr.bf16.gmra.mrb[0].mxu0 %v4188
          %v4494 = vpop.f32.mrb[0].mxu0
          %v4495 = vadd.f32 0.0, %v4494
          %v4496 = vpop.f32.mrb[0].mxu0
          %v4497 = vadd.f32 0.0, %v4496
          %v4498 = vpop.f32.mrb[0].mxu0
          %v4499 = vadd.f32 0.0, %v4498
          %v4500 = vpop.f32.mrb[0].mxu0
          %v4501 = vadd.f32 0.0, %v4500
          %4502 = vmatprep.mubr.bf16.mxu0 0
          %4503 = vmatmul.mubr.bf16.gmra.mrb[0].mxu0 %v4189
          %v4504 = vpop.f32.mrb[0].mxu0
          %v4505 = vadd.f32 0.0, %v4504
          %v4506 = vpop.f32.mrb[0].mxu0
          %v4507 = vadd.f32 0.0, %v4506
          %v4508 = vpop.f32.mrb[0].mxu0
          %v4509 = vadd.f32 0.0, %v4508
          %v4510 = vpop.f32.mrb[0].mxu0
          %v4511 = vadd.f32 0.0, %v4510
          %4512 = vmatprep.mubr.bf16.mxu0 0
          %4513 = vmatmul.mubr.bf16.gmra.mrb[0].mxu0 %v4190
          %v4514 = vpop.f32.mrb[0].mxu0
          %v4515 = vadd.f32 0.0, %v4514
          %v4516 = vpop.f32.mrb[0].mxu0
          %v4517 = vadd.f32 0.0, %v4516
          %v4518 = vpop.f32.mrb[0].mxu0
          %v4519 = vadd.f32 0.0, %v4518
          %v4520 = vpop.f32.mrb[0].mxu0
          %v4521 = vadd.f32 0.0, %v4520
          %4522 = vmatprep.mubr.bf16.mxu0 0
          %4523 = vmatmul.mubr.bf16.gmra.mrb[0].mxu0 %v4191
          %v4524 = vpop.f32.mrb[0].mxu0
          %v4525 = vadd.f32 0.0, %v4524
          %v4526 = vpop.f32.mrb[0].mxu0
          %v4527 = vadd.f32 0.0, %v4526
          %v4528 = vpop.f32.mrb[0].mxu0
          %v4529 = vadd.f32 0.0, %v4528
          %v4530 = vpop.f32.mrb[0].mxu0
          %v4531 = vadd.f32 0.0, %v4530
          %4532 = vmatprep.mubr.bf16.mxu0 0
          %4533 = vmatmul.mubr.bf16.gmra.mrb[0].mxu0 %v4192
          %v4534 = vpop.f32.mrb[0].mxu0
          %v4535 = vadd.f32 0.0, %v4534
          %v4536 = vpop.f32.mrb[0].mxu0
          %v4537 = vadd.f32 0.0, %v4536
          %v4538 = vpop.f32.mrb[0].mxu0
          %v4539 = vadd.f32 0.0, %v4538
          %v4540 = vpop.f32.mrb[0].mxu0
          %v4541 = vadd.f32 0.0, %v4540
          %4542 = vmatprep.mubr.bf16.mxu0 0
          %4543 = vmatmul.mubr.bf16.gmra.mrb[0].mxu0 %v4193
          %v4544 = vpop.f32.mrb[0].mxu0
          %v4545 = vadd.f32 0.0, %v4544
          %v4546 = vpop.f32.mrb[0].mxu0
          %v4547 = vadd.f32 0.0, %v4546
          %v4548 = vpop.f32.mrb[0].mxu0
          %v4549 = vadd.f32 0.0, %v4548
          %v4550 = vpop.f32.mrb[0].mxu0
          %v4551 = vadd.f32 0.0, %v4550
          %4552 = vmatprep.mubr.bf16.mxu0 0
          %4553 = vmatmul.mubr.bf16.gmra.mrb[0].mxu0 %v4194
          %v4554 = vpop.f32.mrb[0].mxu0
          %v4555 = vadd.f32 0.0, %v4554
          %v4556 = vpop.f32.mrb[0].mxu0
          %v4557 = vadd.f32 0.0, %v4556
          %v4558 = vpop.f32.mrb[0].mxu0
          %v4559 = vadd.f32 0.0, %v4558
          %v4560 = vpop.f32.mrb[0].mxu0
          %v4561 = vadd.f32 0.0, %v4560
          %4562 = vmatprep.mubr.bf16.mxu0 0
          %4563 = vmatmul.mubr.bf16.gmra.mrb[0].mxu0 %v4195
          %v4564 = vpop.f32.mrb[0].mxu0
          %v4565 = vadd.f32 0.0, %v4564
          %v4566 = vpop.f32.mrb[0].mxu0
          %v4567 = vadd.f32 0.0, %v4566
          %v4568 = vpop.f32.mrb[0].mxu0
          %v4569 = vadd.f32 0.0, %v4568
          %v4570 = vpop.f32.mrb[0].mxu0
          %v4571 = vadd.f32 0.0, %v4570
          %4572 = vmatprep.mubr.bf16.mxu0 0
          %4573 = vmatmul.mubr.bf16.gmra.mrb[0].mxu0 %v4196
          %v4574 = vpop.f32.mrb[0].mxu0
          %v4575 = vadd.f32 0.0, %v4574
          %v4576 = vpop.f32.mrb[0].mxu0
          %v4577 = vadd.f32 0.0, %v4576
          %v4578 = vpop.f32.mrb[0].mxu0
          %v4579 = vadd.f32 0.0, %v4578
          %v4580 = vpop.f32.mrb[0].mxu0
          %v4581 = vadd.f32 0.0, %v4580
          %4582 = vmatprep.mubr.bf16.mxu0 0
          %4583 = vmatmul.mubr.bf16.gmra.mrb[0].mxu0 %v4197
          %v4584 = vpop.f32.mrb[0].mxu0
          %v4585 = vadd.f32 0.0, %v4584
          %v4586 = vpop.f32.mrb[0].mxu0
          %v4587 = vadd.f32 0.0, %v4586
          %v4588 = vpop.f32.mrb[0].mxu0
          %v4589 = vadd.f32 0.0, %v4588
          %v4590 = vpop.f32.mrb[0].mxu0
          %v4591 = vadd.f32 0.0, %v4590
          %4592 = vmatprep.mubr.bf16.mxu0 0
          %4593 = vmatmul.mubr.bf16.gmra.mrb[0].mxu0 %v4198
          %v4594 = vpop.f32.mrb[0].mxu0
          %v4595 = vadd.f32 0.0, %v4594
          %v4596 = vpop.f32.mrb[0].mxu0
          %v4597 = vadd.f32 0.0, %v4596
          %v4598 = vpop.f32.mrb[0].mxu0
          %v4599 = vadd.f32 0.0, %v4598
          %v4600 = vpop.f32.mrb[0].mxu0
          %v4601 = vadd.f32 0.0, %v4600
          %4602 = vmatprep.mubr.bf16.mxu0 0
          %4603 = vmatmul.mubr.bf16.gmra.mrb[0].mxu0 %v4199
          %v4604 = vpop.f32.mrb[0].mxu0
          %v4605 = vadd.f32 0.0, %v4604
          %v4606 = vpop.f32.mrb[0].mxu0
          %v4607 = vadd.f32 0.0, %v4606
          %v4608 = vpop.f32.mrb[0].mxu0
          %v4609 = vadd.f32 0.0, %v4608
          %v4610 = vpop.f32.mrb[0].mxu0
          %v4611 = vadd.f32 0.0, %v4610
          %4612 = vmatprep.mubr.bf16.mxu0 0
          %4613 = vmatmul.mubr.bf16.gmra.mrb[0].mxu0 %v4200
          %v4614 = vpop.f32.mrb[0].mxu0
          %v4615 = vadd.f32 0.0, %v4614
          %v4616 = vpop.f32.mrb[0].mxu0
          %v4617 = vadd.f32 0.0, %v4616
          %v4618 = vpop.f32.mrb[0].mxu0
          %v4619 = vadd.f32 0.0, %v4618
          %v4620 = vpop.f32.mrb[0].mxu0
          %v4621 = vadd.f32 0.0, %v4620
          %4622 = vmatprep.mubr.bf16.mxu0 0
          %4623 = vmatmul.mubr.bf16.gmra.mrb[0].mxu0 %v4201
          %v4624 = vpop.f32.mrb[0].mxu0
          %v4625 = vadd.f32 0.0, %v4624
          %v4626 = vpop.f32.mrb[0].mxu0
          %v4627 = vadd.f32 0.0, %v4626
          %v4628 = vpop.f32.mrb[0].mxu0
          %v4629 = vadd.f32 0.0, %v4628
          %v4630 = vpop.f32.mrb[0].mxu0
          %v4631 = vadd.f32 0.0, %v4630
          %4632 = vmatprep.mubr.bf16.mxu0 0
          %4633 = vmatmul.mubr.bf16.gmra.mrb[0].mxu0 %v4202
          %v4634 = vpop.f32.mrb[0].mxu0
          %v4635 = vadd.f32 0.0, %v4634
          %v4636 = vpop.f32.mrb[0].mxu0
          %v4637 = vadd.f32 0.0, %v4636
          %v4638 = vpop.f32.mrb[0].mxu0
          %v4639 = vadd.f32 0.0, %v4638
          %v4640 = vpop.f32.mrb[0].mxu0
          %v4641 = vadd.f32 0.0, %v4640
          %4642 = vmatprep.mubr.bf16.mxu0 0
          %4643 = vmatmul.mubr.bf16.gmra.mrb[0].mxu0 %v4203
          %v4644 = vpop.f32.mrb[0].mxu0
          %v4645 = vadd.f32 0.0, %v4644
          %v4646 = vpop.f32.mrb[0].mxu0
          %v4647 = vadd.f32 0.0, %v4646
          %v4648 = vpop.f32.mrb[0].mxu0
          %v4649 = vadd.f32 0.0, %v4648
          %v4650 = vpop.f32.mrb[0].mxu0
          %v4651 = vadd.f32 0.0, %v4650
          %4652 = vdwg.mxu0
          %v4653 = vlaneseq
          %v4654 = vshrl.u32 %v4653, 7
          %v4655 = vadd.s32 %v4654, 8
          %v4656 = vadd.s32 %v4654, 16
          %v4657 = vadd.s32 %v4654, 24
          %v4658 = vadd.s32 %v4654, 32
          %v4659 = vadd.s32 %v4654, 40
          %v4660 = vadd.s32 %v4654, 48
          %v4661 = vadd.s32 %v4654, 56
          %v4662 = vadd.s32 %v4654, 64
          %v4663 = vadd.s32 %v4654, 72
          %v4664 = vadd.s32 %v4654, 80
          %v4665 = vadd.s32 %v4654, 88
          %v4666 = vadd.s32 %v4654, 96
          %v4667 = vadd.s32 %v4654, 104
          %v4668 = vadd.s32 %v4654, 112
          %v4669 = vadd.s32 %v4654, 120
          %v4670 = vadd.s32 %v4654, 128
          %v4671 = vadd.s32 %v4654, 136
          %v4672 = vadd.s32 %v4654, 144
          %v4673 = vadd.s32 %v4654, 152
          %v4674 = vadd.s32 %v4654, 160
          %v4675 = vadd.s32 %v4654, 168
          %v4676 = vadd.s32 %v4654, 176
          %v4677 = vadd.s32 %v4654, 184
          %v4678 = vadd.s32 %v4654, 192
          %v4679 = vadd.s32 %v4654, 200
          %v4680 = vadd.s32 %v4654, 208
          %v4681 = vadd.s32 %v4654, 216
          %v4682 = vadd.s32 %v4654, 224
          %v4683 = vadd.s32 %v4654, 232
          %v4684 = vadd.s32 %v4654, 240
          %v4685 = vadd.s32 %v4654, 248
          %v4686 = vadd.s32 %v4654, 256
          %v4687 = vadd.s32 %v4654, 264
          %v4688 = vadd.s32 %v4654, 272
          %v4689 = vadd.s32 %v4654, 280
          %v4690 = vadd.s32 %v4654, 288
          %v4691 = vadd.s32 %v4654, 296
          %v4692 = vadd.s32 %v4654, 304
          %v4693 = vadd.s32 %v4654, 312
          %v4694 = vadd.s32 %v4654, 320
          %v4695 = vadd.s32 %v4654, 328
          %v4696 = vadd.s32 %v4654, 336
          %v4697 = vadd.s32 %v4654, 344
          %v4698 = vadd.s32 %v4654, 352
          %v4699 = vadd.s32 %v4654, 360
          %v4700 = vadd.s32 %v4654, 368
          %v4701 = vadd.s32 %v4654, 376
          %v4702 = vadd.s32 %v4654, 384
          %v4703 = vadd.s32 %v4654, 392
          %v4704 = vadd.s32 %v4654, 400
          %v4705 = vadd.s32 %v4654, 408
          %v4706 = vadd.s32 %v4654, 416
          %v4707 = vadd.s32 %v4654, 424
          %v4708 = vadd.s32 %v4654, 432
          %v4709 = vadd.s32 %v4654, 440
          %v4710 = vadd.s32 %v4654, 448
          %v4711 = vadd.s32 %v4654, 456
          %v4712 = vadd.s32 %v4654, 464
          %v4713 = vadd.s32 %v4654, 472
          %v4714 = vadd.s32 %v4654, 480
          %v4715 = vadd.s32 %v4654, 488
          %v4716 = vadd.s32 %v4654, 496
          %v4717 = vadd.s32 %v4654, 504
          %v4718 = vlaneseq
          %v4719 = vand.u32 %v4718, 127
          %v4720 = vadd.s32 %v4719, 128
          %vm4721 = vcmp.lt.s32.totalorder %v4654, 0
          %v4722 = vsub.s32 0, %v4654
          %v4723 = vsel %vm4721, %v4722, %v4654
          %v4724 = vshrl.u32 %v4723, 8
          %v4725 = vand.u32 %v4723, 255
          %v4726 = vsub.s32 0, %v4725
          %v4727 = vsel %vm4721, %v4726, %v4725
          %vm4728 = vcmp.lt.s32.totalorder %v4655, 0
          %v4729 = vsub.s32 0, %v4655
          %v4730 = vsel %vm4728, %v4729, %v4655
          %v4731 = vshrl.u32 %v4730, 8
          %v4732 = vand.u32 %v4730, 255
          %v4733 = vsub.s32 0, %v4732
          %v4734 = vsel %vm4728, %v4733, %v4732
          %vm4735 = vcmp.lt.s32.totalorder %v4656, 0
          %v4736 = vsub.s32 0, %v4656
          %v4737 = vsel %vm4735, %v4736, %v4656
          %v4738 = vshrl.u32 %v4737, 8
          %v4739 = vand.u32 %v4737, 255
          %v4740 = vsub.s32 0, %v4739
          %v4741 = vsel %vm4735, %v4740, %v4739
          %vm4742 = vcmp.lt.s32.totalorder %v4657, 0
          %v4743 = vsub.s32 0, %v4657
          %v4744 = vsel %vm4742, %v4743, %v4657
          %v4745 = vshrl.u32 %v4744, 8
          %v4746 = vand.u32 %v4744, 255
          %v4747 = vsub.s32 0, %v4746
          %v4748 = vsel %vm4742, %v4747, %v4746
          %vm4749 = vcmp.lt.s32.totalorder %v4658, 0
          %v4750 = vsub.s32 0, %v4658
          %v4751 = vsel %vm4749, %v4750, %v4658
          %v4752 = vshrl.u32 %v4751, 8
          %v4753 = vand.u32 %v4751, 255
          %v4754 = vsub.s32 0, %v4753
          %v4755 = vsel %vm4749, %v4754, %v4753
          %vm4756 = vcmp.lt.s32.totalorder %v4659, 0
          %v4757 = vsub.s32 0, %v4659
          %v4758 = vsel %vm4756, %v4757, %v4659
          %v4759 = vshrl.u32 %v4758, 8
          %v4760 = vand.u32 %v4758, 255
          %v4761 = vsub.s32 0, %v4760
          %v4762 = vsel %vm4756, %v4761, %v4760
          %vm4763 = vcmp.lt.s32.totalorder %v4660, 0
          %v4764 = vsub.s32 0, %v4660
          %v4765 = vsel %vm4763, %v4764, %v4660
          %v4766 = vshrl.u32 %v4765, 8
          %v4767 = vand.u32 %v4765, 255
          %v4768 = vsub.s32 0, %v4767
          %v4769 = vsel %vm4763, %v4768, %v4767
          %vm4770 = vcmp.lt.s32.totalorder %v4661, 0
          %v4771 = vsub.s32 0, %v4661
          %v4772 = vsel %vm4770, %v4771, %v4661
          %v4773 = vshrl.u32 %v4772, 8
          %v4774 = vand.u32 %v4772, 255
          %v4775 = vsub.s32 0, %v4774
          %v4776 = vsel %vm4770, %v4775, %v4774
          %vm4777 = vcmp.lt.s32.totalorder %v4662, 0
          %v4778 = vsub.s32 0, %v4662
          %v4779 = vsel %vm4777, %v4778, %v4662
          %v4780 = vshrl.u32 %v4779, 8
          %v4781 = vand.u32 %v4779, 255
          %v4782 = vsub.s32 0, %v4781
          %v4783 = vsel %vm4777, %v4782, %v4781
          %vm4784 = vcmp.lt.s32.totalorder %v4663, 0
          %v4785 = vsub.s32 0, %v4663
          %v4786 = vsel %vm4784, %v4785, %v4663
          %v4787 = vshrl.u32 %v4786, 8
          %v4788 = vand.u32 %v4786, 255
          %v4789 = vsub.s32 0, %v4788
          %v4790 = vsel %vm4784, %v4789, %v4788
          %vm4791 = vcmp.lt.s32.totalorder %v4664, 0
          %v4792 = vsub.s32 0, %v4664
          %v4793 = vsel %vm4791, %v4792, %v4664
          %v4794 = vshrl.u32 %v4793, 8
          %v4795 = vand.u32 %v4793, 255
          %v4796 = vsub.s32 0, %v4795
          %v4797 = vsel %vm4791, %v4796, %v4795
          %vm4798 = vcmp.lt.s32.totalorder %v4665, 0
          %v4799 = vsub.s32 0, %v4665
          %v4800 = vsel %vm4798, %v4799, %v4665
          %v4801 = vshrl.u32 %v4800, 8
          %v4802 = vand.u32 %v4800, 255
          %v4803 = vsub.s32 0, %v4802
          %v4804 = vsel %vm4798, %v4803, %v4802
          %vm4805 = vcmp.lt.s32.totalorder %v4666, 0
          %v4806 = vsub.s32 0, %v4666
          %v4807 = vsel %vm4805, %v4806, %v4666
          %v4808 = vshrl.u32 %v4807, 8
          %v4809 = vand.u32 %v4807, 255
          %v4810 = vsub.s32 0, %v4809
          %v4811 = vsel %vm4805, %v4810, %v4809
          %vm4812 = vcmp.lt.s32.totalorder %v4667, 0
          %v4813 = vsub.s32 0, %v4667
          %v4814 = vsel %vm4812, %v4813, %v4667
          %v4815 = vshrl.u32 %v4814, 8
          %v4816 = vand.u32 %v4814, 255
          %v4817 = vsub.s32 0, %v4816
          %v4818 = vsel %vm4812, %v4817, %v4816
          %vm4819 = vcmp.lt.s32.totalorder %v4668, 0
          %v4820 = vsub.s32 0, %v4668
          %v4821 = vsel %vm4819, %v4820, %v4668
          %v4822 = vshrl.u32 %v4821, 8
          %v4823 = vand.u32 %v4821, 255
          %v4824 = vsub.s32 0, %v4823
          %v4825 = vsel %vm4819, %v4824, %v4823
          %vm4826 = vcmp.lt.s32.totalorder %v4669, 0
          %v4827 = vsub.s32 0, %v4669
          %v4828 = vsel %vm4826, %v4827, %v4669
          %v4829 = vshrl.u32 %v4828, 8
          %v4830 = vand.u32 %v4828, 255
          %v4831 = vsub.s32 0, %v4830
          %v4832 = vsel %vm4826, %v4831, %v4830
          %vm4833 = vcmp.lt.s32.totalorder %v4670, 0
          %v4834 = vsub.s32 0, %v4670
          %v4835 = vsel %vm4833, %v4834, %v4670
          %v4836 = vshrl.u32 %v4835, 8
          %v4837 = vand.u32 %v4835, 255
          %v4838 = vsub.s32 0, %v4837
          %v4839 = vsel %vm4833, %v4838, %v4837
          %vm4840 = vcmp.lt.s32.totalorder %v4671, 0
          %v4841 = vsub.s32 0, %v4671
          %v4842 = vsel %vm4840, %v4841, %v4671
          %v4843 = vshrl.u32 %v4842, 8
          %v4844 = vand.u32 %v4842, 255
          %v4845 = vsub.s32 0, %v4844
          %v4846 = vsel %vm4840, %v4845, %v4844
          %vm4847 = vcmp.lt.s32.totalorder %v4672, 0
          %v4848 = vsub.s32 0, %v4672
          %v4849 = vsel %vm4847, %v4848, %v4672
          %v4850 = vshrl.u32 %v4849, 8
          %v4851 = vand.u32 %v4849, 255
          %v4852 = vsub.s32 0, %v4851
          %v4853 = vsel %vm4847, %v4852, %v4851
          %vm4854 = vcmp.lt.s32.totalorder %v4673, 0
          %v4855 = vsub.s32 0, %v4673
          %v4856 = vsel %vm4854, %v4855, %v4673
          %v4857 = vshrl.u32 %v4856, 8
          %v4858 = vand.u32 %v4856, 255
          %v4859 = vsub.s32 0, %v4858
          %v4860 = vsel %vm4854, %v4859, %v4858
          %vm4861 = vcmp.lt.s32.totalorder %v4674, 0
          %v4862 = vsub.s32 0, %v4674
          %v4863 = vsel %vm4861, %v4862, %v4674
          %v4864 = vshrl.u32 %v4863, 8
          %v4865 = vand.u32 %v4863, 255
          %v4866 = vsub.s32 0, %v4865
          %v4867 = vsel %vm4861, %v4866, %v4865
          %vm4868 = vcmp.lt.s32.totalorder %v4675, 0
          %v4869 = vsub.s32 0, %v4675
          %v4870 = vsel %vm4868, %v4869, %v4675
          %v4871 = vshrl.u32 %v4870, 8
          %v4872 = vand.u32 %v4870, 255
          %v4873 = vsub.s32 0, %v4872
          %v4874 = vsel %vm4868, %v4873, %v4872
          %vm4875 = vcmp.lt.s32.totalorder %v4676, 0
          %v4876 = vsub.s32 0, %v4676
          %v4877 = vsel %vm4875, %v4876, %v4676
          %v4878 = vshrl.u32 %v4877, 8
          %v4879 = vand.u32 %v4877, 255
          %v4880 = vsub.s32 0, %v4879
          %v4881 = vsel %vm4875, %v4880, %v4879
          %vm4882 = vcmp.lt.s32.totalorder %v4677, 0
          %v4883 = vsub.s32 0, %v4677
          %v4884 = vsel %vm4882, %v4883, %v4677
          %v4885 = vshrl.u32 %v4884, 8
          %v4886 = vand.u32 %v4884, 255
          %v4887 = vsub.s32 0, %v4886
          %v4888 = vsel %vm4882, %v4887, %v4886
          %vm4889 = vcmp.lt.s32.totalorder %v4678, 0
          %v4890 = vsub.s32 0, %v4678
          %v4891 = vsel %vm4889, %v4890, %v4678
          %v4892 = vshrl.u32 %v4891, 8
          %v4893 = vand.u32 %v4891, 255
          %v4894 = vsub.s32 0, %v4893
          %v4895 = vsel %vm4889, %v4894, %v4893
          %vm4896 = vcmp.lt.s32.totalorder %v4679, 0
          %v4897 = vsub.s32 0, %v4679
          %v4898 = vsel %vm4896, %v4897, %v4679
          %v4899 = vshrl.u32 %v4898, 8
          %v4900 = vand.u32 %v4898, 255
          %v4901 = vsub.s32 0, %v4900
          %v4902 = vsel %vm4896, %v4901, %v4900
          %vm4903 = vcmp.lt.s32.totalorder %v4680, 0
          %v4904 = vsub.s32 0, %v4680
          %v4905 = vsel %vm4903, %v4904, %v4680
          %v4906 = vshrl.u32 %v4905, 8
          %v4907 = vand.u32 %v4905, 255
          %v4908 = vsub.s32 0, %v4907
          %v4909 = vsel %vm4903, %v4908, %v4907
          %vm4910 = vcmp.lt.s32.totalorder %v4681, 0
          %v4911 = vsub.s32 0, %v4681
          %v4912 = vsel %vm4910, %v4911, %v4681
          %v4913 = vshrl.u32 %v4912, 8
          %v4914 = vand.u32 %v4912, 255
          %v4915 = vsub.s32 0, %v4914
          %v4916 = vsel %vm4910, %v4915, %v4914
          %vm4917 = vcmp.lt.s32.totalorder %v4682, 0
          %v4918 = vsub.s32 0, %v4682
          %v4919 = vsel %vm4917, %v4918, %v4682
          %v4920 = vshrl.u32 %v4919, 8
          %v4921 = vand.u32 %v4919, 255
          %v4922 = vsub.s32 0, %v4921
          %v4923 = vsel %vm4917, %v4922, %v4921
          %vm4924 = vcmp.lt.s32.totalorder %v4683, 0
          %v4925 = vsub.s32 0, %v4683
          %v4926 = vsel %vm4924, %v4925, %v4683
          %v4927 = vshrl.u32 %v4926, 8
          %v4928 = vand.u32 %v4926, 255
          %v4929 = vsub.s32 0, %v4928
          %v4930 = vsel %vm4924, %v4929, %v4928
          %vm4931 = vcmp.lt.s32.totalorder %v4684, 0
          %v4932 = vsub.s32 0, %v4684
          %v4933 = vsel %vm4931, %v4932, %v4684
          %v4934 = vshrl.u32 %v4933, 8
          %v4935 = vand.u32 %v4933, 255
          %v4936 = vsub.s32 0, %v4935
          %v4937 = vsel %vm4931, %v4936, %v4935
          %vm4938 = vcmp.lt.s32.totalorder %v4685, 0
          %v4939 = vsub.s32 0, %v4685
          %v4940 = vsel %vm4938, %v4939, %v4685
          %v4941 = vshrl.u32 %v4940, 8
          %v4942 = vand.u32 %v4940, 255
          %v4943 = vsub.s32 0, %v4942
          %v4944 = vsel %vm4938, %v4943, %v4942
          %vm4945 = vcmp.lt.s32.totalorder %v4686, 0
          %v4946 = vsub.s32 0, %v4686
          %v4947 = vsel %vm4945, %v4946, %v4686
          %v4948 = vshrl.u32 %v4947, 8
          %v4949 = vand.u32 %v4947, 255
          %v4950 = vsub.s32 0, %v4949
          %v4951 = vsel %vm4945, %v4950, %v4949
          %vm4952 = vcmp.lt.s32.totalorder %v4687, 0
          %v4953 = vsub.s32 0, %v4687
          %v4954 = vsel %vm4952, %v4953, %v4687
          %v4955 = vshrl.u32 %v4954, 8
          %v4956 = vand.u32 %v4954, 255
          %v4957 = vsub.s32 0, %v4956
          %v4958 = vsel %vm4952, %v4957, %v4956
          %vm4959 = vcmp.lt.s32.totalorder %v4688, 0
          %v4960 = vsub.s32 0, %v4688
          %v4961 = vsel %vm4959, %v4960, %v4688
          %v4962 = vshrl.u32 %v4961, 8
          %v4963 = vand.u32 %v4961, 255
          %v4964 = vsub.s32 0, %v4963
          %v4965 = vsel %vm4959, %v4964, %v4963
          %vm4966 = vcmp.lt.s32.totalorder %v4689, 0
          %v4967 = vsub.s32 0, %v4689
          %v4968 = vsel %vm4966, %v4967, %v4689
          %v4969 = vshrl.u32 %v4968, 8
          %v4970 = vand.u32 %v4968, 255
          %v4971 = vsub.s32 0, %v4970
          %v4972 = vsel %vm4966, %v4971, %v4970
          %vm4973 = vcmp.lt.s32.totalorder %v4690, 0
          %v4974 = vsub.s32 0, %v4690
          %v4975 = vsel %vm4973, %v4974, %v4690
          %v4976 = vshrl.u32 %v4975, 8
          %v4977 = vand.u32 %v4975, 255
          %v4978 = vsub.s32 0, %v4977
          %v4979 = vsel %vm4973, %v4978, %v4977
          %vm4980 = vcmp.lt.s32.totalorder %v4691, 0
          %v4981 = vsub.s32 0, %v4691
          %v4982 = vsel %vm4980, %v4981, %v4691
          %v4983 = vshrl.u32 %v4982, 8
          %v4984 = vand.u32 %v4982, 255
          %v4985 = vsub.s32 0, %v4984
          %v4986 = vsel %vm4980, %v4985, %v4984
          %vm4987 = vcmp.lt.s32.totalorder %v4692, 0
          %v4988 = vsub.s32 0, %v4692
          %v4989 = vsel %vm4987, %v4988, %v4692
          %v4990 = vshrl.u32 %v4989, 8
          %v4991 = vand.u32 %v4989, 255
          %v4992 = vsub.s32 0, %v4991
          %v4993 = vsel %vm4987, %v4992, %v4991
          %vm4994 = vcmp.lt.s32.totalorder %v4693, 0
          %v4995 = vsub.s32 0, %v4693
          %v4996 = vsel %vm4994, %v4995, %v4693
          %v4997 = vshrl.u32 %v4996, 8
          %v4998 = vand.u32 %v4996, 255
          %v4999 = vsub.s32 0, %v4998
          %v5000 = vsel %vm4994, %v4999, %v4998
          %vm5001 = vcmp.lt.s32.totalorder %v4694, 0
          %v5002 = vsub.s32 0, %v4694
          %v5003 = vsel %vm5001, %v5002, %v4694
          %v5004 = vshrl.u32 %v5003, 8
          %v5005 = vand.u32 %v5003, 255
          %v5006 = vsub.s32 0, %v5005
          %v5007 = vsel %vm5001, %v5006, %v5005
          %vm5008 = vcmp.lt.s32.totalorder %v4695, 0
          %v5009 = vsub.s32 0, %v4695
          %v5010 = vsel %vm5008, %v5009, %v4695
          %v5011 = vshrl.u32 %v5010, 8
          %v5012 = vand.u32 %v5010, 255
          %v5013 = vsub.s32 0, %v5012
          %v5014 = vsel %vm5008, %v5013, %v5012
          %vm5015 = vcmp.lt.s32.totalorder %v4696, 0
          %v5016 = vsub.s32 0, %v4696
          %v5017 = vsel %vm5015, %v5016, %v4696
          %v5018 = vshrl.u32 %v5017, 8
          %v5019 = vand.u32 %v5017, 255
          %v5020 = vsub.s32 0, %v5019
          %v5021 = vsel %vm5015, %v5020, %v5019
          %vm5022 = vcmp.lt.s32.totalorder %v4697, 0
          %v5023 = vsub.s32 0, %v4697
          %v5024 = vsel %vm5022, %v5023, %v4697
          %v5025 = vshrl.u32 %v5024, 8
          %v5026 = vand.u32 %v5024, 255
          %v5027 = vsub.s32 0, %v5026
          %v5028 = vsel %vm5022, %v5027, %v5026
          %vm5029 = vcmp.lt.s32.totalorder %v4698, 0
          %v5030 = vsub.s32 0, %v4698
          %v5031 = vsel %vm5029, %v5030, %v4698
          %v5032 = vshrl.u32 %v5031, 8
          %v5033 = vand.u32 %v5031, 255
          %v5034 = vsub.s32 0, %v5033
          %v5035 = vsel %vm5029, %v5034, %v5033
          %vm5036 = vcmp.lt.s32.totalorder %v4699, 0
          %v5037 = vsub.s32 0, %v4699
          %v5038 = vsel %vm5036, %v5037, %v4699
          %v5039 = vshrl.u32 %v5038, 8
          %v5040 = vand.u32 %v5038, 255
          %v5041 = vsub.s32 0, %v5040
          %v5042 = vsel %vm5036, %v5041, %v5040
          %vm5043 = vcmp.lt.s32.totalorder %v4700, 0
          %v5044 = vsub.s32 0, %v4700
          %v5045 = vsel %vm5043, %v5044, %v4700
          %v5046 = vshrl.u32 %v5045, 8
          %v5047 = vand.u32 %v5045, 255
          %v5048 = vsub.s32 0, %v5047
          %v5049 = vsel %vm5043, %v5048, %v5047
          %vm5050 = vcmp.lt.s32.totalorder %v4701, 0
          %v5051 = vsub.s32 0, %v4701
          %v5052 = vsel %vm5050, %v5051, %v4701
          %v5053 = vshrl.u32 %v5052, 8
          %v5054 = vand.u32 %v5052, 255
          %v5055 = vsub.s32 0, %v5054
          %v5056 = vsel %vm5050, %v5055, %v5054
          %vm5057 = vcmp.lt.s32.totalorder %v4702, 0
          %v5058 = vsub.s32 0, %v4702
          %v5059 = vsel %vm5057, %v5058, %v4702
          %v5060 = vshrl.u32 %v5059, 8
          %v5061 = vand.u32 %v5059, 255
          %v5062 = vsub.s32 0, %v5061
          %v5063 = vsel %vm5057, %v5062, %v5061
          %vm5064 = vcmp.lt.s32.totalorder %v4703, 0
          %v5065 = vsub.s32 0, %v4703
          %v5066 = vsel %vm5064, %v5065, %v4703
          %v5067 = vshrl.u32 %v5066, 8
          %v5068 = vand.u32 %v5066, 255
          %v5069 = vsub.s32 0, %v5068
          %v5070 = vsel %vm5064, %v5069, %v5068
          %vm5071 = vcmp.lt.s32.totalorder %v4704, 0
          %v5072 = vsub.s32 0, %v4704
          %v5073 = vsel %vm5071, %v5072, %v4704
          %v5074 = vshrl.u32 %v5073, 8
          %v5075 = vand.u32 %v5073, 255
          %v5076 = vsub.s32 0, %v5075
          %v5077 = vsel %vm5071, %v5076, %v5075
          %vm5078 = vcmp.lt.s32.totalorder %v4705, 0
          %v5079 = vsub.s32 0, %v4705
          %v5080 = vsel %vm5078, %v5079, %v4705
          %v5081 = vshrl.u32 %v5080, 8
          %v5082 = vand.u32 %v5080, 255
          %v5083 = vsub.s32 0, %v5082
          %v5084 = vsel %vm5078, %v5083, %v5082
          %vm5085 = vcmp.lt.s32.totalorder %v4706, 0
          %v5086 = vsub.s32 0, %v4706
          %v5087 = vsel %vm5085, %v5086, %v4706
          %v5088 = vshrl.u32 %v5087, 8
          %v5089 = vand.u32 %v5087, 255
          %v5090 = vsub.s32 0, %v5089
          %v5091 = vsel %vm5085, %v5090, %v5089
          %vm5092 = vcmp.lt.s32.totalorder %v4707, 0
          %v5093 = vsub.s32 0, %v4707
          %v5094 = vsel %vm5092, %v5093, %v4707
          %v5095 = vshrl.u32 %v5094, 8
          %v5096 = vand.u32 %v5094, 255
          %v5097 = vsub.s32 0, %v5096
          %v5098 = vsel %vm5092, %v5097, %v5096
          %vm5099 = vcmp.lt.s32.totalorder %v4708, 0
          %v5100 = vsub.s32 0, %v4708
          %v5101 = vsel %vm5099, %v5100, %v4708
          %v5102 = vshrl.u32 %v5101, 8
          %v5103 = vand.u32 %v5101, 255
          %v5104 = vsub.s32 0, %v5103
          %v5105 = vsel %vm5099, %v5104, %v5103
          %vm5106 = vcmp.lt.s32.totalorder %v4709, 0
          %v5107 = vsub.s32 0, %v4709
          %v5108 = vsel %vm5106, %v5107, %v4709
          %v5109 = vshrl.u32 %v5108, 8
          %v5110 = vand.u32 %v5108, 255
          %v5111 = vsub.s32 0, %v5110
          %v5112 = vsel %vm5106, %v5111, %v5110
          %vm5113 = vcmp.lt.s32.totalorder %v4710, 0
          %v5114 = vsub.s32 0, %v4710
          %v5115 = vsel %vm5113, %v5114, %v4710
          %v5116 = vshrl.u32 %v5115, 8
          %v5117 = vand.u32 %v5115, 255
          %v5118 = vsub.s32 0, %v5117
          %v5119 = vsel %vm5113, %v5118, %v5117
          %vm5120 = vcmp.lt.s32.totalorder %v4711, 0
          %v5121 = vsub.s32 0, %v4711
          %v5122 = vsel %vm5120, %v5121, %v4711
          %v5123 = vshrl.u32 %v5122, 8
          %v5124 = vand.u32 %v5122, 255
          %v5125 = vsub.s32 0, %v5124
          %v5126 = vsel %vm5120, %v5125, %v5124
          %vm5127 = vcmp.lt.s32.totalorder %v4712, 0
          %v5128 = vsub.s32 0, %v4712
          %v5129 = vsel %vm5127, %v5128, %v4712
          %v5130 = vshrl.u32 %v5129, 8
          %v5131 = vand.u32 %v5129, 255
          %v5132 = vsub.s32 0, %v5131
          %v5133 = vsel %vm5127, %v5132, %v5131
          %vm5134 = vcmp.lt.s32.totalorder %v4713, 0
          %v5135 = vsub.s32 0, %v4713
          %v5136 = vsel %vm5134, %v5135, %v4713
          %v5137 = vshrl.u32 %v5136, 8
          %v5138 = vand.u32 %v5136, 255
          %v5139 = vsub.s32 0, %v5138
          %v5140 = vsel %vm5134, %v5139, %v5138
          %vm5141 = vcmp.lt.s32.totalorder %v4714, 0
          %v5142 = vsub.s32 0, %v4714
          %v5143 = vsel %vm5141, %v5142, %v4714
          %v5144 = vshrl.u32 %v5143, 8
          %v5145 = vand.u32 %v5143, 255
          %v5146 = vsub.s32 0, %v5145
          %v5147 = vsel %vm5141, %v5146, %v5145
          %vm5148 = vcmp.lt.s32.totalorder %v4715, 0
          %v5149 = vsub.s32 0, %v4715
          %v5150 = vsel %vm5148, %v5149, %v4715
          %v5151 = vshrl.u32 %v5150, 8
          %v5152 = vand.u32 %v5150, 255
          %v5153 = vsub.s32 0, %v5152
          %v5154 = vsel %vm5148, %v5153, %v5152
          %vm5155 = vcmp.lt.s32.totalorder %v4716, 0
          %v5156 = vsub.s32 0, %v4716
          %v5157 = vsel %vm5155, %v5156, %v4716
          %v5158 = vshrl.u32 %v5157, 8
          %v5159 = vand.u32 %v5157, 255
          %v5160 = vsub.s32 0, %v5159
          %v5161 = vsel %vm5155, %v5160, %v5159
          %vm5162 = vcmp.lt.s32.totalorder %v4717, 0
          %v5163 = vsub.s32 0, %v4717
          %v5164 = vsel %vm5162, %v5163, %v4717
          %v5165 = vshrl.u32 %v5164, 8
          %v5166 = vand.u32 %v5164, 255
          %v5167 = vsub.s32 0, %v5166
          %v5168 = vsel %vm5162, %v5167, %v5166
          %vm5169 = vcmp.ne.s32.totalorder %v4727, 0
          %vm5170 = vcmp.ne.s32.totalorder %v4734, 0
          %vm5171 = vcmp.ne.s32.totalorder %v4741, 0
          %vm5172 = vcmp.ne.s32.totalorder %v4748, 0
          %vm5173 = vcmp.ne.s32.totalorder %v4755, 0
          %vm5174 = vcmp.ne.s32.totalorder %v4762, 0
          %vm5175 = vcmp.ne.s32.totalorder %v4769, 0
          %vm5176 = vcmp.ne.s32.totalorder %v4776, 0
          %vm5177 = vcmp.ne.s32.totalorder %v4783, 0
          %vm5178 = vcmp.ne.s32.totalorder %v4790, 0
          %vm5179 = vcmp.ne.s32.totalorder %v4797, 0
          %vm5180 = vcmp.ne.s32.totalorder %v4804, 0
          %vm5181 = vcmp.ne.s32.totalorder %v4811, 0
          %vm5182 = vcmp.ne.s32.totalorder %v4818, 0
          %vm5183 = vcmp.ne.s32.totalorder %v4825, 0
          %vm5184 = vcmp.ne.s32.totalorder %v4832, 0
          %vm5185 = vcmp.ne.s32.totalorder %v4839, 0
          %vm5186 = vcmp.ne.s32.totalorder %v4846, 0
          %vm5187 = vcmp.ne.s32.totalorder %v4853, 0
          %vm5188 = vcmp.ne.s32.totalorder %v4860, 0
          %vm5189 = vcmp.ne.s32.totalorder %v4867, 0
          %vm5190 = vcmp.ne.s32.totalorder %v4874, 0
          %vm5191 = vcmp.ne.s32.totalorder %v4881, 0
          %vm5192 = vcmp.ne.s32.totalorder %v4888, 0
          %vm5193 = vcmp.ne.s32.totalorder %v4895, 0
          %vm5194 = vcmp.ne.s32.totalorder %v4902, 0
          %vm5195 = vcmp.ne.s32.totalorder %v4909, 0
          %vm5196 = vcmp.ne.s32.totalorder %v4916, 0
          %vm5197 = vcmp.ne.s32.totalorder %v4923, 0
          %vm5198 = vcmp.ne.s32.totalorder %v4930, 0
          %vm5199 = vcmp.ne.s32.totalorder %v4937, 0
          %vm5200 = vcmp.ne.s32.totalorder %v4944, 0
          %vm5201 = vcmp.ne.s32.totalorder %v4951, 0
          %vm5202 = vcmp.ne.s32.totalorder %v4958, 0
          %vm5203 = vcmp.ne.s32.totalorder %v4965, 0
          %vm5204 = vcmp.ne.s32.totalorder %v4972, 0
          %vm5205 = vcmp.ne.s32.totalorder %v4979, 0
          %vm5206 = vcmp.ne.s32.totalorder %v4986, 0
          %vm5207 = vcmp.ne.s32.totalorder %v4993, 0
          %vm5208 = vcmp.ne.s32.totalorder %v5000, 0
          %vm5209 = vcmp.ne.s32.totalorder %v5007, 0
          %vm5210 = vcmp.ne.s32.totalorder %v5014, 0
          %vm5211 = vcmp.ne.s32.totalorder %v5021, 0
          %vm5212 = vcmp.ne.s32.totalorder %v5028, 0
          %vm5213 = vcmp.ne.s32.totalorder %v5035, 0
          %vm5214 = vcmp.ne.s32.totalorder %v5042, 0
          %vm5215 = vcmp.ne.s32.totalorder %v5049, 0
          %vm5216 = vcmp.ne.s32.totalorder %v5056, 0
          %vm5217 = vcmp.ne.s32.totalorder %v5063, 0
          %vm5218 = vcmp.ne.s32.totalorder %v5070, 0
          %vm5219 = vcmp.ne.s32.totalorder %v5077, 0
          %vm5220 = vcmp.ne.s32.totalorder %v5084, 0
          %vm5221 = vcmp.ne.s32.totalorder %v5091, 0
          %vm5222 = vcmp.ne.s32.totalorder %v5098, 0
          %vm5223 = vcmp.ne.s32.totalorder %v5105, 0
          %vm5224 = vcmp.ne.s32.totalorder %v5112, 0
          %vm5225 = vcmp.ne.s32.totalorder %v5119, 0
          %vm5226 = vcmp.ne.s32.totalorder %v5126, 0
          %vm5227 = vcmp.ne.s32.totalorder %v5133, 0
          %vm5228 = vcmp.ne.s32.totalorder %v5140, 0
          %vm5229 = vcmp.ne.s32.totalorder %v5147, 0
          %vm5230 = vcmp.ne.s32.totalorder %v5154, 0
          %vm5231 = vcmp.ne.s32.totalorder %v5161, 0
          %vm5232 = vcmp.ne.s32.totalorder %v5168, 0
          %vm5233 = vcmp.lt.s32.totalorder %v4727, 0
          %vm5234 = vcmp.lt.s32.totalorder %v4734, 0
          %vm5235 = vcmp.lt.s32.totalorder %v4741, 0
          %vm5236 = vcmp.lt.s32.totalorder %v4748, 0
          %vm5237 = vcmp.lt.s32.totalorder %v4755, 0
          %vm5238 = vcmp.lt.s32.totalorder %v4762, 0
          %vm5239 = vcmp.lt.s32.totalorder %v4769, 0
          %vm5240 = vcmp.lt.s32.totalorder %v4776, 0
          %vm5241 = vcmp.lt.s32.totalorder %v4783, 0
          %vm5242 = vcmp.lt.s32.totalorder %v4790, 0
          %vm5243 = vcmp.lt.s32.totalorder %v4797, 0
          %vm5244 = vcmp.lt.s32.totalorder %v4804, 0
          %vm5245 = vcmp.lt.s32.totalorder %v4811, 0
          %vm5246 = vcmp.lt.s32.totalorder %v4818, 0
          %vm5247 = vcmp.lt.s32.totalorder %v4825, 0
          %vm5248 = vcmp.lt.s32.totalorder %v4832, 0
          %vm5249 = vcmp.lt.s32.totalorder %v4839, 0
          %vm5250 = vcmp.lt.s32.totalorder %v4846, 0
          %vm5251 = vcmp.lt.s32.totalorder %v4853, 0
          %vm5252 = vcmp.lt.s32.totalorder %v4860, 0
          %vm5253 = vcmp.lt.s32.totalorder %v4867, 0
          %vm5254 = vcmp.lt.s32.totalorder %v4874, 0
          %vm5255 = vcmp.lt.s32.totalorder %v4881, 0
          %vm5256 = vcmp.lt.s32.totalorder %v4888, 0
          %vm5257 = vcmp.lt.s32.totalorder %v4895, 0
          %vm5258 = vcmp.lt.s32.totalorder %v4902, 0
          %vm5259 = vcmp.lt.s32.totalorder %v4909, 0
          %vm5260 = vcmp.lt.s32.totalorder %v4916, 0
          %vm5261 = vcmp.lt.s32.totalorder %v4923, 0
          %vm5262 = vcmp.lt.s32.totalorder %v4930, 0
          %vm5263 = vcmp.lt.s32.totalorder %v4937, 0
          %vm5264 = vcmp.lt.s32.totalorder %v4944, 0
          %vm5265 = vcmp.lt.s32.totalorder %v4951, 0
          %vm5266 = vcmp.lt.s32.totalorder %v4958, 0
          %vm5267 = vcmp.lt.s32.totalorder %v4965, 0
          %vm5268 = vcmp.lt.s32.totalorder %v4972, 0
          %vm5269 = vcmp.lt.s32.totalorder %v4979, 0
          %vm5270 = vcmp.lt.s32.totalorder %v4986, 0
          %vm5271 = vcmp.lt.s32.totalorder %v4993, 0
          %vm5272 = vcmp.lt.s32.totalorder %v5000, 0
          %vm5273 = vcmp.lt.s32.totalorder %v5007, 0
          %vm5274 = vcmp.lt.s32.totalorder %v5014, 0
          %vm5275 = vcmp.lt.s32.totalorder %v5021, 0
          %vm5276 = vcmp.lt.s32.totalorder %v5028, 0
          %vm5277 = vcmp.lt.s32.totalorder %v5035, 0
          %vm5278 = vcmp.lt.s32.totalorder %v5042, 0
          %vm5279 = vcmp.lt.s32.totalorder %v5049, 0
          %vm5280 = vcmp.lt.s32.totalorder %v5056, 0
          %vm5281 = vcmp.lt.s32.totalorder %v5063, 0
          %vm5282 = vcmp.lt.s32.totalorder %v5070, 0
          %vm5283 = vcmp.lt.s32.totalorder %v5077, 0
          %vm5284 = vcmp.lt.s32.totalorder %v5084, 0
          %vm5285 = vcmp.lt.s32.totalorder %v5091, 0
          %vm5286 = vcmp.lt.s32.totalorder %v5098, 0
          %vm5287 = vcmp.lt.s32.totalorder %v5105, 0
          %vm5288 = vcmp.lt.s32.totalorder %v5112, 0
          %vm5289 = vcmp.lt.s32.totalorder %v5119, 0
          %vm5290 = vcmp.lt.s32.totalorder %v5126, 0
          %vm5291 = vcmp.lt.s32.totalorder %v5133, 0
          %vm5292 = vcmp.lt.s32.totalorder %v5140, 0
          %vm5293 = vcmp.lt.s32.totalorder %v5147, 0
          %vm5294 = vcmp.lt.s32.totalorder %v5154, 0
          %vm5295 = vcmp.lt.s32.totalorder %v5161, 0
          %vm5296 = vcmp.lt.s32.totalorder %v5168, 0
          %vm5297 = vmand %vm5233, %vm5169
          %vm5298 = vmand %vm5234, %vm5170
          %vm5299 = vmand %vm5235, %vm5171
          %vm5300 = vmand %vm5236, %vm5172
          %vm5301 = vmand %vm5237, %vm5173
          %vm5302 = vmand %vm5238, %vm5174
          %vm5303 = vmand %vm5239, %vm5175
          %vm5304 = vmand %vm5240, %vm5176
          %vm5305 = vmand %vm5241, %vm5177
          %vm5306 = vmand %vm5242, %vm5178
          %vm5307 = vmand %vm5243, %vm5179
          %vm5308 = vmand %vm5244, %vm5180
          %vm5309 = vmand %vm5245, %vm5181
          %vm5310 = vmand %vm5246, %vm5182
          %vm5311 = vmand %vm5247, %vm5183
          %vm5312 = vmand %vm5248, %vm5184
          %vm5313 = vmand %vm5249, %vm5185
          %vm5314 = vmand %vm5250, %vm5186
          %vm5315 = vmand %vm5251, %vm5187
          %vm5316 = vmand %vm5252, %vm5188
          %vm5317 = vmand %vm5253, %vm5189
          %vm5318 = vmand %vm5254, %vm5190
          %vm5319 = vmand %vm5255, %vm5191
          %vm5320 = vmand %vm5256, %vm5192
          %vm5321 = vmand %vm5257, %vm5193
          %vm5322 = vmand %vm5258, %vm5194
          %vm5323 = vmand %vm5259, %vm5195
          %vm5324 = vmand %vm5260, %vm5196
          %vm5325 = vmand %vm5261, %vm5197
          %vm5326 = vmand %vm5262, %vm5198
          %vm5327 = vmand %vm5263, %vm5199
          %vm5328 = vmand %vm5264, %vm5200
          %vm5329 = vmand %vm5265, %vm5201
          %vm5330 = vmand %vm5266, %vm5202
          %vm5331 = vmand %vm5267, %vm5203
          %vm5332 = vmand %vm5268, %vm5204
          %vm5333 = vmand %vm5269, %vm5205
          %vm5334 = vmand %vm5270, %vm5206
          %vm5335 = vmand %vm5271, %vm5207
          %vm5336 = vmand %vm5272, %vm5208
          %vm5337 = vmand %vm5273, %vm5209
          %vm5338 = vmand %vm5274, %vm5210
          %vm5339 = vmand %vm5275, %vm5211
          %vm5340 = vmand %vm5276, %vm5212
          %vm5341 = vmand %vm5277, %vm5213
          %vm5342 = vmand %vm5278, %vm5214
          %vm5343 = vmand %vm5279, %vm5215
          %vm5344 = vmand %vm5280, %vm5216
          %vm5345 = vmand %vm5281, %vm5217
          %vm5346 = vmand %vm5282, %vm5218
          %vm5347 = vmand %vm5283, %vm5219
          %vm5348 = vmand %vm5284, %vm5220
          %vm5349 = vmand %vm5285, %vm5221
          %vm5350 = vmand %vm5286, %vm5222
          %vm5351 = vmand %vm5287, %vm5223
          %vm5352 = vmand %vm5288, %vm5224
          %vm5353 = vmand %vm5289, %vm5225
          %vm5354 = vmand %vm5290, %vm5226
          %vm5355 = vmand %vm5291, %vm5227
          %vm5356 = vmand %vm5292, %vm5228
          %vm5357 = vmand %vm5293, %vm5229
          %vm5358 = vmand %vm5294, %vm5230
          %vm5359 = vmand %vm5295, %vm5231
          %vm5360 = vmand %vm5296, %vm5232
          %v5361 = vadd.s32 %v4727, 256
          %v5362 = vadd.s32 %v4734, 256
          %v5363 = vadd.s32 %v4741, 256
          %v5364 = vadd.s32 %v4748, 256
          %v5365 = vadd.s32 %v4755, 256
          %v5366 = vadd.s32 %v4762, 256
          %v5367 = vadd.s32 %v4769, 256
          %v5368 = vadd.s32 %v4776, 256
          %v5369 = vadd.s32 %v4783, 256
          %v5370 = vadd.s32 %v4790, 256
          %v5371 = vadd.s32 %v4797, 256
          %v5372 = vadd.s32 %v4804, 256
          %v5373 = vadd.s32 %v4811, 256
          %v5374 = vadd.s32 %v4818, 256
          %v5375 = vadd.s32 %v4825, 256
          %v5376 = vadd.s32 %v4832, 256
          %v5377 = vadd.s32 %v4839, 256
          %v5378 = vadd.s32 %v4846, 256
          %v5379 = vadd.s32 %v4853, 256
          %v5380 = vadd.s32 %v4860, 256
          %v5381 = vadd.s32 %v4867, 256
          %v5382 = vadd.s32 %v4874, 256
          %v5383 = vadd.s32 %v4881, 256
          %v5384 = vadd.s32 %v4888, 256
          %v5385 = vadd.s32 %v4895, 256
          %v5386 = vadd.s32 %v4902, 256
          %v5387 = vadd.s32 %v4909, 256
          %v5388 = vadd.s32 %v4916, 256
          %v5389 = vadd.s32 %v4923, 256
          %v5390 = vadd.s32 %v4930, 256
          %v5391 = vadd.s32 %v4937, 256
          %v5392 = vadd.s32 %v4944, 256
          %v5393 = vadd.s32 %v4951, 256
          %v5394 = vadd.s32 %v4958, 256
          %v5395 = vadd.s32 %v4965, 256
          %v5396 = vadd.s32 %v4972, 256
          %v5397 = vadd.s32 %v4979, 256
          %v5398 = vadd.s32 %v4986, 256
          %v5399 = vadd.s32 %v4993, 256
          %v5400 = vadd.s32 %v5000, 256
          %v5401 = vadd.s32 %v5007, 256
          %v5402 = vadd.s32 %v5014, 256
          %v5403 = vadd.s32 %v5021, 256
          %v5404 = vadd.s32 %v5028, 256
          %v5405 = vadd.s32 %v5035, 256
          %v5406 = vadd.s32 %v5042, 256
          %v5407 = vadd.s32 %v5049, 256
          %v5408 = vadd.s32 %v5056, 256
          %v5409 = vadd.s32 %v5063, 256
          %v5410 = vadd.s32 %v5070, 256
          %v5411 = vadd.s32 %v5077, 256
          %v5412 = vadd.s32 %v5084, 256
          %v5413 = vadd.s32 %v5091, 256
          %v5414 = vadd.s32 %v5098, 256
          %v5415 = vadd.s32 %v5105, 256
          %v5416 = vadd.s32 %v5112, 256
          %v5417 = vadd.s32 %v5119, 256
          %v5418 = vadd.s32 %v5126, 256
          %v5419 = vadd.s32 %v5133, 256
          %v5420 = vadd.s32 %v5140, 256
          %v5421 = vadd.s32 %v5147, 256
          %v5422 = vadd.s32 %v5154, 256
          %v5423 = vadd.s32 %v5161, 256
          %v5424 = vadd.s32 %v5168, 256
          %v5425 = vsel %vm5297, %v5361, %v4727
          %v5426 = vsel %vm5298, %v5362, %v4734
          %v5427 = vsel %vm5299, %v5363, %v4741
          %v5428 = vsel %vm5300, %v5364, %v4748
          %v5429 = vsel %vm5301, %v5365, %v4755
          %v5430 = vsel %vm5302, %v5366, %v4762
          %v5431 = vsel %vm5303, %v5367, %v4769
          %v5432 = vsel %vm5304, %v5368, %v4776
          %v5433 = vsel %vm5305, %v5369, %v4783
          %v5434 = vsel %vm5306, %v5370, %v4790
          %v5435 = vsel %vm5307, %v5371, %v4797
          %v5436 = vsel %vm5308, %v5372, %v4804
          %v5437 = vsel %vm5309, %v5373, %v4811
          %v5438 = vsel %vm5310, %v5374, %v4818
          %v5439 = vsel %vm5311, %v5375, %v4825
          %v5440 = vsel %vm5312, %v5376, %v4832
          %v5441 = vsel %vm5313, %v5377, %v4839
          %v5442 = vsel %vm5314, %v5378, %v4846
          %v5443 = vsel %vm5315, %v5379, %v4853
          %v5444 = vsel %vm5316, %v5380, %v4860
          %v5445 = vsel %vm5317, %v5381, %v4867
          %v5446 = vsel %vm5318, %v5382, %v4874
          %v5447 = vsel %vm5319, %v5383, %v4881
          %v5448 = vsel %vm5320, %v5384, %v4888
          %v5449 = vsel %vm5321, %v5385, %v4895
          %v5450 = vsel %vm5322, %v5386, %v4902
          %v5451 = vsel %vm5323, %v5387, %v4909
          %v5452 = vsel %vm5324, %v5388, %v4916
          %v5453 = vsel %vm5325, %v5389, %v4923
          %v5454 = vsel %vm5326, %v5390, %v4930
          %v5455 = vsel %vm5327, %v5391, %v4937
          %v5456 = vsel %vm5328, %v5392, %v4944
          %v5457 = vsel %vm5329, %v5393, %v4951
          %v5458 = vsel %vm5330, %v5394, %v4958
          %v5459 = vsel %vm5331, %v5395, %v4965
          %v5460 = vsel %vm5332, %v5396, %v4972
          %v5461 = vsel %vm5333, %v5397, %v4979
          %v5462 = vsel %vm5334, %v5398, %v4986
          %v5463 = vsel %vm5335, %v5399, %v4993
          %v5464 = vsel %vm5336, %v5400, %v5000
          %v5465 = vsel %vm5337, %v5401, %v5007
          %v5466 = vsel %vm5338, %v5402, %v5014
          %v5467 = vsel %vm5339, %v5403, %v5021
          %v5468 = vsel %vm5340, %v5404, %v5028
          %v5469 = vsel %vm5341, %v5405, %v5035
          %v5470 = vsel %vm5342, %v5406, %v5042
          %v5471 = vsel %vm5343, %v5407, %v5049
          %v5472 = vsel %vm5344, %v5408, %v5056
          %v5473 = vsel %vm5345, %v5409, %v5063
          %v5474 = vsel %vm5346, %v5410, %v5070
          %v5475 = vsel %vm5347, %v5411, %v5077
          %v5476 = vsel %vm5348, %v5412, %v5084
          %v5477 = vsel %vm5349, %v5413, %v5091
          %v5478 = vsel %vm5350, %v5414, %v5098
          %v5479 = vsel %vm5351, %v5415, %v5105
          %v5480 = vsel %vm5352, %v5416, %v5112
          %v5481 = vsel %vm5353, %v5417, %v5119
          %v5482 = vsel %vm5354, %v5418, %v5126
          %v5483 = vsel %vm5355, %v5419, %v5133
          %v5484 = vsel %vm5356, %v5420, %v5140
          %v5485 = vsel %vm5357, %v5421, %v5147
          %v5486 = vsel %vm5358, %v5422, %v5154
          %v5487 = vsel %vm5359, %v5423, %v5161
          %v5488 = vsel %vm5360, %v5424, %v5168
          %vm5489 = vcmp.le.s32.totalorder %v4719, %v5425
          %vm5490 = vcmp.le.s32.totalorder %v4720, %v5425
          %vm5491 = vcmp.le.s32.totalorder %v4719, %v5426
          %vm5492 = vcmp.le.s32.totalorder %v4720, %v5426
          %vm5493 = vcmp.le.s32.totalorder %v4719, %v5427
          %vm5494 = vcmp.le.s32.totalorder %v4720, %v5427
          %vm5495 = vcmp.le.s32.totalorder %v4719, %v5428
          %vm5496 = vcmp.le.s32.totalorder %v4720, %v5428
          %vm5497 = vcmp.le.s32.totalorder %v4719, %v5429
          %vm5498 = vcmp.le.s32.totalorder %v4720, %v5429
          %vm5499 = vcmp.le.s32.totalorder %v4719, %v5430
          %vm5500 = vcmp.le.s32.totalorder %v4720, %v5430
          %vm5501 = vcmp.le.s32.totalorder %v4719, %v5431
          %vm5502 = vcmp.le.s32.totalorder %v4720, %v5431
          %vm5503 = vcmp.le.s32.totalorder %v4719, %v5432
          %vm5504 = vcmp.le.s32.totalorder %v4720, %v5432
          %vm5505 = vcmp.le.s32.totalorder %v4719, %v5433
          %vm5506 = vcmp.le.s32.totalorder %v4720, %v5433
          %vm5507 = vcmp.le.s32.totalorder %v4719, %v5434
          %vm5508 = vcmp.le.s32.totalorder %v4720, %v5434
          %vm5509 = vcmp.le.s32.totalorder %v4719, %v5435
          %vm5510 = vcmp.le.s32.totalorder %v4720, %v5435
          %vm5511 = vcmp.le.s32.totalorder %v4719, %v5436
          %vm5512 = vcmp.le.s32.totalorder %v4720, %v5436
          %vm5513 = vcmp.le.s32.totalorder %v4719, %v5437
          %vm5514 = vcmp.le.s32.totalorder %v4720, %v5437
          %vm5515 = vcmp.le.s32.totalorder %v4719, %v5438
          %vm5516 = vcmp.le.s32.totalorder %v4720, %v5438
          %vm5517 = vcmp.le.s32.totalorder %v4719, %v5439
          %vm5518 = vcmp.le.s32.totalorder %v4720, %v5439
          %vm5519 = vcmp.le.s32.totalorder %v4719, %v5440
          %vm5520 = vcmp.le.s32.totalorder %v4720, %v5440
          %vm5521 = vcmp.le.s32.totalorder %v4719, %v5441
          %vm5522 = vcmp.le.s32.totalorder %v4720, %v5441
          %vm5523 = vcmp.le.s32.totalorder %v4719, %v5442
          %vm5524 = vcmp.le.s32.totalorder %v4720, %v5442
          %vm5525 = vcmp.le.s32.totalorder %v4719, %v5443
          %vm5526 = vcmp.le.s32.totalorder %v4720, %v5443
          %vm5527 = vcmp.le.s32.totalorder %v4719, %v5444
          %vm5528 = vcmp.le.s32.totalorder %v4720, %v5444
          %vm5529 = vcmp.le.s32.totalorder %v4719, %v5445
          %vm5530 = vcmp.le.s32.totalorder %v4720, %v5445
          %vm5531 = vcmp.le.s32.totalorder %v4719, %v5446
          %vm5532 = vcmp.le.s32.totalorder %v4720, %v5446
          %vm5533 = vcmp.le.s32.totalorder %v4719, %v5447
          %vm5534 = vcmp.le.s32.totalorder %v4720, %v5447
          %vm5535 = vcmp.le.s32.totalorder %v4719, %v5448
          %vm5536 = vcmp.le.s32.totalorder %v4720, %v5448
          %vm5537 = vcmp.le.s32.totalorder %v4719, %v5449
          %vm5538 = vcmp.le.s32.totalorder %v4720, %v5449
          %vm5539 = vcmp.le.s32.totalorder %v4719, %v5450
          %vm5540 = vcmp.le.s32.totalorder %v4720, %v5450
          %vm5541 = vcmp.le.s32.totalorder %v4719, %v5451
          %vm5542 = vcmp.le.s32.totalorder %v4720, %v5451
          %vm5543 = vcmp.le.s32.totalorder %v4719, %v5452
          %vm5544 = vcmp.le.s32.totalorder %v4720, %v5452
          %vm5545 = vcmp.le.s32.totalorder %v4719, %v5453
          %vm5546 = vcmp.le.s32.totalorder %v4720, %v5453
          %vm5547 = vcmp.le.s32.totalorder %v4719, %v5454
          %vm5548 = vcmp.le.s32.totalorder %v4720, %v5454
          %vm5549 = vcmp.le.s32.totalorder %v4719, %v5455
          %vm5550 = vcmp.le.s32.totalorder %v4720, %v5455
          %vm5551 = vcmp.le.s32.totalorder %v4719, %v5456
          %vm5552 = vcmp.le.s32.totalorder %v4720, %v5456
          %vm5553 = vcmp.le.s32.totalorder %v4719, %v5457
          %vm5554 = vcmp.le.s32.totalorder %v4720, %v5457
          %vm5555 = vcmp.le.s32.totalorder %v4719, %v5458
          %vm5556 = vcmp.le.s32.totalorder %v4720, %v5458
          %vm5557 = vcmp.le.s32.totalorder %v4719, %v5459
          %vm5558 = vcmp.le.s32.totalorder %v4720, %v5459
          %vm5559 = vcmp.le.s32.totalorder %v4719, %v5460
          %vm5560 = vcmp.le.s32.totalorder %v4720, %v5460
          %vm5561 = vcmp.le.s32.totalorder %v4719, %v5461
          %vm5562 = vcmp.le.s32.totalorder %v4720, %v5461
          %vm5563 = vcmp.le.s32.totalorder %v4719, %v5462
          %vm5564 = vcmp.le.s32.totalorder %v4720, %v5462
          %vm5565 = vcmp.le.s32.totalorder %v4719, %v5463
          %vm5566 = vcmp.le.s32.totalorder %v4720, %v5463
          %vm5567 = vcmp.le.s32.totalorder %v4719, %v5464
          %vm5568 = vcmp.le.s32.totalorder %v4720, %v5464
          %vm5569 = vcmp.le.s32.totalorder %v4719, %v5465
          %vm5570 = vcmp.le.s32.totalorder %v4720, %v5465
          %vm5571 = vcmp.le.s32.totalorder %v4719, %v5466
          %vm5572 = vcmp.le.s32.totalorder %v4720, %v5466
          %vm5573 = vcmp.le.s32.totalorder %v4719, %v5467
          %vm5574 = vcmp.le.s32.totalorder %v4720, %v5467
          %vm5575 = vcmp.le.s32.totalorder %v4719, %v5468
          %vm5576 = vcmp.le.s32.totalorder %v4720, %v5468
          %vm5577 = vcmp.le.s32.totalorder %v4719, %v5469
          %vm5578 = vcmp.le.s32.totalorder %v4720, %v5469
          %vm5579 = vcmp.le.s32.totalorder %v4719, %v5470
          %vm5580 = vcmp.le.s32.totalorder %v4720, %v5470
          %vm5581 = vcmp.le.s32.totalorder %v4719, %v5471
          %vm5582 = vcmp.le.s32.totalorder %v4720, %v5471
          %vm5583 = vcmp.le.s32.totalorder %v4719, %v5472
          %vm5584 = vcmp.le.s32.totalorder %v4720, %v5472
          %vm5585 = vcmp.le.s32.totalorder %v4719, %v5473
          %vm5586 = vcmp.le.s32.totalorder %v4720, %v5473
          %vm5587 = vcmp.le.s32.totalorder %v4719, %v5474
          %vm5588 = vcmp.le.s32.totalorder %v4720, %v5474
          %vm5589 = vcmp.le.s32.totalorder %v4719, %v5475
          %vm5590 = vcmp.le.s32.totalorder %v4720, %v5475
          %vm5591 = vcmp.le.s32.totalorder %v4719, %v5476
          %vm5592 = vcmp.le.s32.totalorder %v4720, %v5476
          %vm5593 = vcmp.le.s32.totalorder %v4719, %v5477
          %vm5594 = vcmp.le.s32.totalorder %v4720, %v5477
          %vm5595 = vcmp.le.s32.totalorder %v4719, %v5478
          %vm5596 = vcmp.le.s32.totalorder %v4720, %v5478
          %vm5597 = vcmp.le.s32.totalorder %v4719, %v5479
          %vm5598 = vcmp.le.s32.totalorder %v4720, %v5479
          %vm5599 = vcmp.le.s32.totalorder %v4719, %v5480
          %vm5600 = vcmp.le.s32.totalorder %v4720, %v5480
          %vm5601 = vcmp.le.s32.totalorder %v4719, %v5481
          %vm5602 = vcmp.le.s32.totalorder %v4720, %v5481
          %vm5603 = vcmp.le.s32.totalorder %v4719, %v5482
          %vm5604 = vcmp.le.s32.totalorder %v4720, %v5482
          %vm5605 = vcmp.le.s32.totalorder %v4719, %v5483
          %vm5606 = vcmp.le.s32.totalorder %v4720, %v5483
          %vm5607 = vcmp.le.s32.totalorder %v4719, %v5484
          %vm5608 = vcmp.le.s32.totalorder %v4720, %v5484
          %vm5609 = vcmp.le.s32.totalorder %v4719, %v5485
          %vm5610 = vcmp.le.s32.totalorder %v4720, %v5485
          %vm5611 = vcmp.le.s32.totalorder %v4719, %v5486
          %vm5612 = vcmp.le.s32.totalorder %v4720, %v5486
          %vm5613 = vcmp.le.s32.totalorder %v4719, %v5487
          %vm5614 = vcmp.le.s32.totalorder %v4720, %v5487
          %vm5615 = vcmp.le.s32.totalorder %v4719, %v5488
          %vm5616 = vcmp.le.s32.totalorder %v4720, %v5488
          %v5617 = vsel %vm5489, %v4335, -1e+30
          %v5618 = vsel %vm5490, %v4337, -1e+30
          %v5619 = vsel %vm5491, %v4339, -1e+30
          %v5620 = vsel %vm5492, %v4341, -1e+30
          %v5621 = vsel %vm5493, %v4345, -1e+30
          %v5622 = vsel %vm5494, %v4347, -1e+30
          %v5623 = vsel %vm5495, %v4349, -1e+30
          %v5624 = vsel %vm5496, %v4351, -1e+30
          %v5625 = vsel %vm5497, %v4355, -1e+30
          %v5626 = vsel %vm5498, %v4357, -1e+30
          %v5627 = vsel %vm5499, %v4359, -1e+30
          %v5628 = vsel %vm5500, %v4361, -1e+30
          %v5629 = vsel %vm5501, %v4365, -1e+30
          %v5630 = vsel %vm5502, %v4367, -1e+30
          %v5631 = vsel %vm5503, %v4369, -1e+30
          %v5632 = vsel %vm5504, %v4371, -1e+30
          %v5633 = vsel %vm5505, %v4375, -1e+30
          %v5634 = vsel %vm5506, %v4377, -1e+30
          %v5635 = vsel %vm5507, %v4379, -1e+30
          %v5636 = vsel %vm5508, %v4381, -1e+30
          %v5637 = vsel %vm5509, %v4385, -1e+30
          %v5638 = vsel %vm5510, %v4387, -1e+30
          %v5639 = vsel %vm5511, %v4389, -1e+30
          %v5640 = vsel %vm5512, %v4391, -1e+30
          %v5641 = vsel %vm5513, %v4395, -1e+30
          %v5642 = vsel %vm5514, %v4397, -1e+30
          %v5643 = vsel %vm5515, %v4399, -1e+30
          %v5644 = vsel %vm5516, %v4401, -1e+30
          %v5645 = vsel %vm5517, %v4405, -1e+30
          %v5646 = vsel %vm5518, %v4407, -1e+30
          %v5647 = vsel %vm5519, %v4409, -1e+30
          %v5648 = vsel %vm5520, %v4411, -1e+30
          %v5649 = vsel %vm5521, %v4415, -1e+30
          %v5650 = vsel %vm5522, %v4417, -1e+30
          %v5651 = vsel %vm5523, %v4419, -1e+30
          %v5652 = vsel %vm5524, %v4421, -1e+30
          %v5653 = vsel %vm5525, %v4425, -1e+30
          %v5654 = vsel %vm5526, %v4427, -1e+30
          %v5655 = vsel %vm5527, %v4429, -1e+30
          %v5656 = vsel %vm5528, %v4431, -1e+30
          %v5657 = vsel %vm5529, %v4435, -1e+30
          %v5658 = vsel %vm5530, %v4437, -1e+30
          %v5659 = vsel %vm5531, %v4439, -1e+30
          %v5660 = vsel %vm5532, %v4441, -1e+30
          %v5661 = vsel %vm5533, %v4445, -1e+30
          %v5662 = vsel %vm5534, %v4447, -1e+30
          %v5663 = vsel %vm5535, %v4449, -1e+30
          %v5664 = vsel %vm5536, %v4451, -1e+30
          %v5665 = vsel %vm5537, %v4455, -1e+30
          %v5666 = vsel %vm5538, %v4457, -1e+30
          %v5667 = vsel %vm5539, %v4459, -1e+30
          %v5668 = vsel %vm5540, %v4461, -1e+30
          %v5669 = vsel %vm5541, %v4465, -1e+30
          %v5670 = vsel %vm5542, %v4467, -1e+30
          %v5671 = vsel %vm5543, %v4469, -1e+30
          %v5672 = vsel %vm5544, %v4471, -1e+30
          %v5673 = vsel %vm5545, %v4475, -1e+30
          %v5674 = vsel %vm5546, %v4477, -1e+30
          %v5675 = vsel %vm5547, %v4479, -1e+30
          %v5676 = vsel %vm5548, %v4481, -1e+30
          %v5677 = vsel %vm5549, %v4485, -1e+30
          %v5678 = vsel %vm5550, %v4487, -1e+30
          %v5679 = vsel %vm5551, %v4489, -1e+30
          %v5680 = vsel %vm5552, %v4491, -1e+30
          %v5681 = vsel %vm5553, %v4495, -1e+30
          %v5682 = vsel %vm5554, %v4497, -1e+30
          %v5683 = vsel %vm5555, %v4499, -1e+30
          %v5684 = vsel %vm5556, %v4501, -1e+30
          %v5685 = vsel %vm5557, %v4505, -1e+30
          %v5686 = vsel %vm5558, %v4507, -1e+30
          %v5687 = vsel %vm5559, %v4509, -1e+30
          %v5688 = vsel %vm5560, %v4511, -1e+30
          %v5689 = vsel %vm5561, %v4515, -1e+30
          %v5690 = vsel %vm5562, %v4517, -1e+30
          %v5691 = vsel %vm5563, %v4519, -1e+30
          %v5692 = vsel %vm5564, %v4521, -1e+30
          %v5693 = vsel %vm5565, %v4525, -1e+30
          %v5694 = vsel %vm5566, %v4527, -1e+30
          %v5695 = vsel %vm5567, %v4529, -1e+30
          %v5696 = vsel %vm5568, %v4531, -1e+30
          %v5697 = vsel %vm5569, %v4535, -1e+30
          %v5698 = vsel %vm5570, %v4537, -1e+30
          %v5699 = vsel %vm5571, %v4539, -1e+30
          %v5700 = vsel %vm5572, %v4541, -1e+30
          %v5701 = vsel %vm5573, %v4545, -1e+30
          %v5702 = vsel %vm5574, %v4547, -1e+30
          %v5703 = vsel %vm5575, %v4549, -1e+30
          %v5704 = vsel %vm5576, %v4551, -1e+30
          %v5705 = vsel %vm5577, %v4555, -1e+30
          %v5706 = vsel %vm5578, %v4557, -1e+30
          %v5707 = vsel %vm5579, %v4559, -1e+30
          %v5708 = vsel %vm5580, %v4561, -1e+30
          %v5709 = vsel %vm5581, %v4565, -1e+30
          %v5710 = vsel %vm5582, %v4567, -1e+30
          %v5711 = vsel %vm5583, %v4569, -1e+30
          %v5712 = vsel %vm5584, %v4571, -1e+30
          %v5713 = vsel %vm5585, %v4575, -1e+30
          %v5714 = vsel %vm5586, %v4577, -1e+30
          %v5715 = vsel %vm5587, %v4579, -1e+30
          %v5716 = vsel %vm5588, %v4581, -1e+30
          %v5717 = vsel %vm5589, %v4585, -1e+30
          %v5718 = vsel %vm5590, %v4587, -1e+30
          %v5719 = vsel %vm5591, %v4589, -1e+30
          %v5720 = vsel %vm5592, %v4591, -1e+30
          %v5721 = vsel %vm5593, %v4595, -1e+30
          %v5722 = vsel %vm5594, %v4597, -1e+30
          %v5723 = vsel %vm5595, %v4599, -1e+30
          %v5724 = vsel %vm5596, %v4601, -1e+30
          %v5725 = vsel %vm5597, %v4605, -1e+30
          %v5726 = vsel %vm5598, %v4607, -1e+30
          %v5727 = vsel %vm5599, %v4609, -1e+30
          %v5728 = vsel %vm5600, %v4611, -1e+30
          %v5729 = vsel %vm5601, %v4615, -1e+30
          %v5730 = vsel %vm5602, %v4617, -1e+30
          %v5731 = vsel %vm5603, %v4619, -1e+30
          %v5732 = vsel %vm5604, %v4621, -1e+30
          %v5733 = vsel %vm5605, %v4625, -1e+30
          %v5734 = vsel %vm5606, %v4627, -1e+30
          %v5735 = vsel %vm5607, %v4629, -1e+30
          %v5736 = vsel %vm5608, %v4631, -1e+30
          %v5737 = vsel %vm5609, %v4635, -1e+30
          %v5738 = vsel %vm5610, %v4637, -1e+30
          %v5739 = vsel %vm5611, %v4639, -1e+30
          %v5740 = vsel %vm5612, %v4641, -1e+30
          %v5741 = vsel %vm5613, %v4645, -1e+30
          %v5742 = vsel %vm5614, %v4647, -1e+30
          %v5743 = vsel %vm5615, %v4649, -1e+30
          %v5744 = vsel %vm5616, %v4651, -1e+30
          %v5745 = vld [vmem:[#allocation3] sm:$0xff]
          %v5746 = vld [vmem:[#allocation3 + $0x8] sm:$0xff]
          %v5747 = vld [vmem:[#allocation3 + $0x10] sm:$0xff]
          %v5748 = vld [vmem:[#allocation3 + $0x18] sm:$0xff]
          %v5749 = vld [vmem:[#allocation3 + $0x20] sm:$0xff]
          %v5750 = vld [vmem:[#allocation3 + $0x28] sm:$0xff]
          %v5751 = vld [vmem:[#allocation3 + $0x30] sm:$0xff]
          %v5752 = vld [vmem:[#allocation3 + $0x38] sm:$0xff]
          %v5753 = vld [vmem:[#allocation3 + $0x40] sm:$0xff]
          %v5754 = vld [vmem:[#allocation3 + $0x48] sm:$0xff]
          %v5755 = vld [vmem:[#allocation3 + $0x50] sm:$0xff]
          %v5756 = vld [vmem:[#allocation3 + $0x58] sm:$0xff]
          %v5757 = vld [vmem:[#allocation3 + $0x60] sm:$0xff]
          %v5758 = vld [vmem:[#allocation3 + $0x68] sm:$0xff]
          %v5759 = vld [vmem:[#allocation3 + $0x70] sm:$0xff]
          %v5760 = vld [vmem:[#allocation3 + $0x78] sm:$0xff]
          %v5761 = vld [vmem:[#allocation3 + $0x80] sm:$0xff]
          %v5762 = vld [vmem:[#allocation3 + $0x88] sm:$0xff]
          %v5763 = vld [vmem:[#allocation3 + $0x90] sm:$0xff]
          %v5764 = vld [vmem:[#allocation3 + $0x98] sm:$0xff]
          %v5765 = vld [vmem:[#allocation3 + $0xa0] sm:$0xff]
          %v5766 = vld [vmem:[#allocation3 + $0xa8] sm:$0xff]
          %v5767 = vld [vmem:[#allocation3 + $0xb0] sm:$0xff]
          %v5768 = vld [vmem:[#allocation3 + $0xb8] sm:$0xff]
          %v5769 = vld [vmem:[#allocation3 + $0xc0] sm:$0xff]
          %v5770 = vld [vmem:[#allocation3 + $0xc8] sm:$0xff]
          %v5771 = vld [vmem:[#allocation3 + $0xd0] sm:$0xff]
          %v5772 = vld [vmem:[#allocation3 + $0xd8] sm:$0xff]
          %v5773 = vld [vmem:[#allocation3 + $0xe0] sm:$0xff]
          %v5774 = vld [vmem:[#allocation3 + $0xe8] sm:$0xff]
          %v5775 = vld [vmem:[#allocation3 + $0xf0] sm:$0xff]
          %v5776 = vld [vmem:[#allocation3 + $0xf8] sm:$0xff]
          %v5777 = vld [vmem:[#allocation3 + $0x100] sm:$0xff]
          %v5778 = vld [vmem:[#allocation3 + $0x108] sm:$0xff]
          %v5779 = vld [vmem:[#allocation3 + $0x110] sm:$0xff]
          %v5780 = vld [vmem:[#allocation3 + $0x118] sm:$0xff]
          %v5781 = vld [vmem:[#allocation3 + $0x120] sm:$0xff]
          %v5782 = vld [vmem:[#allocation3 + $0x128] sm:$0xff]
          %v5783 = vld [vmem:[#allocation3 + $0x130] sm:$0xff]
          %v5784 = vld [vmem:[#allocation3 + $0x138] sm:$0xff]
          %v5785 = vld [vmem:[#allocation3 + $0x140] sm:$0xff]
          %v5786 = vld [vmem:[#allocation3 + $0x148] sm:$0xff]
          %v5787 = vld [vmem:[#allocation3 + $0x150] sm:$0xff]
          %v5788 = vld [vmem:[#allocation3 + $0x158] sm:$0xff]
          %v5789 = vld [vmem:[#allocation3 + $0x160] sm:$0xff]
          %v5790 = vld [vmem:[#allocation3 + $0x168] sm:$0xff]
          %v5791 = vld [vmem:[#allocation3 + $0x170] sm:$0xff]
          %v5792 = vld [vmem:[#allocation3 + $0x178] sm:$0xff]
          %v5793 = vld [vmem:[#allocation3 + $0x180] sm:$0xff]
          %v5794 = vld [vmem:[#allocation3 + $0x188] sm:$0xff]
          %v5795 = vld [vmem:[#allocation3 + $0x190] sm:$0xff]
          %v5796 = vld [vmem:[#allocation3 + $0x198] sm:$0xff]
          %v5797 = vld [vmem:[#allocation3 + $0x1a0] sm:$0xff]
          %v5798 = vld [vmem:[#allocation3 + $0x1a8] sm:$0xff]
          %v5799 = vld [vmem:[#allocation3 + $0x1b0] sm:$0xff]
          %v5800 = vld [vmem:[#allocation3 + $0x1b8] sm:$0xff]
          %v5801 = vld [vmem:[#allocation3 + $0x1c0] sm:$0xff]
          %v5802 = vld [vmem:[#allocation3 + $0x1c8] sm:$0xff]
          %v5803 = vld [vmem:[#allocation3 + $0x1d0] sm:$0xff]
          %v5804 = vld [vmem:[#allocation3 + $0x1d8] sm:$0xff]
          %v5805 = vld [vmem:[#allocation3 + $0x1e0] sm:$0xff]
          %v5806 = vld [vmem:[#allocation3 + $0x1e8] sm:$0xff]
          %v5807 = vld [vmem:[#allocation3 + $0x1f0] sm:$0xff]
          %v5808 = vld [vmem:[#allocation3 + $0x1f8] sm:$0xff]
          %v5809 = vmax.f32 %v5617, %v5618
          %5810 = vmax.xlane.f32.xlu0 %v5809
          %v5811 = vpop.xlane.xlu0 %5810
          %v5812 = vmax.f32 %v5619, %v5620
          %5813 = vmax.xlane.f32.xlu0 %v5812
          %v5814 = vpop.xlane.xlu0 %5813
          %v5815 = vmax.f32 %v5621, %v5622
          %5816 = vmax.xlane.f32.xlu0 %v5815
          %v5817 = vpop.xlane.xlu0 %5816
          %v5818 = vmax.f32 %v5623, %v5624
          %5819 = vmax.xlane.f32.xlu0 %v5818
          %v5820 = vpop.xlane.xlu0 %5819
          %v5821 = vmax.f32 %v5625, %v5626
          %5822 = vmax.xlane.f32.xlu0 %v5821
          %v5823 = vpop.xlane.xlu0 %5822
          %v5824 = vmax.f32 %v5627, %v5628
          %5825 = vmax.xlane.f32.xlu0 %v5824
          %v5826 = vpop.xlane.xlu0 %5825
          %v5827 = vmax.f32 %v5629, %v5630
          %5828 = vmax.xlane.f32.xlu0 %v5827
          %v5829 = vpop.xlane.xlu0 %5828
          %v5830 = vmax.f32 %v5631, %v5632
          %5831 = vmax.xlane.f32.xlu0 %v5830
          %v5832 = vpop.xlane.xlu0 %5831
          %v5833 = vmax.f32 %v5633, %v5634
          %5834 = vmax.xlane.f32.xlu0 %v5833
          %v5835 = vpop.xlane.xlu0 %5834
          %v5836 = vmax.f32 %v5635, %v5636
          %5837 = vmax.xlane.f32.xlu0 %v5836
          %v5838 = vpop.xlane.xlu0 %5837
          %v5839 = vmax.f32 %v5637, %v5638
          %5840 = vmax.xlane.f32.xlu0 %v5839
          %v5841 = vpop.xlane.xlu0 %5840
          %v5842 = vmax.f32 %v5639, %v5640
          %5843 = vmax.xlane.f32.xlu0 %v5842
          %v5844 = vpop.xlane.xlu0 %5843
          %v5845 = vmax.f32 %v5641, %v5642
          %5846 = vmax.xlane.f32.xlu0 %v5845
          %v5847 = vpop.xlane.xlu0 %5846
          %v5848 = vmax.f32 %v5643, %v5644
          %5849 = vmax.xlane.f32.xlu0 %v5848
          %v5850 = vpop.xlane.xlu0 %5849
          %v5851 = vmax.f32 %v5645, %v5646
          %5852 = vmax.xlane.f32.xlu0 %v5851
          %v5853 = vpop.xlane.xlu0 %5852
          %v5854 = vmax.f32 %v5647, %v5648
          %5855 = vmax.xlane.f32.xlu0 %v5854
          %v5856 = vpop.xlane.xlu0 %5855
          %v5857 = vmax.f32 %v5649, %v5650
          %5858 = vmax.xlane.f32.xlu0 %v5857
          %v5859 = vpop.xlane.xlu0 %5858
          %v5860 = vmax.f32 %v5651, %v5652
          %5861 = vmax.xlane.f32.xlu0 %v5860
          %v5862 = vpop.xlane.xlu0 %5861
          %v5863 = vmax.f32 %v5653, %v5654
          %5864 = vmax.xlane.f32.xlu0 %v5863
          %v5865 = vpop.xlane.xlu0 %5864
          %v5866 = vmax.f32 %v5655, %v5656
          %5867 = vmax.xlane.f32.xlu0 %v5866
          %v5868 = vpop.xlane.xlu0 %5867
          %v5869 = vmax.f32 %v5657, %v5658
          %5870 = vmax.xlane.f32.xlu0 %v5869
          %v5871 = vpop.xlane.xlu0 %5870
          %v5872 = vmax.f32 %v5659, %v5660
          %5873 = vmax.xlane.f32.xlu0 %v5872
          %v5874 = vpop.xlane.xlu0 %5873
          %v5875 = vmax.f32 %v5661, %v5662
          %5876 = vmax.xlane.f32.xlu0 %v5875
          %v5877 = vpop.xlane.xlu0 %5876
          %v5878 = vmax.f32 %v5663, %v5664
          %5879 = vmax.xlane.f32.xlu0 %v5878
          %v5880 = vpop.xlane.xlu0 %5879
          %v5881 = vmax.f32 %v5665, %v5666
          %5882 = vmax.xlane.f32.xlu0 %v5881
          %v5883 = vpop.xlane.xlu0 %5882
          %v5884 = vmax.f32 %v5667, %v5668
          %5885 = vmax.xlane.f32.xlu0 %v5884
          %v5886 = vpop.xlane.xlu0 %5885
          %v5887 = vmax.f32 %v5669, %v5670
          %5888 = vmax.xlane.f32.xlu0 %v5887
          %v5889 = vpop.xlane.xlu0 %5888
          %v5890 = vmax.f32 %v5671, %v5672
          %5891 = vmax.xlane.f32.xlu0 %v5890
          %v5892 = vpop.xlane.xlu0 %5891
          %v5893 = vmax.f32 %v5673, %v5674
          %5894 = vmax.xlane.f32.xlu0 %v5893
          %v5895 = vpop.xlane.xlu0 %5894
          %v5896 = vmax.f32 %v5675, %v5676
          %5897 = vmax.xlane.f32.xlu0 %v5896
          %v5898 = vpop.xlane.xlu0 %5897
          %v5899 = vmax.f32 %v5677, %v5678
          %5900 = vmax.xlane.f32.xlu0 %v5899
          %v5901 = vpop.xlane.xlu0 %5900
          %v5902 = vmax.f32 %v5679, %v5680
          %5903 = vmax.xlane.f32.xlu0 %v5902
          %v5904 = vpop.xlane.xlu0 %5903
          %v5905 = vmax.f32 %v5681, %v5682
          %5906 = vmax.xlane.f32.xlu0 %v5905
          %v5907 = vpop.xlane.xlu0 %5906
          %v5908 = vmax.f32 %v5683, %v5684
          %5909 = vmax.xlane.f32.xlu0 %v5908
          %v5910 = vpop.xlane.xlu0 %5909
          %v5911 = vmax.f32 %v5685, %v5686
          %5912 = vmax.xlane.f32.xlu0 %v5911
          %v5913 = vpop.xlane.xlu0 %5912
          %v5914 = vmax.f32 %v5687, %v5688
          %5915 = vmax.xlane.f32.xlu0 %v5914
          %v5916 = vpop.xlane.xlu0 %5915
          %v5917 = vmax.f32 %v5689, %v5690
          %5918 = vmax.xlane.f32.xlu0 %v5917
          %v5919 = vpop.xlane.xlu0 %5918
          %v5920 = vmax.f32 %v5691, %v5692
          %5921 = vmax.xlane.f32.xlu0 %v5920
          %v5922 = vpop.xlane.xlu0 %5921
          %v5923 = vmax.f32 %v5693, %v5694
          %5924 = vmax.xlane.f32.xlu0 %v5923
          %v5925 = vpop.xlane.xlu0 %5924
          %v5926 = vmax.f32 %v5695, %v5696
          %5927 = vmax.xlane.f32.xlu0 %v5926
          %v5928 = vpop.xlane.xlu0 %5927
          %v5929 = vmax.f32 %v5697, %v5698
          %5930 = vmax.xlane.f32.xlu0 %v5929
          %v5931 = vpop.xlane.xlu0 %5930
          %v5932 = vmax.f32 %v5699, %v5700
          %5933 = vmax.xlane.f32.xlu0 %v5932
          %v5934 = vpop.xlane.xlu0 %5933
          %v5935 = vmax.f32 %v5701, %v5702
          %5936 = vmax.xlane.f32.xlu0 %v5935
          %v5937 = vpop.xlane.xlu0 %5936
          %v5938 = vmax.f32 %v5703, %v5704
          %5939 = vmax.xlane.f32.xlu0 %v5938
          %v5940 = vpop.xlane.xlu0 %5939
          %v5941 = vmax.f32 %v5705, %v5706
          %5942 = vmax.xlane.f32.xlu0 %v5941
          %v5943 = vpop.xlane.xlu0 %5942
          %v5944 = vmax.f32 %v5707, %v5708
          %5945 = vmax.xlane.f32.xlu0 %v5944
          %v5946 = vpop.xlane.xlu0 %5945
          %v5947 = vmax.f32 %v5709, %v5710
          %5948 = vmax.xlane.f32.xlu0 %v5947
          %v5949 = vpop.xlane.xlu0 %5948
          %v5950 = vmax.f32 %v5711, %v5712
          %5951 = vmax.xlane.f32.xlu0 %v5950
          %v5952 = vpop.xlane.xlu0 %5951
          %v5953 = vmax.f32 %v5713, %v5714
          %5954 = vmax.xlane.f32.xlu0 %v5953
          %v5955 = vpop.xlane.xlu0 %5954
          %v5956 = vmax.f32 %v5715, %v5716
          %5957 = vmax.xlane.f32.xlu0 %v5956
          %v5958 = vpop.xlane.xlu0 %5957
          %v5959 = vmax.f32 %v5717, %v5718
          %5960 = vmax.xlane.f32.xlu0 %v5959
          %v5961 = vpop.xlane.xlu0 %5960
          %v5962 = vmax.f32 %v5719, %v5720
          %5963 = vmax.xlane.f32.xlu0 %v5962
          %v5964 = vpop.xlane.xlu0 %5963
          %v5965 = vmax.f32 %v5721, %v5722
          %5966 = vmax.xlane.f32.xlu0 %v5965
          %v5967 = vpop.xlane.xlu0 %5966
          %v5968 = vmax.f32 %v5723, %v5724
          %5969 = vmax.xlane.f32.xlu0 %v5968
          %v5970 = vpop.xlane.xlu0 %5969
          %v5971 = vmax.f32 %v5725, %v5726
          %5972 = vmax.xlane.f32.xlu0 %v5971
          %v5973 = vpop.xlane.xlu0 %5972
          %v5974 = vmax.f32 %v5727, %v5728
          %5975 = vmax.xlane.f32.xlu0 %v5974
          %v5976 = vpop.xlane.xlu0 %5975
          %v5977 = vmax.f32 %v5729, %v5730
          %5978 = vmax.xlane.f32.xlu0 %v5977
          %v5979 = vpop.xlane.xlu0 %5978
          %v5980 = vmax.f32 %v5731, %v5732
          %5981 = vmax.xlane.f32.xlu0 %v5980
          %v5982 = vpop.xlane.xlu0 %5981
          %v5983 = vmax.f32 %v5733, %v5734
          %5984 = vmax.xlane.f32.xlu0 %v5983
          %v5985 = vpop.xlane.xlu0 %5984
          %v5986 = vmax.f32 %v5735, %v5736
          %5987 = vmax.xlane.f32.xlu0 %v5986
          %v5988 = vpop.xlane.xlu0 %5987
          %v5989 = vmax.f32 %v5737, %v5738
          %5990 = vmax.xlane.f32.xlu0 %v5989
          %v5991 = vpop.xlane.xlu0 %5990
          %v5992 = vmax.f32 %v5739, %v5740
          %5993 = vmax.xlane.f32.xlu0 %v5992
          %v5994 = vpop.xlane.xlu0 %5993
          %v5995 = vmax.f32 %v5741, %v5742
          %5996 = vmax.xlane.f32.xlu0 %v5995
          %v5997 = vpop.xlane.xlu0 %5996
          %v5998 = vmax.f32 %v5743, %v5744
          %5999 = vmax.xlane.f32.xlu0 %v5998
          %v6000 = vpop.xlane.xlu0 %5999
          %v6001 = vmax.f32 %v5745, %v5811
          %v6002 = vmax.f32 %v5746, %v5814
          %v6003 = vmax.f32 %v5747, %v5817
          %v6004 = vmax.f32 %v5748, %v5820
          %v6005 = vmax.f32 %v5749, %v5823
          %v6006 = vmax.f32 %v5750, %v5826
          %v6007 = vmax.f32 %v5751, %v5829
          %v6008 = vmax.f32 %v5752, %v5832
          %v6009 = vmax.f32 %v5753, %v5835
          %v6010 = vmax.f32 %v5754, %v5838
          %v6011 = vmax.f32 %v5755, %v5841
          %v6012 = vmax.f32 %v5756, %v5844
          %v6013 = vmax.f32 %v5757, %v5847
          %v6014 = vmax.f32 %v5758, %v5850
          %v6015 = vmax.f32 %v5759, %v5853
          %v6016 = vmax.f32 %v5760, %v5856
          %v6017 = vmax.f32 %v5761, %v5859
          %v6018 = vmax.f32 %v5762, %v5862
          %v6019 = vmax.f32 %v5763, %v5865
          %v6020 = vmax.f32 %v5764, %v5868
          %v6021 = vmax.f32 %v5765, %v5871
          %v6022 = vmax.f32 %v5766, %v5874
          %v6023 = vmax.f32 %v5767, %v5877
          %v6024 = vmax.f32 %v5768, %v5880
          %v6025 = vmax.f32 %v5769, %v5883
          %v6026 = vmax.f32 %v5770, %v5886
          %v6027 = vmax.f32 %v5771, %v5889
          %v6028 = vmax.f32 %v5772, %v5892
          %v6029 = vmax.f32 %v5773, %v5895
          %v6030 = vmax.f32 %v5774, %v5898
          %v6031 = vmax.f32 %v5775, %v5901
          %v6032 = vmax.f32 %v5776, %v5904
          %v6033 = vmax.f32 %v5777, %v5907
          %v6034 = vmax.f32 %v5778, %v5910
          %v6035 = vmax.f32 %v5779, %v5913
          %v6036 = vmax.f32 %v5780, %v5916
          %v6037 = vmax.f32 %v5781, %v5919
          %v6038 = vmax.f32 %v5782, %v5922
          %v6039 = vmax.f32 %v5783, %v5925
          %v6040 = vmax.f32 %v5784, %v5928
          %v6041 = vmax.f32 %v5785, %v5931
          %v6042 = vmax.f32 %v5786, %v5934
          %v6043 = vmax.f32 %v5787, %v5937
          %v6044 = vmax.f32 %v5788, %v5940
          %v6045 = vmax.f32 %v5789, %v5943
          %v6046 = vmax.f32 %v5790, %v5946
          %v6047 = vmax.f32 %v5791, %v5949
          %v6048 = vmax.f32 %v5792, %v5952
          %v6049 = vmax.f32 %v5793, %v5955
          %v6050 = vmax.f32 %v5794, %v5958
          %v6051 = vmax.f32 %v5795, %v5961
          %v6052 = vmax.f32 %v5796, %v5964
          %v6053 = vmax.f32 %v5797, %v5967
          %v6054 = vmax.f32 %v5798, %v5970
          %v6055 = vmax.f32 %v5799, %v5973
          %v6056 = vmax.f32 %v5800, %v5976
          %v6057 = vmax.f32 %v5801, %v5979
          %v6058 = vmax.f32 %v5802, %v5982
          %v6059 = vmax.f32 %v5803, %v5985
          %v6060 = vmax.f32 %v5804, %v5988
          %v6061 = vmax.f32 %v5805, %v5991
          %v6062 = vmax.f32 %v5806, %v5994
          %v6063 = vmax.f32 %v5807, %v5997
          %v6064 = vmax.f32 %v5808, %v6000
          %v6065 = vsub.f32 %v5745, %v6001
          %v6066 = vsub.f32 %v5746, %v6002
          %v6067 = vsub.f32 %v5747, %v6003
          %v6068 = vsub.f32 %v5748, %v6004
          %v6069 = vsub.f32 %v5749, %v6005
          %v6070 = vsub.f32 %v5750, %v6006
          %v6071 = vsub.f32 %v5751, %v6007
          %v6072 = vsub.f32 %v5752, %v6008
          %v6073 = vsub.f32 %v5753, %v6009
          %v6074 = vsub.f32 %v5754, %v6010
          %v6075 = vsub.f32 %v5755, %v6011
          %v6076 = vsub.f32 %v5756, %v6012
          %v6077 = vsub.f32 %v5757, %v6013
          %v6078 = vsub.f32 %v5758, %v6014
          %v6079 = vsub.f32 %v5759, %v6015
          %v6080 = vsub.f32 %v5760, %v6016
          %v6081 = vsub.f32 %v5761, %v6017
          %v6082 = vsub.f32 %v5762, %v6018
          %v6083 = vsub.f32 %v5763, %v6019
          %v6084 = vsub.f32 %v5764, %v6020
          %v6085 = vsub.f32 %v5765, %v6021
          %v6086 = vsub.f32 %v5766, %v6022
          %v6087 = vsub.f32 %v5767, %v6023
          %v6088 = vsub.f32 %v5768, %v6024
          %v6089 = vsub.f32 %v5769, %v6025
          %v6090 = vsub.f32 %v5770, %v6026
          %v6091 = vsub.f32 %v5771, %v6027
          %v6092 = vsub.f32 %v5772, %v6028
          %v6093 = vsub.f32 %v5773, %v6029
          %v6094 = vsub.f32 %v5774, %v6030
          %v6095 = vsub.f32 %v5775, %v6031
          %v6096 = vsub.f32 %v5776, %v6032
          %v6097 = vsub.f32 %v5777, %v6033
          %v6098 = vsub.f32 %v5778, %v6034
          %v6099 = vsub.f32 %v5779, %v6035
          %v6100 = vsub.f32 %v5780, %v6036
          %v6101 = vsub.f32 %v5781, %v6037
          %v6102 = vsub.f32 %v5782, %v6038
          %v6103 = vsub.f32 %v5783, %v6039
          %v6104 = vsub.f32 %v5784, %v6040
          %v6105 = vsub.f32 %v5785, %v6041
          %v6106 = vsub.f32 %v5786, %v6042
          %v6107 = vsub.f32 %v5787, %v6043
          %v6108 = vsub.f32 %v5788, %v6044
          %v6109 = vsub.f32 %v5789, %v6045
          %v6110 = vsub.f32 %v5790, %v6046
          %v6111 = vsub.f32 %v5791, %v6047
          %v6112 = vsub.f32 %v5792, %v6048
          %v6113 = vsub.f32 %v5793, %v6049
          %v6114 = vsub.f32 %v5794, %v6050
          %v6115 = vsub.f32 %v5795, %v6051
          %v6116 = vsub.f32 %v5796, %v6052
          %v6117 = vsub.f32 %v5797, %v6053
          %v6118 = vsub.f32 %v5798, %v6054
          %v6119 = vsub.f32 %v5799, %v6055
          %v6120 = vsub.f32 %v5800, %v6056
          %v6121 = vsub.f32 %v5801, %v6057
          %v6122 = vsub.f32 %v5802, %v6058
          %v6123 = vsub.f32 %v5803, %v6059
          %v6124 = vsub.f32 %v5804, %v6060
          %v6125 = vsub.f32 %v5805, %v6061
          %v6126 = vsub.f32 %v5806, %v6062
          %v6127 = vsub.f32 %v5807, %v6063
          %v6128 = vsub.f32 %v5808, %v6064
          %v6129 = vmul.f32 %v6065, 1.442695
          %v6130 = vpow.pop %v6129
          %v6131 = vmul.f32 %v6066, 1.442695
          %v6132 = vpow.pop %v6131
          %v6133 = vmul.f32 %v6067, 1.442695
          %v6134 = vpow.pop %v6133
          %v6135 = vmul.f32 %v6068, 1.442695
          %v6136 = vpow.pop %v6135
          %v6137 = vmul.f32 %v6069, 1.442695
          %v6138 = vpow.pop %v6137
          %v6139 = vmul.f32 %v6070, 1.442695
          %v6140 = vpow.pop %v6139
          %v6141 = vmul.f32 %v6071, 1.442695
          %v6142 = vpow.pop %v6141
          %v6143 = vmul.f32 %v6072, 1.442695
          %v6144 = vpow.pop %v6143
          %v6145 = vmul.f32 %v6073, 1.442695
          %v6146 = vpow.pop %v6145
          %v6147 = vmul.f32 %v6074, 1.442695
          %v6148 = vpow.pop %v6147
          %v6149 = vmul.f32 %v6075, 1.442695
          %v6150 = vpow.pop %v6149
          %v6151 = vmul.f32 %v6076, 1.442695
          %v6152 = vpow.pop %v6151
          %v6153 = vmul.f32 %v6077, 1.442695
          %v6154 = vpow.pop %v6153
          %v6155 = vmul.f32 %v6078, 1.442695
          %v6156 = vpow.pop %v6155
          %v6157 = vmul.f32 %v6079, 1.442695
          %v6158 = vpow.pop %v6157
          %v6159 = vmul.f32 %v6080, 1.442695
          %v6160 = vpow.pop %v6159
          %v6161 = vmul.f32 %v6081, 1.442695
          %v6162 = vpow.pop %v6161
          %v6163 = vmul.f32 %v6082, 1.442695
          %v6164 = vpow.pop %v6163
          %v6165 = vmul.f32 %v6083, 1.442695
          %v6166 = vpow.pop %v6165
          %v6167 = vmul.f32 %v6084, 1.442695
          %v6168 = vpow.pop %v6167
          %v6169 = vmul.f32 %v6085, 1.442695
          %v6170 = vpow.pop %v6169
          %v6171 = vmul.f32 %v6086, 1.442695
          %v6172 = vpow.pop %v6171
          %v6173 = vmul.f32 %v6087, 1.442695
          %v6174 = vpow.pop %v6173
          %v6175 = vmul.f32 %v6088, 1.442695
          %v6176 = vpow.pop %v6175
          %v6177 = vmul.f32 %v6089, 1.442695
          %v6178 = vpow.pop %v6177
          %v6179 = vmul.f32 %v6090, 1.442695
          %v6180 = vpow.pop %v6179
          %v6181 = vmul.f32 %v6091, 1.442695
          %v6182 = vpow.pop %v6181
          %v6183 = vmul.f32 %v6092, 1.442695
          %v6184 = vpow.pop %v6183
          %v6185 = vmul.f32 %v6093, 1.442695
          %v6186 = vpow.pop %v6185
          %v6187 = vmul.f32 %v6094, 1.442695
          %v6188 = vpow.pop %v6187
          %v6189 = vmul.f32 %v6095, 1.442695
          %v6190 = vpow.pop %v6189
          %v6191 = vmul.f32 %v6096, 1.442695
          %v6192 = vpow.pop %v6191
          %v6193 = vmul.f32 %v6097, 1.442695
          %v6194 = vpow.pop %v6193
          %v6195 = vmul.f32 %v6098, 1.442695
          %v6196 = vpow.pop %v6195
          %v6197 = vmul.f32 %v6099, 1.442695
          %v6198 = vpow.pop %v6197
          %v6199 = vmul.f32 %v6100, 1.442695
          %v6200 = vpow.pop %v6199
          %v6201 = vmul.f32 %v6101, 1.442695
          %v6202 = vpow.pop %v6201
          %v6203 = vmul.f32 %v6102, 1.442695
          %v6204 = vpow.pop %v6203
          %v6205 = vmul.f32 %v6103, 1.442695
          %v6206 = vpow.pop %v6205
          %v6207 = vmul.f32 %v6104, 1.442695
          %v6208 = vpow.pop %v6207
          %v6209 = vmul.f32 %v6105, 1.442695
          %v6210 = vpow.pop %v6209
          %v6211 = vmul.f32 %v6106, 1.442695
          %v6212 = vpow.pop %v6211
          %v6213 = vmul.f32 %v6107, 1.442695
          %v6214 = vpow.pop %v6213
          %v6215 = vmul.f32 %v6108, 1.442695
          %v6216 = vpow.pop %v6215
          %v6217 = vmul.f32 %v6109, 1.442695
          %v6218 = vpow.pop %v6217
          %v6219 = vmul.f32 %v6110, 1.442695
          %v6220 = vpow.pop %v6219
          %v6221 = vmul.f32 %v6111, 1.442695
          %v6222 = vpow.pop %v6221
          %v6223 = vmul.f32 %v6112, 1.442695
          %v6224 = vpow.pop %v6223
          %v6225 = vmul.f32 %v6113, 1.442695
          %v6226 = vpow.pop %v6225
          %v6227 = vmul.f32 %v6114, 1.442695
          %v6228 = vpow.pop %v6227
          %v6229 = vmul.f32 %v6115, 1.442695
          %v6230 = vpow.pop %v6229
          %v6231 = vmul.f32 %v6116, 1.442695
          %v6232 = vpow.pop %v6231
          %v6233 = vmul.f32 %v6117, 1.442695
          %v6234 = vpow.pop %v6233
          %v6235 = vmul.f32 %v6118, 1.442695
          %v6236 = vpow.pop %v6235
          %v6237 = vmul.f32 %v6119, 1.442695
          %v6238 = vpow.pop %v6237
          %v6239 = vmul.f32 %v6120, 1.442695
          %v6240 = vpow.pop %v6239
          %v6241 = vmul.f32 %v6121, 1.442695
          %v6242 = vpow.pop %v6241
          %v6243 = vmul.f32 %v6122, 1.442695
          %v6244 = vpow.pop %v6243
          %v6245 = vmul.f32 %v6123, 1.442695
          %v6246 = vpow.pop %v6245
          %v6247 = vmul.f32 %v6124, 1.442695
          %v6248 = vpow.pop %v6247
          %v6249 = vmul.f32 %v6125, 1.442695
          %v6250 = vpow.pop %v6249
          %v6251 = vmul.f32 %v6126, 1.442695
          %v6252 = vpow.pop %v6251
          %v6253 = vmul.f32 %v6127, 1.442695
          %v6254 = vpow.pop %v6253
          %v6255 = vmul.f32 %v6128, 1.442695
          %v6256 = vpow.pop %v6255
          %6258 = vset.pattern.permute.xlu0 0
          %6259 = vperm.xlu0 %6258, %v6001
          %v6260 = vpop.permute.xlu0 %6259
          %6263 = vset.pattern.permute.xlu0 0
          %6264 = vperm.xlu0 %6263, %v6002
          %v6265 = vpop.permute.xlu0 %6264
          %6268 = vset.pattern.permute.xlu0 0
          %6269 = vperm.xlu0 %6268, %v6003
          %v6270 = vpop.permute.xlu0 %6269
          %6273 = vset.pattern.permute.xlu0 0
          %6274 = vperm.xlu0 %6273, %v6004
          %v6275 = vpop.permute.xlu0 %6274
          %6278 = vset.pattern.permute.xlu0 0
          %6279 = vperm.xlu0 %6278, %v6005
          %v6280 = vpop.permute.xlu0 %6279
          %6283 = vset.pattern.permute.xlu0 0
          %6284 = vperm.xlu0 %6283, %v6006
          %v6285 = vpop.permute.xlu0 %6284
          %6288 = vset.pattern.permute.xlu0 0
          %6289 = vperm.xlu0 %6288, %v6007
          %v6290 = vpop.permute.xlu0 %6289
          %6293 = vset.pattern.permute.xlu0 0
          %6294 = vperm.xlu0 %6293, %v6008
          %v6295 = vpop.permute.xlu0 %6294
          %6298 = vset.pattern.permute.xlu0 0
          %6299 = vperm.xlu0 %6298, %v6009
          %v6300 = vpop.permute.xlu0 %6299
          %6303 = vset.pattern.permute.xlu0 0
          %6304 = vperm.xlu0 %6303, %v6010
          %v6305 = vpop.permute.xlu0 %6304
          %6308 = vset.pattern.permute.xlu0 0
          %6309 = vperm.xlu0 %6308, %v6011
          %v6310 = vpop.permute.xlu0 %6309
          %6313 = vset.pattern.permute.xlu0 0
          %6314 = vperm.xlu0 %6313, %v6012
          %v6315 = vpop.permute.xlu0 %6314
          %6318 = vset.pattern.permute.xlu0 0
          %6319 = vperm.xlu0 %6318, %v6013
          %v6320 = vpop.permute.xlu0 %6319
          %6323 = vset.pattern.permute.xlu0 0
          %6324 = vperm.xlu0 %6323, %v6014
          %v6325 = vpop.permute.xlu0 %6324
          %6328 = vset.pattern.permute.xlu0 0
          %6329 = vperm.xlu0 %6328, %v6015
          %v6330 = vpop.permute.xlu0 %6329
          %6333 = vset.pattern.permute.xlu0 0
          %6334 = vperm.xlu0 %6333, %v6016
          %v6335 = vpop.permute.xlu0 %6334
          %6338 = vset.pattern.permute.xlu0 0
          %6339 = vperm.xlu0 %6338, %v6017
          %v6340 = vpop.permute.xlu0 %6339
          %6343 = vset.pattern.permute.xlu0 0
          %6344 = vperm.xlu0 %6343, %v6018
          %v6345 = vpop.permute.xlu0 %6344
          %6348 = vset.pattern.permute.xlu0 0
          %6349 = vperm.xlu0 %6348, %v6019
          %v6350 = vpop.permute.xlu0 %6349
          %6353 = vset.pattern.permute.xlu0 0
          %6354 = vperm.xlu0 %6353, %v6020
          %v6355 = vpop.permute.xlu0 %6354
          %6358 = vset.pattern.permute.xlu0 0
          %6359 = vperm.xlu0 %6358, %v6021
          %v6360 = vpop.permute.xlu0 %6359
          %6363 = vset.pattern.permute.xlu0 0
          %6364 = vperm.xlu0 %6363, %v6022
          %v6365 = vpop.permute.xlu0 %6364
          %6368 = vset.pattern.permute.xlu0 0
          %6369 = vperm.xlu0 %6368, %v6023
          %v6370 = vpop.permute.xlu0 %6369
          %6373 = vset.pattern.permute.xlu0 0
          %6374 = vperm.xlu0 %6373, %v6024
          %v6375 = vpop.permute.xlu0 %6374
          %6378 = vset.pattern.permute.xlu0 0
          %6379 = vperm.xlu0 %6378, %v6025
          %v6380 = vpop.permute.xlu0 %6379
          %6383 = vset.pattern.permute.xlu0 0
          %6384 = vperm.xlu0 %6383, %v6026
          %v6385 = vpop.permute.xlu0 %6384
          %6388 = vset.pattern.permute.xlu0 0
          %6389 = vperm.xlu0 %6388, %v6027
          %v6390 = vpop.permute.xlu0 %6389
          %6393 = vset.pattern.permute.xlu0 0
          %6394 = vperm.xlu0 %6393, %v6028
          %v6395 = vpop.permute.xlu0 %6394
          %6398 = vset.pattern.permute.xlu0 0
          %6399 = vperm.xlu0 %6398, %v6029
          %v6400 = vpop.permute.xlu0 %6399
          %6403 = vset.pattern.permute.xlu0 0
          %6404 = vperm.xlu0 %6403, %v6030
          %v6405 = vpop.permute.xlu0 %6404
          %6408 = vset.pattern.permute.xlu0 0
          %6409 = vperm.xlu0 %6408, %v6031
          %v6410 = vpop.permute.xlu0 %6409
          %6413 = vset.pattern.permute.xlu0 0
          %6414 = vperm.xlu0 %6413, %v6032
          %v6415 = vpop.permute.xlu0 %6414
          %6418 = vset.pattern.permute.xlu0 0
          %6419 = vperm.xlu0 %6418, %v6033
          %v6420 = vpop.permute.xlu0 %6419
          %6423 = vset.pattern.permute.xlu0 0
          %6424 = vperm.xlu0 %6423, %v6034
          %v6425 = vpop.permute.xlu0 %6424
          %6428 = vset.pattern.permute.xlu0 0
          %6429 = vperm.xlu0 %6428, %v6035
          %v6430 = vpop.permute.xlu0 %6429
          %6433 = vset.pattern.permute.xlu0 0
          %6434 = vperm.xlu0 %6433, %v6036
          %v6435 = vpop.permute.xlu0 %6434
          %6438 = vset.pattern.permute.xlu0 0
          %6439 = vperm.xlu0 %6438, %v6037
          %v6440 = vpop.permute.xlu0 %6439
          %6443 = vset.pattern.permute.xlu0 0
          %6444 = vperm.xlu0 %6443, %v6038
          %v6445 = vpop.permute.xlu0 %6444
          %6448 = vset.pattern.permute.xlu0 0
          %6449 = vperm.xlu0 %6448, %v6039
          %v6450 = vpop.permute.xlu0 %6449
          %6453 = vset.pattern.permute.xlu0 0
          %6454 = vperm.xlu0 %6453, %v6040
          %v6455 = vpop.permute.xlu0 %6454
          %6458 = vset.pattern.permute.xlu0 0
          %6459 = vperm.xlu0 %6458, %v6041
          %v6460 = vpop.permute.xlu0 %6459
          %6463 = vset.pattern.permute.xlu0 0
          %6464 = vperm.xlu0 %6463, %v6042
          %v6465 = vpop.permute.xlu0 %6464
          %6468 = vset.pattern.permute.xlu0 0
          %6469 = vperm.xlu0 %6468, %v6043
          %v6470 = vpop.permute.xlu0 %6469
          %6473 = vset.pattern.permute.xlu0 0
          %6474 = vperm.xlu0 %6473, %v6044
          %v6475 = vpop.permute.xlu0 %6474
          %6478 = vset.pattern.permute.xlu0 0
          %6479 = vperm.xlu0 %6478, %v6045
          %v6480 = vpop.permute.xlu0 %6479
          %6483 = vset.pattern.permute.xlu0 0
          %6484 = vperm.xlu0 %6483, %v6046
          %v6485 = vpop.permute.xlu0 %6484
          %6488 = vset.pattern.permute.xlu0 0
          %6489 = vperm.xlu0 %6488, %v6047
          %v6490 = vpop.permute.xlu0 %6489
          %6493 = vset.pattern.permute.xlu0 0
          %6494 = vperm.xlu0 %6493, %v6048
          %v6495 = vpop.permute.xlu0 %6494
          %6498 = vset.pattern.permute.xlu0 0
          %6499 = vperm.xlu0 %6498, %v6049
          %v6500 = vpop.permute.xlu0 %6499
          %6503 = vset.pattern.permute.xlu0 0
          %6504 = vperm.xlu0 %6503, %v6050
          %v6505 = vpop.permute.xlu0 %6504
          %6508 = vset.pattern.permute.xlu0 0
          %6509 = vperm.xlu0 %6508, %v6051
          %v6510 = vpop.permute.xlu0 %6509
          %6513 = vset.pattern.permute.xlu0 0
          %6514 = vperm.xlu0 %6513, %v6052
          %v6515 = vpop.permute.xlu0 %6514
          %6518 = vset.pattern.permute.xlu0 0
          %6519 = vperm.xlu0 %6518, %v6053
          %v6520 = vpop.permute.xlu0 %6519
          %6523 = vset.pattern.permute.xlu0 0
          %6524 = vperm.xlu0 %6523, %v6054
          %v6525 = vpop.permute.xlu0 %6524
          %6528 = vset.pattern.permute.xlu0 0
          %6529 = vperm.xlu0 %6528, %v6055
          %v6530 = vpop.permute.xlu0 %6529
          %6533 = vset.pattern.permute.xlu0 0
          %6534 = vperm.xlu0 %6533, %v6056
          %v6535 = vpop.permute.xlu0 %6534
          %6538 = vset.pattern.permute.xlu0 0
          %6539 = vperm.xlu0 %6538, %v6057
          %v6540 = vpop.permute.xlu0 %6539
          %6543 = vset.pattern.permute.xlu0 0
          %6544 = vperm.xlu0 %6543, %v6058
          %v6545 = vpop.permute.xlu0 %6544
          %6548 = vset.pattern.permute.xlu0 0
          %6549 = vperm.xlu0 %6548, %v6059
          %v6550 = vpop.permute.xlu0 %6549
          %6553 = vset.pattern.permute.xlu0 0
          %6554 = vperm.xlu0 %6553, %v6060
          %v6555 = vpop.permute.xlu0 %6554
          %6558 = vset.pattern.permute.xlu0 0
          %6559 = vperm.xlu0 %6558, %v6061
          %v6560 = vpop.permute.xlu0 %6559
          %6563 = vset.pattern.permute.xlu0 0
          %6564 = vperm.xlu0 %6563, %v6062
          %v6565 = vpop.permute.xlu0 %6564
          %6568 = vset.pattern.permute.xlu0 0
          %6569 = vperm.xlu0 %6568, %v6063
          %v6570 = vpop.permute.xlu0 %6569
          %6573 = vset.pattern.permute.xlu0 0
          %6574 = vperm.xlu0 %6573, %v6064
          %v6575 = vpop.permute.xlu0 %6574
          %v6577 = vsub.f32 %v5617, %v6260
          %v6578 = vsub.f32 %v5618, %v6260
          %v6579 = vsub.f32 %v5619, %v6265
          %v6580 = vsub.f32 %v5620, %v6265
          %v6581 = vsub.f32 %v5621, %v6270
          %v6582 = vsub.f32 %v5622, %v6270
          %v6583 = vsub.f32 %v5623, %v6275
          %v6584 = vsub.f32 %v5624, %v6275
          %v6585 = vsub.f32 %v5625, %v6280
          %v6586 = vsub.f32 %v5626, %v6280
          %v6587 = vsub.f32 %v5627, %v6285
          %v6588 = vsub.f32 %v5628, %v6285
          %v6589 = vsub.f32 %v5629, %v6290
          %v6590 = vsub.f32 %v5630, %v6290
          %v6591 = vsub.f32 %v5631, %v6295
          %v6592 = vsub.f32 %v5632, %v6295
          %v6593 = vsub.f32 %v5633, %v6300
          %v6594 = vsub.f32 %v5634, %v6300
          %v6595 = vsub.f32 %v5635, %v6305
          %v6596 = vsub.f32 %v5636, %v6305
          %v6597 = vsub.f32 %v5637, %v6310
          %v6598 = vsub.f32 %v5638, %v6310
          %v6599 = vsub.f32 %v5639, %v6315
          %v6600 = vsub.f32 %v5640, %v6315
          %v6601 = vsub.f32 %v5641, %v6320
          %v6602 = vsub.f32 %v5642, %v6320
          %v6603 = vsub.f32 %v5643, %v6325
          %v6604 = vsub.f32 %v5644, %v6325
          %v6605 = vsub.f32 %v5645, %v6330
          %v6606 = vsub.f32 %v5646, %v6330
          %v6607 = vsub.f32 %v5647, %v6335
          %v6608 = vsub.f32 %v5648, %v6335
          %v6609 = vsub.f32 %v5649, %v6340
          %v6610 = vsub.f32 %v5650, %v6340
          %v6611 = vsub.f32 %v5651, %v6345
          %v6612 = vsub.f32 %v5652, %v6345
          %v6613 = vsub.f32 %v5653, %v6350
          %v6614 = vsub.f32 %v5654, %v6350
          %v6615 = vsub.f32 %v5655, %v6355
          %v6616 = vsub.f32 %v5656, %v6355
          %v6617 = vsub.f32 %v5657, %v6360
          %v6618 = vsub.f32 %v5658, %v6360
          %v6619 = vsub.f32 %v5659, %v6365
          %v6620 = vsub.f32 %v5660, %v6365
          %v6621 = vsub.f32 %v5661, %v6370
          %v6622 = vsub.f32 %v5662, %v6370
          %v6623 = vsub.f32 %v5663, %v6375
          %v6624 = vsub.f32 %v5664, %v6375
          %v6625 = vsub.f32 %v5665, %v6380
          %v6626 = vsub.f32 %v5666, %v6380
          %v6627 = vsub.f32 %v5667, %v6385
          %v6628 = vsub.f32 %v5668, %v6385
          %v6629 = vsub.f32 %v5669, %v6390
          %v6630 = vsub.f32 %v5670, %v6390
          %v6631 = vsub.f32 %v5671, %v6395
          %v6632 = vsub.f32 %v5672, %v6395
          %v6633 = vsub.f32 %v5673, %v6400
          %v6634 = vsub.f32 %v5674, %v6400
          %v6635 = vsub.f32 %v5675, %v6405
          %v6636 = vsub.f32 %v5676, %v6405
          %v6637 = vsub.f32 %v5677, %v6410
          %v6638 = vsub.f32 %v5678, %v6410
          %v6639 = vsub.f32 %v5679, %v6415
          %v6640 = vsub.f32 %v5680, %v6415
          %v6641 = vsub.f32 %v5681, %v6420
          %v6642 = vsub.f32 %v5682, %v6420
          %v6643 = vsub.f32 %v5683, %v6425
          %v6644 = vsub.f32 %v5684, %v6425
          %v6645 = vsub.f32 %v5685, %v6430
          %v6646 = vsub.f32 %v5686, %v6430
          %v6647 = vsub.f32 %v5687, %v6435
          %v6648 = vsub.f32 %v5688, %v6435
          %v6649 = vsub.f32 %v5689, %v6440
          %v6650 = vsub.f32 %v5690, %v6440
          %v6651 = vsub.f32 %v5691, %v6445
          %v6652 = vsub.f32 %v5692, %v6445
          %v6653 = vsub.f32 %v5693, %v6450
          %v6654 = vsub.f32 %v5694, %v6450
          %v6655 = vsub.f32 %v5695, %v6455
          %v6656 = vsub.f32 %v5696, %v6455
          %v6657 = vsub.f32 %v5697, %v6460
          %v6658 = vsub.f32 %v5698, %v6460
          %v6659 = vsub.f32 %v5699, %v6465
          %v6660 = vsub.f32 %v5700, %v6465
          %v6661 = vsub.f32 %v5701, %v6470
          %v6662 = vsub.f32 %v5702, %v6470
          %v6663 = vsub.f32 %v5703, %v6475
          %v6664 = vsub.f32 %v5704, %v6475
          %v6665 = vsub.f32 %v5705, %v6480
          %v6666 = vsub.f32 %v5706, %v6480
          %v6667 = vsub.f32 %v5707, %v6485
          %v6668 = vsub.f32 %v5708, %v6485
          %v6669 = vsub.f32 %v5709, %v6490
          %v6670 = vsub.f32 %v5710, %v6490
          %v6671 = vsub.f32 %v5711, %v6495
          %v6672 = vsub.f32 %v5712, %v6495
          %v6673 = vsub.f32 %v5713, %v6500
          %v6674 = vsub.f32 %v5714, %v6500
          %v6675 = vsub.f32 %v5715, %v6505
          %v6676 = vsub.f32 %v5716, %v6505
          %v6677 = vsub.f32 %v5717, %v6510
          %v6678 = vsub.f32 %v5718, %v6510
          %v6679 = vsub.f32 %v5719, %v6515
          %v6680 = vsub.f32 %v5720, %v6515
          %v6681 = vsub.f32 %v5721, %v6520
          %v6682 = vsub.f32 %v5722, %v6520
          %v6683 = vsub.f32 %v5723, %v6525
          %v6684 = vsub.f32 %v5724, %v6525
          %v6685 = vsub.f32 %v5725, %v6530
          %v6686 = vsub.f32 %v5726, %v6530
          %v6687 = vsub.f32 %v5727, %v6535
          %v6688 = vsub.f32 %v5728, %v6535
          %v6689 = vsub.f32 %v5729, %v6540
          %v6690 = vsub.f32 %v5730, %v6540
          %v6691 = vsub.f32 %v5731, %v6545
          %v6692 = vsub.f32 %v5732, %v6545
          %v6693 = vsub.f32 %v5733, %v6550
          %v6694 = vsub.f32 %v5734, %v6550
          %v6695 = vsub.f32 %v5735, %v6555
          %v6696 = vsub.f32 %v5736, %v6555
          %v6697 = vsub.f32 %v5737, %v6560
          %v6698 = vsub.f32 %v5738, %v6560
          %v6699 = vsub.f32 %v5739, %v6565
          %v6700 = vsub.f32 %v5740, %v6565
          %v6701 = vsub.f32 %v5741, %v6570
          %v6702 = vsub.f32 %v5742, %v6570
          %v6703 = vsub.f32 %v5743, %v6575
          %v6704 = vsub.f32 %v5744, %v6575
          %v6705 = vmul.f32 %v6577, 1.442695
          %v6706 = vpow.pop %v6705
          %v6707 = vmul.f32 %v6578, 1.442695
          %v6708 = vpow.pop %v6707
          %v6709 = vmul.f32 %v6579, 1.442695
          %v6710 = vpow.pop %v6709
          %v6711 = vmul.f32 %v6580, 1.442695
          %v6712 = vpow.pop %v6711
          %v6713 = vmul.f32 %v6581, 1.442695
          %v6714 = vpow.pop %v6713
          %v6715 = vmul.f32 %v6582, 1.442695
          %v6716 = vpow.pop %v6715
          %v6717 = vmul.f32 %v6583, 1.442695
          %v6718 = vpow.pop %v6717
          %v6719 = vmul.f32 %v6584, 1.442695
          %v6720 = vpow.pop %v6719
          %v6721 = vmul.f32 %v6585, 1.442695
          %v6722 = vpow.pop %v6721
          %v6723 = vmul.f32 %v6586, 1.442695
          %v6724 = vpow.pop %v6723
          %v6725 = vmul.f32 %v6587, 1.442695
          %v6726 = vpow.pop %v6725
          %v6727 = vmul.f32 %v6588, 1.442695
          %v6728 = vpow.pop %v6727
          %v6729 = vmul.f32 %v6589, 1.442695
          %v6730 = vpow.pop %v6729
          %v6731 = vmul.f32 %v6590, 1.442695
          %v6732 = vpow.pop %v6731
          %v6733 = vmul.f32 %v6591, 1.442695
          %v6734 = vpow.pop %v6733
          %v6735 = vmul.f32 %v6592, 1.442695
          %v6736 = vpow.pop %v6735
          %v6737 = vmul.f32 %v6593, 1.442695
          %v6738 = vpow.pop %v6737
          %v6739 = vmul.f32 %v6594, 1.442695
          %v6740 = vpow.pop %v6739
          %v6741 = vmul.f32 %v6595, 1.442695
          %v6742 = vpow.pop %v6741
          %v6743 = vmul.f32 %v6596, 1.442695
          %v6744 = vpow.pop %v6743
          %v6745 = vmul.f32 %v6597, 1.442695
          %v6746 = vpow.pop %v6745
          %v6747 = vmul.f32 %v6598, 1.442695
          %v6748 = vpow.pop %v6747
          %v6749 = vmul.f32 %v6599, 1.442695
          %v6750 = vpow.pop %v6749
          %v6751 = vmul.f32 %v6600, 1.442695
          %v6752 = vpow.pop %v6751
          %v6753 = vmul.f32 %v6601, 1.442695
          %v6754 = vpow.pop %v6753
          %v6755 = vmul.f32 %v6602, 1.442695
          %v6756 = vpow.pop %v6755
          %v6757 = vmul.f32 %v6603, 1.442695
          %v6758 = vpow.pop %v6757
          %v6759 = vmul.f32 %v6604, 1.442695
          %v6760 = vpow.pop %v6759
          %v6761 = vmul.f32 %v6605, 1.442695
          %v6762 = vpow.pop %v6761
          %v6763 = vmul.f32 %v6606, 1.442695
          %v6764 = vpow.pop %v6763
          %v6765 = vmul.f32 %v6607, 1.442695
          %v6766 = vpow.pop %v6765
          %v6767 = vmul.f32 %v6608, 1.442695
          %v6768 = vpow.pop %v6767
          %v6769 = vmul.f32 %v6609, 1.442695
          %v6770 = vpow.pop %v6769
          %v6771 = vmul.f32 %v6610, 1.442695
          %v6772 = vpow.pop %v6771
          %v6773 = vmul.f32 %v6611, 1.442695
          %v6774 = vpow.pop %v6773
          %v6775 = vmul.f32 %v6612, 1.442695
          %v6776 = vpow.pop %v6775
          %v6777 = vmul.f32 %v6613, 1.442695
          %v6778 = vpow.pop %v6777
          %v6779 = vmul.f32 %v6614, 1.442695
          %v6780 = vpow.pop %v6779
          %v6781 = vmul.f32 %v6615, 1.442695
          %v6782 = vpow.pop %v6781
          %v6783 = vmul.f32 %v6616, 1.442695
          %v6784 = vpow.pop %v6783
          %v6785 = vmul.f32 %v6617, 1.442695
          %v6786 = vpow.pop %v6785
          %v6787 = vmul.f32 %v6618, 1.442695
          %v6788 = vpow.pop %v6787
          %v6789 = vmul.f32 %v6619, 1.442695
          %v6790 = vpow.pop %v6789
          %v6791 = vmul.f32 %v6620, 1.442695
          %v6792 = vpow.pop %v6791
          %v6793 = vmul.f32 %v6621, 1.442695
          %v6794 = vpow.pop %v6793
          %v6795 = vmul.f32 %v6622, 1.442695
          %v6796 = vpow.pop %v6795
          %v6797 = vmul.f32 %v6623, 1.442695
          %v6798 = vpow.pop %v6797
          %v6799 = vmul.f32 %v6624, 1.442695
          %v6800 = vpow.pop %v6799
          %v6801 = vmul.f32 %v6625, 1.442695
          %v6802 = vpow.pop %v6801
          %v6803 = vmul.f32 %v6626, 1.442695
          %v6804 = vpow.pop %v6803
          %v6805 = vmul.f32 %v6627, 1.442695
          %v6806 = vpow.pop %v6805
          %v6807 = vmul.f32 %v6628, 1.442695
          %v6808 = vpow.pop %v6807
          %v6809 = vmul.f32 %v6629, 1.442695
          %v6810 = vpow.pop %v6809
          %v6811 = vmul.f32 %v6630, 1.442695
          %v6812 = vpow.pop %v6811
          %v6813 = vmul.f32 %v6631, 1.442695
          %v6814 = vpow.pop %v6813
          %v6815 = vmul.f32 %v6632, 1.442695
          %v6816 = vpow.pop %v6815
          %v6817 = vmul.f32 %v6633, 1.442695
          %v6818 = vpow.pop %v6817
          %v6819 = vmul.f32 %v6634, 1.442695
          %v6820 = vpow.pop %v6819
          %v6821 = vmul.f32 %v6635, 1.442695
          %v6822 = vpow.pop %v6821
          %v6823 = vmul.f32 %v6636, 1.442695
          %v6824 = vpow.pop %v6823
          %v6825 = vmul.f32 %v6637, 1.442695
          %v6826 = vpow.pop %v6825
          %v6827 = vmul.f32 %v6638, 1.442695
          %v6828 = vpow.pop %v6827
          %v6829 = vmul.f32 %v6639, 1.442695
          %v6830 = vpow.pop %v6829
          %v6831 = vmul.f32 %v6640, 1.442695
          %v6832 = vpow.pop %v6831
          %v6833 = vmul.f32 %v6641, 1.442695
          %v6834 = vpow.pop %v6833
          %v6835 = vmul.f32 %v6642, 1.442695
          %v6836 = vpow.pop %v6835
          %v6837 = vmul.f32 %v6643, 1.442695
          %v6838 = vpow.pop %v6837
          %v6839 = vmul.f32 %v6644, 1.442695
          %v6840 = vpow.pop %v6839
          %v6841 = vmul.f32 %v6645, 1.442695
          %v6842 = vpow.pop %v6841
          %v6843 = vmul.f32 %v6646, 1.442695
          %v6844 = vpow.pop %v6843
          %v6845 = vmul.f32 %v6647, 1.442695
          %v6846 = vpow.pop %v6845
          %v6847 = vmul.f32 %v6648, 1.442695
          %v6848 = vpow.pop %v6847
          %v6849 = vmul.f32 %v6649, 1.442695
          %v6850 = vpow.pop %v6849
          %v6851 = vmul.f32 %v6650, 1.442695
          %v6852 = vpow.pop %v6851
          %v6853 = vmul.f32 %v6651, 1.442695
          %v6854 = vpow.pop %v6853
          %v6855 = vmul.f32 %v6652, 1.442695
          %v6856 = vpow.pop %v6855
          %v6857 = vmul.f32 %v6653, 1.442695
          %v6858 = vpow.pop %v6857
          %v6859 = vmul.f32 %v6654, 1.442695
          %v6860 = vpow.pop %v6859
          %v6861 = vmul.f32 %v6655, 1.442695
          %v6862 = vpow.pop %v6861
          %v6863 = vmul.f32 %v6656, 1.442695
          %v6864 = vpow.pop %v6863
          %v6865 = vmul.f32 %v6657, 1.442695
          %v6866 = vpow.pop %v6865
          %v6867 = vmul.f32 %v6658, 1.442695
          %v6868 = vpow.pop %v6867
          %v6869 = vmul.f32 %v6659, 1.442695
          %v6870 = vpow.pop %v6869
          %v6871 = vmul.f32 %v6660, 1.442695
          %v6872 = vpow.pop %v6871
          %v6873 = vmul.f32 %v6661, 1.442695
          %v6874 = vpow.pop %v6873
          %v6875 = vmul.f32 %v6662, 1.442695
          %v6876 = vpow.pop %v6875
          %v6877 = vmul.f32 %v6663, 1.442695
          %v6878 = vpow.pop %v6877
          %v6879 = vmul.f32 %v6664, 1.442695
          %v6880 = vpow.pop %v6879
          %v6881 = vmul.f32 %v6665, 1.442695
          %v6882 = vpow.pop %v6881
          %v6883 = vmul.f32 %v6666, 1.442695
          %v6884 = vpow.pop %v6883
          %v6885 = vmul.f32 %v6667, 1.442695
          %v6886 = vpow.pop %v6885
          %v6887 = vmul.f32 %v6668, 1.442695
          %v6888 = vpow.pop %v6887
          %v6889 = vmul.f32 %v6669, 1.442695
          %v6890 = vpow.pop %v6889
          %v6891 = vmul.f32 %v6670, 1.442695
          %v6892 = vpow.pop %v6891
          %v6893 = vmul.f32 %v6671, 1.442695
          %v6894 = vpow.pop %v6893
          %v6895 = vmul.f32 %v6672, 1.442695
          %v6896 = vpow.pop %v6895
          %v6897 = vmul.f32 %v6673, 1.442695
          %v6898 = vpow.pop %v6897
          %v6899 = vmul.f32 %v6674, 1.442695
          %v6900 = vpow.pop %v6899
          %v6901 = vmul.f32 %v6675, 1.442695
          %v6902 = vpow.pop %v6901
          %v6903 = vmul.f32 %v6676, 1.442695
          %v6904 = vpow.pop %v6903
          %v6905 = vmul.f32 %v6677, 1.442695
          %v6906 = vpow.pop %v6905
          %v6907 = vmul.f32 %v6678, 1.442695
          %v6908 = vpow.pop %v6907
          %v6909 = vmul.f32 %v6679, 1.442695
          %v6910 = vpow.pop %v6909
          %v6911 = vmul.f32 %v6680, 1.442695
          %v6912 = vpow.pop %v6911
          %v6913 = vmul.f32 %v6681, 1.442695
          %v6914 = vpow.pop %v6913
          %v6915 = vmul.f32 %v6682, 1.442695
          %v6916 = vpow.pop %v6915
          %v6917 = vmul.f32 %v6683, 1.442695
          %v6918 = vpow.pop %v6917
          %v6919 = vmul.f32 %v6684, 1.442695
          %v6920 = vpow.pop %v6919
          %v6921 = vmul.f32 %v6685, 1.442695
          %v6922 = vpow.pop %v6921
          %v6923 = vmul.f32 %v6686, 1.442695
          %v6924 = vpow.pop %v6923
          %v6925 = vmul.f32 %v6687, 1.442695
          %v6926 = vpow.pop %v6925
          %v6927 = vmul.f32 %v6688, 1.442695
          %v6928 = vpow.pop %v6927
          %v6929 = vmul.f32 %v6689, 1.442695
          %v6930 = vpow.pop %v6929
          %v6931 = vmul.f32 %v6690, 1.442695
          %v6932 = vpow.pop %v6931
          %v6933 = vmul.f32 %v6691, 1.442695
          %v6934 = vpow.pop %v6933
          %v6935 = vmul.f32 %v6692, 1.442695
          %v6936 = vpow.pop %v6935
          %v6937 = vmul.f32 %v6693, 1.442695
          %v6938 = vpow.pop %v6937
          %v6939 = vmul.f32 %v6694, 1.442695
          %v6940 = vpow.pop %v6939
          %v6941 = vmul.f32 %v6695, 1.442695
          %v6942 = vpow.pop %v6941
          %v6943 = vmul.f32 %v6696, 1.442695
          %v6944 = vpow.pop %v6943
          %v6945 = vmul.f32 %v6697, 1.442695
          %v6946 = vpow.pop %v6945
          %v6947 = vmul.f32 %v6698, 1.442695
          %v6948 = vpow.pop %v6947
          %v6949 = vmul.f32 %v6699, 1.442695
          %v6950 = vpow.pop %v6949
          %v6951 = vmul.f32 %v6700, 1.442695
          %v6952 = vpow.pop %v6951
          %v6953 = vmul.f32 %v6701, 1.442695
          %v6954 = vpow.pop %v6953
          %v6955 = vmul.f32 %v6702, 1.442695
          %v6956 = vpow.pop %v6955
          %v6957 = vmul.f32 %v6703, 1.442695
          %v6958 = vpow.pop %v6957
          %v6959 = vmul.f32 %v6704, 1.442695
          %v6960 = vpow.pop %v6959
          %v6961 = vld [vmem:[#allocation4] sm:$0xff]
          %v6962 = vld [vmem:[#allocation4 + $0x8] sm:$0xff]
          %v6963 = vld [vmem:[#allocation4 + $0x10] sm:$0xff]
          %v6964 = vld [vmem:[#allocation4 + $0x18] sm:$0xff]
          %v6965 = vld [vmem:[#allocation4 + $0x20] sm:$0xff]
          %v6966 = vld [vmem:[#allocation4 + $0x28] sm:$0xff]
          %v6967 = vld [vmem:[#allocation4 + $0x30] sm:$0xff]
          %v6968 = vld [vmem:[#allocation4 + $0x38] sm:$0xff]
          %v6969 = vld [vmem:[#allocation4 + $0x40] sm:$0xff]
          %v6970 = vld [vmem:[#allocation4 + $0x48] sm:$0xff]
          %v6971 = vld [vmem:[#allocation4 + $0x50] sm:$0xff]
          %v6972 = vld [vmem:[#allocation4 + $0x58] sm:$0xff]
          %v6973 = vld [vmem:[#allocation4 + $0x60] sm:$0xff]
          %v6974 = vld [vmem:[#allocation4 + $0x68] sm:$0xff]
          %v6975 = vld [vmem:[#allocation4 + $0x70] sm:$0xff]
          %v6976 = vld [vmem:[#allocation4 + $0x78] sm:$0xff]
          %v6977 = vld [vmem:[#allocation4 + $0x80] sm:$0xff]
          %v6978 = vld [vmem:[#allocation4 + $0x88] sm:$0xff]
          %v6979 = vld [vmem:[#allocation4 + $0x90] sm:$0xff]
          %v6980 = vld [vmem:[#allocation4 + $0x98] sm:$0xff]
          %v6981 = vld [vmem:[#allocation4 + $0xa0] sm:$0xff]
          %v6982 = vld [vmem:[#allocation4 + $0xa8] sm:$0xff]
          %v6983 = vld [vmem:[#allocation4 + $0xb0] sm:$0xff]
          %v6984 = vld [vmem:[#allocation4 + $0xb8] sm:$0xff]
          %v6985 = vld [vmem:[#allocation4 + $0xc0] sm:$0xff]
          %v6986 = vld [vmem:[#allocation4 + $0xc8] sm:$0xff]
          %v6987 = vld [vmem:[#allocation4 + $0xd0] sm:$0xff]
          %v6988 = vld [vmem:[#allocation4 + $0xd8] sm:$0xff]
          %v6989 = vld [vmem:[#allocation4 + $0xe0] sm:$0xff]
          %v6990 = vld [vmem:[#allocation4 + $0xe8] sm:$0xff]
          %v6991 = vld [vmem:[#allocation4 + $0xf0] sm:$0xff]
          %v6992 = vld [vmem:[#allocation4 + $0xf8] sm:$0xff]
          %v6993 = vld [vmem:[#allocation4 + $0x100] sm:$0xff]
          %v6994 = vld [vmem:[#allocation4 + $0x108] sm:$0xff]
          %v6995 = vld [vmem:[#allocation4 + $0x110] sm:$0xff]
          %v6996 = vld [vmem:[#allocation4 + $0x118] sm:$0xff]
          %v6997 = vld [vmem:[#allocation4 + $0x120] sm:$0xff]
          %v6998 = vld [vmem:[#allocation4 + $0x128] sm:$0xff]
          %v6999 = vld [vmem:[#allocation4 + $0x130] sm:$0xff]
          %v7000 = vld [vmem:[#allocation4 + $0x138] sm:$0xff]
          %v7001 = vld [vmem:[#allocation4 + $0x140] sm:$0xff]
          %v7002 = vld [vmem:[#allocation4 + $0x148] sm:$0xff]
          %v7003 = vld [vmem:[#allocation4 + $0x150] sm:$0xff]
          %v7004 = vld [vmem:[#allocation4 + $0x158] sm:$0xff]
          %v7005 = vld [vmem:[#allocation4 + $0x160] sm:$0xff]
          %v7006 = vld [vmem:[#allocation4 + $0x168] sm:$0xff]
          %v7007 = vld [vmem:[#allocation4 + $0x170] sm:$0xff]
          %v7008 = vld [vmem:[#allocation4 + $0x178] sm:$0xff]
          %v7009 = vld [vmem:[#allocation4 + $0x180] sm:$0xff]
          %v7010 = vld [vmem:[#allocation4 + $0x188] sm:$0xff]
          %v7011 = vld [vmem:[#allocation4 + $0x190] sm:$0xff]
          %v7012 = vld [vmem:[#allocation4 + $0x198] sm:$0xff]
          %v7013 = vld [vmem:[#allocation4 + $0x1a0] sm:$0xff]
          %v7014 = vld [vmem:[#allocation4 + $0x1a8] sm:$0xff]
          %v7015 = vld [vmem:[#allocation4 + $0x1b0] sm:$0xff]
          %v7016 = vld [vmem:[#allocation4 + $0x1b8] sm:$0xff]
          %v7017 = vld [vmem:[#allocation4 + $0x1c0] sm:$0xff]
          %v7018 = vld [vmem:[#allocation4 + $0x1c8] sm:$0xff]
          %v7019 = vld [vmem:[#allocation4 + $0x1d0] sm:$0xff]
          %v7020 = vld [vmem:[#allocation4 + $0x1d8] sm:$0xff]
          %v7021 = vld [vmem:[#allocation4 + $0x1e0] sm:$0xff]
          %v7022 = vld [vmem:[#allocation4 + $0x1e8] sm:$0xff]
          %v7023 = vld [vmem:[#allocation4 + $0x1f0] sm:$0xff]
          %v7024 = vld [vmem:[#allocation4 + $0x1f8] sm:$0xff]
          %v7025 = vmul.f32 %v6130, %v6961
          %v7026 = vmul.f32 %v6132, %v6962
          %v7027 = vmul.f32 %v6134, %v6963
          %v7028 = vmul.f32 %v6136, %v6964
          %v7029 = vmul.f32 %v6138, %v6965
          %v7030 = vmul.f32 %v6140, %v6966
          %v7031 = vmul.f32 %v6142, %v6967
          %v7032 = vmul.f32 %v6144, %v6968
          %v7033 = vmul.f32 %v6146, %v6969
          %v7034 = vmul.f32 %v6148, %v6970
          %v7035 = vmul.f32 %v6150, %v6971
          %v7036 = vmul.f32 %v6152, %v6972
          %v7037 = vmul.f32 %v6154, %v6973
          %v7038 = vmul.f32 %v6156, %v6974
          %v7039 = vmul.f32 %v6158, %v6975
          %v7040 = vmul.f32 %v6160, %v6976
          %v7041 = vmul.f32 %v6162, %v6977
          %v7042 = vmul.f32 %v6164, %v6978
          %v7043 = vmul.f32 %v6166, %v6979
          %v7044 = vmul.f32 %v6168, %v6980
          %v7045 = vmul.f32 %v6170, %v6981
          %v7046 = vmul.f32 %v6172, %v6982
          %v7047 = vmul.f32 %v6174, %v6983
          %v7048 = vmul.f32 %v6176, %v6984
          %v7049 = vmul.f32 %v6178, %v6985
          %v7050 = vmul.f32 %v6180, %v6986
          %v7051 = vmul.f32 %v6182, %v6987
          %v7052 = vmul.f32 %v6184, %v6988
          %v7053 = vmul.f32 %v6186, %v6989
          %v7054 = vmul.f32 %v6188, %v6990
          %v7055 = vmul.f32 %v6190, %v6991
          %v7056 = vmul.f32 %v6192, %v6992
          %v7057 = vmul.f32 %v6194, %v6993
          %v7058 = vmul.f32 %v6196, %v6994
          %v7059 = vmul.f32 %v6198, %v6995
          %v7060 = vmul.f32 %v6200, %v6996
          %v7061 = vmul.f32 %v6202, %v6997
          %v7062 = vmul.f32 %v6204, %v6998
          %v7063 = vmul.f32 %v6206, %v6999
          %v7064 = vmul.f32 %v6208, %v7000
          %v7065 = vmul.f32 %v6210, %v7001
          %v7066 = vmul.f32 %v6212, %v7002
          %v7067 = vmul.f32 %v6214, %v7003
          %v7068 = vmul.f32 %v6216, %v7004
          %v7069 = vmul.f32 %v6218, %v7005
          %v7070 = vmul.f32 %v6220, %v7006
          %v7071 = vmul.f32 %v6222, %v7007
          %v7072 = vmul.f32 %v6224, %v7008
          %v7073 = vmul.f32 %v6226, %v7009
          %v7074 = vmul.f32 %v6228, %v7010
          %v7075 = vmul.f32 %v6230, %v7011
          %v7076 = vmul.f32 %v6232, %v7012
          %v7077 = vmul.f32 %v6234, %v7013
          %v7078 = vmul.f32 %v6236, %v7014
          %v7079 = vmul.f32 %v6238, %v7015
          %v7080 = vmul.f32 %v6240, %v7016
          %v7081 = vmul.f32 %v6242, %v7017
          %v7082 = vmul.f32 %v6244, %v7018
          %v7083 = vmul.f32 %v6246, %v7019
          %v7084 = vmul.f32 %v6248, %v7020
          %v7085 = vmul.f32 %v6250, %v7021
          %v7086 = vmul.f32 %v6252, %v7022
          %v7087 = vmul.f32 %v6254, %v7023
          %v7088 = vmul.f32 %v6256, %v7024
          %v7089 = vadd.f32 %v6706, %v6708
          %7090 = vadd.xlane.f32.xlu0 %v7089
          %v7091 = vpop.xlane.xlu0 %7090
          %v7092 = vadd.f32 %v6710, %v6712
          %7093 = vadd.xlane.f32.xlu0 %v7092
          %v7094 = vpop.xlane.xlu0 %7093
          %v7095 = vadd.f32 %v6714, %v6716
          %7096 = vadd.xlane.f32.xlu0 %v7095
          %v7097 = vpop.xlane.xlu0 %7096
          %v7098 = vadd.f32 %v6718, %v6720
          %7099 = vadd.xlane.f32.xlu0 %v7098
          %v7100 = vpop.xlane.xlu0 %7099
          %v7101 = vadd.f32 %v6722, %v6724
          %7102 = vadd.xlane.f32.xlu0 %v7101
          %v7103 = vpop.xlane.xlu0 %7102
          %v7104 = vadd.f32 %v6726, %v6728
          %7105 = vadd.xlane.f32.xlu0 %v7104
          %v7106 = vpop.xlane.xlu0 %7105
          %v7107 = vadd.f32 %v6730, %v6732
          %7108 = vadd.xlane.f32.xlu0 %v7107
          %v7109 = vpop.xlane.xlu0 %7108
          %v7110 = vadd.f32 %v6734, %v6736
          %7111 = vadd.xlane.f32.xlu0 %v7110
          %v7112 = vpop.xlane.xlu0 %7111
          %v7113 = vadd.f32 %v6738, %v6740
          %7114 = vadd.xlane.f32.xlu0 %v7113
          %v7115 = vpop.xlane.xlu0 %7114
          %v7116 = vadd.f32 %v6742, %v6744
          %7117 = vadd.xlane.f32.xlu0 %v7116
          %v7118 = vpop.xlane.xlu0 %7117
          %v7119 = vadd.f32 %v6746, %v6748
          %7120 = vadd.xlane.f32.xlu0 %v7119
          %v7121 = vpop.xlane.xlu0 %7120
          %v7122 = vadd.f32 %v6750, %v6752
          %7123 = vadd.xlane.f32.xlu0 %v7122
          %v7124 = vpop.xlane.xlu0 %7123
          %v7125 = vadd.f32 %v6754, %v6756
          %7126 = vadd.xlane.f32.xlu0 %v7125
          %v7127 = vpop.xlane.xlu0 %7126
          %v7128 = vadd.f32 %v6758, %v6760
          %7129 = vadd.xlane.f32.xlu0 %v7128
          %v7130 = vpop.xlane.xlu0 %7129
          %v7131 = vadd.f32 %v6762, %v6764
          %7132 = vadd.xlane.f32.xlu0 %v7131
          %v7133 = vpop.xlane.xlu0 %7132
          %v7134 = vadd.f32 %v6766, %v6768
          %7135 = vadd.xlane.f32.xlu0 %v7134
          %v7136 = vpop.xlane.xlu0 %7135
          %v7137 = vadd.f32 %v6770, %v6772
          %7138 = vadd.xlane.f32.xlu0 %v7137
          %v7139 = vpop.xlane.xlu0 %7138
          %v7140 = vadd.f32 %v6774, %v6776
          %7141 = vadd.xlane.f32.xlu0 %v7140
          %v7142 = vpop.xlane.xlu0 %7141
          %v7143 = vadd.f32 %v6778, %v6780
          %7144 = vadd.xlane.f32.xlu0 %v7143
          %v7145 = vpop.xlane.xlu0 %7144
          %v7146 = vadd.f32 %v6782, %v6784
          %7147 = vadd.xlane.f32.xlu0 %v7146
          %v7148 = vpop.xlane.xlu0 %7147
          %v7149 = vadd.f32 %v6786, %v6788
          %7150 = vadd.xlane.f32.xlu0 %v7149
          %v7151 = vpop.xlane.xlu0 %7150
          %v7152 = vadd.f32 %v6790, %v6792
          %7153 = vadd.xlane.f32.xlu0 %v7152
          %v7154 = vpop.xlane.xlu0 %7153
          %v7155 = vadd.f32 %v6794, %v6796
          %7156 = vadd.xlane.f32.xlu0 %v7155
          %v7157 = vpop.xlane.xlu0 %7156
          %v7158 = vadd.f32 %v6798, %v6800
          %7159 = vadd.xlane.f32.xlu0 %v7158
          %v7160 = vpop.xlane.xlu0 %7159
          %v7161 = vadd.f32 %v6802, %v6804
          %7162 = vadd.xlane.f32.xlu0 %v7161
          %v7163 = vpop.xlane.xlu0 %7162
          %v7164 = vadd.f32 %v6806, %v6808
          %7165 = vadd.xlane.f32.xlu0 %v7164
          %v7166 = vpop.xlane.xlu0 %7165
          %v7167 = vadd.f32 %v6810, %v6812
          %7168 = vadd.xlane.f32.xlu0 %v7167
          %v7169 = vpop.xlane.xlu0 %7168
          %v7170 = vadd.f32 %v6814, %v6816
          %7171 = vadd.xlane.f32.xlu0 %v7170
          %v7172 = vpop.xlane.xlu0 %7171
          %v7173 = vadd.f32 %v6818, %v6820
          %7174 = vadd.xlane.f32.xlu0 %v7173
          %v7175 = vpop.xlane.xlu0 %7174
          %v7176 = vadd.f32 %v6822, %v6824
          %7177 = vadd.xlane.f32.xlu0 %v7176
          %v7178 = vpop.xlane.xlu0 %7177
          %v7179 = vadd.f32 %v6826, %v6828
          %7180 = vadd.xlane.f32.xlu0 %v7179
          %v7181 = vpop.xlane.xlu0 %7180
          %v7182 = vadd.f32 %v6830, %v6832
          %7183 = vadd.xlane.f32.xlu0 %v7182
          %v7184 = vpop.xlane.xlu0 %7183
          %v7185 = vadd.f32 %v6834, %v6836
          %7186 = vadd.xlane.f32.xlu0 %v7185
          %v7187 = vpop.xlane.xlu0 %7186
          %v7188 = vadd.f32 %v6838, %v6840
          %7189 = vadd.xlane.f32.xlu0 %v7188
          %v7190 = vpop.xlane.xlu0 %7189
          %v7191 = vadd.f32 %v6842, %v6844
          %7192 = vadd.xlane.f32.xlu0 %v7191
          %v7193 = vpop.xlane.xlu0 %7192
          %v7194 = vadd.f32 %v6846, %v6848
          %7195 = vadd.xlane.f32.xlu0 %v7194
          %v7196 = vpop.xlane.xlu0 %7195
          %v7197 = vadd.f32 %v6850, %v6852
          %7198 = vadd.xlane.f32.xlu0 %v7197
          %v7199 = vpop.xlane.xlu0 %7198
          %v7200 = vadd.f32 %v6854, %v6856
          %7201 = vadd.xlane.f32.xlu0 %v7200
          %v7202 = vpop.xlane.xlu0 %7201
          %v7203 = vadd.f32 %v6858, %v6860
          %7204 = vadd.xlane.f32.xlu0 %v7203
          %v7205 = vpop.xlane.xlu0 %7204
          %v7206 = vadd.f32 %v6862, %v6864
          %7207 = vadd.xlane.f32.xlu0 %v7206
          %v7208 = vpop.xlane.xlu0 %7207
          %v7209 = vadd.f32 %v6866, %v6868
          %7210 = vadd.xlane.f32.xlu0 %v7209
          %v7211 = vpop.xlane.xlu0 %7210
          %v7212 = vadd.f32 %v6870, %v6872
          %7213 = vadd.xlane.f32.xlu0 %v7212
          %v7214 = vpop.xlane.xlu0 %7213
          %v7215 = vadd.f32 %v6874, %v6876
          %7216 = vadd.xlane.f32.xlu0 %v7215
          %v7217 = vpop.xlane.xlu0 %7216
          %v7218 = vadd.f32 %v6878, %v6880
          %7219 = vadd.xlane.f32.xlu0 %v7218
          %v7220 = vpop.xlane.xlu0 %7219
          %v7221 = vadd.f32 %v6882, %v6884
          %7222 = vadd.xlane.f32.xlu0 %v7221
          %v7223 = vpop.xlane.xlu0 %7222
          %v7224 = vadd.f32 %v6886, %v6888
          %7225 = vadd.xlane.f32.xlu0 %v7224
          %v7226 = vpop.xlane.xlu0 %7225
          %v7227 = vadd.f32 %v6890, %v6892
          %7228 = vadd.xlane.f32.xlu0 %v7227
          %v7229 = vpop.xlane.xlu0 %7228
          %v7230 = vadd.f32 %v6894, %v6896
          %7231 = vadd.xlane.f32.xlu0 %v7230
          %v7232 = vpop.xlane.xlu0 %7231
          %v7233 = vadd.f32 %v6898, %v6900
          %7234 = vadd.xlane.f32.xlu0 %v7233
          %v7235 = vpop.xlane.xlu0 %7234
          %v7236 = vadd.f32 %v6902, %v6904
          %7237 = vadd.xlane.f32.xlu0 %v7236
          %v7238 = vpop.xlane.xlu0 %7237
          %v7239 = vadd.f32 %v6906, %v6908
          %7240 = vadd.xlane.f32.xlu0 %v7239
          %v7241 = vpop.xlane.xlu0 %7240
          %v7242 = vadd.f32 %v6910, %v6912
          %7243 = vadd.xlane.f32.xlu0 %v7242
          %v7244 = vpop.xlane.xlu0 %7243
          %v7245 = vadd.f32 %v6914, %v6916
          %7246 = vadd.xlane.f32.xlu0 %v7245
          %v7247 = vpop.xlane.xlu0 %7246
          %v7248 = vadd.f32 %v6918, %v6920
          %7249 = vadd.xlane.f32.xlu0 %v7248
          %v7250 = vpop.xlane.xlu0 %7249
          %v7251 = vadd.f32 %v6922, %v6924
          %7252 = vadd.xlane.f32.xlu0 %v7251
          %v7253 = vpop.xlane.xlu0 %7252
          %v7254 = vadd.f32 %v6926, %v6928
          %7255 = vadd.xlane.f32.xlu0 %v7254
          %v7256 = vpop.xlane.xlu0 %7255
          %v7257 = vadd.f32 %v6930, %v6932
          %7258 = vadd.xlane.f32.xlu0 %v7257
          %v7259 = vpop.xlane.xlu0 %7258
          %v7260 = vadd.f32 %v6934, %v6936
          %7261 = vadd.xlane.f32.xlu0 %v7260
          %v7262 = vpop.xlane.xlu0 %7261
          %v7263 = vadd.f32 %v6938, %v6940
          %7264 = vadd.xlane.f32.xlu0 %v7263
          %v7265 = vpop.xlane.xlu0 %7264
          %v7266 = vadd.f32 %v6942, %v6944
          %7267 = vadd.xlane.f32.xlu0 %v7266
          %v7268 = vpop.xlane.xlu0 %7267
          %v7269 = vadd.f32 %v6946, %v6948
          %7270 = vadd.xlane.f32.xlu0 %v7269
          %v7271 = vpop.xlane.xlu0 %7270
          %v7272 = vadd.f32 %v6950, %v6952
          %7273 = vadd.xlane.f32.xlu0 %v7272
          %v7274 = vpop.xlane.xlu0 %7273
          %v7275 = vadd.f32 %v6954, %v6956
          %7276 = vadd.xlane.f32.xlu0 %v7275
          %v7277 = vpop.xlane.xlu0 %7276
          %v7278 = vadd.f32 %v6958, %v6960
          %7279 = vadd.xlane.f32.xlu0 %v7278
          %v7280 = vpop.xlane.xlu0 %7279
          %v7281 = vadd.f32 %v7025, %v7091
          %v7282 = vadd.f32 %v7026, %v7094
          %v7283 = vadd.f32 %v7027, %v7097
          %v7284 = vadd.f32 %v7028, %v7100
          %v7285 = vadd.f32 %v7029, %v7103
          %v7286 = vadd.f32 %v7030, %v7106
          %v7287 = vadd.f32 %v7031, %v7109
          %v7288 = vadd.f32 %v7032, %v7112
          %v7289 = vadd.f32 %v7033, %v7115
          %v7290 = vadd.f32 %v7034, %v7118
          %v7291 = vadd.f32 %v7035, %v7121
          %v7292 = vadd.f32 %v7036, %v7124
          %v7293 = vadd.f32 %v7037, %v7127
          %v7294 = vadd.f32 %v7038, %v7130
          %v7295 = vadd.f32 %v7039, %v7133
          %v7296 = vadd.f32 %v7040, %v7136
          %v7297 = vadd.f32 %v7041, %v7139
          %v7298 = vadd.f32 %v7042, %v7142
          %v7299 = vadd.f32 %v7043, %v7145
          %v7300 = vadd.f32 %v7044, %v7148
          %v7301 = vadd.f32 %v7045, %v7151
          %v7302 = vadd.f32 %v7046, %v7154
          %v7303 = vadd.f32 %v7047, %v7157
          %v7304 = vadd.f32 %v7048, %v7160
          %v7305 = vadd.f32 %v7049, %v7163
          %v7306 = vadd.f32 %v7050, %v7166
          %v7307 = vadd.f32 %v7051, %v7169
          %v7308 = vadd.f32 %v7052, %v7172
          %v7309 = vadd.f32 %v7053, %v7175
          %v7310 = vadd.f32 %v7054, %v7178
          %v7311 = vadd.f32 %v7055, %v7181
          %v7312 = vadd.f32 %v7056, %v7184
          %v7313 = vadd.f32 %v7057, %v7187
          %v7314 = vadd.f32 %v7058, %v7190
          %v7315 = vadd.f32 %v7059, %v7193
          %v7316 = vadd.f32 %v7060, %v7196
          %v7317 = vadd.f32 %v7061, %v7199
          %v7318 = vadd.f32 %v7062, %v7202
          %v7319 = vadd.f32 %v7063, %v7205
          %v7320 = vadd.f32 %v7064, %v7208
          %v7321 = vadd.f32 %v7065, %v7211
          %v7322 = vadd.f32 %v7066, %v7214
          %v7323 = vadd.f32 %v7067, %v7217
          %v7324 = vadd.f32 %v7068, %v7220
          %v7325 = vadd.f32 %v7069, %v7223
          %v7326 = vadd.f32 %v7070, %v7226
          %v7327 = vadd.f32 %v7071, %v7229
          %v7328 = vadd.f32 %v7072, %v7232
          %v7329 = vadd.f32 %v7073, %v7235
          %v7330 = vadd.f32 %v7074, %v7238
          %v7331 = vadd.f32 %v7075, %v7241
          %v7332 = vadd.f32 %v7076, %v7244
          %v7333 = vadd.f32 %v7077, %v7247
          %v7334 = vadd.f32 %v7078, %v7250
          %v7335 = vadd.f32 %v7079, %v7253
          %v7336 = vadd.f32 %v7080, %v7256
          %v7337 = vadd.f32 %v7081, %v7259
          %v7338 = vadd.f32 %v7082, %v7262
          %v7339 = vadd.f32 %v7083, %v7265
          %v7340 = vadd.f32 %v7084, %v7268
          %v7341 = vadd.f32 %v7085, %v7271
          %v7342 = vadd.f32 %v7086, %v7274
          %v7343 = vadd.f32 %v7087, %v7277
          %v7344 = vadd.f32 %v7088, %v7280
          %vm7345 = vcmask 7168
          %7346 = vst.msk [vmem:[#allocation4] sm:$0xff] %vm7345, %v7281
          %7347 = vst.msk [vmem:[#allocation4 + $0x8] sm:$0xff] %vm7345, %v7282
          %7348 = vst.msk [vmem:[#allocation4 + $0x10] sm:$0xff] %vm7345, %v7283
          %7349 = vst.msk [vmem:[#allocation4 + $0x18] sm:$0xff] %vm7345, %v7284
          %7350 = vst.msk [vmem:[#allocation4 + $0x20] sm:$0xff] %vm7345, %v7285
          %7351 = vst.msk [vmem:[#allocation4 + $0x28] sm:$0xff] %vm7345, %v7286
          %7352 = vst.msk [vmem:[#allocation4 + $0x30] sm:$0xff] %vm7345, %v7287
          %7353 = vst.msk [vmem:[#allocation4 + $0x38] sm:$0xff] %vm7345, %v7288
          %7354 = vst.msk [vmem:[#allocation4 + $0x40] sm:$0xff] %vm7345, %v7289
          %7355 = vst.msk [vmem:[#allocation4 + $0x48] sm:$0xff] %vm7345, %v7290
          %7356 = vst.msk [vmem:[#allocation4 + $0x50] sm:$0xff] %vm7345, %v7291
          %7357 = vst.msk [vmem:[#allocation4 + $0x58] sm:$0xff] %vm7345, %v7292
          %7358 = vst.msk [vmem:[#allocation4 + $0x60] sm:$0xff] %vm7345, %v7293
          %7359 = vst.msk [vmem:[#allocation4 + $0x68] sm:$0xff] %vm7345, %v7294
          %7360 = vst.msk [vmem:[#allocation4 + $0x70] sm:$0xff] %vm7345, %v7295
          %7361 = vst.msk [vmem:[#allocation4 + $0x78] sm:$0xff] %vm7345, %v7296
          %7362 = vst.msk [vmem:[#allocation4 + $0x80] sm:$0xff] %vm7345, %v7297
          %7363 = vst.msk [vmem:[#allocation4 + $0x88] sm:$0xff] %vm7345, %v7298
          %7364 = vst.msk [vmem:[#allocation4 + $0x90] sm:$0xff] %vm7345, %v7299
          %7365 = vst.msk [vmem:[#allocation4 + $0x98] sm:$0xff] %vm7345, %v7300
          %7366 = vst.msk [vmem:[#allocation4 + $0xa0] sm:$0xff] %vm7345, %v7301
          %7367 = vst.msk [vmem:[#allocation4 + $0xa8] sm:$0xff] %vm7345, %v7302
          %7368 = vst.msk [vmem:[#allocation4 + $0xb0] sm:$0xff] %vm7345, %v7303
          %7369 = vst.msk [vmem:[#allocation4 + $0xb8] sm:$0xff] %vm7345, %v7304
          %7370 = vst.msk [vmem:[#allocation4 + $0xc0] sm:$0xff] %vm7345, %v7305
          %7371 = vst.msk [vmem:[#allocation4 + $0xc8] sm:$0xff] %vm7345, %v7306
          %7372 = vst.msk [vmem:[#allocation4 + $0xd0] sm:$0xff] %vm7345, %v7307
          %7373 = vst.msk [vmem:[#allocation4 + $0xd8] sm:$0xff] %vm7345, %v7308
          %7374 = vst.msk [vmem:[#allocation4 + $0xe0] sm:$0xff] %vm7345, %v7309
          %7375 = vst.msk [vmem:[#allocation4 + $0xe8] sm:$0xff] %vm7345, %v7310
          %7376 = vst.msk [vmem:[#allocation4 + $0xf0] sm:$0xff] %vm7345, %v7311
          %7377 = vst.msk [vmem:[#allocation4 + $0xf8] sm:$0xff] %vm7345, %v7312
          %7378 = vst.msk [vmem:[#allocation4 + $0x100] sm:$0xff] %vm7345, %v7313
          %7379 = vst.msk [vmem:[#allocation4 + $0x108] sm:$0xff] %vm7345, %v7314
          %7380 = vst.msk [vmem:[#allocation4 + $0x110] sm:$0xff] %vm7345, %v7315
          %7381 = vst.msk [vmem:[#allocation4 + $0x118] sm:$0xff] %vm7345, %v7316
          %7382 = vst.msk [vmem:[#allocation4 + $0x120] sm:$0xff] %vm7345, %v7317
          %7383 = vst.msk [vmem:[#allocation4 + $0x128] sm:$0xff] %vm7345, %v7318
          %7384 = vst.msk [vmem:[#allocation4 + $0x130] sm:$0xff] %vm7345, %v7319
          %7385 = vst.msk [vmem:[#allocation4 + $0x138] sm:$0xff] %vm7345, %v7320
          %7386 = vst.msk [vmem:[#allocation4 + $0x140] sm:$0xff] %vm7345, %v7321
          %7387 = vst.msk [vmem:[#allocation4 + $0x148] sm:$0xff] %vm7345, %v7322
          %7388 = vst.msk [vmem:[#allocation4 + $0x150] sm:$0xff] %vm7345, %v7323
          %7389 = vst.msk [vmem:[#allocation4 + $0x158] sm:$0xff] %vm7345, %v7324
          %7390 = vst.msk [vmem:[#allocation4 + $0x160] sm:$0xff] %vm7345, %v7325
          %7391 = vst.msk [vmem:[#allocation4 + $0x168] sm:$0xff] %vm7345, %v7326
          %7392 = vst.msk [vmem:[#allocation4 + $0x170] sm:$0xff] %vm7345, %v7327
          %7393 = vst.msk [vmem:[#allocation4 + $0x178] sm:$0xff] %vm7345, %v7328
          %7394 = vst.msk [vmem:[#allocation4 + $0x180] sm:$0xff] %vm7345, %v7329
          %7395 = vst.msk [vmem:[#allocation4 + $0x188] sm:$0xff] %vm7345, %v7330
          %7396 = vst.msk [vmem:[#allocation4 + $0x190] sm:$0xff] %vm7345, %v7331
          %7397 = vst.msk [vmem:[#allocation4 + $0x198] sm:$0xff] %vm7345, %v7332
          %7398 = vst.msk [vmem:[#allocation4 + $0x1a0] sm:$0xff] %vm7345, %v7333
          %7399 = vst.msk [vmem:[#allocation4 + $0x1a8] sm:$0xff] %vm7345, %v7334
          %7400 = vst.msk [vmem:[#allocation4 + $0x1b0] sm:$0xff] %vm7345, %v7335
          %7401 = vst.msk [vmem:[#allocation4 + $0x1b8] sm:$0xff] %vm7345, %v7336
          %7402 = vst.msk [vmem:[#allocation4 + $0x1c0] sm:$0xff] %vm7345, %v7337
          %7403 = vst.msk [vmem:[#allocation4 + $0x1c8] sm:$0xff] %vm7345, %v7338
          %7404 = vst.msk [vmem:[#allocation4 + $0x1d0] sm:$0xff] %vm7345, %v7339
          %7405 = vst.msk [vmem:[#allocation4 + $0x1d8] sm:$0xff] %vm7345, %v7340
          %7406 = vst.msk [vmem:[#allocation4 + $0x1e0] sm:$0xff] %vm7345, %v7341
          %7407 = vst.msk [vmem:[#allocation4 + $0x1e8] sm:$0xff] %vm7345, %v7342
          %7408 = vst.msk [vmem:[#allocation4 + $0x1f0] sm:$0xff] %vm7345, %v7343
          %7409 = vst.msk [vmem:[#allocation4 + $0x1f8] sm:$0xff] %vm7345, %v7344
          %v7410 = vpack.c.bf16 %v6710, %v6706
          %v7411 = vpack.c.bf16 %v6712, %v6708
          %v7412 = vpack.c.bf16 %v6718, %v6714
          %v7413 = vpack.c.bf16 %v6720, %v6716
          %v7414 = vpack.c.bf16 %v6726, %v6722
          %v7415 = vpack.c.bf16 %v6728, %v6724
          %v7416 = vpack.c.bf16 %v6734, %v6730
          %v7417 = vpack.c.bf16 %v6736, %v6732
          %v7418 = vpack.c.bf16 %v6742, %v6738
          %v7419 = vpack.c.bf16 %v6744, %v6740
          %v7420 = vpack.c.bf16 %v6750, %v6746
          %v7421 = vpack.c.bf16 %v6752, %v6748
          %v7422 = vpack.c.bf16 %v6758, %v6754
          %v7423 = vpack.c.bf16 %v6760, %v6756
          %v7424 = vpack.c.bf16 %v6766, %v6762
          %v7425 = vpack.c.bf16 %v6768, %v6764
          %v7426 = vpack.c.bf16 %v6774, %v6770
          %v7427 = vpack.c.bf16 %v6776, %v6772
          %v7428 = vpack.c.bf16 %v6782, %v6778
          %v7429 = vpack.c.bf16 %v6784, %v6780
          %v7430 = vpack.c.bf16 %v6790, %v6786
          %v7431 = vpack.c.bf16 %v6792, %v6788
          %v7432 = vpack.c.bf16 %v6798, %v6794
          %v7433 = vpack.c.bf16 %v6800, %v6796
          %v7434 = vpack.c.bf16 %v6806, %v6802
          %v7435 = vpack.c.bf16 %v6808, %v6804
          %v7436 = vpack.c.bf16 %v6814, %v6810
          %v7437 = vpack.c.bf16 %v6816, %v6812
          %v7438 = vpack.c.bf16 %v6822, %v6818
          %v7439 = vpack.c.bf16 %v6824, %v6820
          %v7440 = vpack.c.bf16 %v6830, %v6826
          %v7441 = vpack.c.bf16 %v6832, %v6828
          %v7442 = vpack.c.bf16 %v6838, %v6834
          %v7443 = vpack.c.bf16 %v6840, %v6836
          %v7444 = vpack.c.bf16 %v6846, %v6842
          %v7445 = vpack.c.bf16 %v6848, %v6844
          %v7446 = vpack.c.bf16 %v6854, %v6850
          %v7447 = vpack.c.bf16 %v6856, %v6852
          %v7448 = vpack.c.bf16 %v6862, %v6858
          %v7449 = vpack.c.bf16 %v6864, %v6860
          %v7450 = vpack.c.bf16 %v6870, %v6866
          %v7451 = vpack.c.bf16 %v6872, %v6868
          %v7452 = vpack.c.bf16 %v6878, %v6874
          %v7453 = vpack.c.bf16 %v6880, %v6876
          %v7454 = vpack.c.bf16 %v6886, %v6882
          %v7455 = vpack.c.bf16 %v6888, %v6884
          %v7456 = vpack.c.bf16 %v6894, %v6890
          %v7457 = vpack.c.bf16 %v6896, %v6892
          %v7458 = vpack.c.bf16 %v6902, %v6898
          %v7459 = vpack.c.bf16 %v6904, %v6900
          %v7460 = vpack.c.bf16 %v6910, %v6906
          %v7461 = vpack.c.bf16 %v6912, %v6908
          %v7462 = vpack.c.bf16 %v6918, %v6914
          %v7463 = vpack.c.bf16 %v6920, %v6916
          %v7464 = vpack.c.bf16 %v6926, %v6922
          %v7465 = vpack.c.bf16 %v6928, %v6924
          %v7466 = vpack.c.bf16 %v6934, %v6930
          %v7467 = vpack.c.bf16 %v6936, %v6932
          %v7468 = vpack.c.bf16 %v6942, %v6938
          %v7469 = vpack.c.bf16 %v6944, %v6940
          %v7470 = vpack.c.bf16 %v6950, %v6946
          %v7471 = vpack.c.bf16 %v6952, %v6948
          %v7472 = vpack.c.bf16 %v6958, %v6954
          %v7473 = vpack.c.bf16 %v6960, %v6956
          %v7506 = vunpack.c.l.b16 %v4140
          %v7507 = vunpack.c.l.b16 %v4141
          %v7508 = vunpack.c.l.b16 %v4142
          %v7509 = vunpack.c.l.b16 %v4143
          %v7510 = vunpack.c.l.b16 %v4144
          %v7511 = vunpack.c.l.b16 %v4145
          %v7512 = vunpack.c.l.b16 %v4146
          %v7513 = vunpack.c.l.b16 %v4147
          %v7514 = vunpack.c.l.b16 %v4148
          %v7515 = vunpack.c.l.b16 %v4149
          %v7516 = vunpack.c.l.b16 %v4150
          %v7517 = vunpack.c.l.b16 %v4151
          %v7518 = vunpack.c.l.b16 %v4152
          %v7519 = vunpack.c.l.b16 %v4153
          %v7520 = vunpack.c.l.b16 %v4154
          %v7521 = vunpack.c.l.b16 %v4155
          %v7522 = vunpack.c.l.b16 %v4156
          %v7523 = vunpack.c.l.b16 %v4157
          %v7524 = vunpack.c.l.b16 %v4158
          %v7525 = vunpack.c.l.b16 %v4159
          %v7526 = vunpack.c.l.b16 %v4160
          %v7527 = vunpack.c.l.b16 %v4161
          %v7528 = vunpack.c.l.b16 %v4162
          %v7529 = vunpack.c.l.b16 %v4163
          %v7530 = vunpack.c.l.b16 %v4164
          %v7531 = vunpack.c.l.b16 %v4165
          %v7532 = vunpack.c.l.b16 %v4166
          %v7533 = vunpack.c.l.b16 %v4167
          %v7534 = vunpack.c.l.b16 %v4168
          %v7535 = vunpack.c.l.b16 %v4169
          %v7536 = vunpack.c.l.b16 %v4170
          %v7537 = vunpack.c.l.b16 %v4171
          %v7538 = vpack.c.b16 %v7507, %v7506
          %v7539 = vpack.c.b16 %v7509, %v7508
          %v7540 = vpack.c.b16 %v7511, %v7510
          %v7541 = vpack.c.b16 %v7513, %v7512
          %v7542 = vpack.c.b16 %v7515, %v7514
          %v7543 = vpack.c.b16 %v7517, %v7516
          %v7544 = vpack.c.b16 %v7519, %v7518
          %v7545 = vpack.c.b16 %v7521, %v7520
          %v7546 = vpack.c.b16 %v7523, %v7522
          %v7547 = vpack.c.b16 %v7525, %v7524
          %v7548 = vpack.c.b16 %v7527, %v7526
          %v7549 = vpack.c.b16 %v7529, %v7528
          %v7550 = vpack.c.b16 %v7531, %v7530
          %v7551 = vpack.c.b16 %v7533, %v7532
          %v7552 = vpack.c.b16 %v7535, %v7534
          %v7553 = vpack.c.b16 %v7537, %v7536
          %7570 = vmatprep.subr.bf16.mxu0 0
          %7571 = vmatpush1.bf16.msra.mxu0 %v7538
          %7572 = vmatprep.subr.bf16.mxu0 0
          %7573 = vmatpush1.bf16.msra.mxu0 %v7539
          %7574 = vmatprep.subr.bf16.mxu0 0
          %7575 = vmatpush1.bf16.msra.mxu0 %v7540
          %7576 = vmatprep.subr.bf16.mxu0 0
          %7577 = vmatpush1.bf16.msra.mxu0 %v7541
          %7578 = vmatprep.subr.bf16.mxu0 0
          %7579 = vmatpush1.bf16.msra.mxu0 %v7542
          %7580 = vmatprep.subr.bf16.mxu0 0
          %7581 = vmatpush1.bf16.msra.mxu0 %v7543
          %7582 = vmatprep.subr.bf16.mxu0 0
          %7583 = vmatpush1.bf16.msra.mxu0 %v7544
          %7584 = vmatprep.subr.bf16.mxu0 0
          %7585 = vmatpush1.bf16.msra.mxu0 %v7545
          %7586 = vmatprep.subr.bf16.mxu0 0
          %7587 = vmatpush1.bf16.msra.mxu0 %v7546
          %7588 = vmatprep.subr.bf16.mxu0 0
          %7589 = vmatpush1.bf16.msra.mxu0 %v7547
          %7590 = vmatprep.subr.bf16.mxu0 0
          %7591 = vmatpush1.bf16.msra.mxu0 %v7548
          %7592 = vmatprep.subr.bf16.mxu0 0
          %7593 = vmatpush1.bf16.msra.mxu0 %v7549
          %7594 = vmatprep.subr.bf16.mxu0 0
          %7595 = vmatpush1.bf16.msra.mxu0 %v7550
          %7596 = vmatprep.subr.bf16.mxu0 0
          %7597 = vmatpush1.bf16.msra.mxu0 %v7551
          %7598 = vmatprep.subr.bf16.mxu0 0
          %7599 = vmatpush1.bf16.msra.mxu0 %v7552
          %7600 = vmatprep.subr.bf16.mxu0 0
          %7601 = vmatpush1.bf16.msra.mxu0 %v7553
          %7602 = vmatprep.mubr.bf16.mxu0 %v7411
          %7603 = vmatmul.mubr.bf16.gmra.mrb[0].mxu0 %v7410
          %v7604 = vpop.f32.mrb[0].mxu0
          %v7605 = vadd.f32 0.0, %v7604
          %v7606 = vpop.f32.mrb[0].mxu0
          %v7607 = vpop.f32.mrb[0].mxu0
          %v7608 = vadd.f32 0.0, %v7607
          %v7609 = vpop.f32.mrb[0].mxu0
          %7610 = vmatprep.mubr.bf16.mxu0 %v7413
          %7611 = vmatmul.mubr.bf16.gmra.mrb[0].mxu0 %v7412
          %v7612 = vpop.f32.mrb[0].mxu0
          %v7613 = vadd.f32 0.0, %v7612
          %v7614 = vpop.f32.mrb[0].mxu0
          %v7615 = vpop.f32.mrb[0].mxu0
          %v7616 = vadd.f32 0.0, %v7615
          %v7617 = vpop.f32.mrb[0].mxu0
          %7618 = vmatprep.mubr.bf16.mxu0 %v7415
          %7619 = vmatmul.mubr.bf16.gmra.mrb[0].mxu0 %v7414
          %v7620 = vpop.f32.mrb[0].mxu0
          %v7621 = vadd.f32 0.0, %v7620
          %v7622 = vpop.f32.mrb[0].mxu0
          %v7623 = vpop.f32.mrb[0].mxu0
          %v7624 = vadd.f32 0.0, %v7623
          %v7625 = vpop.f32.mrb[0].mxu0
          %7626 = vmatprep.mubr.bf16.mxu0 %v7417
          %7627 = vmatmul.mubr.bf16.gmra.mrb[0].mxu0 %v7416
          %v7628 = vpop.f32.mrb[0].mxu0
          %v7629 = vadd.f32 0.0, %v7628
          %v7630 = vpop.f32.mrb[0].mxu0
          %v7631 = vpop.f32.mrb[0].mxu0
          %v7632 = vadd.f32 0.0, %v7631
          %v7633 = vpop.f32.mrb[0].mxu0
          %7634 = vmatprep.mubr.bf16.mxu0 %v7419
          %7635 = vmatmul.mubr.bf16.gmra.mrb[0].mxu0 %v7418
          %v7636 = vpop.f32.mrb[0].mxu0
          %v7637 = vadd.f32 0.0, %v7636
          %v7638 = vpop.f32.mrb[0].mxu0
          %v7639 = vpop.f32.mrb[0].mxu0
          %v7640 = vadd.f32 0.0, %v7639
          %v7641 = vpop.f32.mrb[0].mxu0
          %7642 = vmatprep.mubr.bf16.mxu0 %v7421
          %7643 = vmatmul.mubr.bf16.gmra.mrb[0].mxu0 %v7420
          %v7644 = vpop.f32.mrb[0].mxu0
          %v7645 = vadd.f32 0.0, %v7644
          %v7646 = vpop.f32.mrb[0].mxu0
          %v7647 = vpop.f32.mrb[0].mxu0
          %v7648 = vadd.f32 0.0, %v7647
          %v7649 = vpop.f32.mrb[0].mxu0
          %7650 = vmatprep.mubr.bf16.mxu0 %v7423
          %7651 = vmatmul.mubr.bf16.gmra.mrb[0].mxu0 %v7422
          %v7652 = vpop.f32.mrb[0].mxu0
          %v7653 = vadd.f32 0.0, %v7652
          %v7654 = vpop.f32.mrb[0].mxu0
          %v7655 = vpop.f32.mrb[0].mxu0
          %v7656 = vadd.f32 0.0, %v7655
          %v7657 = vpop.f32.mrb[0].mxu0
          %7658 = vmatprep.mubr.bf16.mxu0 %v7425
          %7659 = vmatmul.mubr.bf16.gmra.mrb[0].mxu0 %v7424
          %v7660 = vpop.f32.mrb[0].mxu0
          %v7661 = vadd.f32 0.0, %v7660
          %v7662 = vpop.f32.mrb[0].mxu0
          %v7663 = vpop.f32.mrb[0].mxu0
          %v7664 = vadd.f32 0.0, %v7663
          %v7665 = vpop.f32.mrb[0].mxu0
          %7666 = vmatprep.mubr.bf16.mxu0 %v7427
          %7667 = vmatmul.mubr.bf16.gmra.mrb[0].mxu0 %v7426
          %v7668 = vpop.f32.mrb[0].mxu0
          %v7669 = vadd.f32 0.0, %v7668
          %v7670 = vpop.f32.mrb[0].mxu0
          %v7671 = vpop.f32.mrb[0].mxu0
          %v7672 = vadd.f32 0.0, %v7671
          %v7673 = vpop.f32.mrb[0].mxu0
          %7674 = vmatprep.mubr.bf16.mxu0 %v7429
          %7675 = vmatmul.mubr.bf16.gmra.mrb[0].mxu0 %v7428
          %v7676 = vpop.f32.mrb[0].mxu0
          %v7677 = vadd.f32 0.0, %v7676
          %v7678 = vpop.f32.mrb[0].mxu0
          %v7679 = vpop.f32.mrb[0].mxu0
          %v7680 = vadd.f32 0.0, %v7679
          %v7681 = vpop.f32.mrb[0].mxu0
          %7682 = vmatprep.mubr.bf16.mxu0 %v7431
          %7683 = vmatmul.mubr.bf16.gmra.mrb[0].mxu0 %v7430
          %v7684 = vpop.f32.mrb[0].mxu0
          %v7685 = vadd.f32 0.0, %v7684
          %v7686 = vpop.f32.mrb[0].mxu0
          %v7687 = vpop.f32.mrb[0].mxu0
          %v7688 = vadd.f32 0.0, %v7687
          %v7689 = vpop.f32.mrb[0].mxu0
          %7690 = vmatprep.mubr.bf16.mxu0 %v7433
          %7691 = vmatmul.mubr.bf16.gmra.mrb[0].mxu0 %v7432
          %v7692 = vpop.f32.mrb[0].mxu0
          %v7693 = vadd.f32 0.0, %v7692
          %v7694 = vpop.f32.mrb[0].mxu0
          %v7695 = vpop.f32.mrb[0].mxu0
          %v7696 = vadd.f32 0.0, %v7695
          %v7697 = vpop.f32.mrb[0].mxu0
          %7698 = vmatprep.mubr.bf16.mxu0 %v7435
          %7699 = vmatmul.mubr.bf16.gmra.mrb[0].mxu0 %v7434
          %v7700 = vpop.f32.mrb[0].mxu0
          %v7701 = vadd.f32 0.0, %v7700
          %v7702 = vpop.f32.mrb[0].mxu0
          %v7703 = vpop.f32.mrb[0].mxu0
          %v7704 = vadd.f32 0.0, %v7703
          %v7705 = vpop.f32.mrb[0].mxu0
          %7706 = vmatprep.mubr.bf16.mxu0 %v7437
          %7707 = vmatmul.mubr.bf16.gmra.mrb[0].mxu0 %v7436
          %v7708 = vpop.f32.mrb[0].mxu0
          %v7709 = vadd.f32 0.0, %v7708
          %v7710 = vpop.f32.mrb[0].mxu0
          %v7711 = vpop.f32.mrb[0].mxu0
          %v7712 = vadd.f32 0.0, %v7711
          %v7713 = vpop.f32.mrb[0].mxu0
          %7714 = vmatprep.mubr.bf16.mxu0 %v7439
          %7715 = vmatmul.mubr.bf16.gmra.mrb[0].mxu0 %v7438
          %v7716 = vpop.f32.mrb[0].mxu0
          %v7717 = vadd.f32 0.0, %v7716
          %v7718 = vpop.f32.mrb[0].mxu0
          %v7719 = vpop.f32.mrb[0].mxu0
          %v7720 = vadd.f32 0.0, %v7719
          %v7721 = vpop.f32.mrb[0].mxu0
          %7722 = vmatprep.mubr.bf16.mxu0 %v7441
          %7723 = vmatmul.mubr.bf16.gmra.mrb[0].mxu0 %v7440
          %v7724 = vpop.f32.mrb[0].mxu0
          %v7725 = vadd.f32 0.0, %v7724
          %v7726 = vpop.f32.mrb[0].mxu0
          %v7727 = vpop.f32.mrb[0].mxu0
          %v7728 = vadd.f32 0.0, %v7727
          %v7729 = vpop.f32.mrb[0].mxu0
          %7730 = vmatprep.mubr.bf16.mxu0 %v7443
          %7731 = vmatmul.mubr.bf16.gmra.mrb[0].mxu0 %v7442
          %v7732 = vpop.f32.mrb[0].mxu0
          %v7733 = vadd.f32 0.0, %v7732
          %v7734 = vpop.f32.mrb[0].mxu0
          %v7735 = vpop.f32.mrb[0].mxu0
          %v7736 = vadd.f32 0.0, %v7735
          %v7737 = vpop.f32.mrb[0].mxu0
          %7738 = vmatprep.mubr.bf16.mxu0 %v7445
          %7739 = vmatmul.mubr.bf16.gmra.mrb[0].mxu0 %v7444
          %v7740 = vpop.f32.mrb[0].mxu0
          %v7741 = vadd.f32 0.0, %v7740
          %v7742 = vpop.f32.mrb[0].mxu0
          %v7743 = vpop.f32.mrb[0].mxu0
          %v7744 = vadd.f32 0.0, %v7743
          %v7745 = vpop.f32.mrb[0].mxu0
          %7746 = vmatprep.mubr.bf16.mxu0 %v7447
          %7747 = vmatmul.mubr.bf16.gmra.mrb[0].mxu0 %v7446
          %v7748 = vpop.f32.mrb[0].mxu0
          %v7749 = vadd.f32 0.0, %v7748
          %v7750 = vpop.f32.mrb[0].mxu0
          %v7751 = vpop.f32.mrb[0].mxu0
          %v7752 = vadd.f32 0.0, %v7751
          %v7753 = vpop.f32.mrb[0].mxu0
          %7754 = vmatprep.mubr.bf16.mxu0 %v7449
          %7755 = vmatmul.mubr.bf16.gmra.mrb[0].mxu0 %v7448
          %v7756 = vpop.f32.mrb[0].mxu0
          %v7757 = vadd.f32 0.0, %v7756
          %v7758 = vpop.f32.mrb[0].mxu0
          %v7759 = vpop.f32.mrb[0].mxu0
          %v7760 = vadd.f32 0.0, %v7759
          %v7761 = vpop.f32.mrb[0].mxu0
          %7762 = vmatprep.mubr.bf16.mxu0 %v7451
          %7763 = vmatmul.mubr.bf16.gmra.mrb[0].mxu0 %v7450
          %v7764 = vpop.f32.mrb[0].mxu0
          %v7765 = vadd.f32 0.0, %v7764
          %v7766 = vpop.f32.mrb[0].mxu0
          %v7767 = vpop.f32.mrb[0].mxu0
          %v7768 = vadd.f32 0.0, %v7767
          %v7769 = vpop.f32.mrb[0].mxu0
          %7770 = vmatprep.mubr.bf16.mxu0 %v7453
          %7771 = vmatmul.mubr.bf16.gmra.mrb[0].mxu0 %v7452
          %v7772 = vpop.f32.mrb[0].mxu0
          %v7773 = vadd.f32 0.0, %v7772
          %v7774 = vpop.f32.mrb[0].mxu0
          %v7775 = vpop.f32.mrb[0].mxu0
          %v7776 = vadd.f32 0.0, %v7775
          %v7777 = vpop.f32.mrb[0].mxu0
          %7778 = vmatprep.mubr.bf16.mxu0 %v7455
          %7779 = vmatmul.mubr.bf16.gmra.mrb[0].mxu0 %v7454
          %v7780 = vpop.f32.mrb[0].mxu0
          %v7781 = vadd.f32 0.0, %v7780
          %v7782 = vpop.f32.mrb[0].mxu0
          %v7783 = vpop.f32.mrb[0].mxu0
          %v7784 = vadd.f32 0.0, %v7783
          %v7785 = vpop.f32.mrb[0].mxu0
          %7786 = vmatprep.mubr.bf16.mxu0 %v7457
          %7787 = vmatmul.mubr.bf16.gmra.mrb[0].mxu0 %v7456
          %v7788 = vpop.f32.mrb[0].mxu0
          %v7789 = vadd.f32 0.0, %v7788
          %v7790 = vpop.f32.mrb[0].mxu0
          %v7791 = vpop.f32.mrb[0].mxu0
          %v7792 = vadd.f32 0.0, %v7791
          %v7793 = vpop.f32.mrb[0].mxu0
          %7794 = vmatprep.mubr.bf16.mxu0 %v7459
          %7795 = vmatmul.mubr.bf16.gmra.mrb[0].mxu0 %v7458
          %v7796 = vpop.f32.mrb[0].mxu0
          %v7797 = vadd.f32 0.0, %v7796
          %v7798 = vpop.f32.mrb[0].mxu0
          %v7799 = vpop.f32.mrb[0].mxu0
          %v7800 = vadd.f32 0.0, %v7799
          %v7801 = vpop.f32.mrb[0].mxu0
          %7802 = vmatprep.mubr.bf16.mxu0 %v7461
          %7803 = vmatmul.mubr.bf16.gmra.mrb[0].mxu0 %v7460
          %v7804 = vpop.f32.mrb[0].mxu0
          %v7805 = vadd.f32 0.0, %v7804
          %v7806 = vpop.f32.mrb[0].mxu0
          %v7807 = vpop.f32.mrb[0].mxu0
          %v7808 = vadd.f32 0.0, %v7807
          %v7809 = vpop.f32.mrb[0].mxu0
          %7810 = vmatprep.mubr.bf16.mxu0 %v7463
          %7811 = vmatmul.mubr.bf16.gmra.mrb[0].mxu0 %v7462
          %v7812 = vpop.f32.mrb[0].mxu0
          %v7813 = vadd.f32 0.0, %v7812
          %v7814 = vpop.f32.mrb[0].mxu0
          %v7815 = vpop.f32.mrb[0].mxu0
          %v7816 = vadd.f32 0.0, %v7815
          %v7817 = vpop.f32.mrb[0].mxu0
          %7818 = vmatprep.mubr.bf16.mxu0 %v7465
          %7819 = vmatmul.mubr.bf16.gmra.mrb[0].mxu0 %v7464
          %v7820 = vpop.f32.mrb[0].mxu0
          %v7821 = vadd.f32 0.0, %v7820
          %v7822 = vpop.f32.mrb[0].mxu0
          %v7823 = vpop.f32.mrb[0].mxu0
          %v7824 = vadd.f32 0.0, %v7823
          %v7825 = vpop.f32.mrb[0].mxu0
          %7826 = vmatprep.mubr.bf16.mxu0 %v7467
          %7827 = vmatmul.mubr.bf16.gmra.mrb[0].mxu0 %v7466
          %v7828 = vpop.f32.mrb[0].mxu0
          %v7829 = vadd.f32 0.0, %v7828
          %v7830 = vpop.f32.mrb[0].mxu0
          %v7831 = vpop.f32.mrb[0].mxu0
          %v7832 = vadd.f32 0.0, %v7831
          %v7833 = vpop.f32.mrb[0].mxu0
          %7834 = vmatprep.mubr.bf16.mxu0 %v7469
          %7835 = vmatmul.mubr.bf16.gmra.mrb[0].mxu0 %v7468
          %v7836 = vpop.f32.mrb[0].mxu0
          %v7837 = vadd.f32 0.0, %v7836
          %v7838 = vpop.f32.mrb[0].mxu0
          %v7839 = vpop.f32.mrb[0].mxu0
          %v7840 = vadd.f32 0.0, %v7839
          %v7841 = vpop.f32.mrb[0].mxu0
          %7842 = vmatprep.mubr.bf16.mxu0 %v7471
          %7843 = vmatmul.mubr.bf16.gmra.mrb[0].mxu0 %v7470
          %v7844 = vpop.f32.mrb[0].mxu0
          %v7845 = vadd.f32 0.0, %v7844
          %v7846 = vpop.f32.mrb[0].mxu0
          %v7847 = vpop.f32.mrb[0].mxu0
          %v7848 = vadd.f32 0.0, %v7847
          %v7849 = vpop.f32.mrb[0].mxu0
          %7850 = vmatprep.mubr.bf16.mxu0 %v7473
          %7851 = vmatmul.mubr.bf16.gmra.mrb[0].mxu0 %v7472
          %v7852 = vpop.f32.mrb[0].mxu0
          %v7853 = vadd.f32 0.0, %v7852
          %v7854 = vpop.f32.mrb[0].mxu0
          %v7855 = vpop.f32.mrb[0].mxu0
          %v7856 = vadd.f32 0.0, %v7855
          %v7857 = vpop.f32.mrb[0].mxu0
          %7858 = vdwg.mxu0
          %v7859 = vld [vmem:[#allocation5] sm:$0xff]
          %v7860 = vld [vmem:[#allocation5 + $0x8] sm:$0xff]
          %v7861 = vld [vmem:[#allocation5 + $0x10] sm:$0xff]
          %v7862 = vld [vmem:[#allocation5 + $0x18] sm:$0xff]
          %v7863 = vld [vmem:[#allocation5 + $0x20] sm:$0xff]
          %v7864 = vld [vmem:[#allocation5 + $0x28] sm:$0xff]
          %v7865 = vld [vmem:[#allocation5 + $0x30] sm:$0xff]
          %v7866 = vld [vmem:[#allocation5 + $0x38] sm:$0xff]
          %v7867 = vld [vmem:[#allocation5 + $0x40] sm:$0xff]
          %v7868 = vld [vmem:[#allocation5 + $0x48] sm:$0xff]
          %v7869 = vld [vmem:[#allocation5 + $0x50] sm:$0xff]
          %v7870 = vld [vmem:[#allocation5 + $0x58] sm:$0xff]
          %v7871 = vld [vmem:[#allocation5 + $0x60] sm:$0xff]
          %v7872 = vld [vmem:[#allocation5 + $0x68] sm:$0xff]
          %v7873 = vld [vmem:[#allocation5 + $0x70] sm:$0xff]
          %v7874 = vld [vmem:[#allocation5 + $0x78] sm:$0xff]
          %v7875 = vld [vmem:[#allocation5 + $0x80] sm:$0xff]
          %v7876 = vld [vmem:[#allocation5 + $0x88] sm:$0xff]
          %v7877 = vld [vmem:[#allocation5 + $0x90] sm:$0xff]
          %v7878 = vld [vmem:[#allocation5 + $0x98] sm:$0xff]
          %v7879 = vld [vmem:[#allocation5 + $0xa0] sm:$0xff]
          %v7880 = vld [vmem:[#allocation5 + $0xa8] sm:$0xff]
          %v7881 = vld [vmem:[#allocation5 + $0xb0] sm:$0xff]
          %v7882 = vld [vmem:[#allocation5 + $0xb8] sm:$0xff]
          %v7883 = vld [vmem:[#allocation5 + $0xc0] sm:$0xff]
          %v7884 = vld [vmem:[#allocation5 + $0xc8] sm:$0xff]
          %v7885 = vld [vmem:[#allocation5 + $0xd0] sm:$0xff]
          %v7886 = vld [vmem:[#allocation5 + $0xd8] sm:$0xff]
          %v7887 = vld [vmem:[#allocation5 + $0xe0] sm:$0xff]
          %v7888 = vld [vmem:[#allocation5 + $0xe8] sm:$0xff]
          %v7889 = vld [vmem:[#allocation5 + $0xf0] sm:$0xff]
          %v7890 = vld [vmem:[#allocation5 + $0xf8] sm:$0xff]
          %v7891 = vld [vmem:[#allocation5 + $0x100] sm:$0xff]
          %v7892 = vld [vmem:[#allocation5 + $0x108] sm:$0xff]
          %v7893 = vld [vmem:[#allocation5 + $0x110] sm:$0xff]
          %v7894 = vld [vmem:[#allocation5 + $0x118] sm:$0xff]
          %v7895 = vld [vmem:[#allocation5 + $0x120] sm:$0xff]
          %v7896 = vld [vmem:[#allocation5 + $0x128] sm:$0xff]
          %v7897 = vld [vmem:[#allocation5 + $0x130] sm:$0xff]
          %v7898 = vld [vmem:[#allocation5 + $0x138] sm:$0xff]
          %v7899 = vld [vmem:[#allocation5 + $0x140] sm:$0xff]
          %v7900 = vld [vmem:[#allocation5 + $0x148] sm:$0xff]
          %v7901 = vld [vmem:[#allocation5 + $0x150] sm:$0xff]
          %v7902 = vld [vmem:[#allocation5 + $0x158] sm:$0xff]
          %v7903 = vld [vmem:[#allocation5 + $0x160] sm:$0xff]
          %v7904 = vld [vmem:[#allocation5 + $0x168] sm:$0xff]
          %v7905 = vld [vmem:[#allocation5 + $0x170] sm:$0xff]
          %v7906 = vld [vmem:[#allocation5 + $0x178] sm:$0xff]
          %v7907 = vld [vmem:[#allocation5 + $0x180] sm:$0xff]
          %v7908 = vld [vmem:[#allocation5 + $0x188] sm:$0xff]
          %v7909 = vld [vmem:[#allocation5 + $0x190] sm:$0xff]
          %v7910 = vld [vmem:[#allocation5 + $0x198] sm:$0xff]
          %v7911 = vld [vmem:[#allocation5 + $0x1a0] sm:$0xff]
          %v7912 = vld [vmem:[#allocation5 + $0x1a8] sm:$0xff]
          %v7913 = vld [vmem:[#allocation5 + $0x1b0] sm:$0xff]
          %v7914 = vld [vmem:[#allocation5 + $0x1b8] sm:$0xff]
          %v7915 = vld [vmem:[#allocation5 + $0x1c0] sm:$0xff]
          %v7916 = vld [vmem:[#allocation5 + $0x1c8] sm:$0xff]
          %v7917 = vld [vmem:[#allocation5 + $0x1d0] sm:$0xff]
          %v7918 = vld [vmem:[#allocation5 + $0x1d8] sm:$0xff]
          %v7919 = vld [vmem:[#allocation5 + $0x1e0] sm:$0xff]
          %v7920 = vld [vmem:[#allocation5 + $0x1e8] sm:$0xff]
          %v7921 = vld [vmem:[#allocation5 + $0x1f0] sm:$0xff]
          %v7922 = vld [vmem:[#allocation5 + $0x1f8] sm:$0xff]
          %7924 = vset.pattern.permute.xlu0 0
          %7925 = vperm.xlu0 %7924, %v6130
          %v7926 = vpop.permute.xlu0 %7925
          %7929 = vset.pattern.permute.xlu0 0
          %7930 = vperm.xlu0 %7929, %v6132
          %v7931 = vpop.permute.xlu0 %7930
          %7934 = vset.pattern.permute.xlu0 0
          %7935 = vperm.xlu0 %7934, %v6134
          %v7936 = vpop.permute.xlu0 %7935
          %7939 = vset.pattern.permute.xlu0 0
          %7940 = vperm.xlu0 %7939, %v6136
          %v7941 = vpop.permute.xlu0 %7940
          %7944 = vset.pattern.permute.xlu0 0
          %7945 = vperm.xlu0 %7944, %v6138
          %v7946 = vpop.permute.xlu0 %7945
          %7949 = vset.pattern.permute.xlu0 0
          %7950 = vperm.xlu0 %7949, %v6140
          %v7951 = vpop.permute.xlu0 %7950
          %7954 = vset.pattern.permute.xlu0 0
          %7955 = vperm.xlu0 %7954, %v6142
          %v7956 = vpop.permute.xlu0 %7955
          %7959 = vset.pattern.permute.xlu0 0
          %7960 = vperm.xlu0 %7959, %v6144
          %v7961 = vpop.permute.xlu0 %7960
          %7964 = vset.pattern.permute.xlu0 0
          %7965 = vperm.xlu0 %7964, %v6146
          %v7966 = vpop.permute.xlu0 %7965
          %7969 = vset.pattern.permute.xlu0 0
          %7970 = vperm.xlu0 %7969, %v6148
          %v7971 = vpop.permute.xlu0 %7970
          %7974 = vset.pattern.permute.xlu0 0
          %7975 = vperm.xlu0 %7974, %v6150
          %v7976 = vpop.permute.xlu0 %7975
          %7979 = vset.pattern.permute.xlu0 0
          %7980 = vperm.xlu0 %7979, %v6152
          %v7981 = vpop.permute.xlu0 %7980
          %7984 = vset.pattern.permute.xlu0 0
          %7985 = vperm.xlu0 %7984, %v6154
          %v7986 = vpop.permute.xlu0 %7985
          %7989 = vset.pattern.permute.xlu0 0
          %7990 = vperm.xlu0 %7989, %v6156
          %v7991 = vpop.permute.xlu0 %7990
          %7994 = vset.pattern.permute.xlu0 0
          %7995 = vperm.xlu0 %7994, %v6158
          %v7996 = vpop.permute.xlu0 %7995
          %7999 = vset.pattern.permute.xlu0 0
          %8000 = vperm.xlu0 %7999, %v6160
          %v8001 = vpop.permute.xlu0 %8000
          %8004 = vset.pattern.permute.xlu0 0
          %8005 = vperm.xlu0 %8004, %v6162
          %v8006 = vpop.permute.xlu0 %8005
          %8009 = vset.pattern.permute.xlu0 0
          %8010 = vperm.xlu0 %8009, %v6164
          %v8011 = vpop.permute.xlu0 %8010
          %8014 = vset.pattern.permute.xlu0 0
          %8015 = vperm.xlu0 %8014, %v6166
          %v8016 = vpop.permute.xlu0 %8015
          %8019 = vset.pattern.permute.xlu0 0
          %8020 = vperm.xlu0 %8019, %v6168
          %v8021 = vpop.permute.xlu0 %8020
          %8024 = vset.pattern.permute.xlu0 0
          %8025 = vperm.xlu0 %8024, %v6170
          %v8026 = vpop.permute.xlu0 %8025
          %8029 = vset.pattern.permute.xlu0 0
          %8030 = vperm.xlu0 %8029, %v6172
          %v8031 = vpop.permute.xlu0 %8030
          %8034 = vset.pattern.permute.xlu0 0
          %8035 = vperm.xlu0 %8034, %v6174
          %v8036 = vpop.permute.xlu0 %8035
          %8039 = vset.pattern.permute.xlu0 0
          %8040 = vperm.xlu0 %8039, %v6176
          %v8041 = vpop.permute.xlu0 %8040
          %8044 = vset.pattern.permute.xlu0 0
          %8045 = vperm.xlu0 %8044, %v6178
          %v8046 = vpop.permute.xlu0 %8045
          %8049 = vset.pattern.permute.xlu0 0
          %8050 = vperm.xlu0 %8049, %v6180
          %v8051 = vpop.permute.xlu0 %8050
          %8054 = vset.pattern.permute.xlu0 0
          %8055 = vperm.xlu0 %8054, %v6182
          %v8056 = vpop.permute.xlu0 %8055
          %8059 = vset.pattern.permute.xlu0 0
          %8060 = vperm.xlu0 %8059, %v6184
          %v8061 = vpop.permute.xlu0 %8060
          %8064 = vset.pattern.permute.xlu0 0
          %8065 = vperm.xlu0 %8064, %v6186
          %v8066 = vpop.permute.xlu0 %8065
          %8069 = vset.pattern.permute.xlu0 0
          %8070 = vperm.xlu0 %8069, %v6188
          %v8071 = vpop.permute.xlu0 %8070
          %8074 = vset.pattern.permute.xlu0 0
          %8075 = vperm.xlu0 %8074, %v6190
          %v8076 = vpop.permute.xlu0 %8075
          %8079 = vset.pattern.permute.xlu0 0
          %8080 = vperm.xlu0 %8079, %v6192
          %v8081 = vpop.permute.xlu0 %8080
          %8084 = vset.pattern.permute.xlu0 0
          %8085 = vperm.xlu0 %8084, %v6194
          %v8086 = vpop.permute.xlu0 %8085
          %8089 = vset.pattern.permute.xlu0 0
          %8090 = vperm.xlu0 %8089, %v6196
          %v8091 = vpop.permute.xlu0 %8090
          %8094 = vset.pattern.permute.xlu0 0
          %8095 = vperm.xlu0 %8094, %v6198
          %v8096 = vpop.permute.xlu0 %8095
          %8099 = vset.pattern.permute.xlu0 0
          %8100 = vperm.xlu0 %8099, %v6200
          %v8101 = vpop.permute.xlu0 %8100
          %8104 = vset.pattern.permute.xlu0 0
          %8105 = vperm.xlu0 %8104, %v6202
          %v8106 = vpop.permute.xlu0 %8105
          %8109 = vset.pattern.permute.xlu0 0
          %8110 = vperm.xlu0 %8109, %v6204
          %v8111 = vpop.permute.xlu0 %8110
          %8114 = vset.pattern.permute.xlu0 0
          %8115 = vperm.xlu0 %8114, %v6206
          %v8116 = vpop.permute.xlu0 %8115
          %8119 = vset.pattern.permute.xlu0 0
          %8120 = vperm.xlu0 %8119, %v6208
          %v8121 = vpop.permute.xlu0 %8120
          %8124 = vset.pattern.permute.xlu0 0
          %8125 = vperm.xlu0 %8124, %v6210
          %v8126 = vpop.permute.xlu0 %8125
          %8129 = vset.pattern.permute.xlu0 0
          %8130 = vperm.xlu0 %8129, %v6212
          %v8131 = vpop.permute.xlu0 %8130
          %8134 = vset.pattern.permute.xlu0 0
          %8135 = vperm.xlu0 %8134, %v6214
          %v8136 = vpop.permute.xlu0 %8135
          %8139 = vset.pattern.permute.xlu0 0
          %8140 = vperm.xlu0 %8139, %v6216
          %v8141 = vpop.permute.xlu0 %8140
          %8144 = vset.pattern.permute.xlu0 0
          %8145 = vperm.xlu0 %8144, %v6218
          %v8146 = vpop.permute.xlu0 %8145
          %8149 = vset.pattern.permute.xlu0 0
          %8150 = vperm.xlu0 %8149, %v6220
          %v8151 = vpop.permute.xlu0 %8150
          %8154 = vset.pattern.permute.xlu0 0
          %8155 = vperm.xlu0 %8154, %v6222
          %v8156 = vpop.permute.xlu0 %8155
          %8159 = vset.pattern.permute.xlu0 0
          %8160 = vperm.xlu0 %8159, %v6224
          %v8161 = vpop.permute.xlu0 %8160
          %8164 = vset.pattern.permute.xlu0 0
          %8165 = vperm.xlu0 %8164, %v6226
          %v8166 = vpop.permute.xlu0 %8165
          %8169 = vset.pattern.permute.xlu0 0
          %8170 = vperm.xlu0 %8169, %v6228
          %v8171 = vpop.permute.xlu0 %8170
          %8174 = vset.pattern.permute.xlu0 0
          %8175 = vperm.xlu0 %8174, %v6230
          %v8176 = vpop.permute.xlu0 %8175
          %8179 = vset.pattern.permute.xlu0 0
          %8180 = vperm.xlu0 %8179, %v6232
          %v8181 = vpop.permute.xlu0 %8180
          %8184 = vset.pattern.permute.xlu0 0
          %8185 = vperm.xlu0 %8184, %v6234
          %v8186 = vpop.permute.xlu0 %8185
          %8189 = vset.pattern.permute.xlu0 0
          %8190 = vperm.xlu0 %8189, %v6236
          %v8191 = vpop.permute.xlu0 %8190
          %8194 = vset.pattern.permute.xlu0 0
          %8195 = vperm.xlu0 %8194, %v6238
          %v8196 = vpop.permute.xlu0 %8195
          %8199 = vset.pattern.permute.xlu0 0
          %8200 = vperm.xlu0 %8199, %v6240
          %v8201 = vpop.permute.xlu0 %8200
          %8204 = vset.pattern.permute.xlu0 0
          %8205 = vperm.xlu0 %8204, %v6242
          %v8206 = vpop.permute.xlu0 %8205
          %8209 = vset.pattern.permute.xlu0 0
          %8210 = vperm.xlu0 %8209, %v6244
          %v8211 = vpop.permute.xlu0 %8210
          %8214 = vset.pattern.permute.xlu0 0
          %8215 = vperm.xlu0 %8214, %v6246
          %v8216 = vpop.permute.xlu0 %8215
          %8219 = vset.pattern.permute.xlu0 0
          %8220 = vperm.xlu0 %8219, %v6248
          %v8221 = vpop.permute.xlu0 %8220
          %8224 = vset.pattern.permute.xlu0 0
          %8225 = vperm.xlu0 %8224, %v6250
          %v8226 = vpop.permute.xlu0 %8225
          %8229 = vset.pattern.permute.xlu0 0
          %8230 = vperm.xlu0 %8229, %v6252
          %v8231 = vpop.permute.xlu0 %8230
          %8234 = vset.pattern.permute.xlu0 0
          %8235 = vperm.xlu0 %8234, %v6254
          %v8236 = vpop.permute.xlu0 %8235
          %8239 = vset.pattern.permute.xlu0 0
          %8240 = vperm.xlu0 %8239, %v6256
          %v8241 = vpop.permute.xlu0 %8240
          %v8243 = vmul.f32 %v7926, %v7859
          %v8244 = vmul.f32 %v7931, %v7860
          %v8245 = vmul.f32 %v7936, %v7861
          %v8246 = vmul.f32 %v7941, %v7862
          %v8247 = vmul.f32 %v7946, %v7863
          %v8248 = vmul.f32 %v7951, %v7864
          %v8249 = vmul.f32 %v7956, %v7865
          %v8250 = vmul.f32 %v7961, %v7866
          %v8251 = vmul.f32 %v7966, %v7867
          %v8252 = vmul.f32 %v7971, %v7868
          %v8253 = vmul.f32 %v7976, %v7869
          %v8254 = vmul.f32 %v7981, %v7870
          %v8255 = vmul.f32 %v7986, %v7871
          %v8256 = vmul.f32 %v7991, %v7872
          %v8257 = vmul.f32 %v7996, %v7873
          %v8258 = vmul.f32 %v8001, %v7874
          %v8259 = vmul.f32 %v8006, %v7875
          %v8260 = vmul.f32 %v8011, %v7876
          %v8261 = vmul.f32 %v8016, %v7877
          %v8262 = vmul.f32 %v8021, %v7878
          %v8263 = vmul.f32 %v8026, %v7879
          %v8264 = vmul.f32 %v8031, %v7880
          %v8265 = vmul.f32 %v8036, %v7881
          %v8266 = vmul.f32 %v8041, %v7882
          %v8267 = vmul.f32 %v8046, %v7883
          %v8268 = vmul.f32 %v8051, %v7884
          %v8269 = vmul.f32 %v8056, %v7885
          %v8270 = vmul.f32 %v8061, %v7886
          %v8271 = vmul.f32 %v8066, %v7887
          %v8272 = vmul.f32 %v8071, %v7888
          %v8273 = vmul.f32 %v8076, %v7889
          %v8274 = vmul.f32 %v8081, %v7890
          %v8275 = vmul.f32 %v8086, %v7891
          %v8276 = vmul.f32 %v8091, %v7892
          %v8277 = vmul.f32 %v8096, %v7893
          %v8278 = vmul.f32 %v8101, %v7894
          %v8279 = vmul.f32 %v8106, %v7895
          %v8280 = vmul.f32 %v8111, %v7896
          %v8281 = vmul.f32 %v8116, %v7897
          %v8282 = vmul.f32 %v8121, %v7898
          %v8283 = vmul.f32 %v8126, %v7899
          %v8284 = vmul.f32 %v8131, %v7900
          %v8285 = vmul.f32 %v8136, %v7901
          %v8286 = vmul.f32 %v8141, %v7902
          %v8287 = vmul.f32 %v8146, %v7903
          %v8288 = vmul.f32 %v8151, %v7904
          %v8289 = vmul.f32 %v8156, %v7905
          %v8290 = vmul.f32 %v8161, %v7906
          %v8291 = vmul.f32 %v8166, %v7907
          %v8292 = vmul.f32 %v8171, %v7908
          %v8293 = vmul.f32 %v8176, %v7909
          %v8294 = vmul.f32 %v8181, %v7910
          %v8295 = vmul.f32 %v8186, %v7911
          %v8296 = vmul.f32 %v8191, %v7912
          %v8297 = vmul.f32 %v8196, %v7913
          %v8298 = vmul.f32 %v8201, %v7914
          %v8299 = vmul.f32 %v8206, %v7915
          %v8300 = vmul.f32 %v8211, %v7916
          %v8301 = vmul.f32 %v8216, %v7917
          %v8302 = vmul.f32 %v8221, %v7918
          %v8303 = vmul.f32 %v8226, %v7919
          %v8304 = vmul.f32 %v8231, %v7920
          %v8305 = vmul.f32 %v8236, %v7921
          %v8306 = vmul.f32 %v8241, %v7922
          %v8307 = vadd.f32 %v8243, %v7605
          %v8308 = vadd.f32 %v8244, %v7608
          %v8309 = vadd.f32 %v8245, %v7613
          %v8310 = vadd.f32 %v8246, %v7616
          %v8311 = vadd.f32 %v8247, %v7621
          %v8312 = vadd.f32 %v8248, %v7624
          %v8313 = vadd.f32 %v8249, %v7629
          %v8314 = vadd.f32 %v8250, %v7632
          %v8315 = vadd.f32 %v8251, %v7637
          %v8316 = vadd.f32 %v8252, %v7640
          %v8317 = vadd.f32 %v8253, %v7645
          %v8318 = vadd.f32 %v8254, %v7648
          %v8319 = vadd.f32 %v8255, %v7653
          %v8320 = vadd.f32 %v8256, %v7656
          %v8321 = vadd.f32 %v8257, %v7661
          %v8322 = vadd.f32 %v8258, %v7664
          %v8323 = vadd.f32 %v8259, %v7669
          %v8324 = vadd.f32 %v8260, %v7672
          %v8325 = vadd.f32 %v8261, %v7677
          %v8326 = vadd.f32 %v8262, %v7680
          %v8327 = vadd.f32 %v8263, %v7685
          %v8328 = vadd.f32 %v8264, %v7688
          %v8329 = vadd.f32 %v8265, %v7693
          %v8330 = vadd.f32 %v8266, %v7696
          %v8331 = vadd.f32 %v8267, %v7701
          %v8332 = vadd.f32 %v8268, %v7704
          %v8333 = vadd.f32 %v8269, %v7709
          %v8334 = vadd.f32 %v8270, %v7712
          %v8335 = vadd.f32 %v8271, %v7717
          %v8336 = vadd.f32 %v8272, %v7720
          %v8337 = vadd.f32 %v8273, %v7725
          %v8338 = vadd.f32 %v8274, %v7728
          %v8339 = vadd.f32 %v8275, %v7733
          %v8340 = vadd.f32 %v8276, %v7736
          %v8341 = vadd.f32 %v8277, %v7741
          %v8342 = vadd.f32 %v8278, %v7744
          %v8343 = vadd.f32 %v8279, %v7749
          %v8344 = vadd.f32 %v8280, %v7752
          %v8345 = vadd.f32 %v8281, %v7757
          %v8346 = vadd.f32 %v8282, %v7760
          %v8347 = vadd.f32 %v8283, %v7765
          %v8348 = vadd.f32 %v8284, %v7768
          %v8349 = vadd.f32 %v8285, %v7773
          %v8350 = vadd.f32 %v8286, %v7776
          %v8351 = vadd.f32 %v8287, %v7781
          %v8352 = vadd.f32 %v8288, %v7784
          %v8353 = vadd.f32 %v8289, %v7789
          %v8354 = vadd.f32 %v8290, %v7792
          %v8355 = vadd.f32 %v8291, %v7797
          %v8356 = vadd.f32 %v8292, %v7800
          %v8357 = vadd.f32 %v8293, %v7805
          %v8358 = vadd.f32 %v8294, %v7808
          %v8359 = vadd.f32 %v8295, %v7813
          %v8360 = vadd.f32 %v8296, %v7816
          %v8361 = vadd.f32 %v8297, %v7821
          %v8362 = vadd.f32 %v8298, %v7824
          %v8363 = vadd.f32 %v8299, %v7829
          %v8364 = vadd.f32 %v8300, %v7832
          %v8365 = vadd.f32 %v8301, %v7837
          %v8366 = vadd.f32 %v8302, %v7840
          %v8367 = vadd.f32 %v8303, %v7845
          %v8368 = vadd.f32 %v8304, %v7848
          %v8369 = vadd.f32 %v8305, %v7853
          %v8370 = vadd.f32 %v8306, %v7856
          %8371 = vst [vmem:[#allocation5] sm:$0xff] %v8307
          %8372 = vst [vmem:[#allocation5 + $0x8] sm:$0xff] %v8308
          %8373 = vst [vmem:[#allocation5 + $0x10] sm:$0xff] %v8309
          %8374 = vst [vmem:[#allocation5 + $0x18] sm:$0xff] %v8310
          %8375 = vst [vmem:[#allocation5 + $0x20] sm:$0xff] %v8311
          %8376 = vst [vmem:[#allocation5 + $0x28] sm:$0xff] %v8312
          %8377 = vst [vmem:[#allocation5 + $0x30] sm:$0xff] %v8313
          %8378 = vst [vmem:[#allocation5 + $0x38] sm:$0xff] %v8314
          %8379 = vst [vmem:[#allocation5 + $0x40] sm:$0xff] %v8315
          %8380 = vst [vmem:[#allocation5 + $0x48] sm:$0xff] %v8316
          %8381 = vst [vmem:[#allocation5 + $0x50] sm:$0xff] %v8317
          %8382 = vst [vmem:[#allocation5 + $0x58] sm:$0xff] %v8318
          %8383 = vst [vmem:[#allocation5 + $0x60] sm:$0xff] %v8319
          %8384 = vst [vmem:[#allocation5 + $0x68] sm:$0xff] %v8320
          %8385 = vst [vmem:[#allocation5 + $0x70] sm:$0xff] %v8321
          %8386 = vst [vmem:[#allocation5 + $0x78] sm:$0xff] %v8322
          %8387 = vst [vmem:[#allocation5 + $0x80] sm:$0xff] %v8323
          %8388 = vst [vmem:[#allocation5 + $0x88] sm:$0xff] %v8324
          %8389 = vst [vmem:[#allocation5 + $0x90] sm:$0xff] %v8325
          %8390 = vst [vmem:[#allocation5 + $0x98] sm:$0xff] %v8326
          %8391 = vst [vmem:[#allocation5 + $0xa0] sm:$0xff] %v8327
          %8392 = vst [vmem:[#allocation5 + $0xa8] sm:$0xff] %v8328
          %8393 = vst [vmem:[#allocation5 + $0xb0] sm:$0xff] %v8329
          %8394 = vst [vmem:[#allocation5 + $0xb8] sm:$0xff] %v8330
          %8395 = vst [vmem:[#allocation5 + $0xc0] sm:$0xff] %v8331
          %8396 = vst [vmem:[#allocation5 + $0xc8] sm:$0xff] %v8332
          %8397 = vst [vmem:[#allocation5 + $0xd0] sm:$0xff] %v8333
          %8398 = vst [vmem:[#allocation5 + $0xd8] sm:$0xff] %v8334
          %8399 = vst [vmem:[#allocation5 + $0xe0] sm:$0xff] %v8335
          %8400 = vst [vmem:[#allocation5 + $0xe8] sm:$0xff] %v8336
          %8401 = vst [vmem:[#allocation5 + $0xf0] sm:$0xff] %v8337
          %8402 = vst [vmem:[#allocation5 + $0xf8] sm:$0xff] %v8338
          %8403 = vst [vmem:[#allocation5 + $0x100] sm:$0xff] %v8339
          %8404 = vst [vmem:[#allocation5 + $0x108] sm:$0xff] %v8340
          %8405 = vst [vmem:[#allocation5 + $0x110] sm:$0xff] %v8341
          %8406 = vst [vmem:[#allocation5 + $0x118] sm:$0xff] %v8342
          %8407 = vst [vmem:[#allocation5 + $0x120] sm:$0xff] %v8343
          %8408 = vst [vmem:[#allocation5 + $0x128] sm:$0xff] %v8344
          %8409 = vst [vmem:[#allocation5 + $0x130] sm:$0xff] %v8345
          %8410 = vst [vmem:[#allocation5 + $0x138] sm:$0xff] %v8346
          %8411 = vst [vmem:[#allocation5 + $0x140] sm:$0xff] %v8347
          %8412 = vst [vmem:[#allocation5 + $0x148] sm:$0xff] %v8348
          %8413 = vst [vmem:[#allocation5 + $0x150] sm:$0xff] %v8349
          %8414 = vst [vmem:[#allocation5 + $0x158] sm:$0xff] %v8350
          %8415 = vst [vmem:[#allocation5 + $0x160] sm:$0xff] %v8351
          %8416 = vst [vmem:[#allocation5 + $0x168] sm:$0xff] %v8352
          %8417 = vst [vmem:[#allocation5 + $0x170] sm:$0xff] %v8353
          %8418 = vst [vmem:[#allocation5 + $0x178] sm:$0xff] %v8354
          %8419 = vst [vmem:[#allocation5 + $0x180] sm:$0xff] %v8355
          %8420 = vst [vmem:[#allocation5 + $0x188] sm:$0xff] %v8356
          %8421 = vst [vmem:[#allocation5 + $0x190] sm:$0xff] %v8357
          %8422 = vst [vmem:[#allocation5 + $0x198] sm:$0xff] %v8358
          %8423 = vst [vmem:[#allocation5 + $0x1a0] sm:$0xff] %v8359
          %8424 = vst [vmem:[#allocation5 + $0x1a8] sm:$0xff] %v8360
          %8425 = vst [vmem:[#allocation5 + $0x1b0] sm:$0xff] %v8361
          %8426 = vst [vmem:[#allocation5 + $0x1b8] sm:$0xff] %v8362
          %8427 = vst [vmem:[#allocation5 + $0x1c0] sm:$0xff] %v8363
          %8428 = vst [vmem:[#allocation5 + $0x1c8] sm:$0xff] %v8364
          %8429 = vst [vmem:[#allocation5 + $0x1d0] sm:$0xff] %v8365
          %8430 = vst [vmem:[#allocation5 + $0x1d8] sm:$0xff] %v8366
          %8431 = vst [vmem:[#allocation5 + $0x1e0] sm:$0xff] %v8367
          %8432 = vst [vmem:[#allocation5 + $0x1e8] sm:$0xff] %v8368
          %8433 = vst [vmem:[#allocation5 + $0x1f0] sm:$0xff] %v8369
          %8434 = vst [vmem:[#allocation5 + $0x1f8] sm:$0xff] %v8370
          %8435 = vst.msk [vmem:[#allocation3] sm:$0xff] %vm7345, %v6001
          %8436 = vst.msk [vmem:[#allocation3 + $0x8] sm:$0xff] %vm7345, %v6002
          %8437 = vst.msk [vmem:[#allocation3 + $0x10] sm:$0xff] %vm7345, %v6003
          %8438 = vst.msk [vmem:[#allocation3 + $0x18] sm:$0xff] %vm7345, %v6004
          %8439 = vst.msk [vmem:[#allocation3 + $0x20] sm:$0xff] %vm7345, %v6005
          %8440 = vst.msk [vmem:[#allocation3 + $0x28] sm:$0xff] %vm7345, %v6006
          %8441 = vst.msk [vmem:[#allocation3 + $0x30] sm:$0xff] %vm7345, %v6007
          %8442 = vst.msk [vmem:[#allocation3 + $0x38] sm:$0xff] %vm7345, %v6008
          %8443 = vst.msk [vmem:[#allocation3 + $0x40] sm:$0xff] %vm7345, %v6009
          %8444 = vst.msk [vmem:[#allocation3 + $0x48] sm:$0xff] %vm7345, %v6010
          %8445 = vst.msk [vmem:[#allocation3 + $0x50] sm:$0xff] %vm7345, %v6011
          %8446 = vst.msk [vmem:[#allocation3 + $0x58] sm:$0xff] %vm7345, %v6012
          %8447 = vst.msk [vmem:[#allocation3 + $0x60] sm:$0xff] %vm7345, %v6013
          %8448 = vst.msk [vmem:[#allocation3 + $0x68] sm:$0xff] %vm7345, %v6014
          %8449 = vst.msk [vmem:[#allocation3 + $0x70] sm:$0xff] %vm7345, %v6015
          %8450 = vst.msk [vmem:[#allocation3 + $0x78] sm:$0xff] %vm7345, %v6016
          %8451 = vst.msk [vmem:[#allocation3 + $0x80] sm:$0xff] %vm7345, %v6017
          %8452 = vst.msk [vmem:[#allocation3 + $0x88] sm:$0xff] %vm7345, %v6018
          %8453 = vst.msk [vmem:[#allocation3 + $0x90] sm:$0xff] %vm7345, %v6019
          %8454 = vst.msk [vmem:[#allocation3 + $0x98] sm:$0xff] %vm7345, %v6020
          %8455 = vst.msk [vmem:[#allocation3 + $0xa0] sm:$0xff] %vm7345, %v6021
          %8456 = vst.msk [vmem:[#allocation3 + $0xa8] sm:$0xff] %vm7345, %v6022
          %8457 = vst.msk [vmem:[#allocation3 + $0xb0] sm:$0xff] %vm7345, %v6023
          %8458 = vst.msk [vmem:[#allocation3 + $0xb8] sm:$0xff] %vm7345, %v6024
          %8459 = vst.msk [vmem:[#allocation3 + $0xc0] sm:$0xff] %vm7345, %v6025
          %8460 = vst.msk [vmem:[#allocation3 + $0xc8] sm:$0xff] %vm7345, %v6026
          %8461 = vst.msk [vmem:[#allocation3 + $0xd0] sm:$0xff] %vm7345, %v6027
          %8462 = vst.msk [vmem:[#allocation3 + $0xd8] sm:$0xff] %vm7345, %v6028
          %8463 = vst.msk [vmem:[#allocation3 + $0xe0] sm:$0xff] %vm7345, %v6029
          %8464 = vst.msk [vmem:[#allocation3 + $0xe8] sm:$0xff] %vm7345, %v6030
          %8465 = vst.msk [vmem:[#allocation3 + $0xf0] sm:$0xff] %vm7345, %v6031
          %8466 = vst.msk [vmem:[#allocation3 + $0xf8] sm:$0xff] %vm7345, %v6032
          %8467 = vst.msk [vmem:[#allocation3 + $0x100] sm:$0xff] %vm7345, %v6033
          %8468 = vst.msk [vmem:[#allocation3 + $0x108] sm:$0xff] %vm7345, %v6034
          %8469 = vst.msk [vmem:[#allocation3 + $0x110] sm:$0xff] %vm7345, %v6035
          %8470 = vst.msk [vmem:[#allocation3 + $0x118] sm:$0xff] %vm7345, %v6036
          %8471 = vst.msk [vmem:[#allocation3 + $0x120] sm:$0xff] %vm7345, %v6037
          %8472 = vst.msk [vmem:[#allocation3 + $0x128] sm:$0xff] %vm7345, %v6038
          %8473 = vst.msk [vmem:[#allocation3 + $0x130] sm:$0xff] %vm7345, %v6039
          %8474 = vst.msk [vmem:[#allocation3 + $0x138] sm:$0xff] %vm7345, %v6040
          %8475 = vst.msk [vmem:[#allocation3 + $0x140] sm:$0xff] %vm7345, %v6041
          %8476 = vst.msk [vmem:[#allocation3 + $0x148] sm:$0xff] %vm7345, %v6042
          %8477 = vst.msk [vmem:[#allocation3 + $0x150] sm:$0xff] %vm7345, %v6043
          %8478 = vst.msk [vmem:[#allocation3 + $0x158] sm:$0xff] %vm7345, %v6044
          %8479 = vst.msk [vmem:[#allocation3 + $0x160] sm:$0xff] %vm7345, %v6045
          %8480 = vst.msk [vmem:[#allocation3 + $0x168] sm:$0xff] %vm7345, %v6046
          %8481 = vst.msk [vmem:[#allocation3 + $0x170] sm:$0xff] %vm7345, %v6047
          %8482 = vst.msk [vmem:[#allocation3 + $0x178] sm:$0xff] %vm7345, %v6048
          %8483 = vst.msk [vmem:[#allocation3 + $0x180] sm:$0xff] %vm7345, %v6049
          %8484 = vst.msk [vmem:[#allocation3 + $0x188] sm:$0xff] %vm7345, %v6050
          %8485 = vst.msk [vmem:[#allocation3 + $0x190] sm:$0xff] %vm7345, %v6051
          %8486 = vst.msk [vmem:[#allocation3 + $0x198] sm:$0xff] %vm7345, %v6052
          %8487 = vst.msk [vmem:[#allocation3 + $0x1a0] sm:$0xff] %vm7345, %v6053
          %8488 = vst.msk [vmem:[#allocation3 + $0x1a8] sm:$0xff] %vm7345, %v6054
          %8489 = vst.msk [vmem:[#allocation3 + $0x1b0] sm:$0xff] %vm7345, %v6055
          %8490 = vst.msk [vmem:[#allocation3 + $0x1b8] sm:$0xff] %vm7345, %v6056
          %8491 = vst.msk [vmem:[#allocation3 + $0x1c0] sm:$0xff] %vm7345, %v6057
          %8492 = vst.msk [vmem:[#allocation3 + $0x1c8] sm:$0xff] %vm7345, %v6058
          %8493 = vst.msk [vmem:[#allocation3 + $0x1d0] sm:$0xff] %vm7345, %v6059
          %8494 = vst.msk [vmem:[#allocation3 + $0x1d8] sm:$0xff] %vm7345, %v6060
          %8495 = vst.msk [vmem:[#allocation3 + $0x1e0] sm:$0xff] %vm7345, %v6061
          %8496 = vst.msk [vmem:[#allocation3 + $0x1e8] sm:$0xff] %vm7345, %v6062
          %8497 = vst.msk [vmem:[#allocation3 + $0x1f0] sm:$0xff] %vm7345, %v6063
          %8498 = vst.msk [vmem:[#allocation3 + $0x1f8] sm:$0xff] %vm7345, %v6064
          %v8499 = vld [vmem:[#allocation4] sm:$0xff]
          %v8500 = vld [vmem:[#allocation4 + $0x8] sm:$0xff]
          %v8501 = vld [vmem:[#allocation4 + $0x10] sm:$0xff]
          %v8502 = vld [vmem:[#allocation4 + $0x18] sm:$0xff]
          %v8503 = vld [vmem:[#allocation4 + $0x20] sm:$0xff]
          %v8504 = vld [vmem:[#allocation4 + $0x28] sm:$0xff]
          %v8505 = vld [vmem:[#allocation4 + $0x30] sm:$0xff]
          %v8506 = vld [vmem:[#allocation4 + $0x38] sm:$0xff]
          %v8507 = vld [vmem:[#allocation4 + $0x40] sm:$0xff]
          %v8508 = vld [vmem:[#allocation4 + $0x48] sm:$0xff]
          %v8509 = vld [vmem:[#allocation4 + $0x50] sm:$0xff]
          %v8510 = vld [vmem:[#allocation4 + $0x58] sm:$0xff]
          %v8511 = vld [vmem:[#allocation4 + $0x60] sm:$0xff]
          %v8512 = vld [vmem:[#allocation4 + $0x68] sm:$0xff]
          %v8513 = vld [vmem:[#allocation4 + $0x70] sm:$0xff]
          %v8514 = vld [vmem:[#allocation4 + $0x78] sm:$0xff]
          %v8515 = vld [vmem:[#allocation4 + $0x80] sm:$0xff]
          %v8516 = vld [vmem:[#allocation4 + $0x88] sm:$0xff]
          %v8517 = vld [vmem:[#allocation4 + $0x90] sm:$0xff]
          %v8518 = vld [vmem:[#allocation4 + $0x98] sm:$0xff]
          %v8519 = vld [vmem:[#allocation4 + $0xa0] sm:$0xff]
          %v8520 = vld [vmem:[#allocation4 + $0xa8] sm:$0xff]
          %v8521 = vld [vmem:[#allocation4 + $0xb0] sm:$0xff]
          %v8522 = vld [vmem:[#allocation4 + $0xb8] sm:$0xff]
          %v8523 = vld [vmem:[#allocation4 + $0xc0] sm:$0xff]
          %v8524 = vld [vmem:[#allocation4 + $0xc8] sm:$0xff]
          %v8525 = vld [vmem:[#allocation4 + $0xd0] sm:$0xff]
          %v8526 = vld [vmem:[#allocation4 + $0xd8] sm:$0xff]
          %v8527 = vld [vmem:[#allocation4 + $0xe0] sm:$0xff]
          %v8528 = vld [vmem:[#allocation4 + $0xe8] sm:$0xff]
          %v8529 = vld [vmem:[#allocation4 + $0xf0] sm:$0xff]
          %v8530 = vld [vmem:[#allocation4 + $0xf8] sm:$0xff]
          %v8531 = vld [vmem:[#allocation4 + $0x100] sm:$0xff]
          %v8532 = vld [vmem:[#allocation4 + $0x108] sm:$0xff]
          %v8533 = vld [vmem:[#allocation4 + $0x110] sm:$0xff]
          %v8534 = vld [vmem:[#allocation4 + $0x118] sm:$0xff]
          %v8535 = vld [vmem:[#allocation4 + $0x120] sm:$0xff]
          %v8536 = vld [vmem:[#allocation4 + $0x128] sm:$0xff]
          %v8537 = vld [vmem:[#allocation4 + $0x130] sm:$0xff]
          %v8538 = vld [vmem:[#allocation4 + $0x138] sm:$0xff]
          %v8539 = vld [vmem:[#allocation4 + $0x140] sm:$0xff]
          %v8540 = vld [vmem:[#allocation4 + $0x148] sm:$0xff]
          %v8541 = vld [vmem:[#allocation4 + $0x150] sm:$0xff]
          %v8542 = vld [vmem:[#allocation4 + $0x158] sm:$0xff]
          %v8543 = vld [vmem:[#allocation4 + $0x160] sm:$0xff]
          %v8544 = vld [vmem:[#allocation4 + $0x168] sm:$0xff]
          %v8545 = vld [vmem:[#allocation4 + $0x170] sm:$0xff]
          %v8546 = vld [vmem:[#allocation4 + $0x178] sm:$0xff]
          %v8547 = vld [vmem:[#allocation4 + $0x180] sm:$0xff]
          %v8548 = vld [vmem:[#allocation4 + $0x188] sm:$0xff]
          %v8549 = vld [vmem:[#allocation4 + $0x190] sm:$0xff]
          %v8550 = vld [vmem:[#allocation4 + $0x198] sm:$0xff]
          %v8551 = vld [vmem:[#allocation4 + $0x1a0] sm:$0xff]
          %v8552 = vld [vmem:[#allocation4 + $0x1a8] sm:$0xff]
          %v8553 = vld [vmem:[#allocation4 + $0x1b0] sm:$0xff]
          %v8554 = vld [vmem:[#allocation4 + $0x1b8] sm:$0xff]
          %v8555 = vld [vmem:[#allocation4 + $0x1c0] sm:$0xff]
          %v8556 = vld [vmem:[#allocation4 + $0x1c8] sm:$0xff]
          %v8557 = vld [vmem:[#allocation4 + $0x1d0] sm:$0xff]
          %v8558 = vld [vmem:[#allocation4 + $0x1d8] sm:$0xff]
          %v8559 = vld [vmem:[#allocation4 + $0x1e0] sm:$0xff]
          %v8560 = vld [vmem:[#allocation4 + $0x1e8] sm:$0xff]
          %v8561 = vld [vmem:[#allocation4 + $0x1f0] sm:$0xff]
          %v8562 = vld [vmem:[#allocation4 + $0x1f8] sm:$0xff]
          %v8563 = vrcp.pop %v8499
          %v8564 = vrcp.pop %v8500
          %v8565 = vrcp.pop %v8501
          %v8566 = vrcp.pop %v8502
          %v8567 = vrcp.pop %v8503
          %v8568 = vrcp.pop %v8504
          %v8569 = vrcp.pop %v8505
          %v8570 = vrcp.pop %v8506
          %v8571 = vrcp.pop %v8507
          %v8572 = vrcp.pop %v8508
          %v8573 = vrcp.pop %v8509
          %v8574 = vrcp.pop %v8510
          %v8575 = vrcp.pop %v8511
          %v8576 = vrcp.pop %v8512
          %v8577 = vrcp.pop %v8513
          %v8578 = vrcp.pop %v8514
          %v8579 = vrcp.pop %v8515
          %v8580 = vrcp.pop %v8516
          %v8581 = vrcp.pop %v8517
          %v8582 = vrcp.pop %v8518
          %v8583 = vrcp.pop %v8519
          %v8584 = vrcp.pop %v8520
          %v8585 = vrcp.pop %v8521
          %v8586 = vrcp.pop %v8522
          %v8587 = vrcp.pop %v8523
          %v8588 = vrcp.pop %v8524
          %v8589 = vrcp.pop %v8525
          %v8590 = vrcp.pop %v8526
          %v8591 = vrcp.pop %v8527
          %v8592 = vrcp.pop %v8528
          %v8593 = vrcp.pop %v8529
          %v8594 = vrcp.pop %v8530
          %v8595 = vrcp.pop %v8531
          %v8596 = vrcp.pop %v8532
          %v8597 = vrcp.pop %v8533
          %v8598 = vrcp.pop %v8534
          %v8599 = vrcp.pop %v8535
          %v8600 = vrcp.pop %v8536
          %v8601 = vrcp.pop %v8537
          %v8602 = vrcp.pop %v8538
          %v8603 = vrcp.pop %v8539
          %v8604 = vrcp.pop %v8540
          %v8605 = vrcp.pop %v8541
          %v8606 = vrcp.pop %v8542
          %v8607 = vrcp.pop %v8543
          %v8608 = vrcp.pop %v8544
          %v8609 = vrcp.pop %v8545
          %v8610 = vrcp.pop %v8546
          %v8611 = vrcp.pop %v8547
          %v8612 = vrcp.pop %v8548
          %v8613 = vrcp.pop %v8549
          %v8614 = vrcp.pop %v8550
          %v8615 = vrcp.pop %v8551
          %v8616 = vrcp.pop %v8552
          %v8617 = vrcp.pop %v8553
          %v8618 = vrcp.pop %v8554
          %v8619 = vrcp.pop %v8555
          %v8620 = vrcp.pop %v8556
          %v8621 = vrcp.pop %v8557
          %v8622 = vrcp.pop %v8558
          %v8623 = vrcp.pop %v8559
          %v8624 = vrcp.pop %v8560
          %v8625 = vrcp.pop %v8561
          %v8626 = vrcp.pop %v8562
          %v8627 = vld [vmem:[#allocation5] sm:$0xff]
          %v8628 = vld [vmem:[#allocation5 + $0x8] sm:$0xff]
          %v8629 = vld [vmem:[#allocation5 + $0x10] sm:$0xff]
          %v8630 = vld [vmem:[#allocation5 + $0x18] sm:$0xff]
          %v8631 = vld [vmem:[#allocation5 + $0x20] sm:$0xff]
          %v8632 = vld [vmem:[#allocation5 + $0x28] sm:$0xff]
          %v8633 = vld [vmem:[#allocation5 + $0x30] sm:$0xff]
          %v8634 = vld [vmem:[#allocation5 + $0x38] sm:$0xff]
          %v8635 = vld [vmem:[#allocation5 + $0x40] sm:$0xff]
          %v8636 = vld [vmem:[#allocation5 + $0x48] sm:$0xff]
          %v8637 = vld [vmem:[#allocation5 + $0x50] sm:$0xff]
          %v8638 = vld [vmem:[#allocation5 + $0x58] sm:$0xff]
          %v8639 = vld [vmem:[#allocation5 + $0x60] sm:$0xff]
          %v8640 = vld [vmem:[#allocation5 + $0x68] sm:$0xff]
          %v8641 = vld [vmem:[#allocation5 + $0x70] sm:$0xff]
          %v8642 = vld [vmem:[#allocation5 + $0x78] sm:$0xff]
          %v8643 = vld [vmem:[#allocation5 + $0x80] sm:$0xff]
          %v8644 = vld [vmem:[#allocation5 + $0x88] sm:$0xff]
          %v8645 = vld [vmem:[#allocation5 + $0x90] sm:$0xff]
          %v8646 = vld [vmem:[#allocation5 + $0x98] sm:$0xff]
          %v8647 = vld [vmem:[#allocation5 + $0xa0] sm:$0xff]
          %v8648 = vld [vmem:[#allocation5 + $0xa8] sm:$0xff]
          %v8649 = vld [vmem:[#allocation5 + $0xb0] sm:$0xff]
          %v8650 = vld [vmem:[#allocation5 + $0xb8] sm:$0xff]
          %v8651 = vld [vmem:[#allocation5 + $0xc0] sm:$0xff]
          %v8652 = vld [vmem:[#allocation5 + $0xc8] sm:$0xff]
          %v8653 = vld [vmem:[#allocation5 + $0xd0] sm:$0xff]
          %v8654 = vld [vmem:[#allocation5 + $0xd8] sm:$0xff]
          %v8655 = vld [vmem:[#allocation5 + $0xe0] sm:$0xff]
          %v8656 = vld [vmem:[#allocation5 + $0xe8] sm:$0xff]
          %v8657 = vld [vmem:[#allocation5 + $0xf0] sm:$0xff]
          %v8658 = vld [vmem:[#allocation5 + $0xf8] sm:$0xff]
          %8660 = vset.pattern.permute.xlu0 0
          %8661 = vperm.xlu0 %8660, %v8563
          %v8662 = vpop.permute.xlu0 %8661
          %8665 = vset.pattern.permute.xlu0 0
          %8666 = vperm.xlu0 %8665, %v8564
          %v8667 = vpop.permute.xlu0 %8666
          %8670 = vset.pattern.permute.xlu0 0
          %8671 = vperm.xlu0 %8670, %v8565
          %v8672 = vpop.permute.xlu0 %8671
          %8675 = vset.pattern.permute.xlu0 0
          %8676 = vperm.xlu0 %8675, %v8566
          %v8677 = vpop.permute.xlu0 %8676
          %8680 = vset.pattern.permute.xlu0 0
          %8681 = vperm.xlu0 %8680, %v8567
          %v8682 = vpop.permute.xlu0 %8681
          %8685 = vset.pattern.permute.xlu0 0
          %8686 = vperm.xlu0 %8685, %v8568
          %v8687 = vpop.permute.xlu0 %8686
          %8690 = vset.pattern.permute.xlu0 0
          %8691 = vperm.xlu0 %8690, %v8569
          %v8692 = vpop.permute.xlu0 %8691
          %8695 = vset.pattern.permute.xlu0 0
          %8696 = vperm.xlu0 %8695, %v8570
          %v8697 = vpop.permute.xlu0 %8696
          %8700 = vset.pattern.permute.xlu0 0
          %8701 = vperm.xlu0 %8700, %v8571
          %v8702 = vpop.permute.xlu0 %8701
          %8705 = vset.pattern.permute.xlu0 0
          %8706 = vperm.xlu0 %8705, %v8572
          %v8707 = vpop.permute.xlu0 %8706
          %8710 = vset.pattern.permute.xlu0 0
          %8711 = vperm.xlu0 %8710, %v8573
          %v8712 = vpop.permute.xlu0 %8711
          %8715 = vset.pattern.permute.xlu0 0
          %8716 = vperm.xlu0 %8715, %v8574
          %v8717 = vpop.permute.xlu0 %8716
          %8720 = vset.pattern.permute.xlu0 0
          %8721 = vperm.xlu0 %8720, %v8575
          %v8722 = vpop.permute.xlu0 %8721
          %8725 = vset.pattern.permute.xlu0 0
          %8726 = vperm.xlu0 %8725, %v8576
          %v8727 = vpop.permute.xlu0 %8726
          %8730 = vset.pattern.permute.xlu0 0
          %8731 = vperm.xlu0 %8730, %v8577
          %v8732 = vpop.permute.xlu0 %8731
          %8735 = vset.pattern.permute.xlu0 0
          %8736 = vperm.xlu0 %8735, %v8578
          %v8737 = vpop.permute.xlu0 %8736
          %8740 = vset.pattern.permute.xlu0 0
          %8741 = vperm.xlu0 %8740, %v8579
          %v8742 = vpop.permute.xlu0 %8741
          %8745 = vset.pattern.permute.xlu0 0
          %8746 = vperm.xlu0 %8745, %v8580
          %v8747 = vpop.permute.xlu0 %8746
          %8750 = vset.pattern.permute.xlu0 0
          %8751 = vperm.xlu0 %8750, %v8581
          %v8752 = vpop.permute.xlu0 %8751
          %8755 = vset.pattern.permute.xlu0 0
          %8756 = vperm.xlu0 %8755, %v8582
          %v8757 = vpop.permute.xlu0 %8756
          %8760 = vset.pattern.permute.xlu0 0
          %8761 = vperm.xlu0 %8760, %v8583
          %v8762 = vpop.permute.xlu0 %8761
          %8765 = vset.pattern.permute.xlu0 0
          %8766 = vperm.xlu0 %8765, %v8584
          %v8767 = vpop.permute.xlu0 %8766
          %8770 = vset.pattern.permute.xlu0 0
          %8771 = vperm.xlu0 %8770, %v8585
          %v8772 = vpop.permute.xlu0 %8771
          %8775 = vset.pattern.permute.xlu0 0
          %8776 = vperm.xlu0 %8775, %v8586
          %v8777 = vpop.permute.xlu0 %8776
          %8780 = vset.pattern.permute.xlu0 0
          %8781 = vperm.xlu0 %8780, %v8587
          %v8782 = vpop.permute.xlu0 %8781
          %8785 = vset.pattern.permute.xlu0 0
          %8786 = vperm.xlu0 %8785, %v8588
          %v8787 = vpop.permute.xlu0 %8786
          %8790 = vset.pattern.permute.xlu0 0
          %8791 = vperm.xlu0 %8790, %v8589
          %v8792 = vpop.permute.xlu0 %8791
          %8795 = vset.pattern.permute.xlu0 0
          %8796 = vperm.xlu0 %8795, %v8590
          %v8797 = vpop.permute.xlu0 %8796
          %8800 = vset.pattern.permute.xlu0 0
          %8801 = vperm.xlu0 %8800, %v8591
          %v8802 = vpop.permute.xlu0 %8801
          %8805 = vset.pattern.permute.xlu0 0
          %8806 = vperm.xlu0 %8805, %v8592
          %v8807 = vpop.permute.xlu0 %8806
          %8810 = vset.pattern.permute.xlu0 0
          %8811 = vperm.xlu0 %8810, %v8593
          %v8812 = vpop.permute.xlu0 %8811
          %8815 = vset.pattern.permute.xlu0 0
          %8816 = vperm.xlu0 %8815, %v8594
          %v8817 = vpop.permute.xlu0 %8816
          %v8819 = vmul.f32 %v8627, %v8662
          %v8820 = vmul.f32 %v8628, %v8667
          %v8821 = vmul.f32 %v8629, %v8672
          %v8822 = vmul.f32 %v8630, %v8677
          %v8823 = vmul.f32 %v8631, %v8682
          %v8824 = vmul.f32 %v8632, %v8687
          %v8825 = vmul.f32 %v8633, %v8692
          %v8826 = vmul.f32 %v8634, %v8697
          %v8827 = vmul.f32 %v8635, %v8702
          %v8828 = vmul.f32 %v8636, %v8707
          %v8829 = vmul.f32 %v8637, %v8712
          %v8830 = vmul.f32 %v8638, %v8717
          %v8831 = vmul.f32 %v8639, %v8722
          %v8832 = vmul.f32 %v8640, %v8727
          %v8833 = vmul.f32 %v8641, %v8732
          %v8834 = vmul.f32 %v8642, %v8737
          %v8835 = vmul.f32 %v8643, %v8742
          %v8836 = vmul.f32 %v8644, %v8747
          %v8837 = vmul.f32 %v8645, %v8752
          %v8838 = vmul.f32 %v8646, %v8757
          %v8839 = vmul.f32 %v8647, %v8762
          %v8840 = vmul.f32 %v8648, %v8767
          %v8841 = vmul.f32 %v8649, %v8772
          %v8842 = vmul.f32 %v8650, %v8777
          %v8843 = vmul.f32 %v8651, %v8782
          %v8844 = vmul.f32 %v8652, %v8787
          %v8845 = vmul.f32 %v8653, %v8792
          %v8846 = vmul.f32 %v8654, %v8797
          %v8847 = vmul.f32 %v8655, %v8802
          %v8848 = vmul.f32 %v8656, %v8807
          %v8849 = vmul.f32 %v8657, %v8812
          %v8850 = vmul.f32 %v8658, %v8817
          %v8851 = vpack.c.bf16 %v8820, %v8819
          %v8852 = vpack.c.bf16 %v8822, %v8821
          %v8853 = vpack.c.bf16 %v8824, %v8823
          %v8854 = vpack.c.bf16 %v8826, %v8825
          %v8855 = vpack.c.bf16 %v8828, %v8827
          %v8856 = vpack.c.bf16 %v8830, %v8829
          %v8857 = vpack.c.bf16 %v8832, %v8831
          %v8858 = vpack.c.bf16 %v8834, %v8833
          %v8859 = vpack.c.bf16 %v8836, %v8835
          %v8860 = vpack.c.bf16 %v8838, %v8837
          %v8861 = vpack.c.bf16 %v8840, %v8839
          %v8862 = vpack.c.bf16 %v8842, %v8841
          %v8863 = vpack.c.bf16 %v8844, %v8843
          %v8864 = vpack.c.bf16 %v8846, %v8845
          %v8865 = vpack.c.bf16 %v8848, %v8847
          %v8866 = vpack.c.bf16 %v8850, %v8849
          %v8883 = vunpack.c.l.b16 %v8851
          %v8884 = vunpack.c.h.b16 %v8851
          %v8885 = vunpack.c.l.b16 %v8852
          %v8886 = vunpack.c.h.b16 %v8852
          %v8887 = vunpack.c.l.b16 %v8853
          %v8888 = vunpack.c.h.b16 %v8853
          %v8889 = vunpack.c.l.b16 %v8854
          %v8890 = vunpack.c.h.b16 %v8854
          %v8891 = vunpack.c.l.b16 %v8855
          %v8892 = vunpack.c.h.b16 %v8855
          %v8893 = vunpack.c.l.b16 %v8856
          %v8894 = vunpack.c.h.b16 %v8856
          %v8895 = vunpack.c.l.b16 %v8857
          %v8896 = vunpack.c.h.b16 %v8857
          %v8897 = vunpack.c.l.b16 %v8858
          %v8898 = vunpack.c.h.b16 %v8858
          %v8899 = vunpack.c.l.b16 %v8859
          %v8900 = vunpack.c.h.b16 %v8859
          %v8901 = vunpack.c.l.b16 %v8860
          %v8902 = vunpack.c.h.b16 %v8860
          %v8903 = vunpack.c.l.b16 %v8861
          %v8904 = vunpack.c.h.b16 %v8861
          %v8905 = vunpack.c.l.b16 %v8862
          %v8906 = vunpack.c.h.b16 %v8862
          %v8907 = vunpack.c.l.b16 %v8863
          %v8908 = vunpack.c.h.b16 %v8863
          %v8909 = vunpack.c.l.b16 %v8864
          %v8910 = vunpack.c.h.b16 %v8864
          %v8911 = vunpack.c.l.b16 %v8865
          %v8912 = vunpack.c.h.b16 %v8865
          %v8913 = vunpack.c.l.b16 %v8866
          %v8914 = vunpack.c.h.b16 %v8866
          %v8915 = vpack.c.b16 %v8883, %v8883
          %v8916 = vpack.c.b16 %v8884, %v8884
          %v8917 = vpack.c.b16 %v8885, %v8885
          %v8918 = vpack.c.b16 %v8886, %v8886
          %v8919 = vpack.c.b16 %v8887, %v8887
          %v8920 = vpack.c.b16 %v8888, %v8888
          %v8921 = vpack.c.b16 %v8889, %v8889
          %v8922 = vpack.c.b16 %v8890, %v8890
          %v8923 = vpack.c.b16 %v8891, %v8891
          %v8924 = vpack.c.b16 %v8892, %v8892
          %v8925 = vpack.c.b16 %v8893, %v8893
          %v8926 = vpack.c.b16 %v8894, %v8894
          %v8927 = vpack.c.b16 %v8895, %v8895
          %v8928 = vpack.c.b16 %v8896, %v8896
          %v8929 = vpack.c.b16 %v8897, %v8897
          %v8930 = vpack.c.b16 %v8898, %v8898
          %v8931 = vpack.c.b16 %v8899, %v8899
          %v8932 = vpack.c.b16 %v8900, %v8900
          %v8933 = vpack.c.b16 %v8901, %v8901
          %v8934 = vpack.c.b16 %v8902, %v8902
          %v8935 = vpack.c.b16 %v8903, %v8903
          %v8936 = vpack.c.b16 %v8904, %v8904
          %v8937 = vpack.c.b16 %v8905, %v8905
          %v8938 = vpack.c.b16 %v8906, %v8906
          %v8939 = vpack.c.b16 %v8907, %v8907
          %v8940 = vpack.c.b16 %v8908, %v8908
          %v8941 = vpack.c.b16 %v8909, %v8909
          %v8942 = vpack.c.b16 %v8910, %v8910
          %v8943 = vpack.c.b16 %v8911, %v8911
          %v8944 = vpack.c.b16 %v8912, %v8912
          %v8945 = vpack.c.b16 %v8913, %v8913
          %v8946 = vpack.c.b16 %v8914, %v8914
          %8979 = vst [vmem:[%s334] sm:$0xf] %v8915
          %8980 = vst [vmem:[%s334 + $0x8] sm:$0xf] %v8916
          %8981 = vst [vmem:[%s334 + $0x10] sm:$0xf] %v8917
          %8982 = vst [vmem:[%s334 + $0x18] sm:$0xf] %v8918
          %8983 = vst [vmem:[%s334 + $0x20] sm:$0xf] %v8919
          %8984 = vst [vmem:[%s334 + $0x28] sm:$0xf] %v8920
          %8985 = vst [vmem:[%s334 + $0x30] sm:$0xf] %v8921
          %8986 = vst [vmem:[%s334 + $0x38] sm:$0xf] %v8922
          %8987 = vst [vmem:[%s334 + $0x40] sm:$0xf] %v8923
          %8988 = vst [vmem:[%s334 + $0x48] sm:$0xf] %v8924
          %8989 = vst [vmem:[%s334 + $0x50] sm:$0xf] %v8925
          %8990 = vst [vmem:[%s334 + $0x58] sm:$0xf] %v8926
          %8991 = vst [vmem:[%s334 + $0x60] sm:$0xf] %v8927
          %8992 = vst [vmem:[%s334 + $0x68] sm:$0xf] %v8928
          %8993 = vst [vmem:[%s334 + $0x70] sm:$0xf] %v8929
          %8994 = vst [vmem:[%s334 + $0x78] sm:$0xf] %v8930
          %8995 = vst [vmem:[%s334 + $0x80] sm:$0xf] %v8931
          %8996 = vst [vmem:[%s334 + $0x88] sm:$0xf] %v8932
          %8997 = vst [vmem:[%s334 + $0x90] sm:$0xf] %v8933
          %8998 = vst [vmem:[%s334 + $0x98] sm:$0xf] %v8934
          %8999 = vst [vmem:[%s334 + $0xa0] sm:$0xf] %v8935
          %9000 = vst [vmem:[%s334 + $0xa8] sm:$0xf] %v8936
          %9001 = vst [vmem:[%s334 + $0xb0] sm:$0xf] %v8937
          %9002 = vst [vmem:[%s334 + $0xb8] sm:$0xf] %v8938
          %9003 = vst [vmem:[%s334 + $0xc0] sm:$0xf] %v8939
          %9004 = vst [vmem:[%s334 + $0xc8] sm:$0xf] %v8940
          %9005 = vst [vmem:[%s334 + $0xd0] sm:$0xf] %v8941
          %9006 = vst [vmem:[%s334 + $0xd8] sm:$0xf] %v8942
          %9007 = vst [vmem:[%s334 + $0xe0] sm:$0xf] %v8943
          %9008 = vst [vmem:[%s334 + $0xe8] sm:$0xf] %v8944
          %9009 = vst [vmem:[%s334 + $0xf0] sm:$0xf] %v8945
          %9010 = vst [vmem:[%s334 + $0xf8] sm:$0xf] %v8946
          %v9011 = vld [vmem:[#allocation5 + $0x100] sm:$0xff]
          %v9012 = vld [vmem:[#allocation5 + $0x108] sm:$0xff]
          %v9013 = vld [vmem:[#allocation5 + $0x110] sm:$0xff]
          %v9014 = vld [vmem:[#allocation5 + $0x118] sm:$0xff]
          %v9015 = vld [vmem:[#allocation5 + $0x120] sm:$0xff]
          %v9016 = vld [vmem:[#allocation5 + $0x128] sm:$0xff]
          %v9017 = vld [vmem:[#allocation5 + $0x130] sm:$0xff]
          %v9018 = vld [vmem:[#allocation5 + $0x138] sm:$0xff]
          %v9019 = vld [vmem:[#allocation5 + $0x140] sm:$0xff]
          %v9020 = vld [vmem:[#allocation5 + $0x148] sm:$0xff]
          %v9021 = vld [vmem:[#allocation5 + $0x150] sm:$0xff]
          %v9022 = vld [vmem:[#allocation5 + $0x158] sm:$0xff]
          %v9023 = vld [vmem:[#allocation5 + $0x160] sm:$0xff]
          %v9024 = vld [vmem:[#allocation5 + $0x168] sm:$0xff]
          %v9025 = vld [vmem:[#allocation5 + $0x170] sm:$0xff]
          %v9026 = vld [vmem:[#allocation5 + $0x178] sm:$0xff]
          %v9027 = vld [vmem:[#allocation5 + $0x180] sm:$0xff]
          %v9028 = vld [vmem:[#allocation5 + $0x188] sm:$0xff]
          %v9029 = vld [vmem:[#allocation5 + $0x190] sm:$0xff]
          %v9030 = vld [vmem:[#allocation5 + $0x198] sm:$0xff]
          %v9031 = vld [vmem:[#allocation5 + $0x1a0] sm:$0xff]
          %v9032 = vld [vmem:[#allocation5 + $0x1a8] sm:$0xff]
          %v9033 = vld [vmem:[#allocation5 + $0x1b0] sm:$0xff]
          %v9034 = vld [vmem:[#allocation5 + $0x1b8] sm:$0xff]
          %v9035 = vld [vmem:[#allocation5 + $0x1c0] sm:$0xff]
          %v9036 = vld [vmem:[#allocation5 + $0x1c8] sm:$0xff]
          %v9037 = vld [vmem:[#allocation5 + $0x1d0] sm:$0xff]
          %v9038 = vld [vmem:[#allocation5 + $0x1d8] sm:$0xff]
          %v9039 = vld [vmem:[#allocation5 + $0x1e0] sm:$0xff]
          %v9040 = vld [vmem:[#allocation5 + $0x1e8] sm:$0xff]
          %v9041 = vld [vmem:[#allocation5 + $0x1f0] sm:$0xff]
          %v9042 = vld [vmem:[#allocation5 + $0x1f8] sm:$0xff]
          %9044 = vset.pattern.permute.xlu0 0
          %9045 = vperm.xlu0 %9044, %v8595
          %v9046 = vpop.permute.xlu0 %9045
          %9049 = vset.pattern.permute.xlu0 0
          %9050 = vperm.xlu0 %9049, %v8596
          %v9051 = vpop.permute.xlu0 %9050
          %9054 = vset.pattern.permute.xlu0 0
          %9055 = vperm.xlu0 %9054, %v8597
          %v9056 = vpop.permute.xlu0 %9055
          %9059 = vset.pattern.permute.xlu0 0
          %9060 = vperm.xlu0 %9059, %v8598
          %v9061 = vpop.permute.xlu0 %9060
          %9064 = vset.pattern.permute.xlu0 0
          %9065 = vperm.xlu0 %9064, %v8599
          %v9066 = vpop.permute.xlu0 %9065
          %9069 = vset.pattern.permute.xlu0 0
          %9070 = vperm.xlu0 %9069, %v8600
          %v9071 = vpop.permute.xlu0 %9070
          %9074 = vset.pattern.permute.xlu0 0
          %9075 = vperm.xlu0 %9074, %v8601
          %v9076 = vpop.permute.xlu0 %9075
          %9079 = vset.pattern.permute.xlu0 0
          %9080 = vperm.xlu0 %9079, %v8602
          %v9081 = vpop.permute.xlu0 %9080
          %9084 = vset.pattern.permute.xlu0 0
          %9085 = vperm.xlu0 %9084, %v8603
          %v9086 = vpop.permute.xlu0 %9085
          %9089 = vset.pattern.permute.xlu0 0
          %9090 = vperm.xlu0 %9089, %v8604
          %v9091 = vpop.permute.xlu0 %9090
          %9094 = vset.pattern.permute.xlu0 0
          %9095 = vperm.xlu0 %9094, %v8605
          %v9096 = vpop.permute.xlu0 %9095
          %9099 = vset.pattern.permute.xlu0 0
          %9100 = vperm.xlu0 %9099, %v8606
          %v9101 = vpop.permute.xlu0 %9100
          %9104 = vset.pattern.permute.xlu0 0
          %9105 = vperm.xlu0 %9104, %v8607
          %v9106 = vpop.permute.xlu0 %9105
          %9109 = vset.pattern.permute.xlu0 0
          %9110 = vperm.xlu0 %9109, %v8608
          %v9111 = vpop.permute.xlu0 %9110
          %9114 = vset.pattern.permute.xlu0 0
          %9115 = vperm.xlu0 %9114, %v8609
          %v9116 = vpop.permute.xlu0 %9115
          %9119 = vset.pattern.permute.xlu0 0
          %9120 = vperm.xlu0 %9119, %v8610
          %v9121 = vpop.permute.xlu0 %9120
          %9124 = vset.pattern.permute.xlu0 0
          %9125 = vperm.xlu0 %9124, %v8611
          %v9126 = vpop.permute.xlu0 %9125
          %9129 = vset.pattern.permute.xlu0 0
          %9130 = vperm.xlu0 %9129, %v8612
          %v9131 = vpop.permute.xlu0 %9130
          %9134 = vset.pattern.permute.xlu0 0
          %9135 = vperm.xlu0 %9134, %v8613
          %v9136 = vpop.permute.xlu0 %9135
          %9139 = vset.pattern.permute.xlu0 0
          %9140 = vperm.xlu0 %9139, %v8614
          %v9141 = vpop.permute.xlu0 %9140
          %9144 = vset.pattern.permute.xlu0 0
          %9145 = vperm.xlu0 %9144, %v8615
          %v9146 = vpop.permute.xlu0 %9145
          %9149 = vset.pattern.permute.xlu0 0
          %9150 = vperm.xlu0 %9149, %v8616
          %v9151 = vpop.permute.xlu0 %9150
          %9154 = vset.pattern.permute.xlu0 0
          %9155 = vperm.xlu0 %9154, %v8617
          %v9156 = vpop.permute.xlu0 %9155
          %9159 = vset.pattern.permute.xlu0 0
          %9160 = vperm.xlu0 %9159, %v8618
          %v9161 = vpop.permute.xlu0 %9160
          %9164 = vset.pattern.permute.xlu0 0
          %9165 = vperm.xlu0 %9164, %v8619
          %v9166 = vpop.permute.xlu0 %9165
          %9169 = vset.pattern.permute.xlu0 0
          %9170 = vperm.xlu0 %9169, %v8620
          %v9171 = vpop.permute.xlu0 %9170
          %9174 = vset.pattern.permute.xlu0 0
          %9175 = vperm.xlu0 %9174, %v8621
          %v9176 = vpop.permute.xlu0 %9175
          %9179 = vset.pattern.permute.xlu0 0
          %9180 = vperm.xlu0 %9179, %v8622
          %v9181 = vpop.permute.xlu0 %9180
          %9184 = vset.pattern.permute.xlu0 0
          %9185 = vperm.xlu0 %9184, %v8623
          %v9186 = vpop.permute.xlu0 %9185
          %9189 = vset.pattern.permute.xlu0 0
          %9190 = vperm.xlu0 %9189, %v8624
          %v9191 = vpop.permute.xlu0 %9190
          %9194 = vset.pattern.permute.xlu0 0
          %9195 = vperm.xlu0 %9194, %v8625
          %v9196 = vpop.permute.xlu0 %9195
          %9199 = vset.pattern.permute.xlu0 0
          %9200 = vperm.xlu0 %9199, %v8626
          %v9201 = vpop.permute.xlu0 %9200
          %v9203 = vmul.f32 %v9011, %v9046
          %v9204 = vmul.f32 %v9012, %v9051
          %v9205 = vmul.f32 %v9013, %v9056
          %v9206 = vmul.f32 %v9014, %v9061
          %v9207 = vmul.f32 %v9015, %v9066
          %v9208 = vmul.f32 %v9016, %v9071
          %v9209 = vmul.f32 %v9017, %v9076
          %v9210 = vmul.f32 %v9018, %v9081
          %v9211 = vmul.f32 %v9019, %v9086
          %v9212 = vmul.f32 %v9020, %v9091
          %v9213 = vmul.f32 %v9021, %v9096
          %v9214 = vmul.f32 %v9022, %v9101
          %v9215 = vmul.f32 %v9023, %v9106
          %v9216 = vmul.f32 %v9024, %v9111
          %v9217 = vmul.f32 %v9025, %v9116
          %v9218 = vmul.f32 %v9026, %v9121
          %v9219 = vmul.f32 %v9027, %v9126
          %v9220 = vmul.f32 %v9028, %v9131
          %v9221 = vmul.f32 %v9029, %v9136
          %v9222 = vmul.f32 %v9030, %v9141
          %v9223 = vmul.f32 %v9031, %v9146
          %v9224 = vmul.f32 %v9032, %v9151
          %v9225 = vmul.f32 %v9033, %v9156
          %v9226 = vmul.f32 %v9034, %v9161
          %v9227 = vmul.f32 %v9035, %v9166
          %v9228 = vmul.f32 %v9036, %v9171
          %v9229 = vmul.f32 %v9037, %v9176
          %v9230 = vmul.f32 %v9038, %v9181
          %v9231 = vmul.f32 %v9039, %v9186
          %v9232 = vmul.f32 %v9040, %v9191
          %v9233 = vmul.f32 %v9041, %v9196
          %v9234 = vmul.f32 %v9042, %v9201
          %v9235 = vpack.c.bf16 %v9204, %v9203
          %v9236 = vpack.c.bf16 %v9206, %v9205
          %v9237 = vpack.c.bf16 %v9208, %v9207
          %v9238 = vpack.c.bf16 %v9210, %v9209
          %v9239 = vpack.c.bf16 %v9212, %v9211
          %v9240 = vpack.c.bf16 %v9214, %v9213
          %v9241 = vpack.c.bf16 %v9216, %v9215
          %v9242 = vpack.c.bf16 %v9218, %v9217
          %v9243 = vpack.c.bf16 %v9220, %v9219
          %v9244 = vpack.c.bf16 %v9222, %v9221
          %v9245 = vpack.c.bf16 %v9224, %v9223
          %v9246 = vpack.c.bf16 %v9226, %v9225
          %v9247 = vpack.c.bf16 %v9228, %v9227
          %v9248 = vpack.c.bf16 %v9230, %v9229
          %v9249 = vpack.c.bf16 %v9232, %v9231
          %v9250 = vpack.c.bf16 %v9234, %v9233
          %v9267 = vunpack.c.l.b16 %v9235
          %v9268 = vunpack.c.h.b16 %v9235
          %v9269 = vunpack.c.l.b16 %v9236
          %v9270 = vunpack.c.h.b16 %v9236
          %v9271 = vunpack.c.l.b16 %v9237
          %v9272 = vunpack.c.h.b16 %v9237
          %v9273 = vunpack.c.l.b16 %v9238
          %v9274 = vunpack.c.h.b16 %v9238
          %v9275 = vunpack.c.l.b16 %v9239
          %v9276 = vunpack.c.h.b16 %v9239
          %v9277 = vunpack.c.l.b16 %v9240
          %v9278 = vunpack.c.h.b16 %v9240
          %v9279 = vunpack.c.l.b16 %v9241
          %v9280 = vunpack.c.h.b16 %v9241
          %v9281 = vunpack.c.l.b16 %v9242
          %v9282 = vunpack.c.h.b16 %v9242
          %v9283 = vunpack.c.l.b16 %v9243
          %v9284 = vunpack.c.h.b16 %v9243
          %v9285 = vunpack.c.l.b16 %v9244
          %v9286 = vunpack.c.h.b16 %v9244
          %v9287 = vunpack.c.l.b16 %v9245
          %v9288 = vunpack.c.h.b16 %v9245
          %v9289 = vunpack.c.l.b16 %v9246
          %v9290 = vunpack.c.h.b16 %v9246
          %v9291 = vunpack.c.l.b16 %v9247
          %v9292 = vunpack.c.h.b16 %v9247
          %v9293 = vunpack.c.l.b16 %v9248
          %v9294 = vunpack.c.h.b16 %v9248
          %v9295 = vunpack.c.l.b16 %v9249
          %v9296 = vunpack.c.h.b16 %v9249
          %v9297 = vunpack.c.l.b16 %v9250
          %v9298 = vunpack.c.h.b16 %v9250
          %v9299 = vpack.c.b16 %v9267, %v9267
          %v9300 = vpack.c.b16 %v9268, %v9268
          %v9301 = vpack.c.b16 %v9269, %v9269
          %v9302 = vpack.c.b16 %v9270, %v9270
          %v9303 = vpack.c.b16 %v9271, %v9271
          %v9304 = vpack.c.b16 %v9272, %v9272
          %v9305 = vpack.c.b16 %v9273, %v9273
          %v9306 = vpack.c.b16 %v9274, %v9274
          %v9307 = vpack.c.b16 %v9275, %v9275
          %v9308 = vpack.c.b16 %v9276, %v9276
          %v9309 = vpack.c.b16 %v9277, %v9277
          %v9310 = vpack.c.b16 %v9278, %v9278
          %v9311 = vpack.c.b16 %v9279, %v9279
          %v9312 = vpack.c.b16 %v9280, %v9280
          %v9313 = vpack.c.b16 %v9281, %v9281
          %v9314 = vpack.c.b16 %v9282, %v9282
          %v9315 = vpack.c.b16 %v9283, %v9283
          %v9316 = vpack.c.b16 %v9284, %v9284
          %v9317 = vpack.c.b16 %v9285, %v9285
          %v9318 = vpack.c.b16 %v9286, %v9286
          %v9319 = vpack.c.b16 %v9287, %v9287
          %v9320 = vpack.c.b16 %v9288, %v9288
          %v9321 = vpack.c.b16 %v9289, %v9289
          %v9322 = vpack.c.b16 %v9290, %v9290
          %v9323 = vpack.c.b16 %v9291, %v9291
          %v9324 = vpack.c.b16 %v9292, %v9292
          %v9325 = vpack.c.b16 %v9293, %v9293
          %v9326 = vpack.c.b16 %v9294, %v9294
          %v9327 = vpack.c.b16 %v9295, %v9295
          %v9328 = vpack.c.b16 %v9296, %v9296
          %v9329 = vpack.c.b16 %v9297, %v9297
          %v9330 = vpack.c.b16 %v9298, %v9298
          %9363 = vst [vmem:[%s334 + $0x4] sm:$0xf] %v9299
          %9364 = vst [vmem:[%s334 + $0xc] sm:$0xf] %v9300
          %9365 = vst [vmem:[%s334 + $0x14] sm:$0xf] %v9301
          %9366 = vst [vmem:[%s334 + $0x1c] sm:$0xf] %v9302
          %9367 = vst [vmem:[%s334 + $0x24] sm:$0xf] %v9303
          %9368 = vst [vmem:[%s334 + $0x2c] sm:$0xf] %v9304
          %9369 = vst [vmem:[%s334 + $0x34] sm:$0xf] %v9305
          %9370 = vst [vmem:[%s334 + $0x3c] sm:$0xf] %v9306
          %9371 = vst [vmem:[%s334 + $0x44] sm:$0xf] %v9307
          %9372 = vst [vmem:[%s334 + $0x4c] sm:$0xf] %v9308
          %9373 = vst [vmem:[%s334 + $0x54] sm:$0xf] %v9309
          %9374 = vst [vmem:[%s334 + $0x5c] sm:$0xf] %v9310
          %9375 = vst [vmem:[%s334 + $0x64] sm:$0xf] %v9311
          %9376 = vst [vmem:[%s334 + $0x6c] sm:$0xf] %v9312
          %9377 = vst [vmem:[%s334 + $0x74] sm:$0xf] %v9313
          %9378 = vst [vmem:[%s334 + $0x7c] sm:$0xf] %v9314
          %9379 = vst [vmem:[%s334 + $0x84] sm:$0xf] %v9315
          %9380 = vst [vmem:[%s334 + $0x8c] sm:$0xf] %v9316
          %9381 = vst [vmem:[%s334 + $0x94] sm:$0xf] %v9317
          %9382 = vst [vmem:[%s334 + $0x9c] sm:$0xf] %v9318
          %9383 = vst [vmem:[%s334 + $0xa4] sm:$0xf] %v9319
          %9384 = vst [vmem:[%s334 + $0xac] sm:$0xf] %v9320
          %9385 = vst [vmem:[%s334 + $0xb4] sm:$0xf] %v9321
          %9386 = vst [vmem:[%s334 + $0xbc] sm:$0xf] %v9322
          %9387 = vst [vmem:[%s334 + $0xc4] sm:$0xf] %v9323
          %9388 = vst [vmem:[%s334 + $0xcc] sm:$0xf] %v9324
          %9389 = vst [vmem:[%s334 + $0xd4] sm:$0xf] %v9325
          %9390 = vst [vmem:[%s334 + $0xdc] sm:$0xf] %v9326
          %9391 = vst [vmem:[%s334 + $0xe4] sm:$0xf] %v9327
          %9392 = vst [vmem:[%s334 + $0xec] sm:$0xf] %v9328
          %9393 = vst [vmem:[%s334 + $0xf4] sm:$0xf] %v9329
          %9394 = vst [vmem:[%s334 + $0xfc] sm:$0xf] %v9330
        $region56: #{tpu_custom_call.1} parent=31 // pred_fallthru
          _
        %s9395 = sand.u32 %s162, 1
        %s9396 = scalar_lea.sflag [#allocation11], %s9395
        %s9397 = sand.u32 %s162, 1
        %s9398 = smul.addr %s9397, 256
        %s9399 = scalar_lea.vmem [#allocation15], %s9398
        // Predicated region
        $region57: #{tpu_custom_call.1} parent=31 // pred_check
          %p9400 = pneg %p172
        $region58: #{tpu_custom_call.1} parent=31 // pred_check_branch
          %9402 = sbr.rel (%p9400) target = $region60
        $region59: #{tpu_custom_call.1} parent=31 // pred_region
          %s9403 = sld [smem:[#allocation7 + %s40]]
          %s9404 = smul.u32 32, %s9403
          %s9405 = smul.u32 2, %s39
          %s9407 = ssub.s32 4096, 4096
          %9408 = vsyncadd %s9396, %s9407
          %s9409 = smul.addr %s9404, 4
          %s9410 = sadd.s32 %s9405, %s9409
          %s9411 = smul.addr %s38, 256
          %s9412 = sadd.s32 %s9410, %s9411
          %s9413 = smul.addr %s9412, 64
          %s9414 = scalar_lea.hbm %s5, %s9413
          %s9415 = sshll.u32 %s9399, 4
          %s9416 = int_to_ptr.vmem [resolvable:$true] %s9415
          %9421 = dma.vmem_to_hbm [thread:$0]  %s9416, 4096, %s9414, %s9396, 128, 256, 8
        $region60: #{tpu_custom_call.1} parent=31 // pred_fallthru
          _
      $region32: #{tpu_custom_call.1} parent=5 // pred_fallthru
        _
      %p9422 = scmp.le.s32.totalorder 2, %s28
      // Predicated region
      $region61: #{tpu_custom_call.1} parent=5 // pred_check
        %p9423 = pneg %p9422
      $region62: #{tpu_custom_call.1} parent=5 // pred_check_branch
        %9425 = sbr.rel (%p9423) target = $region64
      $region63: #{tpu_custom_call.1} parent=5 // pred_region
        %s9426 = ssub.s32 %s28, 2
        // Predicated region
        $region65: #{tpu_custom_call.1} parent=63 // pred_check
          %p9427 = pneg %p178
        $region66: #{tpu_custom_call.1} parent=63 // pred_check_branch
          %9429 = sbr.rel (%p9427) target = $region68
        $region67: #{tpu_custom_call.1} parent=63 // pred_region
          %s9430 = sand.u32 %s163, 1
          %s9431 = scalar_lea.sflag [#allocation11], %s9430
          %s9432 = sand.u32 %s163, 1
          %s9433 = smul.addr %s9432, 256
          %s9434 = scalar_lea.vmem [#allocation15], %s9433
          %9435 = dma.done %s9431, 4096
        $region68: #{tpu_custom_call.1} parent=63 // pred_fallthru
          _
      $region64: #{tpu_custom_call.1} parent=5 // pred_fallthru
        _
    $region6: #{tpu_custom_call.1} parent=1 // loop_footer
      %s32 = sadd.s32 1, %s28
    $region7: #{tpu_custom_call.1} parent=1 // loop_footer_branch
      %27 = sbr.rel target = $region3
    $region8: #{tpu_custom_call.1} parent=1 // loop_exit
      _
    %9436 = vsyncpa [#allocation10], 1
    %s9437 = scalar_lea.sflag [#allocation10], 1
    %9438 = vsyncpa %s9437, 1
    %9439 = vsyncpa [#allocation13], 1
    %s9440 = scalar_lea.sflag [#allocation13], 1
    %9441 = vsyncpa %s9440, 1
    %9442 = vsyncpa [#allocation11], 1
    %s9443 = scalar_lea.sflag [#allocation11], 1
    %9444 = vsyncpa %s9443, 1

</llo_original>
